<compile_context>
chip_gen: v5e
topology: v5e:2x2
jax: 0.10.0
libtpu: 0.0.40
codegen_flags: <defaults>
</compile_context>

<pallas_src>
import functools
import math

import jax
import jax.numpy as jnp
from jax.experimental import pallas as pl
from jax.experimental.pallas import tpu as pltpu


# ----------------------------------------------------------------------------
# In-kernel building blocks (VMEM-resident values, NHWC: C on lanes, W sublanes)
# ----------------------------------------------------------------------------
def _pad_hw(x):
    """Zero-pad H and W by 1 inside the kernel (no HBM round trip)."""
    H, W, C = x.shape
    zc = jnp.zeros((H, 1, C), x.dtype)
    x = jnp.concatenate([zc, x, zc], axis=1)          # (H, W+2, C)
    zr = jnp.zeros((1, W + 2, C), x.dtype)
    return jnp.concatenate([zr, x, zr], axis=0)       # (H+2, W+2, C)


def _conv3x3(x, w_ref):
    """3x3 'same' conv as a single im2col matmul.

    x: (H, W, Cin) f32; w_ref: (9*Cin, Cout) bf16 with rows ordered
    (kh, kw, cin). Returns the raw (H*W, Cout) f32 accumulator.
    """
    H, W, Cin = x.shape
    xp = _pad_hw(x)
    cols = [xp[kh:kh + H, kw:kw + W, :] for kh in range(3) for kw in range(3)]
    patches = jnp.concatenate(cols, axis=-1)           # (H, W, 9*Cin)
    patches = patches.reshape(H * W, 9 * Cin).astype(jnp.bfloat16)
    return jnp.dot(patches, w_ref[...], preferred_element_type=jnp.float32)


def _conv_bn_relu(x, w_ref, shift_ref):
    """3x3 conv (BN scale pre-folded into w) + shift + ReLU, back to (H,W,Cout)."""
    H, W, _ = x.shape
    Cout = w_ref.shape[1]
    y = _conv3x3(x, w_ref) + shift_ref[...]
    return jnp.maximum(y, 0.0).reshape(H, W, Cout)


def _maxpool2x2(x):
    """2x2 max pool, stride 2 — fused reshape+max, no phase gathers."""
    H, W, C = x.shape
    x = jnp.max(x.reshape(H, W // 2, 2, C), axis=2)        # pool along W
    x = jnp.max(x.reshape(H // 2, 2, W // 2, C), axis=1)   # pool along H
    return x


def _upconv2x2(x, w_ref, b_ref):
    """ConvTranspose2d(k=2, s=2): one matmul to the 4 phases + interleave.

    x: (H, W, Cin); w_ref: (Cin, 4*Cout) with columns ordered (di, dj, cout);
    b_ref: (1, 4*Cout). Returns (2H, 2W, Cout).
    """
    H, W, Cin = x.shape
    Cout = w_ref.shape[1] // 4
    xf = x.reshape(H * W, Cin).astype(jnp.bfloat16)
    y4 = jnp.dot(xf, w_ref[...], preferred_element_type=jnp.float32) + b_ref[...]
    y4 = y4.reshape(H, W, 4 * Cout)
    ph = [y4[:, :, p * Cout:(p + 1) * Cout] for p in range(4)]     # p = 2*di+dj
    row0 = jnp.stack([ph[0], ph[1]], axis=2).reshape(H, 2 * W, Cout)   # di = 0
    row1 = jnp.stack([ph[2], ph[3]], axis=2).reshape(H, 2 * W, Cout)   # di = 1
    return jnp.stack([row0, row1], axis=1).reshape(2 * H, 2 * W, Cout)


# ----------------------------------------------------------------------------
# Fused U-Net forward kernel (one grid step = one batch element)
# ----------------------------------------------------------------------------
def _unet_kernel(*refs, n_enc, n_dec):
    x_ref, o_ref = refs[0], refs[-1]
    w = refs[1:-1]
    idx = 0

    x = x_ref[0]                                      # (H, W, Cin) f32
    feats = []
    for i in range(n_enc):                            # encoder
        if i > 0:
            x = _maxpool2x2(x)
        x = _conv_bn_relu(x, w[idx], w[idx + 1])
        idx += 2
        feats.append(x)

    x = feats[-1]
    for i in range(n_dec):                            # decoder
        up_w, up_b, cw, cs = w[idx:idx + 4]
        idx += 4
        x = _upconv2x2(x, up_w, up_b)
        x = jnp.concatenate([x, feats[n_enc - 2 - i]], axis=-1)   # skip concat
        x = _conv_bn_relu(x, cw, cs)

    hw_ref, hb_ref = w[idx], w[idx + 1]               # head conv + sigmoid
    H, W, _ = x.shape
    out_dim = hw_ref.shape[1]
    acc = _conv3x3(x, hw_ref)                         # (H*W, out_dim)
    if out_dim == 1:
        acc = acc.reshape(1, H * W)                   # lane-dense store
    else:
        acc = jnp.transpose(acc)                      # (out_dim, H*W)
    o_ref[0] = jax.nn.sigmoid(acc + hb_ref[...])


# ----------------------------------------------------------------------------
# Parameter initialization (deterministic, synthetic; matmul weights in bf16)
# ----------------------------------------------------------------------------
def _init_conv(key, kh, kw, cin, cout):
    kw_, kb_ = jax.random.split(key)
    bound = 1.0 / math.sqrt(cin * kh * kw)
    w = jax.random.uniform(kw_, (kh, kw, cin, cout), jnp.float32, -bound, bound)
    b = jax.random.uniform(kb_, (cout,), jnp.float32, -bound, bound)
    return w, b


def _fold_bn(w, b, eps=1e-5):
    """Fold inference-mode BatchNorm (running stats) into conv weight + shift:
    y = scale*(conv(x) + b - mean) + beta  ==  conv_{scale*W}(x) + shift."""
    cout = w.shape[-1]
    gamma = jnp.ones((cout,), jnp.float32)
    beta = jnp.zeros((cout,), jnp.float32)
    mean = jnp.zeros((cout,), jnp.float32)
    var = jnp.ones((cout,), jnp.float32)
    scale = gamma / jnp.sqrt(var + eps)
    w_folded = w * scale                               # broadcast over Cout
    shift = scale * (b - mean) + beta
    return w_folded, shift.reshape(1, cout)


def init_params(key, node_features, out_dim=1, n_downsamples=3,
                initial_hid_dim=32):
    hidden = [initial_hid_dim * 2 ** i for i in range(n_downsamples)]
    enc_ch = [node_features] + hidden
    keys = iter(jax.random.split(key, 4 * n_downsamples + 4))

    enc = []
    for cin, cout in zip(enc_ch[:-1], enc_ch[1:]):
        w, b = _init_conv(next(keys), 3, 3, cin, cout)
        w, shift = _fold_bn(w, b)
        enc.append(dict(w=w.reshape(9 * cin, cout).astype(jnp.bfloat16),
                        shift=shift))

    dec = []
    dec_ch = list(reversed(hidden))                     # e.g. [128, 64, 32]
    for cin, cout in zip(dec_ch[:-1], dec_ch[1:]):
        bnd = 1.0 / math.sqrt(cin * 4)
        k1, k2, k3 = jax.random.split(next(keys), 3)
        w_up = jax.random.uniform(k1, (2, 2, cin, cout), jnp.float32, -bnd, bnd)
        b_up = jax.random.uniform(k2, (cout,), jnp.float32, -bnd, bnd)
        w4 = w_up.transpose(2, 0, 1, 3).reshape(cin, 4 * cout)   # (ci,(di,dj,co))
        b4 = jnp.tile(b_up, 4).reshape(1, 4 * cout)
        w, b = _init_conv(k3, 3, 3, 2 * cout, cout)      # conv after skip concat
        w, shift = _fold_bn(w, b)
        dec.append(dict(up_w=w4.astype(jnp.bfloat16), up_b=b4,
                        w=w.reshape(9 * 2 * cout, cout).astype(jnp.bfloat16),
                        shift=shift))

    wh, bh = _init_conv(next(keys), 3, 3, hidden[0], out_dim)
    head = dict(w=wh.reshape(9 * hidden[0], out_dim).astype(jnp.bfloat16),
                b=bh.reshape(out_dim, 1))
    return dict(enc=enc, dec=dec, head=head)


# ----------------------------------------------------------------------------
# Public forward (PyTorch-style NCHW in / NCHW out)
# ----------------------------------------------------------------------------
def cnn_forward(x_nchw, params):
    N, Cin, H, W = x_nchw.shape
    x = jnp.transpose(x_nchw, (0, 2, 3, 1)).astype(jnp.float32)  # NCHW -> NHWC

    def full_spec(a):
        nd = a.ndim
        return pl.BlockSpec(a.shape, lambda n, _nd=nd: (0,) * _nd)

    args = [x]
    in_specs = [pl.BlockSpec((1, H, W, Cin), lambda n: (n, 0, 0, 0))]
    for p in params["enc"]:
        for a in (p["w"], p["shift"]):
            args.append(a)
            in_specs.append(full_spec(a))
    for p in params["dec"]:
        for a in (p["up_w"], p["up_b"], p["w"], p["shift"]):
            args.append(a)
            in_specs.append(full_spec(a))
    for a in (params["head"]["w"], params["head"]["b"]):
        args.append(a)
        in_specs.append(full_spec(a))

    out_dim = params["head"]["w"].shape[1]
    out = pl.pallas_call(
        functools.partial(_unet_kernel, n_enc=len(params["enc"]),
                          n_dec=len(params["dec"])),
        out_shape=jax.ShapeDtypeStruct((N, out_dim, H * W), jnp.float32),
        grid_spec=pltpu.PrefetchScalarGridSpec(
            num_scalar_prefetch=0,
            grid=(N,),
            in_specs=in_specs,
            out_specs=pl.BlockSpec((1, out_dim, H * W), lambda n: (n, 0, 0)),
        ),
        compiler_params=pltpu.CompilerParams(
            dimension_semantics=("parallel",)),
    )(*args)
    return out.reshape(N, out_dim, H, W)              # already NCHW ordering


# ----------------------------------------------------------------------------
if __name__ == "__main__":
    key = jax.random.PRNGKey(0)
    pkey, xkey = jax.random.split(key)

    node_features, out_dim = 4, 1
    params = init_params(pkey, node_features=node_features, out_dim=out_dim,
                         n_downsamples=3, initial_hid_dim=32)

    # PyTorch-style NCHW input: (batch=2, channels=4, H=16, W=16)
    x = jax.random.normal(xkey, (2, node_features, 16, 16), jnp.float32)

    out = cnn_forward(x, params)
    out = jax.block_until_ready(out)

    assert out.shape == (2, out_dim, 16, 16), out.shape
    assert bool(jnp.all(jnp.isfinite(out)))
    assert bool(jnp.all((out >= 0.0) & (out <= 1.0)))   # sigmoid range
    print("KERNEL_OK")
</pallas_src>

<mosaic_0001>
module attributes {stable_mosaic.version = 11 : i64} {
  func.func @_unet_kernel(%arg0: i32, %arg1: memref<1x16x16x4xf32, #tpu.memory_space<vmem>>, %arg2: memref<36x32xbf16, #tpu.memory_space<vmem>>, %arg3: memref<1x32xf32, #tpu.memory_space<vmem>>, %arg4: memref<288x64xbf16, #tpu.memory_space<vmem>>, %arg5: memref<1x64xf32, #tpu.memory_space<vmem>>, %arg6: memref<576x128xbf16, #tpu.memory_space<vmem>>, %arg7: memref<1x128xf32, #tpu.memory_space<vmem>>, %arg8: memref<128x256xbf16, #tpu.memory_space<vmem>>, %arg9: memref<1x256xf32, #tpu.memory_space<vmem>>, %arg10: memref<1152x64xbf16, #tpu.memory_space<vmem>>, %arg11: memref<1x64xf32, #tpu.memory_space<vmem>>, %arg12: memref<64x128xbf16, #tpu.memory_space<vmem>>, %arg13: memref<1x128xf32, #tpu.memory_space<vmem>>, %arg14: memref<576x32xbf16, #tpu.memory_space<vmem>>, %arg15: memref<1x32xf32, #tpu.memory_space<vmem>>, %arg16: memref<288x1xbf16, #tpu.memory_space<vmem>>, %arg17: memref<1x1xf32, #tpu.memory_space<vmem>>, %arg18: memref<1x1x256xf32, #tpu.memory_space<vmem>>) attributes {dimension_semantics = [#tpu.dimension_semantics<parallel>], iteration_bounds = array<i64: 2>, scalar_prefetch = 0 : i64, scratch_operands = 0 : i64, tpu.core_type = #tpu.core_type<tc>, window_params = [{transform_indices = @transform_0, window_bounds = array<i64: 1, 16, 16, 4>}, {pipeline_mode = #tpu.pipeline_mode<synchronous>, transform_indices = @transform_1, window_bounds = array<i64: 36, 32>}, {pipeline_mode = #tpu.pipeline_mode<synchronous>, transform_indices = @transform_2, window_bounds = array<i64: 1, 32>}, {pipeline_mode = #tpu.pipeline_mode<synchronous>, transform_indices = @transform_3, window_bounds = array<i64: 288, 64>}, {pipeline_mode = #tpu.pipeline_mode<synchronous>, transform_indices = @transform_4, window_bounds = array<i64: 1, 64>}, {pipeline_mode = #tpu.pipeline_mode<synchronous>, transform_indices = @transform_5, window_bounds = array<i64: 576, 128>}, {pipeline_mode = #tpu.pipeline_mode<synchronous>, transform_indices = @transform_6, window_bounds = array<i64: 1, 128>}, {pipeline_mode = #tpu.pipeline_mode<synchronous>, transform_indices = @transform_7, window_bounds = array<i64: 128, 256>}, {pipeline_mode = #tpu.pipeline_mode<synchronous>, transform_indices = @transform_8, window_bounds = array<i64: 1, 256>}, {pipeline_mode = #tpu.pipeline_mode<synchronous>, transform_indices = @transform_9, window_bounds = array<i64: 1152, 64>}, {pipeline_mode = #tpu.pipeline_mode<synchronous>, transform_indices = @transform_10, window_bounds = array<i64: 1, 64>}, {pipeline_mode = #tpu.pipeline_mode<synchronous>, transform_indices = @transform_11, window_bounds = array<i64: 64, 128>}, {pipeline_mode = #tpu.pipeline_mode<synchronous>, transform_indices = @transform_12, window_bounds = array<i64: 1, 128>}, {pipeline_mode = #tpu.pipeline_mode<synchronous>, transform_indices = @transform_13, window_bounds = array<i64: 576, 32>}, {pipeline_mode = #tpu.pipeline_mode<synchronous>, transform_indices = @transform_14, window_bounds = array<i64: 1, 32>}, {pipeline_mode = #tpu.pipeline_mode<synchronous>, transform_indices = @transform_15, window_bounds = array<i64: 288, 1>}, {pipeline_mode = #tpu.pipeline_mode<synchronous>, transform_indices = @transform_16, window_bounds = array<i64: 1, 1>}, {transform_indices = @transform_17, window_bounds = array<i64: 1, 1, 256>}]} {
    %c0 = arith.constant 0 : index
    %c0_0 = arith.constant 0 : index
    %c0_1 = arith.constant 0 : index
    %c0_2 = arith.constant 0 : index
    %0 = vector.load %arg1[%c0, %c0_0, %c0_1, %c0_2] : memref<1x16x16x4xf32, #tpu.memory_space<vmem>>, vector<1x16x16x4xf32>
    %1 = vector.shape_cast %0 : vector<1x16x16x4xf32> to vector<16x16x4xf32>
    %cst = arith.constant 0.000000e+00 : f32
    %2 = vector.broadcast %cst : f32 to vector<16x1x4xf32>
    %3 = tpu.concatenate %2, %1, %2 in 1 : vector<16x1x4xf32>, vector<16x16x4xf32>, vector<16x1x4xf32> -> vector<16x18x4xf32>
    %cst_3 = arith.constant 0.000000e+00 : f32
    %4 = vector.broadcast %cst_3 : f32 to vector<1x18x4xf32>
    %5 = tpu.concatenate %4, %3, %4 in 0 : vector<1x18x4xf32>, vector<16x18x4xf32>, vector<1x18x4xf32> -> vector<18x18x4xf32>
    %6 = vector.extract_strided_slice %5 {offsets = [0, 0, 0], sizes = [16, 16, 4], strides = [1, 1, 1]} : vector<18x18x4xf32> to vector<16x16x4xf32>
    %7 = vector.extract_strided_slice %5 {offsets = [0, 1, 0], sizes = [16, 16, 4], strides = [1, 1, 1]} : vector<18x18x4xf32> to vector<16x16x4xf32>
    %8 = vector.extract_strided_slice %5 {offsets = [0, 2, 0], sizes = [16, 16, 4], strides = [1, 1, 1]} : vector<18x18x4xf32> to vector<16x16x4xf32>
    %9 = vector.extract_strided_slice %5 {offsets = [1, 0, 0], sizes = [16, 16, 4], strides = [1, 1, 1]} : vector<18x18x4xf32> to vector<16x16x4xf32>
    %10 = vector.extract_strided_slice %5 {offsets = [1, 1, 0], sizes = [16, 16, 4], strides = [1, 1, 1]} : vector<18x18x4xf32> to vector<16x16x4xf32>
    %11 = vector.extract_strided_slice %5 {offsets = [1, 2, 0], sizes = [16, 16, 4], strides = [1, 1, 1]} : vector<18x18x4xf32> to vector<16x16x4xf32>
    %12 = vector.extract_strided_slice %5 {offsets = [2, 0, 0], sizes = [16, 16, 4], strides = [1, 1, 1]} : vector<18x18x4xf32> to vector<16x16x4xf32>
    %13 = vector.extract_strided_slice %5 {offsets = [2, 1, 0], sizes = [16, 16, 4], strides = [1, 1, 1]} : vector<18x18x4xf32> to vector<16x16x4xf32>
    %14 = vector.extract_strided_slice %5 {offsets = [2, 2, 0], sizes = [16, 16, 4], strides = [1, 1, 1]} : vector<18x18x4xf32> to vector<16x16x4xf32>
    %15 = tpu.concatenate %6, %7, %8, %9, %10, %11, %12, %13, %14 in 2 : vector<16x16x4xf32>, vector<16x16x4xf32>, vector<16x16x4xf32>, vector<16x16x4xf32>, vector<16x16x4xf32>, vector<16x16x4xf32>, vector<16x16x4xf32>, vector<16x16x4xf32>, vector<16x16x4xf32> -> vector<16x16x36xf32>
    %16 = vector.shape_cast %15 : vector<16x16x36xf32> to vector<256x36xf32>
    %17 = arith.truncf %16 : vector<256x36xf32> to vector<256x36xbf16>
    %c0_4 = arith.constant 0 : index
    %c0_5 = arith.constant 0 : index
    %18 = vector.load %arg2[%c0_4, %c0_5] : memref<36x32xbf16, #tpu.memory_space<vmem>>, vector<36x32xbf16>
    %cst_6 = arith.constant dense<0.000000e+00> : vector<256x32xf32>
    %19 = tpu.matmul %17, %18, %cst_6 {dimension_numbers = #tpu.dot_dimension_numbers<[1], [0], [0], [1], [0, 0, 1, 1], [], []>} : vector<256x36xbf16>, vector<36x32xbf16>, vector<256x32xf32> -> vector<256x32xf32>
    %c0_7 = arith.constant 0 : index
    %c0_8 = arith.constant 0 : index
    %20 = vector.load %arg3[%c0_7, %c0_8] : memref<1x32xf32, #tpu.memory_space<vmem>>, vector<1x32xf32>
    %21 = vector.broadcast %20 : vector<1x32xf32> to vector<256x32xf32>
    %22 = arith.addf %19, %21 : vector<256x32xf32>
    %cst_9 = arith.constant 0.000000e+00 : f32
    %23 = vector.broadcast %cst_9 : f32 to vector<256x32xf32>
    %24 = arith.maximumf %22, %23 : vector<256x32xf32>
    %25 = vector.shape_cast %24 : vector<256x32xf32> to vector<16x16x32xf32>
    %26 = vector.shape_cast %25 : vector<16x16x32xf32> to vector<16x8x2x32xf32>
    %cst_10 = arith.constant dense<0xFF800000> : vector<16x8x32xf32>
    %27 = vector.multi_reduction <maximumf>, %26, %cst_10 [2] : vector<16x8x2x32xf32> to vector<16x8x32xf32>
    %28 = vector.shape_cast %27 : vector<16x8x32xf32> to vector<8x2x8x32xf32>
    %cst_11 = arith.constant dense<0xFF800000> : vector<8x8x32xf32>
    %29 = vector.multi_reduction <maximumf>, %28, %cst_11 [1] : vector<8x2x8x32xf32> to vector<8x8x32xf32>
    %cst_12 = arith.constant 0.000000e+00 : f32
    %30 = vector.broadcast %cst_12 : f32 to vector<8x1x32xf32>
    %31 = tpu.concatenate %30, %29, %30 in 1 : vector<8x1x32xf32>, vector<8x8x32xf32>, vector<8x1x32xf32> -> vector<8x10x32xf32>
    %cst_13 = arith.constant 0.000000e+00 : f32
    %32 = vector.broadcast %cst_13 : f32 to vector<1x10x32xf32>
    %33 = tpu.concatenate %32, %31, %32 in 0 : vector<1x10x32xf32>, vector<8x10x32xf32>, vector<1x10x32xf32> -> vector<10x10x32xf32>
    %34 = vector.extract_strided_slice %33 {offsets = [0, 0, 0], sizes = [8, 8, 32], strides = [1, 1, 1]} : vector<10x10x32xf32> to vector<8x8x32xf32>
    %35 = vector.extract_strided_slice %33 {offsets = [0, 1, 0], sizes = [8, 8, 32], strides = [1, 1, 1]} : vector<10x10x32xf32> to vector<8x8x32xf32>
    %36 = vector.extract_strided_slice %33 {offsets = [0, 2, 0], sizes = [8, 8, 32], strides = [1, 1, 1]} : vector<10x10x32xf32> to vector<8x8x32xf32>
    %37 = vector.extract_strided_slice %33 {offsets = [1, 0, 0], sizes = [8, 8, 32], strides = [1, 1, 1]} : vector<10x10x32xf32> to vector<8x8x32xf32>
    %38 = vector.extract_strided_slice %33 {offsets = [1, 1, 0], sizes = [8, 8, 32], strides = [1, 1, 1]} : vector<10x10x32xf32> to vector<8x8x32xf32>
    %39 = vector.extract_strided_slice %33 {offsets = [1, 2, 0], sizes = [8, 8, 32], strides = [1, 1, 1]} : vector<10x10x32xf32> to vector<8x8x32xf32>
    %40 = vector.extract_strided_slice %33 {offsets = [2, 0, 0], sizes = [8, 8, 32], strides = [1, 1, 1]} : vector<10x10x32xf32> to vector<8x8x32xf32>
    %41 = vector.extract_strided_slice %33 {offsets = [2, 1, 0], sizes = [8, 8, 32], strides = [1, 1, 1]} : vector<10x10x32xf32> to vector<8x8x32xf32>
    %42 = vector.extract_strided_slice %33 {offsets = [2, 2, 0], sizes = [8, 8, 32], strides = [1, 1, 1]} : vector<10x10x32xf32> to vector<8x8x32xf32>
    %43 = tpu.concatenate %34, %35, %36, %37, %38, %39, %40, %41, %42 in 2 : vector<8x8x32xf32>, vector<8x8x32xf32>, vector<8x8x32xf32>, vector<8x8x32xf32>, vector<8x8x32xf32>, vector<8x8x32xf32>, vector<8x8x32xf32>, vector<8x8x32xf32>, vector<8x8x32xf32> -> vector<8x8x288xf32>
    %44 = vector.shape_cast %43 : vector<8x8x288xf32> to vector<64x288xf32>
    %45 = arith.truncf %44 : vector<64x288xf32> to vector<64x288xbf16>
    %c0_14 = arith.constant 0 : index
    %c0_15 = arith.constant 0 : index
    %46 = vector.load %arg4[%c0_14, %c0_15] : memref<288x64xbf16, #tpu.memory_space<vmem>>, vector<288x64xbf16>
    %cst_16 = arith.constant dense<0.000000e+00> : vector<64x64xf32>
    %47 = tpu.matmul %45, %46, %cst_16 {dimension_numbers = #tpu.dot_dimension_numbers<[1], [0], [0], [1], [0, 0, 1, 1], [], []>} : vector<64x288xbf16>, vector<288x64xbf16>, vector<64x64xf32> -> vector<64x64xf32>
    %c0_17 = arith.constant 0 : index
    %c0_18 = arith.constant 0 : index
    %48 = vector.load %arg5[%c0_17, %c0_18] : memref<1x64xf32, #tpu.memory_space<vmem>>, vector<1x64xf32>
    %49 = vector.broadcast %48 : vector<1x64xf32> to vector<64x64xf32>
    %50 = arith.addf %47, %49 : vector<64x64xf32>
    %cst_19 = arith.constant 0.000000e+00 : f32
    %51 = vector.broadcast %cst_19 : f32 to vector<64x64xf32>
    %52 = arith.maximumf %50, %51 : vector<64x64xf32>
    %53 = vector.shape_cast %52 : vector<64x64xf32> to vector<8x8x64xf32>
    %54 = vector.shape_cast %53 : vector<8x8x64xf32> to vector<8x4x2x64xf32>
    %cst_20 = arith.constant dense<0xFF800000> : vector<8x4x64xf32>
    %55 = vector.multi_reduction <maximumf>, %54, %cst_20 [2] : vector<8x4x2x64xf32> to vector<8x4x64xf32>
    %56 = vector.shape_cast %55 : vector<8x4x64xf32> to vector<4x2x4x64xf32>
    %cst_21 = arith.constant dense<0xFF800000> : vector<4x4x64xf32>
    %57 = vector.multi_reduction <maximumf>, %56, %cst_21 [1] : vector<4x2x4x64xf32> to vector<4x4x64xf32>
    %cst_22 = arith.constant 0.000000e+00 : f32
    %58 = vector.broadcast %cst_22 : f32 to vector<4x1x64xf32>
    %59 = tpu.concatenate %58, %57, %58 in 1 : vector<4x1x64xf32>, vector<4x4x64xf32>, vector<4x1x64xf32> -> vector<4x6x64xf32>
    %cst_23 = arith.constant 0.000000e+00 : f32
    %60 = vector.broadcast %cst_23 : f32 to vector<1x6x64xf32>
    %61 = tpu.concatenate %60, %59, %60 in 0 : vector<1x6x64xf32>, vector<4x6x64xf32>, vector<1x6x64xf32> -> vector<6x6x64xf32>
    %62 = vector.extract_strided_slice %61 {offsets = [0, 0, 0], sizes = [4, 4, 64], strides = [1, 1, 1]} : vector<6x6x64xf32> to vector<4x4x64xf32>
    %63 = vector.extract_strided_slice %61 {offsets = [0, 1, 0], sizes = [4, 4, 64], strides = [1, 1, 1]} : vector<6x6x64xf32> to vector<4x4x64xf32>
    %64 = vector.extract_strided_slice %61 {offsets = [0, 2, 0], sizes = [4, 4, 64], strides = [1, 1, 1]} : vector<6x6x64xf32> to vector<4x4x64xf32>
    %65 = vector.extract_strided_slice %61 {offsets = [1, 0, 0], sizes = [4, 4, 64], strides = [1, 1, 1]} : vector<6x6x64xf32> to vector<4x4x64xf32>
    %66 = vector.extract_strided_slice %61 {offsets = [1, 1, 0], sizes = [4, 4, 64], strides = [1, 1, 1]} : vector<6x6x64xf32> to vector<4x4x64xf32>
    %67 = vector.extract_strided_slice %61 {offsets = [1, 2, 0], sizes = [4, 4, 64], strides = [1, 1, 1]} : vector<6x6x64xf32> to vector<4x4x64xf32>
    %68 = vector.extract_strided_slice %61 {offsets = [2, 0, 0], sizes = [4, 4, 64], strides = [1, 1, 1]} : vector<6x6x64xf32> to vector<4x4x64xf32>
    %69 = vector.extract_strided_slice %61 {offsets = [2, 1, 0], sizes = [4, 4, 64], strides = [1, 1, 1]} : vector<6x6x64xf32> to vector<4x4x64xf32>
    %70 = vector.extract_strided_slice %61 {offsets = [2, 2, 0], sizes = [4, 4, 64], strides = [1, 1, 1]} : vector<6x6x64xf32> to vector<4x4x64xf32>
    %71 = tpu.concatenate %62, %63, %64, %65, %66, %67, %68, %69, %70 in 2 : vector<4x4x64xf32>, vector<4x4x64xf32>, vector<4x4x64xf32>, vector<4x4x64xf32>, vector<4x4x64xf32>, vector<4x4x64xf32>, vector<4x4x64xf32>, vector<4x4x64xf32>, vector<4x4x64xf32> -> vector<4x4x576xf32>
    %72 = vector.shape_cast %71 : vector<4x4x576xf32> to vector<16x576xf32>
    %73 = arith.truncf %72 : vector<16x576xf32> to vector<16x576xbf16>
    %c0_24 = arith.constant 0 : index
    %c0_25 = arith.constant 0 : index
    %74 = vector.load %arg6[%c0_24, %c0_25] : memref<576x128xbf16, #tpu.memory_space<vmem>>, vector<576x128xbf16>
    %cst_26 = arith.constant dense<0.000000e+00> : vector<16x128xf32>
    %75 = tpu.matmul %73, %74, %cst_26 {dimension_numbers = #tpu.dot_dimension_numbers<[1], [0], [0], [1], [0, 0, 1, 1], [], []>} : vector<16x576xbf16>, vector<576x128xbf16>, vector<16x128xf32> -> vector<16x128xf32>
    %c0_27 = arith.constant 0 : index
    %c0_28 = arith.constant 0 : index
    %76 = vector.load %arg7[%c0_27, %c0_28] : memref<1x128xf32, #tpu.memory_space<vmem>>, vector<1x128xf32>
    %77 = vector.broadcast %76 : vector<1x128xf32> to vector<16x128xf32>
    %78 = arith.addf %75, %77 : vector<16x128xf32>
    %cst_29 = arith.constant 0.000000e+00 : f32
    %79 = vector.broadcast %cst_29 : f32 to vector<16x128xf32>
    %80 = arith.maximumf %78, %79 : vector<16x128xf32>
    %81 = vector.shape_cast %80 : vector<16x128xf32> to vector<4x4x128xf32>
    %82 = vector.shape_cast %81 : vector<4x4x128xf32> to vector<16x128xf32>
    %83 = arith.truncf %82 : vector<16x128xf32> to vector<16x128xbf16>
    %c0_30 = arith.constant 0 : index
    %c0_31 = arith.constant 0 : index
    %84 = vector.load %arg8[%c0_30, %c0_31] : memref<128x256xbf16, #tpu.memory_space<vmem>>, vector<128x256xbf16>
    %cst_32 = arith.constant dense<0.000000e+00> : vector<16x256xf32>
    %85 = tpu.matmul %83, %84, %cst_32 {dimension_numbers = #tpu.dot_dimension_numbers<[1], [0], [0], [1], [0, 0, 1, 1], [], []>} : vector<16x128xbf16>, vector<128x256xbf16>, vector<16x256xf32> -> vector<16x256xf32>
    %c0_33 = arith.constant 0 : index
    %c0_34 = arith.constant 0 : index
    %86 = vector.load %arg9[%c0_33, %c0_34] : memref<1x256xf32, #tpu.memory_space<vmem>>, vector<1x256xf32>
    %87 = vector.broadcast %86 : vector<1x256xf32> to vector<16x256xf32>
    %88 = arith.addf %85, %87 : vector<16x256xf32>
    %89 = vector.shape_cast %88 : vector<16x256xf32> to vector<4x4x256xf32>
    %90 = vector.extract_strided_slice %89 {offsets = [0, 0, 0], sizes = [4, 4, 64], strides = [1, 1, 1]} : vector<4x4x256xf32> to vector<4x4x64xf32>
    %91 = vector.extract_strided_slice %89 {offsets = [0, 0, 64], sizes = [4, 4, 64], strides = [1, 1, 1]} : vector<4x4x256xf32> to vector<4x4x64xf32>
    %92 = vector.extract_strided_slice %89 {offsets = [0, 0, 128], sizes = [4, 4, 64], strides = [1, 1, 1]} : vector<4x4x256xf32> to vector<4x4x64xf32>
    %93 = vector.extract_strided_slice %89 {offsets = [0, 0, 192], sizes = [4, 4, 64], strides = [1, 1, 1]} : vector<4x4x256xf32> to vector<4x4x64xf32>
    %94 = vector.shape_cast %90 : vector<4x4x64xf32> to vector<4x4x1x64xf32>
    %95 = vector.shape_cast %91 : vector<4x4x64xf32> to vector<4x4x1x64xf32>
    %96 = tpu.concatenate %94, %95 in 2 : vector<4x4x1x64xf32>, vector<4x4x1x64xf32> -> vector<4x4x2x64xf32>
    %97 = vector.shape_cast %96 : vector<4x4x2x64xf32> to vector<4x8x64xf32>
    %98 = vector.shape_cast %92 : vector<4x4x64xf32> to vector<4x4x1x64xf32>
    %99 = vector.shape_cast %93 : vector<4x4x64xf32> to vector<4x4x1x64xf32>
    %100 = tpu.concatenate %98, %99 in 2 : vector<4x4x1x64xf32>, vector<4x4x1x64xf32> -> vector<4x4x2x64xf32>
    %101 = vector.shape_cast %100 : vector<4x4x2x64xf32> to vector<4x8x64xf32>
    %102 = vector.shape_cast %97 : vector<4x8x64xf32> to vector<4x1x8x64xf32>
    %103 = vector.shape_cast %101 : vector<4x8x64xf32> to vector<4x1x8x64xf32>
    %104 = tpu.concatenate %102, %103 in 1 : vector<4x1x8x64xf32>, vector<4x1x8x64xf32> -> vector<4x2x8x64xf32>
    %105 = vector.shape_cast %104 : vector<4x2x8x64xf32> to vector<8x8x64xf32>
    %106 = tpu.concatenate %105, %53 in 2 : vector<8x8x64xf32>, vector<8x8x64xf32> -> vector<8x8x128xf32>
    %cst_35 = arith.constant 0.000000e+00 : f32
    %107 = vector.broadcast %cst_35 : f32 to vector<8x1x128xf32>
    %108 = tpu.concatenate %107, %106, %107 in 1 : vector<8x1x128xf32>, vector<8x8x128xf32>, vector<8x1x128xf32> -> vector<8x10x128xf32>
    %cst_36 = arith.constant 0.000000e+00 : f32
    %109 = vector.broadcast %cst_36 : f32 to vector<1x10x128xf32>
    %110 = tpu.concatenate %109, %108, %109 in 0 : vector<1x10x128xf32>, vector<8x10x128xf32>, vector<1x10x128xf32> -> vector<10x10x128xf32>
    %111 = vector.extract_strided_slice %110 {offsets = [0, 0, 0], sizes = [8, 8, 128], strides = [1, 1, 1]} : vector<10x10x128xf32> to vector<8x8x128xf32>
    %112 = vector.extract_strided_slice %110 {offsets = [0, 1, 0], sizes = [8, 8, 128], strides = [1, 1, 1]} : vector<10x10x128xf32> to vector<8x8x128xf32>
    %113 = vector.extract_strided_slice %110 {offsets = [0, 2, 0], sizes = [8, 8, 128], strides = [1, 1, 1]} : vector<10x10x128xf32> to vector<8x8x128xf32>
    %114 = vector.extract_strided_slice %110 {offsets = [1, 0, 0], sizes = [8, 8, 128], strides = [1, 1, 1]} : vector<10x10x128xf32> to vector<8x8x128xf32>
    %115 = vector.extract_strided_slice %110 {offsets = [1, 1, 0], sizes = [8, 8, 128], strides = [1, 1, 1]} : vector<10x10x128xf32> to vector<8x8x128xf32>
    %116 = vector.extract_strided_slice %110 {offsets = [1, 2, 0], sizes = [8, 8, 128], strides = [1, 1, 1]} : vector<10x10x128xf32> to vector<8x8x128xf32>
    %117 = vector.extract_strided_slice %110 {offsets = [2, 0, 0], sizes = [8, 8, 128], strides = [1, 1, 1]} : vector<10x10x128xf32> to vector<8x8x128xf32>
    %118 = vector.extract_strided_slice %110 {offsets = [2, 1, 0], sizes = [8, 8, 128], strides = [1, 1, 1]} : vector<10x10x128xf32> to vector<8x8x128xf32>
    %119 = vector.extract_strided_slice %110 {offsets = [2, 2, 0], sizes = [8, 8, 128], strides = [1, 1, 1]} : vector<10x10x128xf32> to vector<8x8x128xf32>
    %120 = tpu.concatenate %111, %112, %113, %114, %115, %116, %117, %118, %119 in 2 : vector<8x8x128xf32>, vector<8x8x128xf32>, vector<8x8x128xf32>, vector<8x8x128xf32>, vector<8x8x128xf32>, vector<8x8x128xf32>, vector<8x8x128xf32>, vector<8x8x128xf32>, vector<8x8x128xf32> -> vector<8x8x1152xf32>
    %121 = vector.shape_cast %120 : vector<8x8x1152xf32> to vector<64x1152xf32>
    %122 = arith.truncf %121 : vector<64x1152xf32> to vector<64x1152xbf16>
    %c0_37 = arith.constant 0 : index
    %c0_38 = arith.constant 0 : index
    %123 = vector.load %arg10[%c0_37, %c0_38] : memref<1152x64xbf16, #tpu.memory_space<vmem>>, vector<1152x64xbf16>
    %cst_39 = arith.constant dense<0.000000e+00> : vector<64x64xf32>
    %124 = tpu.matmul %122, %123, %cst_39 {dimension_numbers = #tpu.dot_dimension_numbers<[1], [0], [0], [1], [0, 0, 1, 1], [], []>} : vector<64x1152xbf16>, vector<1152x64xbf16>, vector<64x64xf32> -> vector<64x64xf32>
    %c0_40 = arith.constant 0 : index
    %c0_41 = arith.constant 0 : index
    %125 = vector.load %arg11[%c0_40, %c0_41] : memref<1x64xf32, #tpu.memory_space<vmem>>, vector<1x64xf32>
    %126 = vector.broadcast %125 : vector<1x64xf32> to vector<64x64xf32>
    %127 = arith.addf %124, %126 : vector<64x64xf32>
    %cst_42 = arith.constant 0.000000e+00 : f32
    %128 = vector.broadcast %cst_42 : f32 to vector<64x64xf32>
    %129 = arith.maximumf %127, %128 : vector<64x64xf32>
    %130 = vector.shape_cast %129 : vector<64x64xf32> to vector<8x8x64xf32>
    %131 = vector.shape_cast %130 : vector<8x8x64xf32> to vector<64x64xf32>
    %132 = arith.truncf %131 : vector<64x64xf32> to vector<64x64xbf16>
    %c0_43 = arith.constant 0 : index
    %c0_44 = arith.constant 0 : index
    %133 = vector.load %arg12[%c0_43, %c0_44] : memref<64x128xbf16, #tpu.memory_space<vmem>>, vector<64x128xbf16>
    %cst_45 = arith.constant dense<0.000000e+00> : vector<64x128xf32>
    %134 = tpu.matmul %132, %133, %cst_45 {dimension_numbers = #tpu.dot_dimension_numbers<[1], [0], [0], [1], [0, 0, 1, 1], [], []>} : vector<64x64xbf16>, vector<64x128xbf16>, vector<64x128xf32> -> vector<64x128xf32>
    %c0_46 = arith.constant 0 : index
    %c0_47 = arith.constant 0 : index
    %135 = vector.load %arg13[%c0_46, %c0_47] : memref<1x128xf32, #tpu.memory_space<vmem>>, vector<1x128xf32>
    %136 = vector.broadcast %135 : vector<1x128xf32> to vector<64x128xf32>
    %137 = arith.addf %134, %136 : vector<64x128xf32>
    %138 = vector.shape_cast %137 : vector<64x128xf32> to vector<8x8x128xf32>
    %139 = vector.extract_strided_slice %138 {offsets = [0, 0, 0], sizes = [8, 8, 32], strides = [1, 1, 1]} : vector<8x8x128xf32> to vector<8x8x32xf32>
    %140 = vector.extract_strided_slice %138 {offsets = [0, 0, 32], sizes = [8, 8, 32], strides = [1, 1, 1]} : vector<8x8x128xf32> to vector<8x8x32xf32>
    %141 = vector.extract_strided_slice %138 {offsets = [0, 0, 64], sizes = [8, 8, 32], strides = [1, 1, 1]} : vector<8x8x128xf32> to vector<8x8x32xf32>
    %142 = vector.extract_strided_slice %138 {offsets = [0, 0, 96], sizes = [8, 8, 32], strides = [1, 1, 1]} : vector<8x8x128xf32> to vector<8x8x32xf32>
    %143 = vector.shape_cast %139 : vector<8x8x32xf32> to vector<8x8x1x32xf32>
    %144 = vector.shape_cast %140 : vector<8x8x32xf32> to vector<8x8x1x32xf32>
    %145 = tpu.concatenate %143, %144 in 2 : vector<8x8x1x32xf32>, vector<8x8x1x32xf32> -> vector<8x8x2x32xf32>
    %146 = vector.shape_cast %145 : vector<8x8x2x32xf32> to vector<8x16x32xf32>
    %147 = vector.shape_cast %141 : vector<8x8x32xf32> to vector<8x8x1x32xf32>
    %148 = vector.shape_cast %142 : vector<8x8x32xf32> to vector<8x8x1x32xf32>
    %149 = tpu.concatenate %147, %148 in 2 : vector<8x8x1x32xf32>, vector<8x8x1x32xf32> -> vector<8x8x2x32xf32>
    %150 = vector.shape_cast %149 : vector<8x8x2x32xf32> to vector<8x16x32xf32>
    %151 = vector.shape_cast %146 : vector<8x16x32xf32> to vector<8x1x16x32xf32>
    %152 = vector.shape_cast %150 : vector<8x16x32xf32> to vector<8x1x16x32xf32>
    %153 = tpu.concatenate %151, %152 in 1 : vector<8x1x16x32xf32>, vector<8x1x16x32xf32> -> vector<8x2x16x32xf32>
    %154 = vector.shape_cast %153 : vector<8x2x16x32xf32> to vector<16x16x32xf32>
    %155 = tpu.concatenate %154, %25 in 2 : vector<16x16x32xf32>, vector<16x16x32xf32> -> vector<16x16x64xf32>
    %cst_48 = arith.constant 0.000000e+00 : f32
    %156 = vector.broadcast %cst_48 : f32 to vector<16x1x64xf32>
    %157 = tpu.concatenate %156, %155, %156 in 1 : vector<16x1x64xf32>, vector<16x16x64xf32>, vector<16x1x64xf32> -> vector<16x18x64xf32>
    %cst_49 = arith.constant 0.000000e+00 : f32
    %158 = vector.broadcast %cst_49 : f32 to vector<1x18x64xf32>
    %159 = tpu.concatenate %158, %157, %158 in 0 : vector<1x18x64xf32>, vector<16x18x64xf32>, vector<1x18x64xf32> -> vector<18x18x64xf32>
    %160 = vector.extract_strided_slice %159 {offsets = [0, 0, 0], sizes = [16, 16, 64], strides = [1, 1, 1]} : vector<18x18x64xf32> to vector<16x16x64xf32>
    %161 = vector.extract_strided_slice %159 {offsets = [0, 1, 0], sizes = [16, 16, 64], strides = [1, 1, 1]} : vector<18x18x64xf32> to vector<16x16x64xf32>
    %162 = vector.extract_strided_slice %159 {offsets = [0, 2, 0], sizes = [16, 16, 64], strides = [1, 1, 1]} : vector<18x18x64xf32> to vector<16x16x64xf32>
    %163 = vector.extract_strided_slice %159 {offsets = [1, 0, 0], sizes = [16, 16, 64], strides = [1, 1, 1]} : vector<18x18x64xf32> to vector<16x16x64xf32>
    %164 = vector.extract_strided_slice %159 {offsets = [1, 1, 0], sizes = [16, 16, 64], strides = [1, 1, 1]} : vector<18x18x64xf32> to vector<16x16x64xf32>
    %165 = vector.extract_strided_slice %159 {offsets = [1, 2, 0], sizes = [16, 16, 64], strides = [1, 1, 1]} : vector<18x18x64xf32> to vector<16x16x64xf32>
    %166 = vector.extract_strided_slice %159 {offsets = [2, 0, 0], sizes = [16, 16, 64], strides = [1, 1, 1]} : vector<18x18x64xf32> to vector<16x16x64xf32>
    %167 = vector.extract_strided_slice %159 {offsets = [2, 1, 0], sizes = [16, 16, 64], strides = [1, 1, 1]} : vector<18x18x64xf32> to vector<16x16x64xf32>
    %168 = vector.extract_strided_slice %159 {offsets = [2, 2, 0], sizes = [16, 16, 64], strides = [1, 1, 1]} : vector<18x18x64xf32> to vector<16x16x64xf32>
    %169 = tpu.concatenate %160, %161, %162, %163, %164, %165, %166, %167, %168 in 2 : vector<16x16x64xf32>, vector<16x16x64xf32>, vector<16x16x64xf32>, vector<16x16x64xf32>, vector<16x16x64xf32>, vector<16x16x64xf32>, vector<16x16x64xf32>, vector<16x16x64xf32>, vector<16x16x64xf32> -> vector<16x16x576xf32>
    %170 = vector.shape_cast %169 : vector<16x16x576xf32> to vector<256x576xf32>
    %171 = arith.truncf %170 : vector<256x576xf32> to vector<256x576xbf16>
    %c0_50 = arith.constant 0 : index
    %c0_51 = arith.constant 0 : index
    %172 = vector.load %arg14[%c0_50, %c0_51] : memref<576x32xbf16, #tpu.memory_space<vmem>>, vector<576x32xbf16>
    %cst_52 = arith.constant dense<0.000000e+00> : vector<256x32xf32>
    %173 = tpu.matmul %171, %172, %cst_52 {dimension_numbers = #tpu.dot_dimension_numbers<[1], [0], [0], [1], [0, 0, 1, 1], [], []>} : vector<256x576xbf16>, vector<576x32xbf16>, vector<256x32xf32> -> vector<256x32xf32>
    %c0_53 = arith.constant 0 : index
    %c0_54 = arith.constant 0 : index
    %174 = vector.load %arg15[%c0_53, %c0_54] : memref<1x32xf32, #tpu.memory_space<vmem>>, vector<1x32xf32>
    %175 = vector.broadcast %174 : vector<1x32xf32> to vector<256x32xf32>
    %176 = arith.addf %173, %175 : vector<256x32xf32>
    %cst_55 = arith.constant 0.000000e+00 : f32
    %177 = vector.broadcast %cst_55 : f32 to vector<256x32xf32>
    %178 = arith.maximumf %176, %177 : vector<256x32xf32>
    %179 = vector.shape_cast %178 : vector<256x32xf32> to vector<16x16x32xf32>
    %cst_56 = arith.constant 0.000000e+00 : f32
    %180 = vector.broadcast %cst_56 : f32 to vector<16x1x32xf32>
    %181 = tpu.concatenate %180, %179, %180 in 1 : vector<16x1x32xf32>, vector<16x16x32xf32>, vector<16x1x32xf32> -> vector<16x18x32xf32>
    %cst_57 = arith.constant 0.000000e+00 : f32
    %182 = vector.broadcast %cst_57 : f32 to vector<1x18x32xf32>
    %183 = tpu.concatenate %182, %181, %182 in 0 : vector<1x18x32xf32>, vector<16x18x32xf32>, vector<1x18x32xf32> -> vector<18x18x32xf32>
    %184 = vector.extract_strided_slice %183 {offsets = [0, 0, 0], sizes = [16, 16, 32], strides = [1, 1, 1]} : vector<18x18x32xf32> to vector<16x16x32xf32>
    %185 = vector.extract_strided_slice %183 {offsets = [0, 1, 0], sizes = [16, 16, 32], strides = [1, 1, 1]} : vector<18x18x32xf32> to vector<16x16x32xf32>
    %186 = vector.extract_strided_slice %183 {offsets = [0, 2, 0], sizes = [16, 16, 32], strides = [1, 1, 1]} : vector<18x18x32xf32> to vector<16x16x32xf32>
    %187 = vector.extract_strided_slice %183 {offsets = [1, 0, 0], sizes = [16, 16, 32], strides = [1, 1, 1]} : vector<18x18x32xf32> to vector<16x16x32xf32>
    %188 = vector.extract_strided_slice %183 {offsets = [1, 1, 0], sizes = [16, 16, 32], strides = [1, 1, 1]} : vector<18x18x32xf32> to vector<16x16x32xf32>
    %189 = vector.extract_strided_slice %183 {offsets = [1, 2, 0], sizes = [16, 16, 32], strides = [1, 1, 1]} : vector<18x18x32xf32> to vector<16x16x32xf32>
    %190 = vector.extract_strided_slice %183 {offsets = [2, 0, 0], sizes = [16, 16, 32], strides = [1, 1, 1]} : vector<18x18x32xf32> to vector<16x16x32xf32>
    %191 = vector.extract_strided_slice %183 {offsets = [2, 1, 0], sizes = [16, 16, 32], strides = [1, 1, 1]} : vector<18x18x32xf32> to vector<16x16x32xf32>
    %192 = vector.extract_strided_slice %183 {offsets = [2, 2, 0], sizes = [16, 16, 32], strides = [1, 1, 1]} : vector<18x18x32xf32> to vector<16x16x32xf32>
    %193 = tpu.concatenate %184, %185, %186, %187, %188, %189, %190, %191, %192 in 2 : vector<16x16x32xf32>, vector<16x16x32xf32>, vector<16x16x32xf32>, vector<16x16x32xf32>, vector<16x16x32xf32>, vector<16x16x32xf32>, vector<16x16x32xf32>, vector<16x16x32xf32>, vector<16x16x32xf32> -> vector<16x16x288xf32>
    %194 = vector.shape_cast %193 : vector<16x16x288xf32> to vector<256x288xf32>
    %195 = arith.truncf %194 : vector<256x288xf32> to vector<256x288xbf16>
    %c0_58 = arith.constant 0 : index
    %c0_59 = arith.constant 0 : index
    %196 = vector.load %arg16[%c0_58, %c0_59] : memref<288x1xbf16, #tpu.memory_space<vmem>>, vector<288x1xbf16>
    %cst_60 = arith.constant dense<0.000000e+00> : vector<256x1xf32>
    %197 = tpu.matmul %195, %196, %cst_60 {dimension_numbers = #tpu.dot_dimension_numbers<[1], [0], [0], [1], [0, 0, 1, 1], [], []>} : vector<256x288xbf16>, vector<288x1xbf16>, vector<256x1xf32> -> vector<256x1xf32>
    %198 = vector.shape_cast %197 : vector<256x1xf32> to vector<1x256xf32>
    %c0_61 = arith.constant 0 : index
    %c0_62 = arith.constant 0 : index
    %199 = vector.load %arg17[%c0_61, %c0_62] : memref<1x1xf32, #tpu.memory_space<vmem>>, vector<1x1xf32>
    %200 = vector.broadcast %199 : vector<1x1xf32> to vector<1x256xf32>
    %201 = arith.addf %198, %200 : vector<1x256xf32>
    %202 = arith.negf %201 : vector<1x256xf32>
    %203 = math.exp %202 : vector<1x256xf32>
    %cst_63 = arith.constant 1.000000e+00 : f32
    %204 = vector.broadcast %cst_63 : f32 to vector<1x256xf32>
    %205 = arith.addf %204, %203 : vector<1x256xf32>
    %206 = arith.divf %204, %205 : vector<1x256xf32>
    %c0_64 = arith.constant 0 : index
    %c0_65 = arith.constant 0 : index
    %c0_66 = arith.constant 0 : index
    %207 = vector.load %arg18[%c0_64, %c0_65, %c0_66] : memref<1x1x256xf32, #tpu.memory_space<vmem>>, vector<1x1x256xf32>
    %208 = vector.shape_cast %207 : vector<1x1x256xf32> to vector<1x256xf32>
    %209 = vector.shape_cast %206 : vector<1x256xf32> to vector<1x1x256xf32>
    tpu.vector_store %arg18[%c0_64, %c0_65, %c0_66], %209 {strides = array<i32>} : memref<1x1x256xf32, #tpu.memory_space<vmem>>, vector<1x1x256xf32>,
    return
  }
  func.func @transform_0(%arg0: i32) -> (i32, i32, i32, i32) {
    %c0_i32 = arith.constant 0 : i32
    %c0_i32_0 = arith.constant 0 : i32
    %c0_i32_1 = arith.constant 0 : i32
    %c0_i32_2 = arith.constant 0 : i32
    return %arg0, %c0_i32, %c0_i32_0, %c0_i32_1 : i32, i32, i32, i32
  }
  func.func @transform_1(%arg0: i32) -> (i32, i32) {
    %c0_i32 = arith.constant 0 : i32
    %c0_i32_0 = arith.constant 0 : i32
    %c0_i32_1 = arith.constant 0 : i32
    return %c0_i32, %c0_i32_0 : i32, i32
  }
  func.func @transform_2(%arg0: i32) -> (i32, i32) {
    %c0_i32 = arith.constant 0 : i32
    %c0_i32_0 = arith.constant 0 : i32
    %c0_i32_1 = arith.constant 0 : i32
    return %c0_i32, %c0_i32_0 : i32, i32
  }
  func.func @transform_3(%arg0: i32) -> (i32, i32) {
    %c0_i32 = arith.constant 0 : i32
    %c0_i32_0 = arith.constant 0 : i32
    %c0_i32_1 = arith.constant 0 : i32
    return %c0_i32, %c0_i32_0 : i32, i32
  }
  func.func @transform_4(%arg0: i32) -> (i32, i32) {
    %c0_i32 = arith.constant 0 : i32
    %c0_i32_0 = arith.constant 0 : i32
    %c0_i32_1 = arith.constant 0 : i32
    return %c0_i32, %c0_i32_0 : i32, i32
  }
  func.func @transform_5(%arg0: i32) -> (i32, i32) {
    %c0_i32 = arith.constant 0 : i32
    %c0_i32_0 = arith.constant 0 : i32
    %c0_i32_1 = arith.constant 0 : i32
    return %c0_i32, %c0_i32_0 : i32, i32
  }
  func.func @transform_6(%arg0: i32) -> (i32, i32) {
    %c0_i32 = arith.constant 0 : i32
    %c0_i32_0 = arith.constant 0 : i32
    %c0_i32_1 = arith.constant 0 : i32
    return %c0_i32, %c0_i32_0 : i32, i32
  }
  func.func @transform_7(%arg0: i32) -> (i32, i32) {
    %c0_i32 = arith.constant 0 : i32
    %c0_i32_0 = arith.constant 0 : i32
    %c0_i32_1 = arith.constant 0 : i32
    return %c0_i32, %c0_i32_0 : i32, i32
  }
  func.func @transform_8(%arg0: i32) -> (i32, i32) {
    %c0_i32 = arith.constant 0 : i32
    %c0_i32_0 = arith.constant 0 : i32
    %c0_i32_1 = arith.constant 0 : i32
    return %c0_i32, %c0_i32_0 : i32, i32
  }
  func.func @transform_9(%arg0: i32) -> (i32, i32) {
    %c0_i32 = arith.constant 0 : i32
    %c0_i32_0 = arith.constant 0 : i32
    %c0_i32_1 = arith.constant 0 : i32
    return %c0_i32, %c0_i32_0 : i32, i32
  }
  func.func @transform_10(%arg0: i32) -> (i32, i32) {
    %c0_i32 = arith.constant 0 : i32
    %c0_i32_0 = arith.constant 0 : i32
    %c0_i32_1 = arith.constant 0 : i32
    return %c0_i32, %c0_i32_0 : i32, i32
  }
  func.func @transform_11(%arg0: i32) -> (i32, i32) {
    %c0_i32 = arith.constant 0 : i32
    %c0_i32_0 = arith.constant 0 : i32
    %c0_i32_1 = arith.constant 0 : i32
    return %c0_i32, %c0_i32_0 : i32, i32
  }
  func.func @transform_12(%arg0: i32) -> (i32, i32) {
    %c0_i32 = arith.constant 0 : i32
    %c0_i32_0 = arith.constant 0 : i32
    %c0_i32_1 = arith.constant 0 : i32
    return %c0_i32, %c0_i32_0 : i32, i32
  }
  func.func @transform_13(%arg0: i32) -> (i32, i32) {
    %c0_i32 = arith.constant 0 : i32
    %c0_i32_0 = arith.constant 0 : i32
    %c0_i32_1 = arith.constant 0 : i32
    return %c0_i32, %c0_i32_0 : i32, i32
  }
  func.func @transform_14(%arg0: i32) -> (i32, i32) {
    %c0_i32 = arith.constant 0 : i32
    %c0_i32_0 = arith.constant 0 : i32
    %c0_i32_1 = arith.constant 0 : i32
    return %c0_i32, %c0_i32_0 : i32, i32
  }
  func.func @transform_15(%arg0: i32) -> (i32, i32) {
    %c0_i32 = arith.constant 0 : i32
    %c0_i32_0 = arith.constant 0 : i32
    %c0_i32_1 = arith.constant 0 : i32
    return %c0_i32, %c0_i32_0 : i32, i32
  }
  func.func @transform_16(%arg0: i32) -> (i32, i32) {
    %c0_i32 = arith.constant 0 : i32
    %c0_i32_0 = arith.constant 0 : i32
    %c0_i32_1 = arith.constant 0 : i32
    return %c0_i32, %c0_i32_0 : i32, i32
  }
  func.func @transform_17(%arg0: i32) -> (i32, i32, i32) {
    %c0_i32 = arith.constant 0 : i32
    %c0_i32_0 = arith.constant 0 : i32
    %c0_i32_1 = arith.constant 0 : i32
    return %arg0, %c0_i32, %c0_i32_0 : i32, i32, i32
  }
}

</mosaic_0001>

<llo_original>
// kernel: tpu_custom_call.1
$region0: #{tpu_custom_call.1}
  #allocation0 [shape = 'u32[]', space=smem, size = 0x4, offset = 0x4, fixed_abs, tag = 'smem constant byte address 0x4 - core index']
  #allocation1 [shape = 'u32[72,128]{1,0:T(1,128)}', space=vmem, size = 0x9000, scoped, tag = 'internal scratch']
  #allocation2 [shape = 'f32[1,1]{1,0:T(1,128)S(1)}', space=vmem, size = 0x200, scoped, tag = 'scoped memory for tpu_custom_call.1']
  %s0 = inlined_call_operand.vmem [shape: f32[2,16,16,4], index: 0, kind: input, shape index: {}]
  %s1 = inlined_call_operand.vmem [shape: bf16[36,32], index: 1, kind: input, shape index: {}]
  %s2 = inlined_call_operand.vmem [shape: f32[1,32], index: 2, kind: input, shape index: {}]
  %s3 = inlined_call_operand.vmem [shape: bf16[288,64], index: 3, kind: input, shape index: {}]
  %s4 = inlined_call_operand.vmem [shape: f32[1,64], index: 4, kind: input, shape index: {}]
  %s5 = inlined_call_operand.vmem [shape: bf16[576,128], index: 5, kind: input, shape index: {}]
  %s6 = inlined_call_operand.vmem [shape: f32[1,128], index: 6, kind: input, shape index: {}]
  %s7 = inlined_call_operand.vmem [shape: bf16[128,256], index: 7, kind: input, shape index: {}]
  %s8 = inlined_call_operand.vmem [shape: f32[1,256], index: 8, kind: input, shape index: {}]
  %s9 = inlined_call_operand.vmem [shape: bf16[1152,64], index: 9, kind: input, shape index: {}]
  %s10 = inlined_call_operand.vmem [shape: f32[1,64], index: 10, kind: input, shape index: {}]
  %s11 = inlined_call_operand.vmem [shape: bf16[64,128], index: 11, kind: input, shape index: {}]
  %s12 = inlined_call_operand.vmem [shape: f32[1,128], index: 12, kind: input, shape index: {}]
  %s13 = inlined_call_operand.vmem [shape: bf16[576,32], index: 13, kind: input, shape index: {}]
  %s14 = inlined_call_operand.vmem [shape: f32[1,32], index: 14, kind: input, shape index: {}]
  %s15 = inlined_call_operand.vmem [shape: bf16[288,1], index: 15, kind: input, shape index: {}]
  %s16 = inlined_call_operand.<no memory space> [shape: f32[1,1], index: 16, kind: input, shape index: {}]
  %s17 = inlined_call_operand.hbm [shape: f32[2,1,256], index: 17, kind: output, shape index: {}]
  %s18 = sld [smem:[#allocation0]]
  $region101: #{tpu_custom_call.1} parent=0
    _
  %s20 = ssub.s32 1, %s18
  %s21 = scalar_select 0, %s20, %s18
  %v22 = vstv %s16
  %23 = vst [vmem:[#allocation2] sm:$0x1] %v22
  $region1: #{tpu_custom_call.1} parent=0
    #allocation3 [shape = 'u8[2048]{0}', space=vmem, size = 0x800, scoped, tag = 'output window, operand 0']
    #allocation4 [shape = 's32[2]{0}', space=sflag, size = 0x8, scoped, tag = 'scoped memory for tpu_custom_call.1']
    %24 = vsyncpa [#allocation4], 0
    %s25 = scalar_lea.sflag [#allocation4], 1
    %26 = vsyncpa %s25, 0
    loop: start=0, step=1, limit=4
    $region2: #{tpu_custom_call.1} parent=1 // loop_pre_header
      _
    $region3: #{tpu_custom_call.1} parent=1 // loop_header
      %s28 = sphi 0, %s32
      %p29 = scmp.ge.s32.totalorder %s28, 4
      %s38 = sphi 0, %s40
      %s41 = sphi 0, %s38
      %s42 = sphi 0, %s41
      %s58 = sphi 0, %s42
      %s62 = sphi 0, %s62
      %s64 = sphi 0, %s62
      %s65 = sphi 0, %s64
      %s79 = sphi 0, %s65
      %s83 = sphi 0, %s83
      %s85 = sphi 0, %s83
      %s86 = sphi 0, %s85
      %s100 = sphi 0, %s86
      %s104 = sphi 0, %s104
      %s106 = sphi 0, %s104
      %s107 = sphi 0, %s106
      %s121 = sphi 0, %s107
      %s125 = sphi 0, %s125
      %s127 = sphi 0, %s125
      %s128 = sphi 0, %s127
      %s142 = sphi 0, %s128
      %s146 = sphi 0, %s146
      %s148 = sphi 0, %s146
      %s149 = sphi 0, %s148
      %s163 = sphi 0, %s149
      %s167 = sphi 0, %s167
      %s169 = sphi 0, %s167
      %s170 = sphi 0, %s169
      %s184 = sphi 0, %s170
      %s188 = sphi 0, %s188
      %s190 = sphi 0, %s188
      %s191 = sphi 0, %s190
      %s205 = sphi 0, %s191
      %s209 = sphi 0, %s209
      %s211 = sphi 0, %s209
      %s212 = sphi 0, %s211
      %s226 = sphi 0, %s212
      %s230 = sphi 0, %s230
      %s232 = sphi 0, %s230
      %s233 = sphi 0, %s232
      %s247 = sphi 0, %s233
      %s251 = sphi 0, %s251
      %s253 = sphi 0, %s251
      %s254 = sphi 0, %s253
      %s268 = sphi 0, %s254
      %s272 = sphi 0, %s272
      %s274 = sphi 0, %s272
      %s275 = sphi 0, %s274
      %s289 = sphi 0, %s275
      %s293 = sphi 0, %s293
      %s295 = sphi 0, %s293
      %s296 = sphi 0, %s295
      %s310 = sphi 0, %s296
      %s314 = sphi 0, %s314
      %s316 = sphi 0, %s314
      %s317 = sphi 0, %s316
      %s331 = sphi 0, %s317
      %s335 = sphi 0, %s335
      %s337 = sphi 0, %s335
      %s338 = sphi 0, %s337
      %s352 = sphi 0, %s338
      %s356 = sphi 0, %s356
      %s358 = sphi 0, %s356
      %s359 = sphi 0, %s358
      %s373 = sphi 0, %s359
      %s377 = sphi 0, %s377
      %s379 = sphi 0, %s377
      %s380 = sphi 0, %s379
      %s394 = sphi 0, %s380
      %s400 = sphi 0, %s402
      %s403 = sphi 0, %s400
      %s404 = sphi 0, %s403
      %s420 = sphi 0, %s404
    $region4: #{tpu_custom_call.1} parent=1 // loop_header_branch
      %31 = sbr.rel (%p29) target = $region8
    $region5: #{tpu_custom_call.1} parent=1 // loop_body
      %s33 = ssub.s32 %s28, 1
      %s34 = ssub.s32 %s28, 2
      %s35 = sadd.s32 %s28, 1
      %s36 = ssub.s32 %s28, %s35
      %p37 = scmp.eq.s32.totalorder %s36, 0
      %s39 = sadd.s32 %s38, 1
      %s40 = scalar_select %p37, %s38, %s39
      %p43 = pneg %p37
      %p44 = scmp.eq.s32.totalorder %s28, 1
      %p45 = por %p43, %p44
      %p46 = scmp.ne.s32.totalorder %s38, %s41
      %p47 = scmp.eq.s32.totalorder %s28, 0
      %p48 = por %p46, %p47
      %p49 = scmp.ne.s32.totalorder %s38, %s41
      %p50 = scmp.eq.s32.totalorder %s33, 1
      %p51 = por %p49, %p50
      %p52 = scmp.ne.s32.totalorder %s41, %s42
      %p53 = scmp.eq.s32.totalorder %s33, 0
      %p54 = por %p52, %p53
      %p55 = scmp.ne.s32.totalorder %s41, %s42
      %p56 = scmp.eq.s32.totalorder %s34, 1
      %p57 = por %p55, %p56
      %p59 = scmp.ne.s32.totalorder %s42, %s58
      %p60 = scmp.eq.s32.totalorder %s34, 0
      %p61 = por %p59, %p60
      %s63 = sadd.s32 %s62, 1
      %p66 = scmp.eq.s32.totalorder %s28, 1
      %p67 = scmp.ne.s32.totalorder %s62, %s64
      %p68 = scmp.eq.s32.totalorder %s28, 0
      %p69 = por %p67, %p68
      %p70 = scmp.ne.s32.totalorder %s62, %s64
      %p71 = scmp.eq.s32.totalorder %s33, 1
      %p72 = por %p70, %p71
      %p73 = scmp.ne.s32.totalorder %s64, %s65
      %p74 = scmp.eq.s32.totalorder %s33, 0
      %p75 = por %p73, %p74
      %p76 = scmp.ne.s32.totalorder %s64, %s65
      %p77 = scmp.eq.s32.totalorder %s34, 1
      %p78 = por %p76, %p77
      %p80 = scmp.ne.s32.totalorder %s65, %s79
      %p81 = scmp.eq.s32.totalorder %s34, 0
      %p82 = por %p80, %p81
      %s84 = sadd.s32 %s83, 1
      %p87 = scmp.eq.s32.totalorder %s28, 1
      %p88 = scmp.ne.s32.totalorder %s83, %s85
      %p89 = scmp.eq.s32.totalorder %s28, 0
      %p90 = por %p88, %p89
      %p91 = scmp.ne.s32.totalorder %s83, %s85
      %p92 = scmp.eq.s32.totalorder %s33, 1
      %p93 = por %p91, %p92
      %p94 = scmp.ne.s32.totalorder %s85, %s86
      %p95 = scmp.eq.s32.totalorder %s33, 0
      %p96 = por %p94, %p95
      %p97 = scmp.ne.s32.totalorder %s85, %s86
      %p98 = scmp.eq.s32.totalorder %s34, 1
      %p99 = por %p97, %p98
      %p101 = scmp.ne.s32.totalorder %s86, %s100
      %p102 = scmp.eq.s32.totalorder %s34, 0
      %p103 = por %p101, %p102
      %s105 = sadd.s32 %s104, 1
      %p108 = scmp.eq.s32.totalorder %s28, 1
      %p109 = scmp.ne.s32.totalorder %s104, %s106
      %p110 = scmp.eq.s32.totalorder %s28, 0
      %p111 = por %p109, %p110
      %p112 = scmp.ne.s32.totalorder %s104, %s106
      %p113 = scmp.eq.s32.totalorder %s33, 1
      %p114 = por %p112, %p113
      %p115 = scmp.ne.s32.totalorder %s106, %s107
      %p116 = scmp.eq.s32.totalorder %s33, 0
      %p117 = por %p115, %p116
      %p118 = scmp.ne.s32.totalorder %s106, %s107
      %p119 = scmp.eq.s32.totalorder %s34, 1
      %p120 = por %p118, %p119
      %p122 = scmp.ne.s32.totalorder %s107, %s121
      %p123 = scmp.eq.s32.totalorder %s34, 0
      %p124 = por %p122, %p123
      %s126 = sadd.s32 %s125, 1
      %p129 = scmp.eq.s32.totalorder %s28, 1
      %p130 = scmp.ne.s32.totalorder %s125, %s127
      %p131 = scmp.eq.s32.totalorder %s28, 0
      %p132 = por %p130, %p131
      %p133 = scmp.ne.s32.totalorder %s125, %s127
      %p134 = scmp.eq.s32.totalorder %s33, 1
      %p135 = por %p133, %p134
      %p136 = scmp.ne.s32.totalorder %s127, %s128
      %p137 = scmp.eq.s32.totalorder %s33, 0
      %p138 = por %p136, %p137
      %p139 = scmp.ne.s32.totalorder %s127, %s128
      %p140 = scmp.eq.s32.totalorder %s34, 1
      %p141 = por %p139, %p140
      %p143 = scmp.ne.s32.totalorder %s128, %s142
      %p144 = scmp.eq.s32.totalorder %s34, 0
      %p145 = por %p143, %p144
      %s147 = sadd.s32 %s146, 1
      %p150 = scmp.eq.s32.totalorder %s28, 1
      %p151 = scmp.ne.s32.totalorder %s146, %s148
      %p152 = scmp.eq.s32.totalorder %s28, 0
      %p153 = por %p151, %p152
      %p154 = scmp.ne.s32.totalorder %s146, %s148
      %p155 = scmp.eq.s32.totalorder %s33, 1
      %p156 = por %p154, %p155
      %p157 = scmp.ne.s32.totalorder %s148, %s149
      %p158 = scmp.eq.s32.totalorder %s33, 0
      %p159 = por %p157, %p158
      %p160 = scmp.ne.s32.totalorder %s148, %s149
      %p161 = scmp.eq.s32.totalorder %s34, 1
      %p162 = por %p160, %p161
      %p164 = scmp.ne.s32.totalorder %s149, %s163
      %p165 = scmp.eq.s32.totalorder %s34, 0
      %p166 = por %p164, %p165
      %s168 = sadd.s32 %s167, 1
      %p171 = scmp.eq.s32.totalorder %s28, 1
      %p172 = scmp.ne.s32.totalorder %s167, %s169
      %p173 = scmp.eq.s32.totalorder %s28, 0
      %p174 = por %p172, %p173
      %p175 = scmp.ne.s32.totalorder %s167, %s169
      %p176 = scmp.eq.s32.totalorder %s33, 1
      %p177 = por %p175, %p176
      %p178 = scmp.ne.s32.totalorder %s169, %s170
      %p179 = scmp.eq.s32.totalorder %s33, 0
      %p180 = por %p178, %p179
      %p181 = scmp.ne.s32.totalorder %s169, %s170
      %p182 = scmp.eq.s32.totalorder %s34, 1
      %p183 = por %p181, %p182
      %p185 = scmp.ne.s32.totalorder %s170, %s184
      %p186 = scmp.eq.s32.totalorder %s34, 0
      %p187 = por %p185, %p186
      %s189 = sadd.s32 %s188, 1
      %p192 = scmp.eq.s32.totalorder %s28, 1
      %p193 = scmp.ne.s32.totalorder %s188, %s190
      %p194 = scmp.eq.s32.totalorder %s28, 0
      %p195 = por %p193, %p194
      %p196 = scmp.ne.s32.totalorder %s188, %s190
      %p197 = scmp.eq.s32.totalorder %s33, 1
      %p198 = por %p196, %p197
      %p199 = scmp.ne.s32.totalorder %s190, %s191
      %p200 = scmp.eq.s32.totalorder %s33, 0
      %p201 = por %p199, %p200
      %p202 = scmp.ne.s32.totalorder %s190, %s191
      %p203 = scmp.eq.s32.totalorder %s34, 1
      %p204 = por %p202, %p203
      %p206 = scmp.ne.s32.totalorder %s191, %s205
      %p207 = scmp.eq.s32.totalorder %s34, 0
      %p208 = por %p206, %p207
      %s210 = sadd.s32 %s209, 1
      %p213 = scmp.eq.s32.totalorder %s28, 1
      %p214 = scmp.ne.s32.totalorder %s209, %s211
      %p215 = scmp.eq.s32.totalorder %s28, 0
      %p216 = por %p214, %p215
      %p217 = scmp.ne.s32.totalorder %s209, %s211
      %p218 = scmp.eq.s32.totalorder %s33, 1
      %p219 = por %p217, %p218
      %p220 = scmp.ne.s32.totalorder %s211, %s212
      %p221 = scmp.eq.s32.totalorder %s33, 0
      %p222 = por %p220, %p221
      %p223 = scmp.ne.s32.totalorder %s211, %s212
      %p224 = scmp.eq.s32.totalorder %s34, 1
      %p225 = por %p223, %p224
      %p227 = scmp.ne.s32.totalorder %s212, %s226
      %p228 = scmp.eq.s32.totalorder %s34, 0
      %p229 = por %p227, %p228
      %s231 = sadd.s32 %s230, 1
      %p234 = scmp.eq.s32.totalorder %s28, 1
      %p235 = scmp.ne.s32.totalorder %s230, %s232
      %p236 = scmp.eq.s32.totalorder %s28, 0
      %p237 = por %p235, %p236
      %p238 = scmp.ne.s32.totalorder %s230, %s232
      %p239 = scmp.eq.s32.totalorder %s33, 1
      %p240 = por %p238, %p239
      %p241 = scmp.ne.s32.totalorder %s232, %s233
      %p242 = scmp.eq.s32.totalorder %s33, 0
      %p243 = por %p241, %p242
      %p244 = scmp.ne.s32.totalorder %s232, %s233
      %p245 = scmp.eq.s32.totalorder %s34, 1
      %p246 = por %p244, %p245
      %p248 = scmp.ne.s32.totalorder %s233, %s247
      %p249 = scmp.eq.s32.totalorder %s34, 0
      %p250 = por %p248, %p249
      %s252 = sadd.s32 %s251, 1
      %p255 = scmp.eq.s32.totalorder %s28, 1
      %p256 = scmp.ne.s32.totalorder %s251, %s253
      %p257 = scmp.eq.s32.totalorder %s28, 0
      %p258 = por %p256, %p257
      %p259 = scmp.ne.s32.totalorder %s251, %s253
      %p260 = scmp.eq.s32.totalorder %s33, 1
      %p261 = por %p259, %p260
      %p262 = scmp.ne.s32.totalorder %s253, %s254
      %p263 = scmp.eq.s32.totalorder %s33, 0
      %p264 = por %p262, %p263
      %p265 = scmp.ne.s32.totalorder %s253, %s254
      %p266 = scmp.eq.s32.totalorder %s34, 1
      %p267 = por %p265, %p266
      %p269 = scmp.ne.s32.totalorder %s254, %s268
      %p270 = scmp.eq.s32.totalorder %s34, 0
      %p271 = por %p269, %p270
      %s273 = sadd.s32 %s272, 1
      %p276 = scmp.eq.s32.totalorder %s28, 1
      %p277 = scmp.ne.s32.totalorder %s272, %s274
      %p278 = scmp.eq.s32.totalorder %s28, 0
      %p279 = por %p277, %p278
      %p280 = scmp.ne.s32.totalorder %s272, %s274
      %p281 = scmp.eq.s32.totalorder %s33, 1
      %p282 = por %p280, %p281
      %p283 = scmp.ne.s32.totalorder %s274, %s275
      %p284 = scmp.eq.s32.totalorder %s33, 0
      %p285 = por %p283, %p284
      %p286 = scmp.ne.s32.totalorder %s274, %s275
      %p287 = scmp.eq.s32.totalorder %s34, 1
      %p288 = por %p286, %p287
      %p290 = scmp.ne.s32.totalorder %s275, %s289
      %p291 = scmp.eq.s32.totalorder %s34, 0
      %p292 = por %p290, %p291
      %s294 = sadd.s32 %s293, 1
      %p297 = scmp.eq.s32.totalorder %s28, 1
      %p298 = scmp.ne.s32.totalorder %s293, %s295
      %p299 = scmp.eq.s32.totalorder %s28, 0
      %p300 = por %p298, %p299
      %p301 = scmp.ne.s32.totalorder %s293, %s295
      %p302 = scmp.eq.s32.totalorder %s33, 1
      %p303 = por %p301, %p302
      %p304 = scmp.ne.s32.totalorder %s295, %s296
      %p305 = scmp.eq.s32.totalorder %s33, 0
      %p306 = por %p304, %p305
      %p307 = scmp.ne.s32.totalorder %s295, %s296
      %p308 = scmp.eq.s32.totalorder %s34, 1
      %p309 = por %p307, %p308
      %p311 = scmp.ne.s32.totalorder %s296, %s310
      %p312 = scmp.eq.s32.totalorder %s34, 0
      %p313 = por %p311, %p312
      %s315 = sadd.s32 %s314, 1
      %p318 = scmp.eq.s32.totalorder %s28, 1
      %p319 = scmp.ne.s32.totalorder %s314, %s316
      %p320 = scmp.eq.s32.totalorder %s28, 0
      %p321 = por %p319, %p320
      %p322 = scmp.ne.s32.totalorder %s314, %s316
      %p323 = scmp.eq.s32.totalorder %s33, 1
      %p324 = por %p322, %p323
      %p325 = scmp.ne.s32.totalorder %s316, %s317
      %p326 = scmp.eq.s32.totalorder %s33, 0
      %p327 = por %p325, %p326
      %p328 = scmp.ne.s32.totalorder %s316, %s317
      %p329 = scmp.eq.s32.totalorder %s34, 1
      %p330 = por %p328, %p329
      %p332 = scmp.ne.s32.totalorder %s317, %s331
      %p333 = scmp.eq.s32.totalorder %s34, 0
      %p334 = por %p332, %p333
      %s336 = sadd.s32 %s335, 1
      %p339 = scmp.eq.s32.totalorder %s28, 1
      %p340 = scmp.ne.s32.totalorder %s335, %s337
      %p341 = scmp.eq.s32.totalorder %s28, 0
      %p342 = por %p340, %p341
      %p343 = scmp.ne.s32.totalorder %s335, %s337
      %p344 = scmp.eq.s32.totalorder %s33, 1
      %p345 = por %p343, %p344
      %p346 = scmp.ne.s32.totalorder %s337, %s338
      %p347 = scmp.eq.s32.totalorder %s33, 0
      %p348 = por %p346, %p347
      %p349 = scmp.ne.s32.totalorder %s337, %s338
      %p350 = scmp.eq.s32.totalorder %s34, 1
      %p351 = por %p349, %p350
      %p353 = scmp.ne.s32.totalorder %s338, %s352
      %p354 = scmp.eq.s32.totalorder %s34, 0
      %p355 = por %p353, %p354
      %s357 = sadd.s32 %s356, 1
      %p360 = scmp.eq.s32.totalorder %s28, 1
      %p361 = scmp.ne.s32.totalorder %s356, %s358
      %p362 = scmp.eq.s32.totalorder %s28, 0
      %p363 = por %p361, %p362
      %p364 = scmp.ne.s32.totalorder %s356, %s358
      %p365 = scmp.eq.s32.totalorder %s33, 1
      %p366 = por %p364, %p365
      %p367 = scmp.ne.s32.totalorder %s358, %s359
      %p368 = scmp.eq.s32.totalorder %s33, 0
      %p369 = por %p367, %p368
      %p370 = scmp.ne.s32.totalorder %s358, %s359
      %p371 = scmp.eq.s32.totalorder %s34, 1
      %p372 = por %p370, %p371
      %p374 = scmp.ne.s32.totalorder %s359, %s373
      %p375 = scmp.eq.s32.totalorder %s34, 0
      %p376 = por %p374, %p375
      %s378 = sadd.s32 %s377, 1
      %p381 = scmp.eq.s32.totalorder %s28, 1
      %p382 = scmp.ne.s32.totalorder %s377, %s379
      %p383 = scmp.eq.s32.totalorder %s28, 0
      %p384 = por %p382, %p383
      %p385 = scmp.ne.s32.totalorder %s377, %s379
      %p386 = scmp.eq.s32.totalorder %s33, 1
      %p387 = por %p385, %p386
      %p388 = scmp.ne.s32.totalorder %s379, %s380
      %p389 = scmp.eq.s32.totalorder %s33, 0
      %p390 = por %p388, %p389
      %p391 = scmp.ne.s32.totalorder %s379, %s380
      %p392 = scmp.eq.s32.totalorder %s34, 1
      %p393 = por %p391, %p392
      %p395 = scmp.ne.s32.totalorder %s380, %s394
      %p396 = scmp.eq.s32.totalorder %s34, 0
      %p397 = por %p395, %p396
      %s398 = ssub.s32 %s28, %s35
      %p399 = scmp.eq.s32.totalorder %s398, 0
      %s401 = sadd.s32 %s400, 1
      %s402 = scalar_select %p399, %s400, %s401
      %p405 = pneg %p399
      %p406 = scmp.eq.s32.totalorder %s28, 1
      %p407 = por %p405, %p406
      %p408 = scmp.ne.s32.totalorder %s400, %s403
      %p409 = scmp.eq.s32.totalorder %s28, 0
      %p410 = por %p408, %p409
      %p411 = scmp.ne.s32.totalorder %s400, %s403
      %p412 = scmp.eq.s32.totalorder %s33, 1
      %p413 = por %p411, %p412
      %p414 = scmp.ne.s32.totalorder %s403, %s404
      %p415 = scmp.eq.s32.totalorder %s33, 0
      %p416 = por %p414, %p415
      %p417 = scmp.ne.s32.totalorder %s403, %s404
      %p418 = scmp.eq.s32.totalorder %s34, 1
      %p419 = por %p417, %p418
      %p421 = scmp.ne.s32.totalorder %s404, %s420
      %p422 = scmp.eq.s32.totalorder %s34, 0
      %p423 = por %p421, %p422
      %p424 = scmp.le.s32.totalorder 1, %s28
      %p425 = scmp.lt.s32.totalorder %s28, 3
      %p426 = pnand %p424, %p425
      %p427 = pneg %p426
      // Predicated region
      $region9: #{tpu_custom_call.1} parent=5 // pred_check
        _
      $region10: #{tpu_custom_call.1} parent=5 // pred_check_branch
        %429 = sbr.rel (%p426) target = $region12
      $region11: #{tpu_custom_call.1} parent=5 // pred_region
        %s430 = ssub.s32 %s28, 1
        // Predicated region
        $region13: #{tpu_custom_call.1} parent=11 // pred_check
          %p431 = pneg %p75
        $region14: #{tpu_custom_call.1} parent=11 // pred_check_branch
          %433 = sbr.rel (%p431) target = $region16
        $region15: #{tpu_custom_call.1} parent=11 // pred_region
          _
        $region16: #{tpu_custom_call.1} parent=11 // pred_fallthru
          _
        // Predicated region
        $region17: #{tpu_custom_call.1} parent=11 // pred_check
          %p434 = pneg %p96
        $region18: #{tpu_custom_call.1} parent=11 // pred_check_branch
          %436 = sbr.rel (%p434) target = $region20
        $region19: #{tpu_custom_call.1} parent=11 // pred_region
          _
        $region20: #{tpu_custom_call.1} parent=11 // pred_fallthru
          _
        // Predicated region
        $region21: #{tpu_custom_call.1} parent=11 // pred_check
          %p437 = pneg %p117
        $region22: #{tpu_custom_call.1} parent=11 // pred_check_branch
          %439 = sbr.rel (%p437) target = $region24
        $region23: #{tpu_custom_call.1} parent=11 // pred_region
          _
        $region24: #{tpu_custom_call.1} parent=11 // pred_fallthru
          _
        // Predicated region
        $region25: #{tpu_custom_call.1} parent=11 // pred_check
          %p440 = pneg %p138
        $region26: #{tpu_custom_call.1} parent=11 // pred_check_branch
          %442 = sbr.rel (%p440) target = $region28
        $region27: #{tpu_custom_call.1} parent=11 // pred_region
          _
        $region28: #{tpu_custom_call.1} parent=11 // pred_fallthru
          _
        // Predicated region
        $region29: #{tpu_custom_call.1} parent=11 // pred_check
          %p443 = pneg %p159
        $region30: #{tpu_custom_call.1} parent=11 // pred_check_branch
          %445 = sbr.rel (%p443) target = $region32
        $region31: #{tpu_custom_call.1} parent=11 // pred_region
          _
        $region32: #{tpu_custom_call.1} parent=11 // pred_fallthru
          _
        // Predicated region
        $region33: #{tpu_custom_call.1} parent=11 // pred_check
          %p446 = pneg %p180
        $region34: #{tpu_custom_call.1} parent=11 // pred_check_branch
          %448 = sbr.rel (%p446) target = $region36
        $region35: #{tpu_custom_call.1} parent=11 // pred_region
          _
        $region36: #{tpu_custom_call.1} parent=11 // pred_fallthru
          _
        // Predicated region
        $region37: #{tpu_custom_call.1} parent=11 // pred_check
          %p449 = pneg %p201
        $region38: #{tpu_custom_call.1} parent=11 // pred_check_branch
          %451 = sbr.rel (%p449) target = $region40
        $region39: #{tpu_custom_call.1} parent=11 // pred_region
          _
        $region40: #{tpu_custom_call.1} parent=11 // pred_fallthru
          _
        // Predicated region
        $region41: #{tpu_custom_call.1} parent=11 // pred_check
          %p452 = pneg %p222
        $region42: #{tpu_custom_call.1} parent=11 // pred_check_branch
          %454 = sbr.rel (%p452) target = $region44
        $region43: #{tpu_custom_call.1} parent=11 // pred_region
          _
        $region44: #{tpu_custom_call.1} parent=11 // pred_fallthru
          _
        // Predicated region
        $region45: #{tpu_custom_call.1} parent=11 // pred_check
          %p455 = pneg %p243
        $region46: #{tpu_custom_call.1} parent=11 // pred_check_branch
          %457 = sbr.rel (%p455) target = $region48
        $region47: #{tpu_custom_call.1} parent=11 // pred_region
          _
        $region48: #{tpu_custom_call.1} parent=11 // pred_fallthru
          _
        // Predicated region
        $region49: #{tpu_custom_call.1} parent=11 // pred_check
          %p458 = pneg %p264
        $region50: #{tpu_custom_call.1} parent=11 // pred_check_branch
          %460 = sbr.rel (%p458) target = $region52
        $region51: #{tpu_custom_call.1} parent=11 // pred_region
          _
        $region52: #{tpu_custom_call.1} parent=11 // pred_fallthru
          _
        // Predicated region
        $region53: #{tpu_custom_call.1} parent=11 // pred_check
          %p461 = pneg %p285
        $region54: #{tpu_custom_call.1} parent=11 // pred_check_branch
          %463 = sbr.rel (%p461) target = $region56
        $region55: #{tpu_custom_call.1} parent=11 // pred_region
          _
        $region56: #{tpu_custom_call.1} parent=11 // pred_fallthru
          _
        // Predicated region
        $region57: #{tpu_custom_call.1} parent=11 // pred_check
          %p464 = pneg %p306
        $region58: #{tpu_custom_call.1} parent=11 // pred_check_branch
          %466 = sbr.rel (%p464) target = $region60
        $region59: #{tpu_custom_call.1} parent=11 // pred_region
          _
        $region60: #{tpu_custom_call.1} parent=11 // pred_fallthru
          _
        // Predicated region
        $region61: #{tpu_custom_call.1} parent=11 // pred_check
          %p467 = pneg %p327
        $region62: #{tpu_custom_call.1} parent=11 // pred_check_branch
          %469 = sbr.rel (%p467) target = $region64
        $region63: #{tpu_custom_call.1} parent=11 // pred_region
          _
        $region64: #{tpu_custom_call.1} parent=11 // pred_fallthru
          _
        // Predicated region
        $region65: #{tpu_custom_call.1} parent=11 // pred_check
          %p470 = pneg %p348
        $region66: #{tpu_custom_call.1} parent=11 // pred_check_branch
          %472 = sbr.rel (%p470) target = $region68
        $region67: #{tpu_custom_call.1} parent=11 // pred_region
          _
        $region68: #{tpu_custom_call.1} parent=11 // pred_fallthru
          _
        // Predicated region
        $region69: #{tpu_custom_call.1} parent=11 // pred_check
          %p473 = pneg %p369
        $region70: #{tpu_custom_call.1} parent=11 // pred_check_branch
          %475 = sbr.rel (%p473) target = $region72
        $region71: #{tpu_custom_call.1} parent=11 // pred_region
          _
        $region72: #{tpu_custom_call.1} parent=11 // pred_fallthru
          _
        // Predicated region
        $region73: #{tpu_custom_call.1} parent=11 // pred_check
          %p476 = pneg %p390
        $region74: #{tpu_custom_call.1} parent=11 // pred_check_branch
          %478 = sbr.rel (%p476) target = $region76
        $region75: #{tpu_custom_call.1} parent=11 // pred_region
          _
        $region76: #{tpu_custom_call.1} parent=11 // pred_fallthru
          _
      $region12: #{tpu_custom_call.1} parent=5 // pred_fallthru
        _
      %p479 = scmp.lt.s32.totalorder %s28, 2
      // Predicated region
      $region77: #{tpu_custom_call.1} parent=5 // pred_check
        %p480 = pneg %p479
      $region78: #{tpu_custom_call.1} parent=5 // pred_check_branch
        %482 = sbr.rel (%p480) target = $region80
      $region79: #{tpu_custom_call.1} parent=5 // pred_region
        // Predicated region
        $region81: #{tpu_custom_call.1} parent=79 // pred_check
          %p483 = pneg %p48
        $region82: #{tpu_custom_call.1} parent=79 // pred_check_branch
          %485 = sbr.rel (%p483) target = $region84
        $region83: #{tpu_custom_call.1} parent=79 // pred_region
          %p486 = scmp.lt.s32.totalorder %s28, 1
          %s487 = scalar_select %p486, %s28, 1
          %s488 = smul.addr %s487, 32
          %s489 = smul.addr %s488, 8
          %s490 = scalar_lea.vmem %s0, %s489
        $region84: #{tpu_custom_call.1} parent=79 // pred_fallthru
          _
      $region80: #{tpu_custom_call.1} parent=5 // pred_fallthru
        _
      %p491 = scmp.le.s32.totalorder 1, %s28
      %p492 = scmp.lt.s32.totalorder %s28, 3
      %p493 = pnand %p491, %p492
      %p494 = pneg %p493
      // Predicated region
      $region85: #{tpu_custom_call.1} parent=5 // pred_check
        _
      $region86: #{tpu_custom_call.1} parent=5 // pred_check_branch
        %496 = sbr.rel (%p493) target = $region88
      $region87: #{tpu_custom_call.1} parent=5 // pred_region
        %s497 = ssub.s32 %s28, 1
        %p498 = scmp.lt.s32.totalorder %s33, 1
        %s499 = scalar_select %p498, %s33, 1
        %s500 = smul.addr %s499, 32
        %s501 = smul.addr %s500, 8
        %s502 = scalar_lea.vmem %s0, %s501
        %p503 = pneg %p54
        %p504 = pneg %p51
        %p505 = pneg %p75
        %p506 = pneg %p72
        %p507 = pneg %p96
        %p508 = pneg %p93
        %p509 = pneg %p117
        %p510 = pneg %p114
        %p511 = pneg %p138
        %p512 = pneg %p135
        %p513 = pneg %p159
        %p514 = pneg %p156
        %p515 = pneg %p180
        %p516 = pneg %p177
        %p517 = pneg %p201
        %p518 = pneg %p198
        %p519 = pneg %p222
        %p520 = pneg %p219
        %p521 = pneg %p243
        %p522 = pneg %p240
        %p523 = pneg %p264
        %p524 = pneg %p261
        %p525 = pneg %p285
        %p526 = pneg %p282
        %p527 = pneg %p306
        %p528 = pneg %p303
        %p529 = pneg %p327
        %p530 = pneg %p324
        %p531 = pneg %p348
        %p532 = pneg %p345
        %p533 = pneg %p369
        %p534 = pneg %p366
        %p535 = pneg %p390
        %p536 = pneg %p387
        %p537 = pneg %p416
        %p538 = pneg %p413
        %s539 = sand.u32 %s403, 1
        %s540 = scalar_lea.sflag [#allocation4], %s539
        %s541 = sand.u32 %s403, 1
        %s542 = smul.addr %s541, 2
        %s543 = scalar_lea.vmem [#allocation3], %s542
        %p544 = scmp.lt.s32.totalorder %s33, 1
        %s545 = scalar_select %p544, %s33, 1
        %s546 = smul.addr %s545, 32
        %s547 = smul.addr %s546, 8
        %s548 = scalar_lea.vmem %s0, %s547
        %v550 = vld [vmem:[%s548] sm:$0xff]
        %v551 = vld [vmem:[%s548 + $0x8] sm:$0xff]
        %v552 = vld [vmem:[%s548 + $0x10] sm:$0xff]
        %v553 = vld [vmem:[%s548 + $0x18] sm:$0xff]
        %v554 = vld [vmem:[%s548 + $0x20] sm:$0xff]
        %v555 = vld [vmem:[%s548 + $0x28] sm:$0xff]
        %v556 = vld [vmem:[%s548 + $0x30] sm:$0xff]
        %v557 = vld [vmem:[%s548 + $0x38] sm:$0xff]
        %v558 = vld [vmem:[%s548 + $0x40] sm:$0xff]
        %v559 = vld [vmem:[%s548 + $0x48] sm:$0xff]
        %v560 = vld [vmem:[%s548 + $0x50] sm:$0xff]
        %v561 = vld [vmem:[%s548 + $0x58] sm:$0xff]
        %v562 = vld [vmem:[%s548 + $0x60] sm:$0xff]
        %v563 = vld [vmem:[%s548 + $0x68] sm:$0xff]
        %v564 = vld [vmem:[%s548 + $0x70] sm:$0xff]
        %v565 = vld [vmem:[%s548 + $0x78] sm:$0xff]
        %v566 = vld [vmem:[%s548 + $0x80] sm:$0xff]
        %v567 = vld [vmem:[%s548 + $0x88] sm:$0xff]
        %v568 = vld [vmem:[%s548 + $0x90] sm:$0xff]
        %v569 = vld [vmem:[%s548 + $0x98] sm:$0xff]
        %v570 = vld [vmem:[%s548 + $0xa0] sm:$0xff]
        %v571 = vld [vmem:[%s548 + $0xa8] sm:$0xff]
        %v572 = vld [vmem:[%s548 + $0xb0] sm:$0xff]
        %v573 = vld [vmem:[%s548 + $0xb8] sm:$0xff]
        %v574 = vld [vmem:[%s548 + $0xc0] sm:$0xff]
        %v575 = vld [vmem:[%s548 + $0xc8] sm:$0xff]
        %v576 = vld [vmem:[%s548 + $0xd0] sm:$0xff]
        %v577 = vld [vmem:[%s548 + $0xd8] sm:$0xff]
        %v578 = vld [vmem:[%s548 + $0xe0] sm:$0xff]
        %v579 = vld [vmem:[%s548 + $0xe8] sm:$0xff]
        %v580 = vld [vmem:[%s548 + $0xf0] sm:$0xff]
        %v581 = vld [vmem:[%s548 + $0xf8] sm:$0xff]
        %vm614 = vcmask 1040384
        %v615 = vrot.slane %v550, 7
        %v616 = vrot.slane %v551, 7
        %v617 = vsel %vm614, %v615, %v616
        %v618 = vrot.slane %v552, 7
        %v619 = vrot.slane %v553, 7
        %v620 = vsel %vm614, %v618, %v619
        %v621 = vrot.slane %v554, 7
        %v622 = vrot.slane %v555, 7
        %v623 = vsel %vm614, %v621, %v622
        %v624 = vrot.slane %v556, 7
        %v625 = vrot.slane %v557, 7
        %v626 = vsel %vm614, %v624, %v625
        %v627 = vrot.slane %v558, 7
        %v628 = vrot.slane %v559, 7
        %v629 = vsel %vm614, %v627, %v628
        %v630 = vrot.slane %v560, 7
        %v631 = vrot.slane %v561, 7
        %v632 = vsel %vm614, %v630, %v631
        %v633 = vrot.slane %v562, 7
        %v634 = vrot.slane %v563, 7
        %v635 = vsel %vm614, %v633, %v634
        %v636 = vrot.slane %v564, 7
        %v637 = vrot.slane %v565, 7
        %v638 = vsel %vm614, %v636, %v637
        %v639 = vrot.slane %v566, 7
        %v640 = vrot.slane %v567, 7
        %v641 = vsel %vm614, %v639, %v640
        %v642 = vrot.slane %v568, 7
        %v643 = vrot.slane %v569, 7
        %v644 = vsel %vm614, %v642, %v643
        %v645 = vrot.slane %v570, 7
        %v646 = vrot.slane %v571, 7
        %v647 = vsel %vm614, %v645, %v646
        %v648 = vrot.slane %v572, 7
        %v649 = vrot.slane %v573, 7
        %v650 = vsel %vm614, %v648, %v649
        %v651 = vrot.slane %v574, 7
        %v652 = vrot.slane %v575, 7
        %v653 = vsel %vm614, %v651, %v652
        %v654 = vrot.slane %v576, 7
        %v655 = vrot.slane %v577, 7
        %v656 = vsel %vm614, %v654, %v655
        %v657 = vrot.slane %v578, 7
        %v658 = vrot.slane %v579, 7
        %v659 = vsel %vm614, %v657, %v658
        %v660 = vrot.slane %v580, 7
        %v661 = vrot.slane %v581, 7
        %v662 = vsel %vm614, %v660, %v661
        %v710 = vsel %vm614, 0.0, %v615
        %v711 = vsel %vm614, 0.0, %v618
        %v712 = vsel %vm614, 0.0, %v621
        %v713 = vsel %vm614, 0.0, %v624
        %v714 = vsel %vm614, 0.0, %v627
        %v715 = vsel %vm614, 0.0, %v630
        %v716 = vsel %vm614, 0.0, %v633
        %v717 = vsel %vm614, 0.0, %v636
        %v718 = vsel %vm614, 0.0, %v639
        %v719 = vsel %vm614, 0.0, %v642
        %v720 = vsel %vm614, 0.0, %v645
        %v721 = vsel %vm614, 0.0, %v648
        %v722 = vsel %vm614, 0.0, %v651
        %v723 = vsel %vm614, 0.0, %v654
        %v724 = vsel %vm614, 0.0, %v657
        %v725 = vsel %vm614, 0.0, %v660
        %v726 = vsel %vm614, %v616, 0.0
        %v727 = vsel %vm614, %v619, 0.0
        %v728 = vsel %vm614, %v622, 0.0
        %v729 = vsel %vm614, %v625, 0.0
        %v730 = vsel %vm614, %v628, 0.0
        %v731 = vsel %vm614, %v631, 0.0
        %v732 = vsel %vm614, %v634, 0.0
        %v733 = vsel %vm614, %v637, 0.0
        %v734 = vsel %vm614, %v640, 0.0
        %v735 = vsel %vm614, %v643, 0.0
        %v736 = vsel %vm614, %v646, 0.0
        %v737 = vsel %vm614, %v649, 0.0
        %v738 = vsel %vm614, %v652, 0.0
        %v739 = vsel %vm614, %v655, 0.0
        %v740 = vsel %vm614, %v658, 0.0
        %v741 = vsel %vm614, %v661, 0.0
        %vm773 = vcmask 1046528
        %v774 = vrot.slane 0.0, 1
        %v775 = vsel %vm773, %v774, %v774
        %v776 = vrot.slane %v710, 1
        %v777 = vrot.slane %v617, 1
        %v778 = vsel %vm773, %v776, %v777
        %v779 = vrot.slane %v726, 1
        %v780 = vsel %vm773, %v777, %v779
        %v781 = vrot.slane %v711, 1
        %v782 = vrot.slane %v620, 1
        %v783 = vsel %vm773, %v781, %v782
        %v784 = vrot.slane %v727, 1
        %v785 = vsel %vm773, %v782, %v784
        %v786 = vrot.slane %v712, 1
        %v787 = vrot.slane %v623, 1
        %v788 = vsel %vm773, %v786, %v787
        %v789 = vrot.slane %v728, 1
        %v790 = vsel %vm773, %v787, %v789
        %v791 = vrot.slane %v713, 1
        %v792 = vrot.slane %v626, 1
        %v793 = vsel %vm773, %v791, %v792
        %v794 = vrot.slane %v729, 1
        %v795 = vsel %vm773, %v792, %v794
        %v796 = vrot.slane %v714, 1
        %v797 = vrot.slane %v629, 1
        %v798 = vsel %vm773, %v796, %v797
        %v799 = vrot.slane %v730, 1
        %v800 = vsel %vm773, %v797, %v799
        %v801 = vrot.slane %v715, 1
        %v802 = vrot.slane %v632, 1
        %v803 = vsel %vm773, %v801, %v802
        %v804 = vrot.slane %v731, 1
        %v805 = vsel %vm773, %v802, %v804
        %v806 = vrot.slane %v716, 1
        %v807 = vrot.slane %v635, 1
        %v808 = vsel %vm773, %v806, %v807
        %v809 = vrot.slane %v732, 1
        %v810 = vsel %vm773, %v807, %v809
        %v811 = vrot.slane %v717, 1
        %v812 = vrot.slane %v638, 1
        %v813 = vsel %vm773, %v811, %v812
        %v814 = vrot.slane %v733, 1
        %v815 = vsel %vm773, %v812, %v814
        %v816 = vrot.slane %v718, 1
        %v817 = vrot.slane %v641, 1
        %v818 = vsel %vm773, %v816, %v817
        %v819 = vrot.slane %v734, 1
        %v820 = vsel %vm773, %v817, %v819
        %v821 = vrot.slane %v719, 1
        %v822 = vrot.slane %v644, 1
        %v823 = vsel %vm773, %v821, %v822
        %v824 = vrot.slane %v735, 1
        %v825 = vsel %vm773, %v822, %v824
        %v826 = vrot.slane %v720, 1
        %v827 = vrot.slane %v647, 1
        %v828 = vsel %vm773, %v826, %v827
        %v829 = vrot.slane %v736, 1
        %v830 = vsel %vm773, %v827, %v829
        %v831 = vrot.slane %v721, 1
        %v832 = vrot.slane %v650, 1
        %v833 = vsel %vm773, %v831, %v832
        %v834 = vrot.slane %v737, 1
        %v835 = vsel %vm773, %v832, %v834
        %v836 = vrot.slane %v722, 1
        %v837 = vrot.slane %v653, 1
        %v838 = vsel %vm773, %v836, %v837
        %v839 = vrot.slane %v738, 1
        %v840 = vsel %vm773, %v837, %v839
        %v841 = vrot.slane %v723, 1
        %v842 = vrot.slane %v656, 1
        %v843 = vsel %vm773, %v841, %v842
        %v844 = vrot.slane %v739, 1
        %v845 = vsel %vm773, %v842, %v844
        %v846 = vrot.slane %v724, 1
        %v847 = vrot.slane %v659, 1
        %v848 = vsel %vm773, %v846, %v847
        %v849 = vrot.slane %v740, 1
        %v850 = vsel %vm773, %v847, %v849
        %851 = vrot.lane.b32.xlu0 %v775, 4
        %v852 = vpop.permute.xlu0 %851
        %853 = vrot.lane.b32.xlu0 %v778, 4
        %v854 = vpop.permute.xlu0 %853
        %855 = vrot.lane.b32.xlu0 %v780, 4
        %v856 = vpop.permute.xlu0 %855
        %857 = vrot.lane.b32.xlu0 %v783, 4
        %v858 = vpop.permute.xlu0 %857
        %859 = vrot.lane.b32.xlu0 %v785, 4
        %v860 = vpop.permute.xlu0 %859
        %861 = vrot.lane.b32.xlu0 %v788, 4
        %v862 = vpop.permute.xlu0 %861
        %863 = vrot.lane.b32.xlu0 %v790, 4
        %v864 = vpop.permute.xlu0 %863
        %865 = vrot.lane.b32.xlu0 %v793, 4
        %v866 = vpop.permute.xlu0 %865
        %867 = vrot.lane.b32.xlu0 %v795, 4
        %v868 = vpop.permute.xlu0 %867
        %869 = vrot.lane.b32.xlu0 %v798, 4
        %v870 = vpop.permute.xlu0 %869
        %871 = vrot.lane.b32.xlu0 %v800, 4
        %v872 = vpop.permute.xlu0 %871
        %873 = vrot.lane.b32.xlu0 %v803, 4
        %v874 = vpop.permute.xlu0 %873
        %875 = vrot.lane.b32.xlu0 %v805, 4
        %v876 = vpop.permute.xlu0 %875
        %877 = vrot.lane.b32.xlu0 %v808, 4
        %v878 = vpop.permute.xlu0 %877
        %879 = vrot.lane.b32.xlu0 %v810, 4
        %v880 = vpop.permute.xlu0 %879
        %881 = vrot.lane.b32.xlu0 %v813, 4
        %v882 = vpop.permute.xlu0 %881
        %883 = vrot.lane.b32.xlu0 %v815, 4
        %v884 = vpop.permute.xlu0 %883
        %885 = vrot.lane.b32.xlu0 %v818, 4
        %v886 = vpop.permute.xlu0 %885
        %887 = vrot.lane.b32.xlu0 %v820, 4
        %v888 = vpop.permute.xlu0 %887
        %889 = vrot.lane.b32.xlu0 %v823, 4
        %v890 = vpop.permute.xlu0 %889
        %891 = vrot.lane.b32.xlu0 %v825, 4
        %v892 = vpop.permute.xlu0 %891
        %893 = vrot.lane.b32.xlu0 %v828, 4
        %v894 = vpop.permute.xlu0 %893
        %895 = vrot.lane.b32.xlu0 %v830, 4
        %v896 = vpop.permute.xlu0 %895
        %897 = vrot.lane.b32.xlu0 %v833, 4
        %v898 = vpop.permute.xlu0 %897
        %899 = vrot.lane.b32.xlu0 %v835, 4
        %v900 = vpop.permute.xlu0 %899
        %901 = vrot.lane.b32.xlu0 %v838, 4
        %v902 = vpop.permute.xlu0 %901
        %903 = vrot.lane.b32.xlu0 %v840, 4
        %v904 = vpop.permute.xlu0 %903
        %905 = vrot.lane.b32.xlu0 %v843, 4
        %v906 = vpop.permute.xlu0 %905
        %907 = vrot.lane.b32.xlu0 %v845, 4
        %v908 = vpop.permute.xlu0 %907
        %909 = vrot.lane.b32.xlu0 %v848, 4
        %v910 = vpop.permute.xlu0 %909
        %911 = vrot.lane.b32.xlu0 %v850, 4
        %v912 = vpop.permute.xlu0 %911
        %vm944 = vcmask 1045504
        %v945 = vrot.slane 0.0, 2
        %v946 = vsel %vm944, %v945, %v945
        %v947 = vrot.slane %v710, 2
        %v948 = vrot.slane %v617, 2
        %v949 = vsel %vm944, %v947, %v948
        %v950 = vrot.slane %v726, 2
        %v951 = vsel %vm944, %v948, %v950
        %v952 = vrot.slane %v711, 2
        %v953 = vrot.slane %v620, 2
        %v954 = vsel %vm944, %v952, %v953
        %v955 = vrot.slane %v727, 2
        %v956 = vsel %vm944, %v953, %v955
        %v957 = vrot.slane %v712, 2
        %v958 = vrot.slane %v623, 2
        %v959 = vsel %vm944, %v957, %v958
        %v960 = vrot.slane %v728, 2
        %v961 = vsel %vm944, %v958, %v960
        %v962 = vrot.slane %v713, 2
        %v963 = vrot.slane %v626, 2
        %v964 = vsel %vm944, %v962, %v963
        %v965 = vrot.slane %v729, 2
        %v966 = vsel %vm944, %v963, %v965
        %v967 = vrot.slane %v714, 2
        %v968 = vrot.slane %v629, 2
        %v969 = vsel %vm944, %v967, %v968
        %v970 = vrot.slane %v730, 2
        %v971 = vsel %vm944, %v968, %v970
        %v972 = vrot.slane %v715, 2
        %v973 = vrot.slane %v632, 2
        %v974 = vsel %vm944, %v972, %v973
        %v975 = vrot.slane %v731, 2
        %v976 = vsel %vm944, %v973, %v975
        %v977 = vrot.slane %v716, 2
        %v978 = vrot.slane %v635, 2
        %v979 = vsel %vm944, %v977, %v978
        %v980 = vrot.slane %v732, 2
        %v981 = vsel %vm944, %v978, %v980
        %v982 = vrot.slane %v717, 2
        %v983 = vrot.slane %v638, 2
        %v984 = vsel %vm944, %v982, %v983
        %v985 = vrot.slane %v733, 2
        %v986 = vsel %vm944, %v983, %v985
        %v987 = vrot.slane %v718, 2
        %v988 = vrot.slane %v641, 2
        %v989 = vsel %vm944, %v987, %v988
        %v990 = vrot.slane %v734, 2
        %v991 = vsel %vm944, %v988, %v990
        %v992 = vrot.slane %v719, 2
        %v993 = vrot.slane %v644, 2
        %v994 = vsel %vm944, %v992, %v993
        %v995 = vrot.slane %v735, 2
        %v996 = vsel %vm944, %v993, %v995
        %v997 = vrot.slane %v720, 2
        %v998 = vrot.slane %v647, 2
        %v999 = vsel %vm944, %v997, %v998
        %v1000 = vrot.slane %v736, 2
        %v1001 = vsel %vm944, %v998, %v1000
        %v1002 = vrot.slane %v721, 2
        %v1003 = vrot.slane %v650, 2
        %v1004 = vsel %vm944, %v1002, %v1003
        %v1005 = vrot.slane %v737, 2
        %v1006 = vsel %vm944, %v1003, %v1005
        %v1007 = vrot.slane %v722, 2
        %v1008 = vrot.slane %v653, 2
        %v1009 = vsel %vm944, %v1007, %v1008
        %v1010 = vrot.slane %v738, 2
        %v1011 = vsel %vm944, %v1008, %v1010
        %v1012 = vrot.slane %v723, 2
        %v1013 = vrot.slane %v656, 2
        %v1014 = vsel %vm944, %v1012, %v1013
        %v1015 = vrot.slane %v739, 2
        %v1016 = vsel %vm944, %v1013, %v1015
        %v1017 = vrot.slane %v724, 2
        %v1018 = vrot.slane %v659, 2
        %v1019 = vsel %vm944, %v1017, %v1018
        %v1020 = vrot.slane %v740, 2
        %v1021 = vsel %vm944, %v1018, %v1020
        %1022 = vrot.lane.b32.xlu0 %v946, 8
        %v1023 = vpop.permute.xlu0 %1022
        %1024 = vrot.lane.b32.xlu0 %v949, 8
        %v1025 = vpop.permute.xlu0 %1024
        %1026 = vrot.lane.b32.xlu0 %v951, 8
        %v1027 = vpop.permute.xlu0 %1026
        %1028 = vrot.lane.b32.xlu0 %v954, 8
        %v1029 = vpop.permute.xlu0 %1028
        %1030 = vrot.lane.b32.xlu0 %v956, 8
        %v1031 = vpop.permute.xlu0 %1030
        %1032 = vrot.lane.b32.xlu0 %v959, 8
        %v1033 = vpop.permute.xlu0 %1032
        %1034 = vrot.lane.b32.xlu0 %v961, 8
        %v1035 = vpop.permute.xlu0 %1034
        %1036 = vrot.lane.b32.xlu0 %v964, 8
        %v1037 = vpop.permute.xlu0 %1036
        %1038 = vrot.lane.b32.xlu0 %v966, 8
        %v1039 = vpop.permute.xlu0 %1038
        %1040 = vrot.lane.b32.xlu0 %v969, 8
        %v1041 = vpop.permute.xlu0 %1040
        %1042 = vrot.lane.b32.xlu0 %v971, 8
        %v1043 = vpop.permute.xlu0 %1042
        %1044 = vrot.lane.b32.xlu0 %v974, 8
        %v1045 = vpop.permute.xlu0 %1044
        %1046 = vrot.lane.b32.xlu0 %v976, 8
        %v1047 = vpop.permute.xlu0 %1046
        %1048 = vrot.lane.b32.xlu0 %v979, 8
        %v1049 = vpop.permute.xlu0 %1048
        %1050 = vrot.lane.b32.xlu0 %v981, 8
        %v1051 = vpop.permute.xlu0 %1050
        %1052 = vrot.lane.b32.xlu0 %v984, 8
        %v1053 = vpop.permute.xlu0 %1052
        %1054 = vrot.lane.b32.xlu0 %v986, 8
        %v1055 = vpop.permute.xlu0 %1054
        %1056 = vrot.lane.b32.xlu0 %v989, 8
        %v1057 = vpop.permute.xlu0 %1056
        %1058 = vrot.lane.b32.xlu0 %v991, 8
        %v1059 = vpop.permute.xlu0 %1058
        %1060 = vrot.lane.b32.xlu0 %v994, 8
        %v1061 = vpop.permute.xlu0 %1060
        %1062 = vrot.lane.b32.xlu0 %v996, 8
        %v1063 = vpop.permute.xlu0 %1062
        %1064 = vrot.lane.b32.xlu0 %v999, 8
        %v1065 = vpop.permute.xlu0 %1064
        %1066 = vrot.lane.b32.xlu0 %v1001, 8
        %v1067 = vpop.permute.xlu0 %1066
        %1068 = vrot.lane.b32.xlu0 %v1004, 8
        %v1069 = vpop.permute.xlu0 %1068
        %1070 = vrot.lane.b32.xlu0 %v1006, 8
        %v1071 = vpop.permute.xlu0 %1070
        %1072 = vrot.lane.b32.xlu0 %v1009, 8
        %v1073 = vpop.permute.xlu0 %1072
        %1074 = vrot.lane.b32.xlu0 %v1011, 8
        %v1075 = vpop.permute.xlu0 %1074
        %1076 = vrot.lane.b32.xlu0 %v1014, 8
        %v1077 = vpop.permute.xlu0 %1076
        %1078 = vrot.lane.b32.xlu0 %v1016, 8
        %v1079 = vpop.permute.xlu0 %1078
        %1080 = vrot.lane.b32.xlu0 %v1019, 8
        %v1081 = vpop.permute.xlu0 %1080
        %1082 = vrot.lane.b32.xlu0 %v1021, 8
        %v1083 = vpop.permute.xlu0 %1082
        %1116 = vrot.lane.b32.xlu0 %v710, 12
        %v1117 = vpop.permute.xlu0 %1116
        %1118 = vrot.lane.b32.xlu0 %v617, 12
        %v1119 = vpop.permute.xlu0 %1118
        %1120 = vrot.lane.b32.xlu0 %v711, 12
        %v1121 = vpop.permute.xlu0 %1120
        %1122 = vrot.lane.b32.xlu0 %v620, 12
        %v1123 = vpop.permute.xlu0 %1122
        %1124 = vrot.lane.b32.xlu0 %v712, 12
        %v1125 = vpop.permute.xlu0 %1124
        %1126 = vrot.lane.b32.xlu0 %v623, 12
        %v1127 = vpop.permute.xlu0 %1126
        %1128 = vrot.lane.b32.xlu0 %v713, 12
        %v1129 = vpop.permute.xlu0 %1128
        %1130 = vrot.lane.b32.xlu0 %v626, 12
        %v1131 = vpop.permute.xlu0 %1130
        %1132 = vrot.lane.b32.xlu0 %v714, 12
        %v1133 = vpop.permute.xlu0 %1132
        %1134 = vrot.lane.b32.xlu0 %v629, 12
        %v1135 = vpop.permute.xlu0 %1134
        %1136 = vrot.lane.b32.xlu0 %v715, 12
        %v1137 = vpop.permute.xlu0 %1136
        %1138 = vrot.lane.b32.xlu0 %v632, 12
        %v1139 = vpop.permute.xlu0 %1138
        %1140 = vrot.lane.b32.xlu0 %v716, 12
        %v1141 = vpop.permute.xlu0 %1140
        %1142 = vrot.lane.b32.xlu0 %v635, 12
        %v1143 = vpop.permute.xlu0 %1142
        %1144 = vrot.lane.b32.xlu0 %v717, 12
        %v1145 = vpop.permute.xlu0 %1144
        %1146 = vrot.lane.b32.xlu0 %v638, 12
        %v1147 = vpop.permute.xlu0 %1146
        %1148 = vrot.lane.b32.xlu0 %v718, 12
        %v1149 = vpop.permute.xlu0 %1148
        %1150 = vrot.lane.b32.xlu0 %v641, 12
        %v1151 = vpop.permute.xlu0 %1150
        %1152 = vrot.lane.b32.xlu0 %v719, 12
        %v1153 = vpop.permute.xlu0 %1152
        %1154 = vrot.lane.b32.xlu0 %v644, 12
        %v1155 = vpop.permute.xlu0 %1154
        %1156 = vrot.lane.b32.xlu0 %v720, 12
        %v1157 = vpop.permute.xlu0 %1156
        %1158 = vrot.lane.b32.xlu0 %v647, 12
        %v1159 = vpop.permute.xlu0 %1158
        %1160 = vrot.lane.b32.xlu0 %v721, 12
        %v1161 = vpop.permute.xlu0 %1160
        %1162 = vrot.lane.b32.xlu0 %v650, 12
        %v1163 = vpop.permute.xlu0 %1162
        %1164 = vrot.lane.b32.xlu0 %v722, 12
        %v1165 = vpop.permute.xlu0 %1164
        %1166 = vrot.lane.b32.xlu0 %v653, 12
        %v1167 = vpop.permute.xlu0 %1166
        %1168 = vrot.lane.b32.xlu0 %v723, 12
        %v1169 = vpop.permute.xlu0 %1168
        %1170 = vrot.lane.b32.xlu0 %v656, 12
        %v1171 = vpop.permute.xlu0 %1170
        %1172 = vrot.lane.b32.xlu0 %v724, 12
        %v1173 = vpop.permute.xlu0 %1172
        %1174 = vrot.lane.b32.xlu0 %v659, 12
        %v1175 = vpop.permute.xlu0 %1174
        %1176 = vrot.lane.b32.xlu0 %v725, 12
        %v1177 = vpop.permute.xlu0 %1176
        %1178 = vrot.lane.b32.xlu0 %v662, 12
        %v1179 = vpop.permute.xlu0 %1178
        %v1213 = vrot.slane %v725, 1
        %v1214 = vrot.slane %v662, 1
        %v1215 = vsel %vm773, %v1213, %v1214
        %v1216 = vrot.slane %v741, 1
        %v1217 = vsel %vm773, %v1214, %v1216
        %1218 = vrot.lane.b32.xlu0 %v778, 16
        %v1219 = vpop.permute.xlu0 %1218
        %1220 = vrot.lane.b32.xlu0 %v780, 16
        %v1221 = vpop.permute.xlu0 %1220
        %1222 = vrot.lane.b32.xlu0 %v783, 16
        %v1223 = vpop.permute.xlu0 %1222
        %1224 = vrot.lane.b32.xlu0 %v785, 16
        %v1225 = vpop.permute.xlu0 %1224
        %1226 = vrot.lane.b32.xlu0 %v788, 16
        %v1227 = vpop.permute.xlu0 %1226
        %1228 = vrot.lane.b32.xlu0 %v790, 16
        %v1229 = vpop.permute.xlu0 %1228
        %1230 = vrot.lane.b32.xlu0 %v793, 16
        %v1231 = vpop.permute.xlu0 %1230
        %1232 = vrot.lane.b32.xlu0 %v795, 16
        %v1233 = vpop.permute.xlu0 %1232
        %1234 = vrot.lane.b32.xlu0 %v798, 16
        %v1235 = vpop.permute.xlu0 %1234
        %1236 = vrot.lane.b32.xlu0 %v800, 16
        %v1237 = vpop.permute.xlu0 %1236
        %1238 = vrot.lane.b32.xlu0 %v803, 16
        %v1239 = vpop.permute.xlu0 %1238
        %1240 = vrot.lane.b32.xlu0 %v805, 16
        %v1241 = vpop.permute.xlu0 %1240
        %1242 = vrot.lane.b32.xlu0 %v808, 16
        %v1243 = vpop.permute.xlu0 %1242
        %1244 = vrot.lane.b32.xlu0 %v810, 16
        %v1245 = vpop.permute.xlu0 %1244
        %1246 = vrot.lane.b32.xlu0 %v813, 16
        %v1247 = vpop.permute.xlu0 %1246
        %1248 = vrot.lane.b32.xlu0 %v815, 16
        %v1249 = vpop.permute.xlu0 %1248
        %1250 = vrot.lane.b32.xlu0 %v818, 16
        %v1251 = vpop.permute.xlu0 %1250
        %1252 = vrot.lane.b32.xlu0 %v820, 16
        %v1253 = vpop.permute.xlu0 %1252
        %1254 = vrot.lane.b32.xlu0 %v823, 16
        %v1255 = vpop.permute.xlu0 %1254
        %1256 = vrot.lane.b32.xlu0 %v825, 16
        %v1257 = vpop.permute.xlu0 %1256
        %1258 = vrot.lane.b32.xlu0 %v828, 16
        %v1259 = vpop.permute.xlu0 %1258
        %1260 = vrot.lane.b32.xlu0 %v830, 16
        %v1261 = vpop.permute.xlu0 %1260
        %1262 = vrot.lane.b32.xlu0 %v833, 16
        %v1263 = vpop.permute.xlu0 %1262
        %1264 = vrot.lane.b32.xlu0 %v835, 16
        %v1265 = vpop.permute.xlu0 %1264
        %1266 = vrot.lane.b32.xlu0 %v838, 16
        %v1267 = vpop.permute.xlu0 %1266
        %1268 = vrot.lane.b32.xlu0 %v840, 16
        %v1269 = vpop.permute.xlu0 %1268
        %1270 = vrot.lane.b32.xlu0 %v843, 16
        %v1271 = vpop.permute.xlu0 %1270
        %1272 = vrot.lane.b32.xlu0 %v845, 16
        %v1273 = vpop.permute.xlu0 %1272
        %1274 = vrot.lane.b32.xlu0 %v848, 16
        %v1275 = vpop.permute.xlu0 %1274
        %1276 = vrot.lane.b32.xlu0 %v850, 16
        %v1277 = vpop.permute.xlu0 %1276
        %1278 = vrot.lane.b32.xlu0 %v1215, 16
        %v1279 = vpop.permute.xlu0 %1278
        %1280 = vrot.lane.b32.xlu0 %v1217, 16
        %v1281 = vpop.permute.xlu0 %1280
        %v1314 = vrot.slane %v725, 2
        %v1315 = vrot.slane %v662, 2
        %v1316 = vsel %vm944, %v1314, %v1315
        %v1317 = vrot.slane %v741, 2
        %v1318 = vsel %vm944, %v1315, %v1317
        %1319 = vrot.lane.b32.xlu0 %v949, 20
        %v1320 = vpop.permute.xlu0 %1319
        %1321 = vrot.lane.b32.xlu0 %v951, 20
        %v1322 = vpop.permute.xlu0 %1321
        %1323 = vrot.lane.b32.xlu0 %v954, 20
        %v1324 = vpop.permute.xlu0 %1323
        %1325 = vrot.lane.b32.xlu0 %v956, 20
        %v1326 = vpop.permute.xlu0 %1325
        %1327 = vrot.lane.b32.xlu0 %v959, 20
        %v1328 = vpop.permute.xlu0 %1327
        %1329 = vrot.lane.b32.xlu0 %v961, 20
        %v1330 = vpop.permute.xlu0 %1329
        %1331 = vrot.lane.b32.xlu0 %v964, 20
        %v1332 = vpop.permute.xlu0 %1331
        %1333 = vrot.lane.b32.xlu0 %v966, 20
        %v1334 = vpop.permute.xlu0 %1333
        %1335 = vrot.lane.b32.xlu0 %v969, 20
        %v1336 = vpop.permute.xlu0 %1335
        %1337 = vrot.lane.b32.xlu0 %v971, 20
        %v1338 = vpop.permute.xlu0 %1337
        %1339 = vrot.lane.b32.xlu0 %v974, 20
        %v1340 = vpop.permute.xlu0 %1339
        %1341 = vrot.lane.b32.xlu0 %v976, 20
        %v1342 = vpop.permute.xlu0 %1341
        %1343 = vrot.lane.b32.xlu0 %v979, 20
        %v1344 = vpop.permute.xlu0 %1343
        %1345 = vrot.lane.b32.xlu0 %v981, 20
        %v1346 = vpop.permute.xlu0 %1345
        %1347 = vrot.lane.b32.xlu0 %v984, 20
        %v1348 = vpop.permute.xlu0 %1347
        %1349 = vrot.lane.b32.xlu0 %v986, 20
        %v1350 = vpop.permute.xlu0 %1349
        %1351 = vrot.lane.b32.xlu0 %v989, 20
        %v1352 = vpop.permute.xlu0 %1351
        %1353 = vrot.lane.b32.xlu0 %v991, 20
        %v1354 = vpop.permute.xlu0 %1353
        %1355 = vrot.lane.b32.xlu0 %v994, 20
        %v1356 = vpop.permute.xlu0 %1355
        %1357 = vrot.lane.b32.xlu0 %v996, 20
        %v1358 = vpop.permute.xlu0 %1357
        %1359 = vrot.lane.b32.xlu0 %v999, 20
        %v1360 = vpop.permute.xlu0 %1359
        %1361 = vrot.lane.b32.xlu0 %v1001, 20
        %v1362 = vpop.permute.xlu0 %1361
        %1363 = vrot.lane.b32.xlu0 %v1004, 20
        %v1364 = vpop.permute.xlu0 %1363
        %1365 = vrot.lane.b32.xlu0 %v1006, 20
        %v1366 = vpop.permute.xlu0 %1365
        %1367 = vrot.lane.b32.xlu0 %v1009, 20
        %v1368 = vpop.permute.xlu0 %1367
        %1369 = vrot.lane.b32.xlu0 %v1011, 20
        %v1370 = vpop.permute.xlu0 %1369
        %1371 = vrot.lane.b32.xlu0 %v1014, 20
        %v1372 = vpop.permute.xlu0 %1371
        %1373 = vrot.lane.b32.xlu0 %v1016, 20
        %v1374 = vpop.permute.xlu0 %1373
        %1375 = vrot.lane.b32.xlu0 %v1019, 20
        %v1376 = vpop.permute.xlu0 %1375
        %1377 = vrot.lane.b32.xlu0 %v1021, 20
        %v1378 = vpop.permute.xlu0 %1377
        %1379 = vrot.lane.b32.xlu0 %v1316, 20
        %v1380 = vpop.permute.xlu0 %1379
        %1381 = vrot.lane.b32.xlu0 %v1318, 20
        %v1382 = vpop.permute.xlu0 %1381
        %1415 = vrot.lane.b32.xlu0 %v711, 24
        %v1416 = vpop.permute.xlu0 %1415
        %1417 = vrot.lane.b32.xlu0 %v620, 24
        %v1418 = vpop.permute.xlu0 %1417
        %1419 = vrot.lane.b32.xlu0 %v712, 24
        %v1420 = vpop.permute.xlu0 %1419
        %1421 = vrot.lane.b32.xlu0 %v623, 24
        %v1422 = vpop.permute.xlu0 %1421
        %1423 = vrot.lane.b32.xlu0 %v713, 24
        %v1424 = vpop.permute.xlu0 %1423
        %1425 = vrot.lane.b32.xlu0 %v626, 24
        %v1426 = vpop.permute.xlu0 %1425
        %1427 = vrot.lane.b32.xlu0 %v714, 24
        %v1428 = vpop.permute.xlu0 %1427
        %1429 = vrot.lane.b32.xlu0 %v629, 24
        %v1430 = vpop.permute.xlu0 %1429
        %1431 = vrot.lane.b32.xlu0 %v715, 24
        %v1432 = vpop.permute.xlu0 %1431
        %1433 = vrot.lane.b32.xlu0 %v632, 24
        %v1434 = vpop.permute.xlu0 %1433
        %1435 = vrot.lane.b32.xlu0 %v716, 24
        %v1436 = vpop.permute.xlu0 %1435
        %1437 = vrot.lane.b32.xlu0 %v635, 24
        %v1438 = vpop.permute.xlu0 %1437
        %1439 = vrot.lane.b32.xlu0 %v717, 24
        %v1440 = vpop.permute.xlu0 %1439
        %1441 = vrot.lane.b32.xlu0 %v638, 24
        %v1442 = vpop.permute.xlu0 %1441
        %1443 = vrot.lane.b32.xlu0 %v718, 24
        %v1444 = vpop.permute.xlu0 %1443
        %1445 = vrot.lane.b32.xlu0 %v641, 24
        %v1446 = vpop.permute.xlu0 %1445
        %1447 = vrot.lane.b32.xlu0 %v719, 24
        %v1448 = vpop.permute.xlu0 %1447
        %1449 = vrot.lane.b32.xlu0 %v644, 24
        %v1450 = vpop.permute.xlu0 %1449
        %1451 = vrot.lane.b32.xlu0 %v720, 24
        %v1452 = vpop.permute.xlu0 %1451
        %1453 = vrot.lane.b32.xlu0 %v647, 24
        %v1454 = vpop.permute.xlu0 %1453
        %1455 = vrot.lane.b32.xlu0 %v721, 24
        %v1456 = vpop.permute.xlu0 %1455
        %1457 = vrot.lane.b32.xlu0 %v650, 24
        %v1458 = vpop.permute.xlu0 %1457
        %1459 = vrot.lane.b32.xlu0 %v722, 24
        %v1460 = vpop.permute.xlu0 %1459
        %1461 = vrot.lane.b32.xlu0 %v653, 24
        %v1462 = vpop.permute.xlu0 %1461
        %1463 = vrot.lane.b32.xlu0 %v723, 24
        %v1464 = vpop.permute.xlu0 %1463
        %1465 = vrot.lane.b32.xlu0 %v656, 24
        %v1466 = vpop.permute.xlu0 %1465
        %1467 = vrot.lane.b32.xlu0 %v724, 24
        %v1468 = vpop.permute.xlu0 %1467
        %1469 = vrot.lane.b32.xlu0 %v659, 24
        %v1470 = vpop.permute.xlu0 %1469
        %1471 = vrot.lane.b32.xlu0 %v725, 24
        %v1472 = vpop.permute.xlu0 %1471
        %1473 = vrot.lane.b32.xlu0 %v662, 24
        %v1474 = vpop.permute.xlu0 %1473
        %1475 = vrot.lane.b32.xlu0 0.0, 24
        %v1476 = vpop.permute.xlu0 %1475
        %1508 = vrot.lane.b32.xlu0 %v783, 28
        %v1509 = vpop.permute.xlu0 %1508
        %1510 = vrot.lane.b32.xlu0 %v785, 28
        %v1511 = vpop.permute.xlu0 %1510
        %1512 = vrot.lane.b32.xlu0 %v788, 28
        %v1513 = vpop.permute.xlu0 %1512
        %1514 = vrot.lane.b32.xlu0 %v790, 28
        %v1515 = vpop.permute.xlu0 %1514
        %1516 = vrot.lane.b32.xlu0 %v793, 28
        %v1517 = vpop.permute.xlu0 %1516
        %1518 = vrot.lane.b32.xlu0 %v795, 28
        %v1519 = vpop.permute.xlu0 %1518
        %1520 = vrot.lane.b32.xlu0 %v798, 28
        %v1521 = vpop.permute.xlu0 %1520
        %1522 = vrot.lane.b32.xlu0 %v800, 28
        %v1523 = vpop.permute.xlu0 %1522
        %1524 = vrot.lane.b32.xlu0 %v803, 28
        %v1525 = vpop.permute.xlu0 %1524
        %1526 = vrot.lane.b32.xlu0 %v805, 28
        %v1527 = vpop.permute.xlu0 %1526
        %1528 = vrot.lane.b32.xlu0 %v808, 28
        %v1529 = vpop.permute.xlu0 %1528
        %1530 = vrot.lane.b32.xlu0 %v810, 28
        %v1531 = vpop.permute.xlu0 %1530
        %1532 = vrot.lane.b32.xlu0 %v813, 28
        %v1533 = vpop.permute.xlu0 %1532
        %1534 = vrot.lane.b32.xlu0 %v815, 28
        %v1535 = vpop.permute.xlu0 %1534
        %1536 = vrot.lane.b32.xlu0 %v818, 28
        %v1537 = vpop.permute.xlu0 %1536
        %1538 = vrot.lane.b32.xlu0 %v820, 28
        %v1539 = vpop.permute.xlu0 %1538
        %1540 = vrot.lane.b32.xlu0 %v823, 28
        %v1541 = vpop.permute.xlu0 %1540
        %1542 = vrot.lane.b32.xlu0 %v825, 28
        %v1543 = vpop.permute.xlu0 %1542
        %1544 = vrot.lane.b32.xlu0 %v828, 28
        %v1545 = vpop.permute.xlu0 %1544
        %1546 = vrot.lane.b32.xlu0 %v830, 28
        %v1547 = vpop.permute.xlu0 %1546
        %1548 = vrot.lane.b32.xlu0 %v833, 28
        %v1549 = vpop.permute.xlu0 %1548
        %1550 = vrot.lane.b32.xlu0 %v835, 28
        %v1551 = vpop.permute.xlu0 %1550
        %1552 = vrot.lane.b32.xlu0 %v838, 28
        %v1553 = vpop.permute.xlu0 %1552
        %1554 = vrot.lane.b32.xlu0 %v840, 28
        %v1555 = vpop.permute.xlu0 %1554
        %1556 = vrot.lane.b32.xlu0 %v843, 28
        %v1557 = vpop.permute.xlu0 %1556
        %1558 = vrot.lane.b32.xlu0 %v845, 28
        %v1559 = vpop.permute.xlu0 %1558
        %1560 = vrot.lane.b32.xlu0 %v848, 28
        %v1561 = vpop.permute.xlu0 %1560
        %1562 = vrot.lane.b32.xlu0 %v850, 28
        %v1563 = vpop.permute.xlu0 %1562
        %1564 = vrot.lane.b32.xlu0 %v1215, 28
        %v1565 = vpop.permute.xlu0 %1564
        %1566 = vrot.lane.b32.xlu0 %v1217, 28
        %v1567 = vpop.permute.xlu0 %1566
        %1568 = vrot.lane.b32.xlu0 %v775, 28
        %v1569 = vpop.permute.xlu0 %1568
        %1601 = vrot.lane.b32.xlu0 %v954, 32
        %v1602 = vpop.permute.xlu0 %1601
        %1603 = vrot.lane.b32.xlu0 %v956, 32
        %v1604 = vpop.permute.xlu0 %1603
        %1605 = vrot.lane.b32.xlu0 %v959, 32
        %v1606 = vpop.permute.xlu0 %1605
        %1607 = vrot.lane.b32.xlu0 %v961, 32
        %v1608 = vpop.permute.xlu0 %1607
        %1609 = vrot.lane.b32.xlu0 %v964, 32
        %v1610 = vpop.permute.xlu0 %1609
        %1611 = vrot.lane.b32.xlu0 %v966, 32
        %v1612 = vpop.permute.xlu0 %1611
        %1613 = vrot.lane.b32.xlu0 %v969, 32
        %v1614 = vpop.permute.xlu0 %1613
        %1615 = vrot.lane.b32.xlu0 %v971, 32
        %v1616 = vpop.permute.xlu0 %1615
        %1617 = vrot.lane.b32.xlu0 %v974, 32
        %v1618 = vpop.permute.xlu0 %1617
        %1619 = vrot.lane.b32.xlu0 %v976, 32
        %v1620 = vpop.permute.xlu0 %1619
        %1621 = vrot.lane.b32.xlu0 %v979, 32
        %v1622 = vpop.permute.xlu0 %1621
        %1623 = vrot.lane.b32.xlu0 %v981, 32
        %v1624 = vpop.permute.xlu0 %1623
        %1625 = vrot.lane.b32.xlu0 %v984, 32
        %v1626 = vpop.permute.xlu0 %1625
        %1627 = vrot.lane.b32.xlu0 %v986, 32
        %v1628 = vpop.permute.xlu0 %1627
        %1629 = vrot.lane.b32.xlu0 %v989, 32
        %v1630 = vpop.permute.xlu0 %1629
        %1631 = vrot.lane.b32.xlu0 %v991, 32
        %v1632 = vpop.permute.xlu0 %1631
        %1633 = vrot.lane.b32.xlu0 %v994, 32
        %v1634 = vpop.permute.xlu0 %1633
        %1635 = vrot.lane.b32.xlu0 %v996, 32
        %v1636 = vpop.permute.xlu0 %1635
        %1637 = vrot.lane.b32.xlu0 %v999, 32
        %v1638 = vpop.permute.xlu0 %1637
        %1639 = vrot.lane.b32.xlu0 %v1001, 32
        %v1640 = vpop.permute.xlu0 %1639
        %1641 = vrot.lane.b32.xlu0 %v1004, 32
        %v1642 = vpop.permute.xlu0 %1641
        %1643 = vrot.lane.b32.xlu0 %v1006, 32
        %v1644 = vpop.permute.xlu0 %1643
        %1645 = vrot.lane.b32.xlu0 %v1009, 32
        %v1646 = vpop.permute.xlu0 %1645
        %1647 = vrot.lane.b32.xlu0 %v1011, 32
        %v1648 = vpop.permute.xlu0 %1647
        %1649 = vrot.lane.b32.xlu0 %v1014, 32
        %v1650 = vpop.permute.xlu0 %1649
        %1651 = vrot.lane.b32.xlu0 %v1016, 32
        %v1652 = vpop.permute.xlu0 %1651
        %1653 = vrot.lane.b32.xlu0 %v1019, 32
        %v1654 = vpop.permute.xlu0 %1653
        %1655 = vrot.lane.b32.xlu0 %v1021, 32
        %v1656 = vpop.permute.xlu0 %1655
        %1657 = vrot.lane.b32.xlu0 %v1316, 32
        %v1658 = vpop.permute.xlu0 %1657
        %1659 = vrot.lane.b32.xlu0 %v1318, 32
        %v1660 = vpop.permute.xlu0 %1659
        %1661 = vrot.lane.b32.xlu0 %v946, 32
        %v1662 = vpop.permute.xlu0 %1661
        %vm1694 = vcmask 31744
        %v1695 = vsel %vm1694, 0.0, %v852
        %v1696 = vsel %vm1694, %v710, %v854
        %v1697 = vsel %vm1694, %v617, %v856
        %v1698 = vsel %vm1694, %v711, %v858
        %v1699 = vsel %vm1694, %v620, %v860
        %v1700 = vsel %vm1694, %v712, %v862
        %v1701 = vsel %vm1694, %v623, %v864
        %v1702 = vsel %vm1694, %v713, %v866
        %v1703 = vsel %vm1694, %v626, %v868
        %v1704 = vsel %vm1694, %v714, %v870
        %v1705 = vsel %vm1694, %v629, %v872
        %v1706 = vsel %vm1694, %v715, %v874
        %v1707 = vsel %vm1694, %v632, %v876
        %v1708 = vsel %vm1694, %v716, %v878
        %v1709 = vsel %vm1694, %v635, %v880
        %v1710 = vsel %vm1694, %v717, %v882
        %v1711 = vsel %vm1694, %v638, %v884
        %v1712 = vsel %vm1694, %v718, %v886
        %v1713 = vsel %vm1694, %v641, %v888
        %v1714 = vsel %vm1694, %v719, %v890
        %v1715 = vsel %vm1694, %v644, %v892
        %v1716 = vsel %vm1694, %v720, %v894
        %v1717 = vsel %vm1694, %v647, %v896
        %v1718 = vsel %vm1694, %v721, %v898
        %v1719 = vsel %vm1694, %v650, %v900
        %v1720 = vsel %vm1694, %v722, %v902
        %v1721 = vsel %vm1694, %v653, %v904
        %v1722 = vsel %vm1694, %v723, %v906
        %v1723 = vsel %vm1694, %v656, %v908
        %v1724 = vsel %vm1694, %v724, %v910
        %v1725 = vsel %vm1694, %v659, %v912
        %vm1726 = vcmask 64512
        %v1727 = vsel %vm1726, %v1695, %v1023
        %v1728 = vsel %vm1726, %v1696, %v1025
        %v1729 = vsel %vm1726, %v1697, %v1027
        %v1730 = vsel %vm1726, %v1698, %v1029
        %v1731 = vsel %vm1726, %v1699, %v1031
        %v1732 = vsel %vm1726, %v1700, %v1033
        %v1733 = vsel %vm1726, %v1701, %v1035
        %v1734 = vsel %vm1726, %v1702, %v1037
        %v1735 = vsel %vm1726, %v1703, %v1039
        %v1736 = vsel %vm1726, %v1704, %v1041
        %v1737 = vsel %vm1726, %v1705, %v1043
        %v1738 = vsel %vm1726, %v1706, %v1045
        %v1739 = vsel %vm1726, %v1707, %v1047
        %v1740 = vsel %vm1726, %v1708, %v1049
        %v1741 = vsel %vm1726, %v1709, %v1051
        %v1742 = vsel %vm1726, %v1710, %v1053
        %v1743 = vsel %vm1726, %v1711, %v1055
        %v1744 = vsel %vm1726, %v1712, %v1057
        %v1745 = vsel %vm1726, %v1713, %v1059
        %v1746 = vsel %vm1726, %v1714, %v1061
        %v1747 = vsel %vm1726, %v1715, %v1063
        %v1748 = vsel %vm1726, %v1716, %v1065
        %v1749 = vsel %vm1726, %v1717, %v1067
        %v1750 = vsel %vm1726, %v1718, %v1069
        %v1751 = vsel %vm1726, %v1719, %v1071
        %v1752 = vsel %vm1726, %v1720, %v1073
        %v1753 = vsel %vm1726, %v1721, %v1075
        %v1754 = vsel %vm1726, %v1722, %v1077
        %v1755 = vsel %vm1726, %v1723, %v1079
        %v1756 = vsel %vm1726, %v1724, %v1081
        %v1757 = vsel %vm1726, %v1725, %v1083
        %vm1758 = vcmask 97280
        %v1759 = vsel %vm1758, %v1727, %v1117
        %v1760 = vsel %vm1758, %v1727, %v1119
        %v1761 = vsel %vm1758, %v1728, %v1121
        %v1762 = vsel %vm1758, %v1729, %v1123
        %v1763 = vsel %vm1758, %v1730, %v1125
        %v1764 = vsel %vm1758, %v1731, %v1127
        %v1765 = vsel %vm1758, %v1732, %v1129
        %v1766 = vsel %vm1758, %v1733, %v1131
        %v1767 = vsel %vm1758, %v1734, %v1133
        %v1768 = vsel %vm1758, %v1735, %v1135
        %v1769 = vsel %vm1758, %v1736, %v1137
        %v1770 = vsel %vm1758, %v1737, %v1139
        %v1771 = vsel %vm1758, %v1738, %v1141
        %v1772 = vsel %vm1758, %v1739, %v1143
        %v1773 = vsel %vm1758, %v1740, %v1145
        %v1774 = vsel %vm1758, %v1741, %v1147
        %v1775 = vsel %vm1758, %v1742, %v1149
        %v1776 = vsel %vm1758, %v1743, %v1151
        %v1777 = vsel %vm1758, %v1744, %v1153
        %v1778 = vsel %vm1758, %v1745, %v1155
        %v1779 = vsel %vm1758, %v1746, %v1157
        %v1780 = vsel %vm1758, %v1747, %v1159
        %v1781 = vsel %vm1758, %v1748, %v1161
        %v1782 = vsel %vm1758, %v1749, %v1163
        %v1783 = vsel %vm1758, %v1750, %v1165
        %v1784 = vsel %vm1758, %v1751, %v1167
        %v1785 = vsel %vm1758, %v1752, %v1169
        %v1786 = vsel %vm1758, %v1753, %v1171
        %v1787 = vsel %vm1758, %v1754, %v1173
        %v1788 = vsel %vm1758, %v1755, %v1175
        %v1789 = vsel %vm1758, %v1756, %v1177
        %v1790 = vsel %vm1758, %v1757, %v1179
        %vm1791 = vcmask 130048
        %v1792 = vsel %vm1791, %v1759, %v1219
        %v1793 = vsel %vm1791, %v1760, %v1221
        %v1794 = vsel %vm1791, %v1761, %v1223
        %v1795 = vsel %vm1791, %v1762, %v1225
        %v1796 = vsel %vm1791, %v1763, %v1227
        %v1797 = vsel %vm1791, %v1764, %v1229
        %v1798 = vsel %vm1791, %v1765, %v1231
        %v1799 = vsel %vm1791, %v1766, %v1233
        %v1800 = vsel %vm1791, %v1767, %v1235
        %v1801 = vsel %vm1791, %v1768, %v1237
        %v1802 = vsel %vm1791, %v1769, %v1239
        %v1803 = vsel %vm1791, %v1770, %v1241
        %v1804 = vsel %vm1791, %v1771, %v1243
        %v1805 = vsel %vm1791, %v1772, %v1245
        %v1806 = vsel %vm1791, %v1773, %v1247
        %v1807 = vsel %vm1791, %v1774, %v1249
        %v1808 = vsel %vm1791, %v1775, %v1251
        %v1809 = vsel %vm1791, %v1776, %v1253
        %v1810 = vsel %vm1791, %v1777, %v1255
        %v1811 = vsel %vm1791, %v1778, %v1257
        %v1812 = vsel %vm1791, %v1779, %v1259
        %v1813 = vsel %vm1791, %v1780, %v1261
        %v1814 = vsel %vm1791, %v1781, %v1263
        %v1815 = vsel %vm1791, %v1782, %v1265
        %v1816 = vsel %vm1791, %v1783, %v1267
        %v1817 = vsel %vm1791, %v1784, %v1269
        %v1818 = vsel %vm1791, %v1785, %v1271
        %v1819 = vsel %vm1791, %v1786, %v1273
        %v1820 = vsel %vm1791, %v1787, %v1275
        %v1821 = vsel %vm1791, %v1788, %v1277
        %v1822 = vsel %vm1791, %v1789, %v1279
        %v1823 = vsel %vm1791, %v1790, %v1281
        %vm1824 = vcmask 162816
        %v1825 = vsel %vm1824, %v1792, %v1320
        %v1826 = vsel %vm1824, %v1793, %v1322
        %v1827 = vsel %vm1824, %v1794, %v1324
        %v1828 = vsel %vm1824, %v1795, %v1326
        %v1829 = vsel %vm1824, %v1796, %v1328
        %v1830 = vsel %vm1824, %v1797, %v1330
        %v1831 = vsel %vm1824, %v1798, %v1332
        %v1832 = vsel %vm1824, %v1799, %v1334
        %v1833 = vsel %vm1824, %v1800, %v1336
        %v1834 = vsel %vm1824, %v1801, %v1338
        %v1835 = vsel %vm1824, %v1802, %v1340
        %v1836 = vsel %vm1824, %v1803, %v1342
        %v1837 = vsel %vm1824, %v1804, %v1344
        %v1838 = vsel %vm1824, %v1805, %v1346
        %v1839 = vsel %vm1824, %v1806, %v1348
        %v1840 = vsel %vm1824, %v1807, %v1350
        %v1841 = vsel %vm1824, %v1808, %v1352
        %v1842 = vsel %vm1824, %v1809, %v1354
        %v1843 = vsel %vm1824, %v1810, %v1356
        %v1844 = vsel %vm1824, %v1811, %v1358
        %v1845 = vsel %vm1824, %v1812, %v1360
        %v1846 = vsel %vm1824, %v1813, %v1362
        %v1847 = vsel %vm1824, %v1814, %v1364
        %v1848 = vsel %vm1824, %v1815, %v1366
        %v1849 = vsel %vm1824, %v1816, %v1368
        %v1850 = vsel %vm1824, %v1817, %v1370
        %v1851 = vsel %vm1824, %v1818, %v1372
        %v1852 = vsel %vm1824, %v1819, %v1374
        %v1853 = vsel %vm1824, %v1820, %v1376
        %v1854 = vsel %vm1824, %v1821, %v1378
        %v1855 = vsel %vm1824, %v1822, %v1380
        %v1856 = vsel %vm1824, %v1823, %v1382
        %vm1857 = vcmask 195584
        %v1858 = vsel %vm1857, %v1825, %v1416
        %v1859 = vsel %vm1857, %v1826, %v1418
        %v1860 = vsel %vm1857, %v1827, %v1420
        %v1861 = vsel %vm1857, %v1828, %v1422
        %v1862 = vsel %vm1857, %v1829, %v1424
        %v1863 = vsel %vm1857, %v1830, %v1426
        %v1864 = vsel %vm1857, %v1831, %v1428
        %v1865 = vsel %vm1857, %v1832, %v1430
        %v1866 = vsel %vm1857, %v1833, %v1432
        %v1867 = vsel %vm1857, %v1834, %v1434
        %v1868 = vsel %vm1857, %v1835, %v1436
        %v1869 = vsel %vm1857, %v1836, %v1438
        %v1870 = vsel %vm1857, %v1837, %v1440
        %v1871 = vsel %vm1857, %v1838, %v1442
        %v1872 = vsel %vm1857, %v1839, %v1444
        %v1873 = vsel %vm1857, %v1840, %v1446
        %v1874 = vsel %vm1857, %v1841, %v1448
        %v1875 = vsel %vm1857, %v1842, %v1450
        %v1876 = vsel %vm1857, %v1843, %v1452
        %v1877 = vsel %vm1857, %v1844, %v1454
        %v1878 = vsel %vm1857, %v1845, %v1456
        %v1879 = vsel %vm1857, %v1846, %v1458
        %v1880 = vsel %vm1857, %v1847, %v1460
        %v1881 = vsel %vm1857, %v1848, %v1462
        %v1882 = vsel %vm1857, %v1849, %v1464
        %v1883 = vsel %vm1857, %v1850, %v1466
        %v1884 = vsel %vm1857, %v1851, %v1468
        %v1885 = vsel %vm1857, %v1852, %v1470
        %v1886 = vsel %vm1857, %v1853, %v1472
        %v1887 = vsel %vm1857, %v1854, %v1474
        %v1888 = vsel %vm1857, %v1855, %v1476
        %v1889 = vsel %vm1857, %v1856, %v1476
        %vm1890 = vcmask 228352
        %v1891 = vsel %vm1890, %v1858, %v1509
        %v1892 = vsel %vm1890, %v1859, %v1511
        %v1893 = vsel %vm1890, %v1860, %v1513
        %v1894 = vsel %vm1890, %v1861, %v1515
        %v1895 = vsel %vm1890, %v1862, %v1517
        %v1896 = vsel %vm1890, %v1863, %v1519
        %v1897 = vsel %vm1890, %v1864, %v1521
        %v1898 = vsel %vm1890, %v1865, %v1523
        %v1899 = vsel %vm1890, %v1866, %v1525
        %v1900 = vsel %vm1890, %v1867, %v1527
        %v1901 = vsel %vm1890, %v1868, %v1529
        %v1902 = vsel %vm1890, %v1869, %v1531
        %v1903 = vsel %vm1890, %v1870, %v1533
        %v1904 = vsel %vm1890, %v1871, %v1535
        %v1905 = vsel %vm1890, %v1872, %v1537
        %v1906 = vsel %vm1890, %v1873, %v1539
        %v1907 = vsel %vm1890, %v1874, %v1541
        %v1908 = vsel %vm1890, %v1875, %v1543
        %v1909 = vsel %vm1890, %v1876, %v1545
        %v1910 = vsel %vm1890, %v1877, %v1547
        %v1911 = vsel %vm1890, %v1878, %v1549
        %v1912 = vsel %vm1890, %v1879, %v1551
        %v1913 = vsel %vm1890, %v1880, %v1553
        %v1914 = vsel %vm1890, %v1881, %v1555
        %v1915 = vsel %vm1890, %v1882, %v1557
        %v1916 = vsel %vm1890, %v1883, %v1559
        %v1917 = vsel %vm1890, %v1884, %v1561
        %v1918 = vsel %vm1890, %v1885, %v1563
        %v1919 = vsel %vm1890, %v1886, %v1565
        %v1920 = vsel %vm1890, %v1887, %v1567
        %v1921 = vsel %vm1890, %v1888, %v1569
        %v1922 = vsel %vm1890, %v1889, %v1569
        %vm1923 = vcmask 261120
        %v1924 = vsel %vm1923, %v1891, %v1602
        %v1925 = vsel %vm1923, %v1892, %v1604
        %v1926 = vsel %vm1923, %v1893, %v1606
        %v1927 = vsel %vm1923, %v1894, %v1608
        %v1928 = vsel %vm1923, %v1895, %v1610
        %v1929 = vsel %vm1923, %v1896, %v1612
        %v1930 = vsel %vm1923, %v1897, %v1614
        %v1931 = vsel %vm1923, %v1898, %v1616
        %v1932 = vsel %vm1923, %v1899, %v1618
        %v1933 = vsel %vm1923, %v1900, %v1620
        %v1934 = vsel %vm1923, %v1901, %v1622
        %v1935 = vsel %vm1923, %v1902, %v1624
        %v1936 = vsel %vm1923, %v1903, %v1626
        %v1937 = vsel %vm1923, %v1904, %v1628
        %v1938 = vsel %vm1923, %v1905, %v1630
        %v1939 = vsel %vm1923, %v1906, %v1632
        %v1940 = vsel %vm1923, %v1907, %v1634
        %v1941 = vsel %vm1923, %v1908, %v1636
        %v1942 = vsel %vm1923, %v1909, %v1638
        %v1943 = vsel %vm1923, %v1910, %v1640
        %v1944 = vsel %vm1923, %v1911, %v1642
        %v1945 = vsel %vm1923, %v1912, %v1644
        %v1946 = vsel %vm1923, %v1913, %v1646
        %v1947 = vsel %vm1923, %v1914, %v1648
        %v1948 = vsel %vm1923, %v1915, %v1650
        %v1949 = vsel %vm1923, %v1916, %v1652
        %v1950 = vsel %vm1923, %v1917, %v1654
        %v1951 = vsel %vm1923, %v1918, %v1656
        %v1952 = vsel %vm1923, %v1919, %v1658
        %v1953 = vsel %vm1923, %v1920, %v1660
        %v1954 = vsel %vm1923, %v1921, %v1662
        %v1955 = vsel %vm1923, %v1922, %v1662
        %v1956 = vpack.c.bf16 %v1925, %v1924
        %v1957 = vpack.c.bf16 %v1927, %v1926
        %v1958 = vpack.c.bf16 %v1929, %v1928
        %v1959 = vpack.c.bf16 %v1931, %v1930
        %v1960 = vpack.c.bf16 %v1933, %v1932
        %v1961 = vpack.c.bf16 %v1935, %v1934
        %v1962 = vpack.c.bf16 %v1937, %v1936
        %v1963 = vpack.c.bf16 %v1939, %v1938
        %v1964 = vpack.c.bf16 %v1941, %v1940
        %v1965 = vpack.c.bf16 %v1943, %v1942
        %v1966 = vpack.c.bf16 %v1945, %v1944
        %v1967 = vpack.c.bf16 %v1947, %v1946
        %v1968 = vpack.c.bf16 %v1949, %v1948
        %v1969 = vpack.c.bf16 %v1951, %v1950
        %v1970 = vpack.c.bf16 %v1953, %v1952
        %v1971 = vpack.c.bf16 %v1955, %v1954
        %v1972 = vld [vmem:[%s1] sm:$0xf]
        %v1973 = vld [vmem:[%s1 + $0x4] sm:$0xf]
        %v1974 = vld [vmem:[%s1 + $0x8] sm:$0xf]
        %v1975 = vld [vmem:[%s1 + $0xc] sm:$0xf]
        %v1976 = vld [vmem:[%s1 + $0x10] sm:$0x3]
        %v1977 = vld [vmem:[%s2] sm:$0x1]
        %v1979 = vperm.slane %v1977, 0
        %v1986 = vunpack.c.l.b16 %v1972
        %v1987 = vunpack.c.l.b16 %v1973
        %v1988 = vunpack.c.l.b16 %v1974
        %v1989 = vunpack.c.l.b16 %v1975
        %v1990 = vunpack.c.l.b16 %v1976
        %v1991 = vpack.c.b16 %v1987, %v1986
        %v1992 = vpack.c.b16 %v1989, %v1988
        %v1993 = vpack.c.b16 %v1990, %v1990
        %vm1996 = vcmask 293888
        %v1998 = vsel %vm1996, %v1956, 0
        %v2001 = vsel %vm1996, %v1957, 0
        %v2004 = vsel %vm1996, %v1958, 0
        %v2007 = vsel %vm1996, %v1959, 0
        %v2010 = vsel %vm1996, %v1960, 0
        %v2013 = vsel %vm1996, %v1961, 0
        %v2016 = vsel %vm1996, %v1962, 0
        %v2019 = vsel %vm1996, %v1963, 0
        %v2022 = vsel %vm1996, %v1964, 0
        %v2025 = vsel %vm1996, %v1965, 0
        %v2028 = vsel %vm1996, %v1966, 0
        %v2031 = vsel %vm1996, %v1967, 0
        %v2034 = vsel %vm1996, %v1968, 0
        %v2037 = vsel %vm1996, %v1969, 0
        %v2040 = vsel %vm1996, %v1970, 0
        %v2043 = vsel %vm1996, %v1971, 0
        %vm2045 = vcmask 1041408
        %v2047 = vsel %vm2045, %v1993, 0
        %2049 = vmatpush.bf16.msra.mxu0 0
        %2050 = vmatpush.bf16.msra.mxu0 0
        %2051 = vmatpush.bf16.msra.mxu0 0
        %2052 = vmatpush.bf16.msra.mxu0 0
        %2053 = vmatpush.bf16.msra.mxu0 0
        %2054 = vmatpush.bf16.msra.mxu0 %v2047
        %2055 = vmatpush.bf16.msra.mxu0 %v1992
        %2056 = vmatpush.bf16.msra.mxu0 %v1991
        %2057 = vmatmul.bf16.gmra.mxu0 %v1998
        %v2058 = vpop.f32.mrf.mxu0
        %v2059 = vadd.f32 %v1979, %v2058
        %v2060 = vpop.f32.mrf.mxu0
        %v2061 = vadd.f32 %v1979, %v2060
        %2062 = vmatmul.bf16.gmra.mxu0 %v2001
        %v2063 = vpop.f32.mrf.mxu0
        %v2064 = vadd.f32 %v1979, %v2063
        %v2065 = vpop.f32.mrf.mxu0
        %v2066 = vadd.f32 %v1979, %v2065
        %2067 = vmatmul.bf16.gmra.mxu0 %v2004
        %v2068 = vpop.f32.mrf.mxu0
        %v2069 = vadd.f32 %v1979, %v2068
        %v2070 = vpop.f32.mrf.mxu0
        %v2071 = vadd.f32 %v1979, %v2070
        %2072 = vmatmul.bf16.gmra.mxu0 %v2007
        %v2073 = vpop.f32.mrf.mxu0
        %v2074 = vadd.f32 %v1979, %v2073
        %v2075 = vpop.f32.mrf.mxu0
        %v2076 = vadd.f32 %v1979, %v2075
        %2077 = vmatmul.bf16.gmra.mxu0 %v2010
        %v2078 = vpop.f32.mrf.mxu0
        %v2079 = vadd.f32 %v1979, %v2078
        %v2080 = vpop.f32.mrf.mxu0
        %v2081 = vadd.f32 %v1979, %v2080
        %2082 = vmatmul.bf16.gmra.mxu0 %v2013
        %v2083 = vpop.f32.mrf.mxu0
        %v2084 = vadd.f32 %v1979, %v2083
        %v2085 = vpop.f32.mrf.mxu0
        %v2086 = vadd.f32 %v1979, %v2085
        %2087 = vmatmul.bf16.gmra.mxu0 %v2016
        %v2088 = vpop.f32.mrf.mxu0
        %v2089 = vadd.f32 %v1979, %v2088
        %v2090 = vpop.f32.mrf.mxu0
        %v2091 = vadd.f32 %v1979, %v2090
        %2092 = vmatmul.bf16.gmra.mxu0 %v2019
        %v2093 = vpop.f32.mrf.mxu0
        %v2094 = vadd.f32 %v1979, %v2093
        %v2095 = vpop.f32.mrf.mxu0
        %v2096 = vadd.f32 %v1979, %v2095
        %2097 = vmatmul.bf16.gmra.mxu0 %v2022
        %v2098 = vpop.f32.mrf.mxu0
        %v2099 = vadd.f32 %v1979, %v2098
        %v2100 = vpop.f32.mrf.mxu0
        %v2101 = vadd.f32 %v1979, %v2100
        %2102 = vmatmul.bf16.gmra.mxu0 %v2025
        %v2103 = vpop.f32.mrf.mxu0
        %v2104 = vadd.f32 %v1979, %v2103
        %v2105 = vpop.f32.mrf.mxu0
        %v2106 = vadd.f32 %v1979, %v2105
        %2107 = vmatmul.bf16.gmra.mxu0 %v2028
        %v2108 = vpop.f32.mrf.mxu0
        %v2109 = vadd.f32 %v1979, %v2108
        %v2110 = vpop.f32.mrf.mxu0
        %v2111 = vadd.f32 %v1979, %v2110
        %2112 = vmatmul.bf16.gmra.mxu0 %v2031
        %v2113 = vpop.f32.mrf.mxu0
        %v2114 = vadd.f32 %v1979, %v2113
        %v2115 = vpop.f32.mrf.mxu0
        %v2116 = vadd.f32 %v1979, %v2115
        %2117 = vmatmul.bf16.gmra.mxu0 %v2034
        %v2118 = vpop.f32.mrf.mxu0
        %v2119 = vadd.f32 %v1979, %v2118
        %v2120 = vpop.f32.mrf.mxu0
        %v2121 = vadd.f32 %v1979, %v2120
        %2122 = vmatmul.bf16.gmra.mxu0 %v2037
        %v2123 = vpop.f32.mrf.mxu0
        %v2124 = vadd.f32 %v1979, %v2123
        %v2125 = vpop.f32.mrf.mxu0
        %v2126 = vadd.f32 %v1979, %v2125
        %2127 = vmatmul.bf16.gmra.mxu0 %v2040
        %v2128 = vpop.f32.mrf.mxu0
        %v2129 = vadd.f32 %v1979, %v2128
        %v2130 = vpop.f32.mrf.mxu0
        %v2131 = vadd.f32 %v1979, %v2130
        %2132 = vmatmul.bf16.gmra.mxu0 %v2043
        %v2133 = vpop.f32.mrf.mxu0
        %v2134 = vadd.f32 %v1979, %v2133
        %v2135 = vpop.f32.mrf.mxu0
        %v2136 = vadd.f32 %v1979, %v2135
        %2137 = vdwg.mxu0
        %v2138 = vmax.f32 %v2059, 0.0
        %v2139 = vmax.f32 %v2061, 0.0
        %v2140 = vmax.f32 %v2064, 0.0
        %v2141 = vmax.f32 %v2066, 0.0
        %v2142 = vmax.f32 %v2069, 0.0
        %v2143 = vmax.f32 %v2071, 0.0
        %v2144 = vmax.f32 %v2074, 0.0
        %v2145 = vmax.f32 %v2076, 0.0
        %v2146 = vmax.f32 %v2079, 0.0
        %v2147 = vmax.f32 %v2081, 0.0
        %v2148 = vmax.f32 %v2084, 0.0
        %v2149 = vmax.f32 %v2086, 0.0
        %v2150 = vmax.f32 %v2089, 0.0
        %v2151 = vmax.f32 %v2091, 0.0
        %v2152 = vmax.f32 %v2094, 0.0
        %v2153 = vmax.f32 %v2096, 0.0
        %v2154 = vmax.f32 %v2099, 0.0
        %v2155 = vmax.f32 %v2101, 0.0
        %v2156 = vmax.f32 %v2104, 0.0
        %v2157 = vmax.f32 %v2106, 0.0
        %v2158 = vmax.f32 %v2109, 0.0
        %v2159 = vmax.f32 %v2111, 0.0
        %v2160 = vmax.f32 %v2114, 0.0
        %v2161 = vmax.f32 %v2116, 0.0
        %v2162 = vmax.f32 %v2119, 0.0
        %v2163 = vmax.f32 %v2121, 0.0
        %v2164 = vmax.f32 %v2124, 0.0
        %v2165 = vmax.f32 %v2126, 0.0
        %v2166 = vmax.f32 %v2129, 0.0
        %v2167 = vmax.f32 %v2131, 0.0
        %v2168 = vmax.f32 %v2134, 0.0
        %v2169 = vmax.f32 %v2136, 0.0
        %v2202 = vrot.slane %v2138, 2
        %v2203 = vrot.slane %v2138, 4
        %v2204 = vrot.slane %v2138, 6
        %v2205 = vrot.slane %v2139, 2
        %v2206 = vrot.slane %v2139, 4
        %v2207 = vrot.slane %v2139, 6
        %v2208 = vrot.slane %v2140, 2
        %v2209 = vrot.slane %v2140, 4
        %v2210 = vrot.slane %v2140, 6
        %v2211 = vrot.slane %v2141, 2
        %v2212 = vrot.slane %v2141, 4
        %v2213 = vrot.slane %v2141, 6
        %v2214 = vrot.slane %v2142, 2
        %v2215 = vrot.slane %v2142, 4
        %v2216 = vrot.slane %v2142, 6
        %v2217 = vrot.slane %v2143, 2
        %v2218 = vrot.slane %v2143, 4
        %v2219 = vrot.slane %v2143, 6
        %v2220 = vrot.slane %v2144, 2
        %v2221 = vrot.slane %v2144, 4
        %v2222 = vrot.slane %v2144, 6
        %v2223 = vrot.slane %v2145, 2
        %v2224 = vrot.slane %v2145, 4
        %v2225 = vrot.slane %v2145, 6
        %v2226 = vrot.slane %v2146, 2
        %v2227 = vrot.slane %v2146, 4
        %v2228 = vrot.slane %v2146, 6
        %v2229 = vrot.slane %v2147, 2
        %v2230 = vrot.slane %v2147, 4
        %v2231 = vrot.slane %v2147, 6
        %v2232 = vrot.slane %v2148, 2
        %v2233 = vrot.slane %v2148, 4
        %v2234 = vrot.slane %v2148, 6
        %v2235 = vrot.slane %v2149, 2
        %v2236 = vrot.slane %v2149, 4
        %v2237 = vrot.slane %v2149, 6
        %v2238 = vrot.slane %v2150, 2
        %v2239 = vrot.slane %v2150, 4
        %v2240 = vrot.slane %v2150, 6
        %v2241 = vrot.slane %v2151, 2
        %v2242 = vrot.slane %v2151, 4
        %v2243 = vrot.slane %v2151, 6
        %v2244 = vrot.slane %v2152, 2
        %v2245 = vrot.slane %v2152, 4
        %v2246 = vrot.slane %v2152, 6
        %v2247 = vrot.slane %v2153, 2
        %v2248 = vrot.slane %v2153, 4
        %v2249 = vrot.slane %v2153, 6
        %v2250 = vrot.slane %v2154, 2
        %v2251 = vrot.slane %v2154, 4
        %v2252 = vrot.slane %v2154, 6
        %v2253 = vrot.slane %v2155, 2
        %v2254 = vrot.slane %v2155, 4
        %v2255 = vrot.slane %v2155, 6
        %v2256 = vrot.slane %v2156, 2
        %v2257 = vrot.slane %v2156, 4
        %v2258 = vrot.slane %v2156, 6
        %v2259 = vrot.slane %v2157, 2
        %v2260 = vrot.slane %v2157, 4
        %v2261 = vrot.slane %v2157, 6
        %v2262 = vrot.slane %v2158, 2
        %v2263 = vrot.slane %v2158, 4
        %v2264 = vrot.slane %v2158, 6
        %v2265 = vrot.slane %v2159, 2
        %v2266 = vrot.slane %v2159, 4
        %v2267 = vrot.slane %v2159, 6
        %v2268 = vrot.slane %v2160, 2
        %v2269 = vrot.slane %v2160, 4
        %v2270 = vrot.slane %v2160, 6
        %v2271 = vrot.slane %v2161, 2
        %v2272 = vrot.slane %v2161, 4
        %v2273 = vrot.slane %v2161, 6
        %v2274 = vrot.slane %v2162, 2
        %v2275 = vrot.slane %v2162, 4
        %v2276 = vrot.slane %v2162, 6
        %v2277 = vrot.slane %v2163, 2
        %v2278 = vrot.slane %v2163, 4
        %v2279 = vrot.slane %v2163, 6
        %v2280 = vrot.slane %v2164, 2
        %v2281 = vrot.slane %v2164, 4
        %v2282 = vrot.slane %v2164, 6
        %v2283 = vrot.slane %v2165, 2
        %v2284 = vrot.slane %v2165, 4
        %v2285 = vrot.slane %v2165, 6
        %v2286 = vrot.slane %v2166, 2
        %v2287 = vrot.slane %v2166, 4
        %v2288 = vrot.slane %v2166, 6
        %v2289 = vrot.slane %v2167, 2
        %v2290 = vrot.slane %v2167, 4
        %v2291 = vrot.slane %v2167, 6
        %v2292 = vrot.slane %v2168, 2
        %v2293 = vrot.slane %v2168, 4
        %v2294 = vrot.slane %v2168, 6
        %v2295 = vrot.slane %v2169, 2
        %v2296 = vrot.slane %v2169, 4
        %v2297 = vrot.slane %v2169, 6
        %vm2394 = vcmask 254976
        %v2395 = vsel %vm2394, %v2138, -inf
        %v2396 = vrot.slane %v2395, 4
        %v2397 = vmax.f32 %v2395, %v2396
        %v2398 = vrot.slane %v2397, 2
        %v2399 = vmax.f32 %v2397, %v2398
        %v2400 = vrot.slane %v2399, 1
        %v2401 = vmax.f32 %v2399, %v2400
        %v2402 = vsel %vm2394, %v2202, -inf
        %v2403 = vrot.slane %v2402, 4
        %v2404 = vmax.f32 %v2402, %v2403
        %v2405 = vrot.slane %v2404, 2
        %v2406 = vmax.f32 %v2404, %v2405
        %v2407 = vrot.slane %v2406, 1
        %v2408 = vmax.f32 %v2406, %v2407
        %v2409 = vsel %vm2394, %v2203, -inf
        %v2410 = vrot.slane %v2409, 4
        %v2411 = vmax.f32 %v2409, %v2410
        %v2412 = vrot.slane %v2411, 2
        %v2413 = vmax.f32 %v2411, %v2412
        %v2414 = vrot.slane %v2413, 1
        %v2415 = vmax.f32 %v2413, %v2414
        %v2416 = vsel %vm2394, %v2204, -inf
        %v2417 = vrot.slane %v2416, 4
        %v2418 = vmax.f32 %v2416, %v2417
        %v2419 = vrot.slane %v2418, 2
        %v2420 = vmax.f32 %v2418, %v2419
        %v2421 = vrot.slane %v2420, 1
        %v2422 = vmax.f32 %v2420, %v2421
        %v2423 = vsel %vm2394, %v2139, -inf
        %v2424 = vrot.slane %v2423, 4
        %v2425 = vmax.f32 %v2423, %v2424
        %v2426 = vrot.slane %v2425, 2
        %v2427 = vmax.f32 %v2425, %v2426
        %v2428 = vrot.slane %v2427, 1
        %v2429 = vmax.f32 %v2427, %v2428
        %v2430 = vsel %vm2394, %v2205, -inf
        %v2431 = vrot.slane %v2430, 4
        %v2432 = vmax.f32 %v2430, %v2431
        %v2433 = vrot.slane %v2432, 2
        %v2434 = vmax.f32 %v2432, %v2433
        %v2435 = vrot.slane %v2434, 1
        %v2436 = vmax.f32 %v2434, %v2435
        %v2437 = vsel %vm2394, %v2206, -inf
        %v2438 = vrot.slane %v2437, 4
        %v2439 = vmax.f32 %v2437, %v2438
        %v2440 = vrot.slane %v2439, 2
        %v2441 = vmax.f32 %v2439, %v2440
        %v2442 = vrot.slane %v2441, 1
        %v2443 = vmax.f32 %v2441, %v2442
        %v2444 = vsel %vm2394, %v2207, -inf
        %v2445 = vrot.slane %v2444, 4
        %v2446 = vmax.f32 %v2444, %v2445
        %v2447 = vrot.slane %v2446, 2
        %v2448 = vmax.f32 %v2446, %v2447
        %v2449 = vrot.slane %v2448, 1
        %v2450 = vmax.f32 %v2448, %v2449
        %v2451 = vsel %vm2394, %v2140, -inf
        %v2452 = vrot.slane %v2451, 4
        %v2453 = vmax.f32 %v2451, %v2452
        %v2454 = vrot.slane %v2453, 2
        %v2455 = vmax.f32 %v2453, %v2454
        %v2456 = vrot.slane %v2455, 1
        %v2457 = vmax.f32 %v2455, %v2456
        %v2458 = vsel %vm2394, %v2208, -inf
        %v2459 = vrot.slane %v2458, 4
        %v2460 = vmax.f32 %v2458, %v2459
        %v2461 = vrot.slane %v2460, 2
        %v2462 = vmax.f32 %v2460, %v2461
        %v2463 = vrot.slane %v2462, 1
        %v2464 = vmax.f32 %v2462, %v2463
        %v2465 = vsel %vm2394, %v2209, -inf
        %v2466 = vrot.slane %v2465, 4
        %v2467 = vmax.f32 %v2465, %v2466
        %v2468 = vrot.slane %v2467, 2
        %v2469 = vmax.f32 %v2467, %v2468
        %v2470 = vrot.slane %v2469, 1
        %v2471 = vmax.f32 %v2469, %v2470
        %v2472 = vsel %vm2394, %v2210, -inf
        %v2473 = vrot.slane %v2472, 4
        %v2474 = vmax.f32 %v2472, %v2473
        %v2475 = vrot.slane %v2474, 2
        %v2476 = vmax.f32 %v2474, %v2475
        %v2477 = vrot.slane %v2476, 1
        %v2478 = vmax.f32 %v2476, %v2477
        %v2479 = vsel %vm2394, %v2141, -inf
        %v2480 = vrot.slane %v2479, 4
        %v2481 = vmax.f32 %v2479, %v2480
        %v2482 = vrot.slane %v2481, 2
        %v2483 = vmax.f32 %v2481, %v2482
        %v2484 = vrot.slane %v2483, 1
        %v2485 = vmax.f32 %v2483, %v2484
        %v2486 = vsel %vm2394, %v2211, -inf
        %v2487 = vrot.slane %v2486, 4
        %v2488 = vmax.f32 %v2486, %v2487
        %v2489 = vrot.slane %v2488, 2
        %v2490 = vmax.f32 %v2488, %v2489
        %v2491 = vrot.slane %v2490, 1
        %v2492 = vmax.f32 %v2490, %v2491
        %v2493 = vsel %vm2394, %v2212, -inf
        %v2494 = vrot.slane %v2493, 4
        %v2495 = vmax.f32 %v2493, %v2494
        %v2496 = vrot.slane %v2495, 2
        %v2497 = vmax.f32 %v2495, %v2496
        %v2498 = vrot.slane %v2497, 1
        %v2499 = vmax.f32 %v2497, %v2498
        %v2500 = vsel %vm2394, %v2213, -inf
        %v2501 = vrot.slane %v2500, 4
        %v2502 = vmax.f32 %v2500, %v2501
        %v2503 = vrot.slane %v2502, 2
        %v2504 = vmax.f32 %v2502, %v2503
        %v2505 = vrot.slane %v2504, 1
        %v2506 = vmax.f32 %v2504, %v2505
        %v2507 = vsel %vm2394, %v2142, -inf
        %v2508 = vrot.slane %v2507, 4
        %v2509 = vmax.f32 %v2507, %v2508
        %v2510 = vrot.slane %v2509, 2
        %v2511 = vmax.f32 %v2509, %v2510
        %v2512 = vrot.slane %v2511, 1
        %v2513 = vmax.f32 %v2511, %v2512
        %v2514 = vsel %vm2394, %v2214, -inf
        %v2515 = vrot.slane %v2514, 4
        %v2516 = vmax.f32 %v2514, %v2515
        %v2517 = vrot.slane %v2516, 2
        %v2518 = vmax.f32 %v2516, %v2517
        %v2519 = vrot.slane %v2518, 1
        %v2520 = vmax.f32 %v2518, %v2519
        %v2521 = vsel %vm2394, %v2215, -inf
        %v2522 = vrot.slane %v2521, 4
        %v2523 = vmax.f32 %v2521, %v2522
        %v2524 = vrot.slane %v2523, 2
        %v2525 = vmax.f32 %v2523, %v2524
        %v2526 = vrot.slane %v2525, 1
        %v2527 = vmax.f32 %v2525, %v2526
        %v2528 = vsel %vm2394, %v2216, -inf
        %v2529 = vrot.slane %v2528, 4
        %v2530 = vmax.f32 %v2528, %v2529
        %v2531 = vrot.slane %v2530, 2
        %v2532 = vmax.f32 %v2530, %v2531
        %v2533 = vrot.slane %v2532, 1
        %v2534 = vmax.f32 %v2532, %v2533
        %v2535 = vsel %vm2394, %v2143, -inf
        %v2536 = vrot.slane %v2535, 4
        %v2537 = vmax.f32 %v2535, %v2536
        %v2538 = vrot.slane %v2537, 2
        %v2539 = vmax.f32 %v2537, %v2538
        %v2540 = vrot.slane %v2539, 1
        %v2541 = vmax.f32 %v2539, %v2540
        %v2542 = vsel %vm2394, %v2217, -inf
        %v2543 = vrot.slane %v2542, 4
        %v2544 = vmax.f32 %v2542, %v2543
        %v2545 = vrot.slane %v2544, 2
        %v2546 = vmax.f32 %v2544, %v2545
        %v2547 = vrot.slane %v2546, 1
        %v2548 = vmax.f32 %v2546, %v2547
        %v2549 = vsel %vm2394, %v2218, -inf
        %v2550 = vrot.slane %v2549, 4
        %v2551 = vmax.f32 %v2549, %v2550
        %v2552 = vrot.slane %v2551, 2
        %v2553 = vmax.f32 %v2551, %v2552
        %v2554 = vrot.slane %v2553, 1
        %v2555 = vmax.f32 %v2553, %v2554
        %v2556 = vsel %vm2394, %v2219, -inf
        %v2557 = vrot.slane %v2556, 4
        %v2558 = vmax.f32 %v2556, %v2557
        %v2559 = vrot.slane %v2558, 2
        %v2560 = vmax.f32 %v2558, %v2559
        %v2561 = vrot.slane %v2560, 1
        %v2562 = vmax.f32 %v2560, %v2561
        %v2563 = vsel %vm2394, %v2144, -inf
        %v2564 = vrot.slane %v2563, 4
        %v2565 = vmax.f32 %v2563, %v2564
        %v2566 = vrot.slane %v2565, 2
        %v2567 = vmax.f32 %v2565, %v2566
        %v2568 = vrot.slane %v2567, 1
        %v2569 = vmax.f32 %v2567, %v2568
        %v2570 = vsel %vm2394, %v2220, -inf
        %v2571 = vrot.slane %v2570, 4
        %v2572 = vmax.f32 %v2570, %v2571
        %v2573 = vrot.slane %v2572, 2
        %v2574 = vmax.f32 %v2572, %v2573
        %v2575 = vrot.slane %v2574, 1
        %v2576 = vmax.f32 %v2574, %v2575
        %v2577 = vsel %vm2394, %v2221, -inf
        %v2578 = vrot.slane %v2577, 4
        %v2579 = vmax.f32 %v2577, %v2578
        %v2580 = vrot.slane %v2579, 2
        %v2581 = vmax.f32 %v2579, %v2580
        %v2582 = vrot.slane %v2581, 1
        %v2583 = vmax.f32 %v2581, %v2582
        %v2584 = vsel %vm2394, %v2222, -inf
        %v2585 = vrot.slane %v2584, 4
        %v2586 = vmax.f32 %v2584, %v2585
        %v2587 = vrot.slane %v2586, 2
        %v2588 = vmax.f32 %v2586, %v2587
        %v2589 = vrot.slane %v2588, 1
        %v2590 = vmax.f32 %v2588, %v2589
        %v2591 = vsel %vm2394, %v2145, -inf
        %v2592 = vrot.slane %v2591, 4
        %v2593 = vmax.f32 %v2591, %v2592
        %v2594 = vrot.slane %v2593, 2
        %v2595 = vmax.f32 %v2593, %v2594
        %v2596 = vrot.slane %v2595, 1
        %v2597 = vmax.f32 %v2595, %v2596
        %v2598 = vsel %vm2394, %v2223, -inf
        %v2599 = vrot.slane %v2598, 4
        %v2600 = vmax.f32 %v2598, %v2599
        %v2601 = vrot.slane %v2600, 2
        %v2602 = vmax.f32 %v2600, %v2601
        %v2603 = vrot.slane %v2602, 1
        %v2604 = vmax.f32 %v2602, %v2603
        %v2605 = vsel %vm2394, %v2224, -inf
        %v2606 = vrot.slane %v2605, 4
        %v2607 = vmax.f32 %v2605, %v2606
        %v2608 = vrot.slane %v2607, 2
        %v2609 = vmax.f32 %v2607, %v2608
        %v2610 = vrot.slane %v2609, 1
        %v2611 = vmax.f32 %v2609, %v2610
        %v2612 = vsel %vm2394, %v2225, -inf
        %v2613 = vrot.slane %v2612, 4
        %v2614 = vmax.f32 %v2612, %v2613
        %v2615 = vrot.slane %v2614, 2
        %v2616 = vmax.f32 %v2614, %v2615
        %v2617 = vrot.slane %v2616, 1
        %v2618 = vmax.f32 %v2616, %v2617
        %v2619 = vsel %vm2394, %v2146, -inf
        %v2620 = vrot.slane %v2619, 4
        %v2621 = vmax.f32 %v2619, %v2620
        %v2622 = vrot.slane %v2621, 2
        %v2623 = vmax.f32 %v2621, %v2622
        %v2624 = vrot.slane %v2623, 1
        %v2625 = vmax.f32 %v2623, %v2624
        %v2626 = vsel %vm2394, %v2226, -inf
        %v2627 = vrot.slane %v2626, 4
        %v2628 = vmax.f32 %v2626, %v2627
        %v2629 = vrot.slane %v2628, 2
        %v2630 = vmax.f32 %v2628, %v2629
        %v2631 = vrot.slane %v2630, 1
        %v2632 = vmax.f32 %v2630, %v2631
        %v2633 = vsel %vm2394, %v2227, -inf
        %v2634 = vrot.slane %v2633, 4
        %v2635 = vmax.f32 %v2633, %v2634
        %v2636 = vrot.slane %v2635, 2
        %v2637 = vmax.f32 %v2635, %v2636
        %v2638 = vrot.slane %v2637, 1
        %v2639 = vmax.f32 %v2637, %v2638
        %v2640 = vsel %vm2394, %v2228, -inf
        %v2641 = vrot.slane %v2640, 4
        %v2642 = vmax.f32 %v2640, %v2641
        %v2643 = vrot.slane %v2642, 2
        %v2644 = vmax.f32 %v2642, %v2643
        %v2645 = vrot.slane %v2644, 1
        %v2646 = vmax.f32 %v2644, %v2645
        %v2647 = vsel %vm2394, %v2147, -inf
        %v2648 = vrot.slane %v2647, 4
        %v2649 = vmax.f32 %v2647, %v2648
        %v2650 = vrot.slane %v2649, 2
        %v2651 = vmax.f32 %v2649, %v2650
        %v2652 = vrot.slane %v2651, 1
        %v2653 = vmax.f32 %v2651, %v2652
        %v2654 = vsel %vm2394, %v2229, -inf
        %v2655 = vrot.slane %v2654, 4
        %v2656 = vmax.f32 %v2654, %v2655
        %v2657 = vrot.slane %v2656, 2
        %v2658 = vmax.f32 %v2656, %v2657
        %v2659 = vrot.slane %v2658, 1
        %v2660 = vmax.f32 %v2658, %v2659
        %v2661 = vsel %vm2394, %v2230, -inf
        %v2662 = vrot.slane %v2661, 4
        %v2663 = vmax.f32 %v2661, %v2662
        %v2664 = vrot.slane %v2663, 2
        %v2665 = vmax.f32 %v2663, %v2664
        %v2666 = vrot.slane %v2665, 1
        %v2667 = vmax.f32 %v2665, %v2666
        %v2668 = vsel %vm2394, %v2231, -inf
        %v2669 = vrot.slane %v2668, 4
        %v2670 = vmax.f32 %v2668, %v2669
        %v2671 = vrot.slane %v2670, 2
        %v2672 = vmax.f32 %v2670, %v2671
        %v2673 = vrot.slane %v2672, 1
        %v2674 = vmax.f32 %v2672, %v2673
        %v2675 = vsel %vm2394, %v2148, -inf
        %v2676 = vrot.slane %v2675, 4
        %v2677 = vmax.f32 %v2675, %v2676
        %v2678 = vrot.slane %v2677, 2
        %v2679 = vmax.f32 %v2677, %v2678
        %v2680 = vrot.slane %v2679, 1
        %v2681 = vmax.f32 %v2679, %v2680
        %v2682 = vsel %vm2394, %v2232, -inf
        %v2683 = vrot.slane %v2682, 4
        %v2684 = vmax.f32 %v2682, %v2683
        %v2685 = vrot.slane %v2684, 2
        %v2686 = vmax.f32 %v2684, %v2685
        %v2687 = vrot.slane %v2686, 1
        %v2688 = vmax.f32 %v2686, %v2687
        %v2689 = vsel %vm2394, %v2233, -inf
        %v2690 = vrot.slane %v2689, 4
        %v2691 = vmax.f32 %v2689, %v2690
        %v2692 = vrot.slane %v2691, 2
        %v2693 = vmax.f32 %v2691, %v2692
        %v2694 = vrot.slane %v2693, 1
        %v2695 = vmax.f32 %v2693, %v2694
        %v2696 = vsel %vm2394, %v2234, -inf
        %v2697 = vrot.slane %v2696, 4
        %v2698 = vmax.f32 %v2696, %v2697
        %v2699 = vrot.slane %v2698, 2
        %v2700 = vmax.f32 %v2698, %v2699
        %v2701 = vrot.slane %v2700, 1
        %v2702 = vmax.f32 %v2700, %v2701
        %v2703 = vsel %vm2394, %v2149, -inf
        %v2704 = vrot.slane %v2703, 4
        %v2705 = vmax.f32 %v2703, %v2704
        %v2706 = vrot.slane %v2705, 2
        %v2707 = vmax.f32 %v2705, %v2706
        %v2708 = vrot.slane %v2707, 1
        %v2709 = vmax.f32 %v2707, %v2708
        %v2710 = vsel %vm2394, %v2235, -inf
        %v2711 = vrot.slane %v2710, 4
        %v2712 = vmax.f32 %v2710, %v2711
        %v2713 = vrot.slane %v2712, 2
        %v2714 = vmax.f32 %v2712, %v2713
        %v2715 = vrot.slane %v2714, 1
        %v2716 = vmax.f32 %v2714, %v2715
        %v2717 = vsel %vm2394, %v2236, -inf
        %v2718 = vrot.slane %v2717, 4
        %v2719 = vmax.f32 %v2717, %v2718
        %v2720 = vrot.slane %v2719, 2
        %v2721 = vmax.f32 %v2719, %v2720
        %v2722 = vrot.slane %v2721, 1
        %v2723 = vmax.f32 %v2721, %v2722
        %v2724 = vsel %vm2394, %v2237, -inf
        %v2725 = vrot.slane %v2724, 4
        %v2726 = vmax.f32 %v2724, %v2725
        %v2727 = vrot.slane %v2726, 2
        %v2728 = vmax.f32 %v2726, %v2727
        %v2729 = vrot.slane %v2728, 1
        %v2730 = vmax.f32 %v2728, %v2729
        %v2731 = vsel %vm2394, %v2150, -inf
        %v2732 = vrot.slane %v2731, 4
        %v2733 = vmax.f32 %v2731, %v2732
        %v2734 = vrot.slane %v2733, 2
        %v2735 = vmax.f32 %v2733, %v2734
        %v2736 = vrot.slane %v2735, 1
        %v2737 = vmax.f32 %v2735, %v2736
        %v2738 = vsel %vm2394, %v2238, -inf
        %v2739 = vrot.slane %v2738, 4
        %v2740 = vmax.f32 %v2738, %v2739
        %v2741 = vrot.slane %v2740, 2
        %v2742 = vmax.f32 %v2740, %v2741
        %v2743 = vrot.slane %v2742, 1
        %v2744 = vmax.f32 %v2742, %v2743
        %v2745 = vsel %vm2394, %v2239, -inf
        %v2746 = vrot.slane %v2745, 4
        %v2747 = vmax.f32 %v2745, %v2746
        %v2748 = vrot.slane %v2747, 2
        %v2749 = vmax.f32 %v2747, %v2748
        %v2750 = vrot.slane %v2749, 1
        %v2751 = vmax.f32 %v2749, %v2750
        %v2752 = vsel %vm2394, %v2240, -inf
        %v2753 = vrot.slane %v2752, 4
        %v2754 = vmax.f32 %v2752, %v2753
        %v2755 = vrot.slane %v2754, 2
        %v2756 = vmax.f32 %v2754, %v2755
        %v2757 = vrot.slane %v2756, 1
        %v2758 = vmax.f32 %v2756, %v2757
        %v2759 = vsel %vm2394, %v2151, -inf
        %v2760 = vrot.slane %v2759, 4
        %v2761 = vmax.f32 %v2759, %v2760
        %v2762 = vrot.slane %v2761, 2
        %v2763 = vmax.f32 %v2761, %v2762
        %v2764 = vrot.slane %v2763, 1
        %v2765 = vmax.f32 %v2763, %v2764
        %v2766 = vsel %vm2394, %v2241, -inf
        %v2767 = vrot.slane %v2766, 4
        %v2768 = vmax.f32 %v2766, %v2767
        %v2769 = vrot.slane %v2768, 2
        %v2770 = vmax.f32 %v2768, %v2769
        %v2771 = vrot.slane %v2770, 1
        %v2772 = vmax.f32 %v2770, %v2771
        %v2773 = vsel %vm2394, %v2242, -inf
        %v2774 = vrot.slane %v2773, 4
        %v2775 = vmax.f32 %v2773, %v2774
        %v2776 = vrot.slane %v2775, 2
        %v2777 = vmax.f32 %v2775, %v2776
        %v2778 = vrot.slane %v2777, 1
        %v2779 = vmax.f32 %v2777, %v2778
        %v2780 = vsel %vm2394, %v2243, -inf
        %v2781 = vrot.slane %v2780, 4
        %v2782 = vmax.f32 %v2780, %v2781
        %v2783 = vrot.slane %v2782, 2
        %v2784 = vmax.f32 %v2782, %v2783
        %v2785 = vrot.slane %v2784, 1
        %v2786 = vmax.f32 %v2784, %v2785
        %v2787 = vsel %vm2394, %v2152, -inf
        %v2788 = vrot.slane %v2787, 4
        %v2789 = vmax.f32 %v2787, %v2788
        %v2790 = vrot.slane %v2789, 2
        %v2791 = vmax.f32 %v2789, %v2790
        %v2792 = vrot.slane %v2791, 1
        %v2793 = vmax.f32 %v2791, %v2792
        %v2794 = vsel %vm2394, %v2244, -inf
        %v2795 = vrot.slane %v2794, 4
        %v2796 = vmax.f32 %v2794, %v2795
        %v2797 = vrot.slane %v2796, 2
        %v2798 = vmax.f32 %v2796, %v2797
        %v2799 = vrot.slane %v2798, 1
        %v2800 = vmax.f32 %v2798, %v2799
        %v2801 = vsel %vm2394, %v2245, -inf
        %v2802 = vrot.slane %v2801, 4
        %v2803 = vmax.f32 %v2801, %v2802
        %v2804 = vrot.slane %v2803, 2
        %v2805 = vmax.f32 %v2803, %v2804
        %v2806 = vrot.slane %v2805, 1
        %v2807 = vmax.f32 %v2805, %v2806
        %v2808 = vsel %vm2394, %v2246, -inf
        %v2809 = vrot.slane %v2808, 4
        %v2810 = vmax.f32 %v2808, %v2809
        %v2811 = vrot.slane %v2810, 2
        %v2812 = vmax.f32 %v2810, %v2811
        %v2813 = vrot.slane %v2812, 1
        %v2814 = vmax.f32 %v2812, %v2813
        %v2815 = vsel %vm2394, %v2153, -inf
        %v2816 = vrot.slane %v2815, 4
        %v2817 = vmax.f32 %v2815, %v2816
        %v2818 = vrot.slane %v2817, 2
        %v2819 = vmax.f32 %v2817, %v2818
        %v2820 = vrot.slane %v2819, 1
        %v2821 = vmax.f32 %v2819, %v2820
        %v2822 = vsel %vm2394, %v2247, -inf
        %v2823 = vrot.slane %v2822, 4
        %v2824 = vmax.f32 %v2822, %v2823
        %v2825 = vrot.slane %v2824, 2
        %v2826 = vmax.f32 %v2824, %v2825
        %v2827 = vrot.slane %v2826, 1
        %v2828 = vmax.f32 %v2826, %v2827
        %v2829 = vsel %vm2394, %v2248, -inf
        %v2830 = vrot.slane %v2829, 4
        %v2831 = vmax.f32 %v2829, %v2830
        %v2832 = vrot.slane %v2831, 2
        %v2833 = vmax.f32 %v2831, %v2832
        %v2834 = vrot.slane %v2833, 1
        %v2835 = vmax.f32 %v2833, %v2834
        %v2836 = vsel %vm2394, %v2249, -inf
        %v2837 = vrot.slane %v2836, 4
        %v2838 = vmax.f32 %v2836, %v2837
        %v2839 = vrot.slane %v2838, 2
        %v2840 = vmax.f32 %v2838, %v2839
        %v2841 = vrot.slane %v2840, 1
        %v2842 = vmax.f32 %v2840, %v2841
        %v2843 = vsel %vm2394, %v2154, -inf
        %v2844 = vrot.slane %v2843, 4
        %v2845 = vmax.f32 %v2843, %v2844
        %v2846 = vrot.slane %v2845, 2
        %v2847 = vmax.f32 %v2845, %v2846
        %v2848 = vrot.slane %v2847, 1
        %v2849 = vmax.f32 %v2847, %v2848
        %v2850 = vsel %vm2394, %v2250, -inf
        %v2851 = vrot.slane %v2850, 4
        %v2852 = vmax.f32 %v2850, %v2851
        %v2853 = vrot.slane %v2852, 2
        %v2854 = vmax.f32 %v2852, %v2853
        %v2855 = vrot.slane %v2854, 1
        %v2856 = vmax.f32 %v2854, %v2855
        %v2857 = vsel %vm2394, %v2251, -inf
        %v2858 = vrot.slane %v2857, 4
        %v2859 = vmax.f32 %v2857, %v2858
        %v2860 = vrot.slane %v2859, 2
        %v2861 = vmax.f32 %v2859, %v2860
        %v2862 = vrot.slane %v2861, 1
        %v2863 = vmax.f32 %v2861, %v2862
        %v2864 = vsel %vm2394, %v2252, -inf
        %v2865 = vrot.slane %v2864, 4
        %v2866 = vmax.f32 %v2864, %v2865
        %v2867 = vrot.slane %v2866, 2
        %v2868 = vmax.f32 %v2866, %v2867
        %v2869 = vrot.slane %v2868, 1
        %v2870 = vmax.f32 %v2868, %v2869
        %v2871 = vsel %vm2394, %v2155, -inf
        %v2872 = vrot.slane %v2871, 4
        %v2873 = vmax.f32 %v2871, %v2872
        %v2874 = vrot.slane %v2873, 2
        %v2875 = vmax.f32 %v2873, %v2874
        %v2876 = vrot.slane %v2875, 1
        %v2877 = vmax.f32 %v2875, %v2876
        %v2878 = vsel %vm2394, %v2253, -inf
        %v2879 = vrot.slane %v2878, 4
        %v2880 = vmax.f32 %v2878, %v2879
        %v2881 = vrot.slane %v2880, 2
        %v2882 = vmax.f32 %v2880, %v2881
        %v2883 = vrot.slane %v2882, 1
        %v2884 = vmax.f32 %v2882, %v2883
        %v2885 = vsel %vm2394, %v2254, -inf
        %v2886 = vrot.slane %v2885, 4
        %v2887 = vmax.f32 %v2885, %v2886
        %v2888 = vrot.slane %v2887, 2
        %v2889 = vmax.f32 %v2887, %v2888
        %v2890 = vrot.slane %v2889, 1
        %v2891 = vmax.f32 %v2889, %v2890
        %v2892 = vsel %vm2394, %v2255, -inf
        %v2893 = vrot.slane %v2892, 4
        %v2894 = vmax.f32 %v2892, %v2893
        %v2895 = vrot.slane %v2894, 2
        %v2896 = vmax.f32 %v2894, %v2895
        %v2897 = vrot.slane %v2896, 1
        %v2898 = vmax.f32 %v2896, %v2897
        %v2899 = vsel %vm2394, %v2156, -inf
        %v2900 = vrot.slane %v2899, 4
        %v2901 = vmax.f32 %v2899, %v2900
        %v2902 = vrot.slane %v2901, 2
        %v2903 = vmax.f32 %v2901, %v2902
        %v2904 = vrot.slane %v2903, 1
        %v2905 = vmax.f32 %v2903, %v2904
        %v2906 = vsel %vm2394, %v2256, -inf
        %v2907 = vrot.slane %v2906, 4
        %v2908 = vmax.f32 %v2906, %v2907
        %v2909 = vrot.slane %v2908, 2
        %v2910 = vmax.f32 %v2908, %v2909
        %v2911 = vrot.slane %v2910, 1
        %v2912 = vmax.f32 %v2910, %v2911
        %v2913 = vsel %vm2394, %v2257, -inf
        %v2914 = vrot.slane %v2913, 4
        %v2915 = vmax.f32 %v2913, %v2914
        %v2916 = vrot.slane %v2915, 2
        %v2917 = vmax.f32 %v2915, %v2916
        %v2918 = vrot.slane %v2917, 1
        %v2919 = vmax.f32 %v2917, %v2918
        %v2920 = vsel %vm2394, %v2258, -inf
        %v2921 = vrot.slane %v2920, 4
        %v2922 = vmax.f32 %v2920, %v2921
        %v2923 = vrot.slane %v2922, 2
        %v2924 = vmax.f32 %v2922, %v2923
        %v2925 = vrot.slane %v2924, 1
        %v2926 = vmax.f32 %v2924, %v2925
        %v2927 = vsel %vm2394, %v2157, -inf
        %v2928 = vrot.slane %v2927, 4
        %v2929 = vmax.f32 %v2927, %v2928
        %v2930 = vrot.slane %v2929, 2
        %v2931 = vmax.f32 %v2929, %v2930
        %v2932 = vrot.slane %v2931, 1
        %v2933 = vmax.f32 %v2931, %v2932
        %v2934 = vsel %vm2394, %v2259, -inf
        %v2935 = vrot.slane %v2934, 4
        %v2936 = vmax.f32 %v2934, %v2935
        %v2937 = vrot.slane %v2936, 2
        %v2938 = vmax.f32 %v2936, %v2937
        %v2939 = vrot.slane %v2938, 1
        %v2940 = vmax.f32 %v2938, %v2939
        %v2941 = vsel %vm2394, %v2260, -inf
        %v2942 = vrot.slane %v2941, 4
        %v2943 = vmax.f32 %v2941, %v2942
        %v2944 = vrot.slane %v2943, 2
        %v2945 = vmax.f32 %v2943, %v2944
        %v2946 = vrot.slane %v2945, 1
        %v2947 = vmax.f32 %v2945, %v2946
        %v2948 = vsel %vm2394, %v2261, -inf
        %v2949 = vrot.slane %v2948, 4
        %v2950 = vmax.f32 %v2948, %v2949
        %v2951 = vrot.slane %v2950, 2
        %v2952 = vmax.f32 %v2950, %v2951
        %v2953 = vrot.slane %v2952, 1
        %v2954 = vmax.f32 %v2952, %v2953
        %v2955 = vsel %vm2394, %v2158, -inf
        %v2956 = vrot.slane %v2955, 4
        %v2957 = vmax.f32 %v2955, %v2956
        %v2958 = vrot.slane %v2957, 2
        %v2959 = vmax.f32 %v2957, %v2958
        %v2960 = vrot.slane %v2959, 1
        %v2961 = vmax.f32 %v2959, %v2960
        %v2962 = vsel %vm2394, %v2262, -inf
        %v2963 = vrot.slane %v2962, 4
        %v2964 = vmax.f32 %v2962, %v2963
        %v2965 = vrot.slane %v2964, 2
        %v2966 = vmax.f32 %v2964, %v2965
        %v2967 = vrot.slane %v2966, 1
        %v2968 = vmax.f32 %v2966, %v2967
        %v2969 = vsel %vm2394, %v2263, -inf
        %v2970 = vrot.slane %v2969, 4
        %v2971 = vmax.f32 %v2969, %v2970
        %v2972 = vrot.slane %v2971, 2
        %v2973 = vmax.f32 %v2971, %v2972
        %v2974 = vrot.slane %v2973, 1
        %v2975 = vmax.f32 %v2973, %v2974
        %v2976 = vsel %vm2394, %v2264, -inf
        %v2977 = vrot.slane %v2976, 4
        %v2978 = vmax.f32 %v2976, %v2977
        %v2979 = vrot.slane %v2978, 2
        %v2980 = vmax.f32 %v2978, %v2979
        %v2981 = vrot.slane %v2980, 1
        %v2982 = vmax.f32 %v2980, %v2981
        %v2983 = vsel %vm2394, %v2159, -inf
        %v2984 = vrot.slane %v2983, 4
        %v2985 = vmax.f32 %v2983, %v2984
        %v2986 = vrot.slane %v2985, 2
        %v2987 = vmax.f32 %v2985, %v2986
        %v2988 = vrot.slane %v2987, 1
        %v2989 = vmax.f32 %v2987, %v2988
        %v2990 = vsel %vm2394, %v2265, -inf
        %v2991 = vrot.slane %v2990, 4
        %v2992 = vmax.f32 %v2990, %v2991
        %v2993 = vrot.slane %v2992, 2
        %v2994 = vmax.f32 %v2992, %v2993
        %v2995 = vrot.slane %v2994, 1
        %v2996 = vmax.f32 %v2994, %v2995
        %v2997 = vsel %vm2394, %v2266, -inf
        %v2998 = vrot.slane %v2997, 4
        %v2999 = vmax.f32 %v2997, %v2998
        %v3000 = vrot.slane %v2999, 2
        %v3001 = vmax.f32 %v2999, %v3000
        %v3002 = vrot.slane %v3001, 1
        %v3003 = vmax.f32 %v3001, %v3002
        %v3004 = vsel %vm2394, %v2267, -inf
        %v3005 = vrot.slane %v3004, 4
        %v3006 = vmax.f32 %v3004, %v3005
        %v3007 = vrot.slane %v3006, 2
        %v3008 = vmax.f32 %v3006, %v3007
        %v3009 = vrot.slane %v3008, 1
        %v3010 = vmax.f32 %v3008, %v3009
        %v3011 = vsel %vm2394, %v2160, -inf
        %v3012 = vrot.slane %v3011, 4
        %v3013 = vmax.f32 %v3011, %v3012
        %v3014 = vrot.slane %v3013, 2
        %v3015 = vmax.f32 %v3013, %v3014
        %v3016 = vrot.slane %v3015, 1
        %v3017 = vmax.f32 %v3015, %v3016
        %v3018 = vsel %vm2394, %v2268, -inf
        %v3019 = vrot.slane %v3018, 4
        %v3020 = vmax.f32 %v3018, %v3019
        %v3021 = vrot.slane %v3020, 2
        %v3022 = vmax.f32 %v3020, %v3021
        %v3023 = vrot.slane %v3022, 1
        %v3024 = vmax.f32 %v3022, %v3023
        %v3025 = vsel %vm2394, %v2269, -inf
        %v3026 = vrot.slane %v3025, 4
        %v3027 = vmax.f32 %v3025, %v3026
        %v3028 = vrot.slane %v3027, 2
        %v3029 = vmax.f32 %v3027, %v3028
        %v3030 = vrot.slane %v3029, 1
        %v3031 = vmax.f32 %v3029, %v3030
        %v3032 = vsel %vm2394, %v2270, -inf
        %v3033 = vrot.slane %v3032, 4
        %v3034 = vmax.f32 %v3032, %v3033
        %v3035 = vrot.slane %v3034, 2
        %v3036 = vmax.f32 %v3034, %v3035
        %v3037 = vrot.slane %v3036, 1
        %v3038 = vmax.f32 %v3036, %v3037
        %v3039 = vsel %vm2394, %v2161, -inf
        %v3040 = vrot.slane %v3039, 4
        %v3041 = vmax.f32 %v3039, %v3040
        %v3042 = vrot.slane %v3041, 2
        %v3043 = vmax.f32 %v3041, %v3042
        %v3044 = vrot.slane %v3043, 1
        %v3045 = vmax.f32 %v3043, %v3044
        %v3046 = vsel %vm2394, %v2271, -inf
        %v3047 = vrot.slane %v3046, 4
        %v3048 = vmax.f32 %v3046, %v3047
        %v3049 = vrot.slane %v3048, 2
        %v3050 = vmax.f32 %v3048, %v3049
        %v3051 = vrot.slane %v3050, 1
        %v3052 = vmax.f32 %v3050, %v3051
        %v3053 = vsel %vm2394, %v2272, -inf
        %v3054 = vrot.slane %v3053, 4
        %v3055 = vmax.f32 %v3053, %v3054
        %v3056 = vrot.slane %v3055, 2
        %v3057 = vmax.f32 %v3055, %v3056
        %v3058 = vrot.slane %v3057, 1
        %v3059 = vmax.f32 %v3057, %v3058
        %v3060 = vsel %vm2394, %v2273, -inf
        %v3061 = vrot.slane %v3060, 4
        %v3062 = vmax.f32 %v3060, %v3061
        %v3063 = vrot.slane %v3062, 2
        %v3064 = vmax.f32 %v3062, %v3063
        %v3065 = vrot.slane %v3064, 1
        %v3066 = vmax.f32 %v3064, %v3065
        %v3067 = vsel %vm2394, %v2162, -inf
        %v3068 = vrot.slane %v3067, 4
        %v3069 = vmax.f32 %v3067, %v3068
        %v3070 = vrot.slane %v3069, 2
        %v3071 = vmax.f32 %v3069, %v3070
        %v3072 = vrot.slane %v3071, 1
        %v3073 = vmax.f32 %v3071, %v3072
        %v3074 = vsel %vm2394, %v2274, -inf
        %v3075 = vrot.slane %v3074, 4
        %v3076 = vmax.f32 %v3074, %v3075
        %v3077 = vrot.slane %v3076, 2
        %v3078 = vmax.f32 %v3076, %v3077
        %v3079 = vrot.slane %v3078, 1
        %v3080 = vmax.f32 %v3078, %v3079
        %v3081 = vsel %vm2394, %v2275, -inf
        %v3082 = vrot.slane %v3081, 4
        %v3083 = vmax.f32 %v3081, %v3082
        %v3084 = vrot.slane %v3083, 2
        %v3085 = vmax.f32 %v3083, %v3084
        %v3086 = vrot.slane %v3085, 1
        %v3087 = vmax.f32 %v3085, %v3086
        %v3088 = vsel %vm2394, %v2276, -inf
        %v3089 = vrot.slane %v3088, 4
        %v3090 = vmax.f32 %v3088, %v3089
        %v3091 = vrot.slane %v3090, 2
        %v3092 = vmax.f32 %v3090, %v3091
        %v3093 = vrot.slane %v3092, 1
        %v3094 = vmax.f32 %v3092, %v3093
        %v3095 = vsel %vm2394, %v2163, -inf
        %v3096 = vrot.slane %v3095, 4
        %v3097 = vmax.f32 %v3095, %v3096
        %v3098 = vrot.slane %v3097, 2
        %v3099 = vmax.f32 %v3097, %v3098
        %v3100 = vrot.slane %v3099, 1
        %v3101 = vmax.f32 %v3099, %v3100
        %v3102 = vsel %vm2394, %v2277, -inf
        %v3103 = vrot.slane %v3102, 4
        %v3104 = vmax.f32 %v3102, %v3103
        %v3105 = vrot.slane %v3104, 2
        %v3106 = vmax.f32 %v3104, %v3105
        %v3107 = vrot.slane %v3106, 1
        %v3108 = vmax.f32 %v3106, %v3107
        %v3109 = vsel %vm2394, %v2278, -inf
        %v3110 = vrot.slane %v3109, 4
        %v3111 = vmax.f32 %v3109, %v3110
        %v3112 = vrot.slane %v3111, 2
        %v3113 = vmax.f32 %v3111, %v3112
        %v3114 = vrot.slane %v3113, 1
        %v3115 = vmax.f32 %v3113, %v3114
        %v3116 = vsel %vm2394, %v2279, -inf
        %v3117 = vrot.slane %v3116, 4
        %v3118 = vmax.f32 %v3116, %v3117
        %v3119 = vrot.slane %v3118, 2
        %v3120 = vmax.f32 %v3118, %v3119
        %v3121 = vrot.slane %v3120, 1
        %v3122 = vmax.f32 %v3120, %v3121
        %v3123 = vsel %vm2394, %v2164, -inf
        %v3124 = vrot.slane %v3123, 4
        %v3125 = vmax.f32 %v3123, %v3124
        %v3126 = vrot.slane %v3125, 2
        %v3127 = vmax.f32 %v3125, %v3126
        %v3128 = vrot.slane %v3127, 1
        %v3129 = vmax.f32 %v3127, %v3128
        %v3130 = vsel %vm2394, %v2280, -inf
        %v3131 = vrot.slane %v3130, 4
        %v3132 = vmax.f32 %v3130, %v3131
        %v3133 = vrot.slane %v3132, 2
        %v3134 = vmax.f32 %v3132, %v3133
        %v3135 = vrot.slane %v3134, 1
        %v3136 = vmax.f32 %v3134, %v3135
        %v3137 = vsel %vm2394, %v2281, -inf
        %v3138 = vrot.slane %v3137, 4
        %v3139 = vmax.f32 %v3137, %v3138
        %v3140 = vrot.slane %v3139, 2
        %v3141 = vmax.f32 %v3139, %v3140
        %v3142 = vrot.slane %v3141, 1
        %v3143 = vmax.f32 %v3141, %v3142
        %v3144 = vsel %vm2394, %v2282, -inf
        %v3145 = vrot.slane %v3144, 4
        %v3146 = vmax.f32 %v3144, %v3145
        %v3147 = vrot.slane %v3146, 2
        %v3148 = vmax.f32 %v3146, %v3147
        %v3149 = vrot.slane %v3148, 1
        %v3150 = vmax.f32 %v3148, %v3149
        %v3151 = vsel %vm2394, %v2165, -inf
        %v3152 = vrot.slane %v3151, 4
        %v3153 = vmax.f32 %v3151, %v3152
        %v3154 = vrot.slane %v3153, 2
        %v3155 = vmax.f32 %v3153, %v3154
        %v3156 = vrot.slane %v3155, 1
        %v3157 = vmax.f32 %v3155, %v3156
        %v3158 = vsel %vm2394, %v2283, -inf
        %v3159 = vrot.slane %v3158, 4
        %v3160 = vmax.f32 %v3158, %v3159
        %v3161 = vrot.slane %v3160, 2
        %v3162 = vmax.f32 %v3160, %v3161
        %v3163 = vrot.slane %v3162, 1
        %v3164 = vmax.f32 %v3162, %v3163
        %v3165 = vsel %vm2394, %v2284, -inf
        %v3166 = vrot.slane %v3165, 4
        %v3167 = vmax.f32 %v3165, %v3166
        %v3168 = vrot.slane %v3167, 2
        %v3169 = vmax.f32 %v3167, %v3168
        %v3170 = vrot.slane %v3169, 1
        %v3171 = vmax.f32 %v3169, %v3170
        %v3172 = vsel %vm2394, %v2285, -inf
        %v3173 = vrot.slane %v3172, 4
        %v3174 = vmax.f32 %v3172, %v3173
        %v3175 = vrot.slane %v3174, 2
        %v3176 = vmax.f32 %v3174, %v3175
        %v3177 = vrot.slane %v3176, 1
        %v3178 = vmax.f32 %v3176, %v3177
        %v3179 = vsel %vm2394, %v2166, -inf
        %v3180 = vrot.slane %v3179, 4
        %v3181 = vmax.f32 %v3179, %v3180
        %v3182 = vrot.slane %v3181, 2
        %v3183 = vmax.f32 %v3181, %v3182
        %v3184 = vrot.slane %v3183, 1
        %v3185 = vmax.f32 %v3183, %v3184
        %v3186 = vsel %vm2394, %v2286, -inf
        %v3187 = vrot.slane %v3186, 4
        %v3188 = vmax.f32 %v3186, %v3187
        %v3189 = vrot.slane %v3188, 2
        %v3190 = vmax.f32 %v3188, %v3189
        %v3191 = vrot.slane %v3190, 1
        %v3192 = vmax.f32 %v3190, %v3191
        %v3193 = vsel %vm2394, %v2287, -inf
        %v3194 = vrot.slane %v3193, 4
        %v3195 = vmax.f32 %v3193, %v3194
        %v3196 = vrot.slane %v3195, 2
        %v3197 = vmax.f32 %v3195, %v3196
        %v3198 = vrot.slane %v3197, 1
        %v3199 = vmax.f32 %v3197, %v3198
        %v3200 = vsel %vm2394, %v2288, -inf
        %v3201 = vrot.slane %v3200, 4
        %v3202 = vmax.f32 %v3200, %v3201
        %v3203 = vrot.slane %v3202, 2
        %v3204 = vmax.f32 %v3202, %v3203
        %v3205 = vrot.slane %v3204, 1
        %v3206 = vmax.f32 %v3204, %v3205
        %v3207 = vsel %vm2394, %v2167, -inf
        %v3208 = vrot.slane %v3207, 4
        %v3209 = vmax.f32 %v3207, %v3208
        %v3210 = vrot.slane %v3209, 2
        %v3211 = vmax.f32 %v3209, %v3210
        %v3212 = vrot.slane %v3211, 1
        %v3213 = vmax.f32 %v3211, %v3212
        %v3214 = vsel %vm2394, %v2289, -inf
        %v3215 = vrot.slane %v3214, 4
        %v3216 = vmax.f32 %v3214, %v3215
        %v3217 = vrot.slane %v3216, 2
        %v3218 = vmax.f32 %v3216, %v3217
        %v3219 = vrot.slane %v3218, 1
        %v3220 = vmax.f32 %v3218, %v3219
        %v3221 = vsel %vm2394, %v2290, -inf
        %v3222 = vrot.slane %v3221, 4
        %v3223 = vmax.f32 %v3221, %v3222
        %v3224 = vrot.slane %v3223, 2
        %v3225 = vmax.f32 %v3223, %v3224
        %v3226 = vrot.slane %v3225, 1
        %v3227 = vmax.f32 %v3225, %v3226
        %v3228 = vsel %vm2394, %v2291, -inf
        %v3229 = vrot.slane %v3228, 4
        %v3230 = vmax.f32 %v3228, %v3229
        %v3231 = vrot.slane %v3230, 2
        %v3232 = vmax.f32 %v3230, %v3231
        %v3233 = vrot.slane %v3232, 1
        %v3234 = vmax.f32 %v3232, %v3233
        %v3235 = vsel %vm2394, %v2168, -inf
        %v3236 = vrot.slane %v3235, 4
        %v3237 = vmax.f32 %v3235, %v3236
        %v3238 = vrot.slane %v3237, 2
        %v3239 = vmax.f32 %v3237, %v3238
        %v3240 = vrot.slane %v3239, 1
        %v3241 = vmax.f32 %v3239, %v3240
        %v3242 = vsel %vm2394, %v2292, -inf
        %v3243 = vrot.slane %v3242, 4
        %v3244 = vmax.f32 %v3242, %v3243
        %v3245 = vrot.slane %v3244, 2
        %v3246 = vmax.f32 %v3244, %v3245
        %v3247 = vrot.slane %v3246, 1
        %v3248 = vmax.f32 %v3246, %v3247
        %v3249 = vsel %vm2394, %v2293, -inf
        %v3250 = vrot.slane %v3249, 4
        %v3251 = vmax.f32 %v3249, %v3250
        %v3252 = vrot.slane %v3251, 2
        %v3253 = vmax.f32 %v3251, %v3252
        %v3254 = vrot.slane %v3253, 1
        %v3255 = vmax.f32 %v3253, %v3254
        %v3256 = vsel %vm2394, %v2294, -inf
        %v3257 = vrot.slane %v3256, 4
        %v3258 = vmax.f32 %v3256, %v3257
        %v3259 = vrot.slane %v3258, 2
        %v3260 = vmax.f32 %v3258, %v3259
        %v3261 = vrot.slane %v3260, 1
        %v3262 = vmax.f32 %v3260, %v3261
        %v3263 = vsel %vm2394, %v2169, -inf
        %v3264 = vrot.slane %v3263, 4
        %v3265 = vmax.f32 %v3263, %v3264
        %v3266 = vrot.slane %v3265, 2
        %v3267 = vmax.f32 %v3265, %v3266
        %v3268 = vrot.slane %v3267, 1
        %v3269 = vmax.f32 %v3267, %v3268
        %v3270 = vsel %vm2394, %v2295, -inf
        %v3271 = vrot.slane %v3270, 4
        %v3272 = vmax.f32 %v3270, %v3271
        %v3273 = vrot.slane %v3272, 2
        %v3274 = vmax.f32 %v3272, %v3273
        %v3275 = vrot.slane %v3274, 1
        %v3276 = vmax.f32 %v3274, %v3275
        %v3277 = vsel %vm2394, %v2296, -inf
        %v3278 = vrot.slane %v3277, 4
        %v3279 = vmax.f32 %v3277, %v3278
        %v3280 = vrot.slane %v3279, 2
        %v3281 = vmax.f32 %v3279, %v3280
        %v3282 = vrot.slane %v3281, 1
        %v3283 = vmax.f32 %v3281, %v3282
        %v3284 = vsel %vm2394, %v2297, -inf
        %v3285 = vrot.slane %v3284, 4
        %v3286 = vmax.f32 %v3284, %v3285
        %v3287 = vrot.slane %v3286, 2
        %v3288 = vmax.f32 %v3286, %v3287
        %v3289 = vrot.slane %v3288, 1
        %v3290 = vmax.f32 %v3288, %v3289
        %v3291 = vsel %vm1923, %v2401, -inf
        %v3292 = vsel %vm1923, %v2457, -inf
        %v3293 = vmax.f32 %v3291, %v3292
        %v3294 = vsel %vm1923, %v2408, -inf
        %v3295 = vsel %vm1923, %v2464, -inf
        %v3296 = vmax.f32 %v3294, %v3295
        %v3297 = vsel %vm1923, %v2415, -inf
        %v3298 = vsel %vm1923, %v2471, -inf
        %v3299 = vmax.f32 %v3297, %v3298
        %v3300 = vsel %vm1923, %v2422, -inf
        %v3301 = vsel %vm1923, %v2478, -inf
        %v3302 = vmax.f32 %v3300, %v3301
        %v3303 = vsel %vm1923, %v2429, -inf
        %v3304 = vsel %vm1923, %v2485, -inf
        %v3305 = vmax.f32 %v3303, %v3304
        %v3306 = vsel %vm1923, %v2436, -inf
        %v3307 = vsel %vm1923, %v2492, -inf
        %v3308 = vmax.f32 %v3306, %v3307
        %v3309 = vsel %vm1923, %v2443, -inf
        %v3310 = vsel %vm1923, %v2499, -inf
        %v3311 = vmax.f32 %v3309, %v3310
        %v3312 = vsel %vm1923, %v2450, -inf
        %v3313 = vsel %vm1923, %v2506, -inf
        %v3314 = vmax.f32 %v3312, %v3313
        %v3315 = vsel %vm1923, %v2513, -inf
        %v3316 = vsel %vm1923, %v2569, -inf
        %v3317 = vmax.f32 %v3315, %v3316
        %v3318 = vsel %vm1923, %v2520, -inf
        %v3319 = vsel %vm1923, %v2576, -inf
        %v3320 = vmax.f32 %v3318, %v3319
        %v3321 = vsel %vm1923, %v2527, -inf
        %v3322 = vsel %vm1923, %v2583, -inf
        %v3323 = vmax.f32 %v3321, %v3322
        %v3324 = vsel %vm1923, %v2534, -inf
        %v3325 = vsel %vm1923, %v2590, -inf
        %v3326 = vmax.f32 %v3324, %v3325
        %v3327 = vsel %vm1923, %v2541, -inf
        %v3328 = vsel %vm1923, %v2597, -inf
        %v3329 = vmax.f32 %v3327, %v3328
        %v3330 = vsel %vm1923, %v2548, -inf
        %v3331 = vsel %vm1923, %v2604, -inf
        %v3332 = vmax.f32 %v3330, %v3331
        %v3333 = vsel %vm1923, %v2555, -inf
        %v3334 = vsel %vm1923, %v2611, -inf
        %v3335 = vmax.f32 %v3333, %v3334
        %v3336 = vsel %vm1923, %v2562, -inf
        %v3337 = vsel %vm1923, %v2618, -inf
        %v3338 = vmax.f32 %v3336, %v3337
        %v3339 = vsel %vm1923, %v2625, -inf
        %v3340 = vsel %vm1923, %v2681, -inf
        %v3341 = vmax.f32 %v3339, %v3340
        %v3342 = vsel %vm1923, %v2632, -inf
        %v3343 = vsel %vm1923, %v2688, -inf
        %v3344 = vmax.f32 %v3342, %v3343
        %v3345 = vsel %vm1923, %v2639, -inf
        %v3346 = vsel %vm1923, %v2695, -inf
        %v3347 = vmax.f32 %v3345, %v3346
        %v3348 = vsel %vm1923, %v2646, -inf
        %v3349 = vsel %vm1923, %v2702, -inf
        %v3350 = vmax.f32 %v3348, %v3349
        %v3351 = vsel %vm1923, %v2653, -inf
        %v3352 = vsel %vm1923, %v2709, -inf
        %v3353 = vmax.f32 %v3351, %v3352
        %v3354 = vsel %vm1923, %v2660, -inf
        %v3355 = vsel %vm1923, %v2716, -inf
        %v3356 = vmax.f32 %v3354, %v3355
        %v3357 = vsel %vm1923, %v2667, -inf
        %v3358 = vsel %vm1923, %v2723, -inf
        %v3359 = vmax.f32 %v3357, %v3358
        %v3360 = vsel %vm1923, %v2674, -inf
        %v3361 = vsel %vm1923, %v2730, -inf
        %v3362 = vmax.f32 %v3360, %v3361
        %v3363 = vsel %vm1923, %v2737, -inf
        %v3364 = vsel %vm1923, %v2793, -inf
        %v3365 = vmax.f32 %v3363, %v3364
        %v3366 = vsel %vm1923, %v2744, -inf
        %v3367 = vsel %vm1923, %v2800, -inf
        %v3368 = vmax.f32 %v3366, %v3367
        %v3369 = vsel %vm1923, %v2751, -inf
        %v3370 = vsel %vm1923, %v2807, -inf
        %v3371 = vmax.f32 %v3369, %v3370
        %v3372 = vsel %vm1923, %v2758, -inf
        %v3373 = vsel %vm1923, %v2814, -inf
        %v3374 = vmax.f32 %v3372, %v3373
        %v3375 = vsel %vm1923, %v2765, -inf
        %v3376 = vsel %vm1923, %v2821, -inf
        %v3377 = vmax.f32 %v3375, %v3376
        %v3378 = vsel %vm1923, %v2772, -inf
        %v3379 = vsel %vm1923, %v2828, -inf
        %v3380 = vmax.f32 %v3378, %v3379
        %v3381 = vsel %vm1923, %v2779, -inf
        %v3382 = vsel %vm1923, %v2835, -inf
        %v3383 = vmax.f32 %v3381, %v3382
        %v3384 = vsel %vm1923, %v2786, -inf
        %v3385 = vsel %vm1923, %v2842, -inf
        %v3386 = vmax.f32 %v3384, %v3385
        %v3387 = vsel %vm1923, %v2849, -inf
        %v3388 = vsel %vm1923, %v2905, -inf
        %v3389 = vmax.f32 %v3387, %v3388
        %v3390 = vsel %vm1923, %v2856, -inf
        %v3391 = vsel %vm1923, %v2912, -inf
        %v3392 = vmax.f32 %v3390, %v3391
        %v3393 = vsel %vm1923, %v2863, -inf
        %v3394 = vsel %vm1923, %v2919, -inf
        %v3395 = vmax.f32 %v3393, %v3394
        %v3396 = vsel %vm1923, %v2870, -inf
        %v3397 = vsel %vm1923, %v2926, -inf
        %v3398 = vmax.f32 %v3396, %v3397
        %v3399 = vsel %vm1923, %v2877, -inf
        %v3400 = vsel %vm1923, %v2933, -inf
        %v3401 = vmax.f32 %v3399, %v3400
        %v3402 = vsel %vm1923, %v2884, -inf
        %v3403 = vsel %vm1923, %v2940, -inf
        %v3404 = vmax.f32 %v3402, %v3403
        %v3405 = vsel %vm1923, %v2891, -inf
        %v3406 = vsel %vm1923, %v2947, -inf
        %v3407 = vmax.f32 %v3405, %v3406
        %v3408 = vsel %vm1923, %v2898, -inf
        %v3409 = vsel %vm1923, %v2954, -inf
        %v3410 = vmax.f32 %v3408, %v3409
        %v3411 = vsel %vm1923, %v2961, -inf
        %v3412 = vsel %vm1923, %v3017, -inf
        %v3413 = vmax.f32 %v3411, %v3412
        %v3414 = vsel %vm1923, %v2968, -inf
        %v3415 = vsel %vm1923, %v3024, -inf
        %v3416 = vmax.f32 %v3414, %v3415
        %v3417 = vsel %vm1923, %v2975, -inf
        %v3418 = vsel %vm1923, %v3031, -inf
        %v3419 = vmax.f32 %v3417, %v3418
        %v3420 = vsel %vm1923, %v2982, -inf
        %v3421 = vsel %vm1923, %v3038, -inf
        %v3422 = vmax.f32 %v3420, %v3421
        %v3423 = vsel %vm1923, %v2989, -inf
        %v3424 = vsel %vm1923, %v3045, -inf
        %v3425 = vmax.f32 %v3423, %v3424
        %v3426 = vsel %vm1923, %v2996, -inf
        %v3427 = vsel %vm1923, %v3052, -inf
        %v3428 = vmax.f32 %v3426, %v3427
        %v3429 = vsel %vm1923, %v3003, -inf
        %v3430 = vsel %vm1923, %v3059, -inf
        %v3431 = vmax.f32 %v3429, %v3430
        %v3432 = vsel %vm1923, %v3010, -inf
        %v3433 = vsel %vm1923, %v3066, -inf
        %v3434 = vmax.f32 %v3432, %v3433
        %v3435 = vsel %vm1923, %v3073, -inf
        %v3436 = vsel %vm1923, %v3129, -inf
        %v3437 = vmax.f32 %v3435, %v3436
        %v3438 = vsel %vm1923, %v3080, -inf
        %v3439 = vsel %vm1923, %v3136, -inf
        %v3440 = vmax.f32 %v3438, %v3439
        %v3441 = vsel %vm1923, %v3087, -inf
        %v3442 = vsel %vm1923, %v3143, -inf
        %v3443 = vmax.f32 %v3441, %v3442
        %v3444 = vsel %vm1923, %v3094, -inf
        %v3445 = vsel %vm1923, %v3150, -inf
        %v3446 = vmax.f32 %v3444, %v3445
        %v3447 = vsel %vm1923, %v3101, -inf
        %v3448 = vsel %vm1923, %v3157, -inf
        %v3449 = vmax.f32 %v3447, %v3448
        %v3450 = vsel %vm1923, %v3108, -inf
        %v3451 = vsel %vm1923, %v3164, -inf
        %v3452 = vmax.f32 %v3450, %v3451
        %v3453 = vsel %vm1923, %v3115, -inf
        %v3454 = vsel %vm1923, %v3171, -inf
        %v3455 = vmax.f32 %v3453, %v3454
        %v3456 = vsel %vm1923, %v3122, -inf
        %v3457 = vsel %vm1923, %v3178, -inf
        %v3458 = vmax.f32 %v3456, %v3457
        %v3459 = vsel %vm1923, %v3185, -inf
        %v3460 = vsel %vm1923, %v3241, -inf
        %v3461 = vmax.f32 %v3459, %v3460
        %v3462 = vsel %vm1923, %v3192, -inf
        %v3463 = vsel %vm1923, %v3248, -inf
        %v3464 = vmax.f32 %v3462, %v3463
        %v3465 = vsel %vm1923, %v3199, -inf
        %v3466 = vsel %vm1923, %v3255, -inf
        %v3467 = vmax.f32 %v3465, %v3466
        %v3468 = vsel %vm1923, %v3206, -inf
        %v3469 = vsel %vm1923, %v3262, -inf
        %v3470 = vmax.f32 %v3468, %v3469
        %v3471 = vsel %vm1923, %v3213, -inf
        %v3472 = vsel %vm1923, %v3269, -inf
        %v3473 = vmax.f32 %v3471, %v3472
        %v3474 = vsel %vm1923, %v3220, -inf
        %v3475 = vsel %vm1923, %v3276, -inf
        %v3476 = vmax.f32 %v3474, %v3475
        %v3477 = vsel %vm1923, %v3227, -inf
        %v3478 = vsel %vm1923, %v3283, -inf
        %v3479 = vmax.f32 %v3477, %v3478
        %v3480 = vsel %vm1923, %v3234, -inf
        %v3481 = vsel %vm1923, %v3290, -inf
        %v3482 = vmax.f32 %v3480, %v3481
        %vm3547 = vcmask 1042434
        %v3548 = vsel %vm3547, %v3296, %v3293
        %vm3549 = vcmask 1043459
        %v3550 = vsel %vm3549, %v3299, %v3548
        %vm3551 = vcmask 1044484
        %v3552 = vsel %vm3551, %v3302, %v3550
        %vm3553 = vcmask 1045509
        %v3554 = vsel %vm3553, %v3305, %v3552
        %vm3555 = vcmask 1046534
        %v3556 = vsel %vm3555, %v3308, %v3554
        %vm3557 = vcmask 1047559
        %v3558 = vsel %vm3557, %v3311, %v3556
        %v3559 = vsel %vm3547, %v3320, %v3317
        %v3560 = vsel %vm3549, %v3323, %v3559
        %v3561 = vsel %vm3551, %v3326, %v3560
        %v3562 = vsel %vm3553, %v3329, %v3561
        %v3563 = vsel %vm3555, %v3332, %v3562
        %v3564 = vsel %vm3557, %v3335, %v3563
        %v3565 = vsel %vm3547, %v3344, %v3341
        %v3566 = vsel %vm3549, %v3347, %v3565
        %v3567 = vsel %vm3551, %v3350, %v3566
        %v3568 = vsel %vm3553, %v3353, %v3567
        %v3569 = vsel %vm3555, %v3356, %v3568
        %v3570 = vsel %vm3557, %v3359, %v3569
        %v3571 = vsel %vm3547, %v3368, %v3365
        %v3572 = vsel %vm3549, %v3371, %v3571
        %v3573 = vsel %vm3551, %v3374, %v3572
        %v3574 = vsel %vm3553, %v3377, %v3573
        %v3575 = vsel %vm3555, %v3380, %v3574
        %v3576 = vsel %vm3557, %v3383, %v3575
        %v3577 = vsel %vm3547, %v3392, %v3389
        %v3578 = vsel %vm3549, %v3395, %v3577
        %v3579 = vsel %vm3551, %v3398, %v3578
        %v3580 = vsel %vm3553, %v3401, %v3579
        %v3581 = vsel %vm3555, %v3404, %v3580
        %v3582 = vsel %vm3557, %v3407, %v3581
        %v3583 = vsel %vm3547, %v3416, %v3413
        %v3584 = vsel %vm3549, %v3419, %v3583
        %v3585 = vsel %vm3551, %v3422, %v3584
        %v3586 = vsel %vm3553, %v3425, %v3585
        %v3587 = vsel %vm3555, %v3428, %v3586
        %v3588 = vsel %vm3557, %v3431, %v3587
        %v3589 = vsel %vm3547, %v3440, %v3437
        %v3590 = vsel %vm3549, %v3443, %v3589
        %v3591 = vsel %vm3551, %v3446, %v3590
        %v3592 = vsel %vm3553, %v3449, %v3591
        %v3593 = vsel %vm3555, %v3452, %v3592
        %v3594 = vsel %vm3557, %v3455, %v3593
        %v3595 = vsel %vm3547, %v3464, %v3461
        %v3596 = vsel %vm3549, %v3467, %v3595
        %v3597 = vsel %vm3551, %v3470, %v3596
        %v3598 = vsel %vm3553, %v3473, %v3597
        %v3599 = vsel %vm3555, %v3476, %v3598
        %v3600 = vsel %vm3557, %v3479, %v3599
        %v3617 = vsel %vm614, 0.0, %v3558
        %v3618 = vsel %vm614, 0.0, %v3564
        %v3619 = vsel %vm614, 0.0, %v3570
        %v3620 = vsel %vm614, 0.0, %v3576
        %v3621 = vsel %vm614, 0.0, %v3582
        %v3622 = vsel %vm614, 0.0, %v3588
        %v3623 = vsel %vm614, 0.0, %v3594
        %v3624 = vsel %vm614, 0.0, %v3600
        %v3625 = vsel %vm614, %v3314, 0.0
        %v3626 = vsel %vm614, %v3338, 0.0
        %v3627 = vsel %vm614, %v3362, 0.0
        %v3628 = vsel %vm614, %v3386, 0.0
        %v3629 = vsel %vm614, %v3410, 0.0
        %v3630 = vsel %vm614, %v3434, 0.0
        %v3631 = vsel %vm614, %v3458, 0.0
        %v3632 = vsel %vm614, %v3482, 0.0
        %v3647 = vrot.slane %v3617, 1
        %v3648 = vrot.slane %v3625, 1
        %v3649 = vsel %vm773, %v3647, %v3648
        %v3650 = vrot.slane %v3618, 1
        %v3651 = vrot.slane %v3626, 1
        %v3652 = vsel %vm773, %v3650, %v3651
        %v3653 = vrot.slane %v3619, 1
        %v3654 = vrot.slane %v3627, 1
        %v3655 = vsel %vm773, %v3653, %v3654
        %v3656 = vrot.slane %v3620, 1
        %v3657 = vrot.slane %v3628, 1
        %v3658 = vsel %vm773, %v3656, %v3657
        %v3659 = vrot.slane %v3621, 1
        %v3660 = vrot.slane %v3629, 1
        %v3661 = vsel %vm773, %v3659, %v3660
        %v3662 = vrot.slane %v3622, 1
        %v3663 = vrot.slane %v3630, 1
        %v3664 = vsel %vm773, %v3662, %v3663
        %v3665 = vrot.slane %v3623, 1
        %v3666 = vrot.slane %v3631, 1
        %v3667 = vsel %vm773, %v3665, %v3666
        %3668 = vrot.lane.b32.xlu0 %v775, 32
        %v3669 = vpop.permute.xlu0 %3668
        %3670 = vrot.lane.b32.xlu0 %v3649, 32
        %v3671 = vpop.permute.xlu0 %3670
        %3672 = vrot.lane.b32.xlu0 %v3652, 32
        %v3673 = vpop.permute.xlu0 %3672
        %3674 = vrot.lane.b32.xlu0 %v3655, 32
        %v3675 = vpop.permute.xlu0 %3674
        %3676 = vrot.lane.b32.xlu0 %v3658, 32
        %v3677 = vpop.permute.xlu0 %3676
        %3678 = vrot.lane.b32.xlu0 %v3661, 32
        %v3679 = vpop.permute.xlu0 %3678
        %3680 = vrot.lane.b32.xlu0 %v3664, 32
        %v3681 = vpop.permute.xlu0 %3680
        %3682 = vrot.lane.b32.xlu0 %v3667, 32
        %v3683 = vpop.permute.xlu0 %3682
        %v3692 = vrot.slane %v3617, 2
        %v3693 = vrot.slane %v3625, 2
        %v3694 = vsel %vm944, %v3692, %v3693
        %v3695 = vrot.slane %v3618, 2
        %v3696 = vrot.slane %v3626, 2
        %v3697 = vsel %vm944, %v3695, %v3696
        %v3698 = vrot.slane %v3619, 2
        %v3699 = vrot.slane %v3627, 2
        %v3700 = vsel %vm944, %v3698, %v3699
        %v3701 = vrot.slane %v3620, 2
        %v3702 = vrot.slane %v3628, 2
        %v3703 = vsel %vm944, %v3701, %v3702
        %v3704 = vrot.slane %v3621, 2
        %v3705 = vrot.slane %v3629, 2
        %v3706 = vsel %vm944, %v3704, %v3705
        %v3707 = vrot.slane %v3622, 2
        %v3708 = vrot.slane %v3630, 2
        %v3709 = vsel %vm944, %v3707, %v3708
        %v3710 = vrot.slane %v3623, 2
        %v3711 = vrot.slane %v3631, 2
        %v3712 = vsel %vm944, %v3710, %v3711
        %3713 = vrot.lane.b32.xlu0 %v946, 64
        %v3714 = vpop.permute.xlu0 %3713
        %3715 = vrot.lane.b32.xlu0 %v3694, 64
        %v3716 = vpop.permute.xlu0 %3715
        %3717 = vrot.lane.b32.xlu0 %v3697, 64
        %v3718 = vpop.permute.xlu0 %3717
        %3719 = vrot.lane.b32.xlu0 %v3700, 64
        %v3720 = vpop.permute.xlu0 %3719
        %3721 = vrot.lane.b32.xlu0 %v3703, 64
        %v3722 = vpop.permute.xlu0 %3721
        %3723 = vrot.lane.b32.xlu0 %v3706, 64
        %v3724 = vpop.permute.xlu0 %3723
        %3725 = vrot.lane.b32.xlu0 %v3709, 64
        %v3726 = vpop.permute.xlu0 %3725
        %3727 = vrot.lane.b32.xlu0 %v3712, 64
        %v3728 = vpop.permute.xlu0 %3727
        %3738 = vrot.lane.b32.xlu0 %v3617, 96
        %v3739 = vpop.permute.xlu0 %3738
        %3740 = vrot.lane.b32.xlu0 %v3618, 96
        %v3741 = vpop.permute.xlu0 %3740
        %3742 = vrot.lane.b32.xlu0 %v3619, 96
        %v3743 = vpop.permute.xlu0 %3742
        %3744 = vrot.lane.b32.xlu0 %v3620, 96
        %v3745 = vpop.permute.xlu0 %3744
        %3746 = vrot.lane.b32.xlu0 %v3621, 96
        %v3747 = vpop.permute.xlu0 %3746
        %3748 = vrot.lane.b32.xlu0 %v3622, 96
        %v3749 = vpop.permute.xlu0 %3748
        %3750 = vrot.lane.b32.xlu0 %v3623, 96
        %v3751 = vpop.permute.xlu0 %3750
        %3752 = vrot.lane.b32.xlu0 %v3624, 96
        %v3753 = vpop.permute.xlu0 %3752
        %v3763 = vrot.slane %v3624, 1
        %v3764 = vrot.slane %v3632, 1
        %v3765 = vsel %vm773, %v3763, %v3764
        %v3774 = vrot.slane %v3624, 2
        %v3775 = vrot.slane %v3632, 2
        %v3776 = vsel %vm944, %v3774, %v3775
        %3777 = vrot.lane.b32.xlu0 %v3694, 32
        %v3778 = vpop.permute.xlu0 %3777
        %3779 = vrot.lane.b32.xlu0 %v3697, 32
        %v3780 = vpop.permute.xlu0 %3779
        %3781 = vrot.lane.b32.xlu0 %v3700, 32
        %v3782 = vpop.permute.xlu0 %3781
        %3783 = vrot.lane.b32.xlu0 %v3703, 32
        %v3784 = vpop.permute.xlu0 %3783
        %3785 = vrot.lane.b32.xlu0 %v3706, 32
        %v3786 = vpop.permute.xlu0 %3785
        %3787 = vrot.lane.b32.xlu0 %v3709, 32
        %v3788 = vpop.permute.xlu0 %3787
        %3789 = vrot.lane.b32.xlu0 %v3712, 32
        %v3790 = vpop.permute.xlu0 %3789
        %3791 = vrot.lane.b32.xlu0 %v3776, 32
        %v3792 = vpop.permute.xlu0 %3791
        %3801 = vrot.lane.b32.xlu0 %v3618, 64
        %v3802 = vpop.permute.xlu0 %3801
        %3803 = vrot.lane.b32.xlu0 %v3619, 64
        %v3804 = vpop.permute.xlu0 %3803
        %3805 = vrot.lane.b32.xlu0 %v3620, 64
        %v3806 = vpop.permute.xlu0 %3805
        %3807 = vrot.lane.b32.xlu0 %v3621, 64
        %v3808 = vpop.permute.xlu0 %3807
        %3809 = vrot.lane.b32.xlu0 %v3622, 64
        %v3810 = vpop.permute.xlu0 %3809
        %3811 = vrot.lane.b32.xlu0 %v3623, 64
        %v3812 = vpop.permute.xlu0 %3811
        %3813 = vrot.lane.b32.xlu0 %v3624, 64
        %v3814 = vpop.permute.xlu0 %3813
        %3815 = vrot.lane.b32.xlu0 0.0, 64
        %v3816 = vpop.permute.xlu0 %3815
        %3825 = vrot.lane.b32.xlu0 %v3652, 96
        %v3826 = vpop.permute.xlu0 %3825
        %3827 = vrot.lane.b32.xlu0 %v3655, 96
        %v3828 = vpop.permute.xlu0 %3827
        %3829 = vrot.lane.b32.xlu0 %v3658, 96
        %v3830 = vpop.permute.xlu0 %3829
        %3831 = vrot.lane.b32.xlu0 %v3661, 96
        %v3832 = vpop.permute.xlu0 %3831
        %3833 = vrot.lane.b32.xlu0 %v3664, 96
        %v3834 = vpop.permute.xlu0 %3833
        %3835 = vrot.lane.b32.xlu0 %v3667, 96
        %v3836 = vpop.permute.xlu0 %3835
        %3837 = vrot.lane.b32.xlu0 %v3765, 96
        %v3838 = vpop.permute.xlu0 %3837
        %3839 = vrot.lane.b32.xlu0 %v775, 96
        %v3840 = vpop.permute.xlu0 %3839
        %v3857 = vsel %vm1923, 0.0, %v3669
        %v3858 = vsel %vm1923, %v3617, %v3671
        %v3859 = vsel %vm1923, %v3618, %v3673
        %v3860 = vsel %vm1923, %v3619, %v3675
        %v3861 = vsel %vm1923, %v3620, %v3677
        %v3862 = vsel %vm1923, %v3621, %v3679
        %v3863 = vsel %vm1923, %v3622, %v3681
        %v3864 = vsel %vm1923, %v3623, %v3683
        %vm3865 = vcmask 523264
        %v3866 = vsel %vm3865, %v3857, %v3714
        %v3867 = vsel %vm3865, %v3858, %v3716
        %v3868 = vsel %vm3865, %v3859, %v3718
        %v3869 = vsel %vm3865, %v3860, %v3720
        %v3870 = vsel %vm3865, %v3861, %v3722
        %v3871 = vsel %vm3865, %v3862, %v3724
        %v3872 = vsel %vm3865, %v3863, %v3726
        %v3873 = vsel %vm3865, %v3864, %v3728
        %vm3874 = vcmask 785408
        %v3875 = vsel %vm3874, %v3866, %v3739
        %v3876 = vsel %vm3874, %v3867, %v3741
        %v3877 = vsel %vm3874, %v3868, %v3743
        %v3878 = vsel %vm3874, %v3869, %v3745
        %v3879 = vsel %vm3874, %v3870, %v3747
        %v3880 = vsel %vm3874, %v3871, %v3749
        %v3881 = vsel %vm3874, %v3872, %v3751
        %v3882 = vsel %vm3874, %v3873, %v3753
        %v3883 = vsel %vm1923, %v3649, %v3778
        %v3884 = vsel %vm1923, %v3652, %v3780
        %v3885 = vsel %vm1923, %v3655, %v3782
        %v3886 = vsel %vm1923, %v3658, %v3784
        %v3887 = vsel %vm1923, %v3661, %v3786
        %v3888 = vsel %vm1923, %v3664, %v3788
        %v3889 = vsel %vm1923, %v3667, %v3790
        %v3890 = vsel %vm1923, %v3765, %v3792
        %v3891 = vsel %vm3865, %v3883, %v3802
        %v3892 = vsel %vm3865, %v3884, %v3804
        %v3893 = vsel %vm3865, %v3885, %v3806
        %v3894 = vsel %vm3865, %v3886, %v3808
        %v3895 = vsel %vm3865, %v3887, %v3810
        %v3896 = vsel %vm3865, %v3888, %v3812
        %v3897 = vsel %vm3865, %v3889, %v3814
        %v3898 = vsel %vm3865, %v3890, %v3816
        %v3899 = vsel %vm3874, %v3891, %v3826
        %v3900 = vsel %vm3874, %v3892, %v3828
        %v3901 = vsel %vm3874, %v3893, %v3830
        %v3902 = vsel %vm3874, %v3894, %v3832
        %v3903 = vsel %vm3874, %v3895, %v3834
        %v3904 = vsel %vm3874, %v3896, %v3836
        %v3905 = vsel %vm3874, %v3897, %v3838
        %v3906 = vsel %vm3874, %v3898, %v3840
        %v3907 = vpack.c.bf16 %v3876, %v3875
        %v3908 = vpack.c.bf16 %v3900, %v3899
        %v3909 = vpack.c.bf16 %v3700, %v3697
        %v3910 = vpack.c.bf16 %v3878, %v3877
        %v3911 = vpack.c.bf16 %v3902, %v3901
        %v3912 = vpack.c.bf16 %v3706, %v3703
        %v3913 = vpack.c.bf16 %v3880, %v3879
        %v3914 = vpack.c.bf16 %v3904, %v3903
        %v3915 = vpack.c.bf16 %v3712, %v3709
        %v3916 = vpack.c.bf16 %v3882, %v3881
        %v3917 = vpack.c.bf16 %v3906, %v3905
        %v3918 = vpack.c.bf16 %v946, %v3776
        %v3919 = vld [vmem:[%s3] sm:$0xf]
        %v3920 = vld [vmem:[%s3 + $0x4] sm:$0xf]
        %v3921 = vld [vmem:[%s3 + $0x8] sm:$0xf]
        %v3922 = vld [vmem:[%s3 + $0xc] sm:$0xf]
        %v3923 = vld [vmem:[%s3 + $0x10] sm:$0xf]
        %v3924 = vld [vmem:[%s3 + $0x14] sm:$0xf]
        %v3925 = vld [vmem:[%s3 + $0x18] sm:$0xf]
        %v3926 = vld [vmem:[%s3 + $0x1c] sm:$0xf]
        %v3927 = vld [vmem:[%s3 + $0x20] sm:$0xf]
        %v3928 = vld [vmem:[%s3 + $0x24] sm:$0xf]
        %v3929 = vld [vmem:[%s3 + $0x28] sm:$0xf]
        %v3930 = vld [vmem:[%s3 + $0x2c] sm:$0xf]
        %v3931 = vld [vmem:[%s3 + $0x30] sm:$0xf]
        %v3932 = vld [vmem:[%s3 + $0x34] sm:$0xf]
        %v3933 = vld [vmem:[%s3 + $0x38] sm:$0xf]
        %v3934 = vld [vmem:[%s3 + $0x3c] sm:$0xf]
        %v3935 = vld [vmem:[%s3 + $0x40] sm:$0xf]
        %v3936 = vld [vmem:[%s3 + $0x44] sm:$0xf]
        %v3937 = vld [vmem:[%s3 + $0x48] sm:$0xf]
        %v3938 = vld [vmem:[%s3 + $0x4c] sm:$0xf]
        %v3939 = vld [vmem:[%s3 + $0x50] sm:$0xf]
        %v3940 = vld [vmem:[%s3 + $0x54] sm:$0xf]
        %v3941 = vld [vmem:[%s3 + $0x58] sm:$0xf]
        %v3942 = vld [vmem:[%s3 + $0x5c] sm:$0xf]
        %v3943 = vld [vmem:[%s3 + $0x60] sm:$0xf]
        %v3944 = vld [vmem:[%s3 + $0x64] sm:$0xf]
        %v3945 = vld [vmem:[%s3 + $0x68] sm:$0xf]
        %v3946 = vld [vmem:[%s3 + $0x6c] sm:$0xf]
        %v3947 = vld [vmem:[%s3 + $0x70] sm:$0xf]
        %v3948 = vld [vmem:[%s3 + $0x74] sm:$0xf]
        %v3949 = vld [vmem:[%s3 + $0x78] sm:$0xf]
        %v3950 = vld [vmem:[%s3 + $0x7c] sm:$0xf]
        %v3951 = vld [vmem:[%s3 + $0x80] sm:$0xf]
        %v3952 = vld [vmem:[%s3 + $0x84] sm:$0xf]
        %v3953 = vld [vmem:[%s3 + $0x88] sm:$0xf]
        %v3954 = vld [vmem:[%s3 + $0x8c] sm:$0xf]
        %v3955 = vld [vmem:[%s4] sm:$0x1]
        %v3957 = vperm.slane %v3955, 0
        %v3995 = vunpack.c.l.b16 %v3919
        %v3996 = vunpack.c.l.b16 %v3920
        %v3997 = vunpack.c.l.b16 %v3921
        %v3998 = vunpack.c.l.b16 %v3922
        %v3999 = vunpack.c.l.b16 %v3923
        %v4000 = vunpack.c.l.b16 %v3924
        %v4001 = vunpack.c.l.b16 %v3925
        %v4002 = vunpack.c.l.b16 %v3926
        %v4003 = vunpack.c.l.b16 %v3927
        %v4004 = vunpack.c.l.b16 %v3928
        %v4005 = vunpack.c.l.b16 %v3929
        %v4006 = vunpack.c.l.b16 %v3930
        %v4007 = vunpack.c.l.b16 %v3931
        %v4008 = vunpack.c.l.b16 %v3932
        %v4009 = vunpack.c.l.b16 %v3933
        %v4010 = vunpack.c.l.b16 %v3934
        %v4011 = vunpack.c.l.b16 %v3935
        %v4012 = vunpack.c.l.b16 %v3936
        %v4013 = vunpack.c.l.b16 %v3937
        %v4014 = vunpack.c.l.b16 %v3938
        %v4015 = vunpack.c.l.b16 %v3939
        %v4016 = vunpack.c.l.b16 %v3940
        %v4017 = vunpack.c.l.b16 %v3941
        %v4018 = vunpack.c.l.b16 %v3942
        %v4019 = vunpack.c.l.b16 %v3943
        %v4020 = vunpack.c.l.b16 %v3944
        %v4021 = vunpack.c.l.b16 %v3945
        %v4022 = vunpack.c.l.b16 %v3946
        %v4023 = vunpack.c.l.b16 %v3947
        %v4024 = vunpack.c.l.b16 %v3948
        %v4025 = vunpack.c.l.b16 %v3949
        %v4026 = vunpack.c.l.b16 %v3950
        %v4027 = vunpack.c.l.b16 %v3951
        %v4028 = vunpack.c.l.b16 %v3952
        %v4029 = vunpack.c.l.b16 %v3953
        %v4030 = vunpack.c.l.b16 %v3954
        %v4031 = vpack.c.b16 %v3996, %v3995
        %v4032 = vpack.c.b16 %v3998, %v3997
        %v4033 = vpack.c.b16 %v4000, %v3999
        %v4034 = vpack.c.b16 %v4002, %v4001
        %v4035 = vpack.c.b16 %v4004, %v4003
        %v4036 = vpack.c.b16 %v4006, %v4005
        %v4037 = vpack.c.b16 %v4008, %v4007
        %v4038 = vpack.c.b16 %v4010, %v4009
        %v4039 = vpack.c.b16 %v4012, %v4011
        %v4040 = vpack.c.b16 %v4014, %v4013
        %v4041 = vpack.c.b16 %v4016, %v4015
        %v4042 = vpack.c.b16 %v4018, %v4017
        %v4043 = vpack.c.b16 %v4020, %v4019
        %v4044 = vpack.c.b16 %v4022, %v4021
        %v4045 = vpack.c.b16 %v4024, %v4023
        %v4046 = vpack.c.b16 %v4026, %v4025
        %v4047 = vpack.c.b16 %v4028, %v4027
        %v4048 = vpack.c.b16 %v4030, %v4029
        %v4068 = vsel %vm1923, %v3909, 0
        %v4071 = vsel %vm1923, %v3912, 0
        %v4074 = vsel %vm1923, %v3915, 0
        %v4077 = vsel %vm1923, %v3918, 0
        %4079 = vmatpush.bf16.msra.mxu0 %v4038
        %4080 = vmatpush.bf16.msra.mxu0 %v4037
        %4081 = vmatpush.bf16.msra.mxu0 %v4036
        %4082 = vmatpush.bf16.msra.mxu0 %v4035
        %4083 = vmatpush.bf16.msra.mxu0 %v4034
        %4084 = vmatpush.bf16.msra.mxu0 %v4033
        %4085 = vmatpush.bf16.msra.mxu0 %v4032
        %4086 = vmatpush.bf16.msra.mxu0 %v4031
        %4087 = vmatmul.bf16.gmra.mxu0 %v3907
        %v4088 = vpop.f32.mrf.mxu0
        %v4089 = vadd.f32 %v3957, %v4088
        %v4090 = vpop.f32.mrf.mxu0
        %v4091 = vadd.f32 %v3957, %v4090
        %4092 = vmatmul.bf16.gmra.mxu0 %v3910
        %v4093 = vpop.f32.mrf.mxu0
        %v4094 = vadd.f32 %v3957, %v4093
        %v4095 = vpop.f32.mrf.mxu0
        %v4096 = vadd.f32 %v3957, %v4095
        %4097 = vmatmul.bf16.gmra.mxu0 %v3913
        %v4098 = vpop.f32.mrf.mxu0
        %v4099 = vadd.f32 %v3957, %v4098
        %v4100 = vpop.f32.mrf.mxu0
        %v4101 = vadd.f32 %v3957, %v4100
        %4102 = vmatmul.bf16.gmra.mxu0 %v3916
        %v4103 = vpop.f32.mrf.mxu0
        %v4104 = vadd.f32 %v3957, %v4103
        %v4105 = vpop.f32.mrf.mxu0
        %v4106 = vadd.f32 %v3957, %v4105
        %4107 = vdwg.mxu0
        %4108 = vmatpush.bf16.msra.mxu0 %v4046
        %4109 = vmatpush.bf16.msra.mxu0 %v4045
        %4110 = vmatpush.bf16.msra.mxu0 %v4044
        %4111 = vmatpush.bf16.msra.mxu0 %v4043
        %4112 = vmatpush.bf16.msra.mxu0 %v4042
        %4113 = vmatpush.bf16.msra.mxu0 %v4041
        %4114 = vmatpush.bf16.msra.mxu0 %v4040
        %4115 = vmatpush.bf16.msra.mxu0 %v4039
        %4116 = vmatmul.bf16.gmra.mxu0 %v3908
        %v4117 = vpop.f32.mrf.mxu0
        %v4118 = vadd.f32 %v4089, %v4117
        %v4119 = vpop.f32.mrf.mxu0
        %v4120 = vadd.f32 %v4091, %v4119
        %4121 = vmatmul.bf16.gmra.mxu0 %v3911
        %v4122 = vpop.f32.mrf.mxu0
        %v4123 = vadd.f32 %v4094, %v4122
        %v4124 = vpop.f32.mrf.mxu0
        %v4125 = vadd.f32 %v4096, %v4124
        %4126 = vmatmul.bf16.gmra.mxu0 %v3914
        %v4127 = vpop.f32.mrf.mxu0
        %v4128 = vadd.f32 %v4099, %v4127
        %v4129 = vpop.f32.mrf.mxu0
        %v4130 = vadd.f32 %v4101, %v4129
        %4131 = vmatmul.bf16.gmra.mxu0 %v3917
        %v4132 = vpop.f32.mrf.mxu0
        %v4133 = vadd.f32 %v4104, %v4132
        %v4134 = vpop.f32.mrf.mxu0
        %v4135 = vadd.f32 %v4106, %v4134
        %4136 = vdwg.mxu0
        %4137 = vmatpush.bf16.msra.mxu0 0
        %4138 = vmatpush.bf16.msra.mxu0 0
        %4139 = vmatpush.bf16.msra.mxu0 0
        %4140 = vmatpush.bf16.msra.mxu0 0
        %4141 = vmatpush.bf16.msra.mxu0 0
        %4142 = vmatpush.bf16.msra.mxu0 0
        %4143 = vmatpush.bf16.msra.mxu0 %v4048
        %4144 = vmatpush.bf16.msra.mxu0 %v4047
        %4145 = vmatmul.bf16.gmra.mxu0 %v4068
        %v4146 = vpop.f32.mrf.mxu0
        %v4147 = vadd.f32 %v4118, %v4146
        %v4148 = vpop.f32.mrf.mxu0
        %v4149 = vadd.f32 %v4120, %v4148
        %4150 = vmatmul.bf16.gmra.mxu0 %v4071
        %v4151 = vpop.f32.mrf.mxu0
        %v4152 = vadd.f32 %v4123, %v4151
        %v4153 = vpop.f32.mrf.mxu0
        %v4154 = vadd.f32 %v4125, %v4153
        %4155 = vmatmul.bf16.gmra.mxu0 %v4074
        %v4156 = vpop.f32.mrf.mxu0
        %v4157 = vadd.f32 %v4128, %v4156
        %v4158 = vpop.f32.mrf.mxu0
        %v4159 = vadd.f32 %v4130, %v4158
        %4160 = vmatmul.bf16.gmra.mxu0 %v4077
        %v4161 = vpop.f32.mrf.mxu0
        %v4162 = vadd.f32 %v4133, %v4161
        %v4163 = vpop.f32.mrf.mxu0
        %v4164 = vadd.f32 %v4135, %v4163
        %4165 = vdwg.mxu0
        %v4166 = vmax.f32 %v4147, 0.0
        %v4167 = vmax.f32 %v4149, 0.0
        %v4168 = vmax.f32 %v4152, 0.0
        %v4169 = vmax.f32 %v4154, 0.0
        %v4170 = vmax.f32 %v4157, 0.0
        %v4171 = vmax.f32 %v4159, 0.0
        %v4172 = vmax.f32 %v4162, 0.0
        %v4173 = vmax.f32 %v4164, 0.0
        %v4182 = vrot.slane %v4166, 2
        %v4183 = vrot.slane %v4166, 4
        %v4184 = vrot.slane %v4166, 6
        %v4185 = vrot.slane %v4167, 2
        %v4186 = vrot.slane %v4167, 4
        %v4187 = vrot.slane %v4167, 6
        %v4188 = vrot.slane %v4168, 2
        %v4189 = vrot.slane %v4168, 4
        %v4190 = vrot.slane %v4168, 6
        %v4191 = vrot.slane %v4169, 2
        %v4192 = vrot.slane %v4169, 4
        %v4193 = vrot.slane %v4169, 6
        %v4194 = vrot.slane %v4170, 2
        %v4195 = vrot.slane %v4170, 4
        %v4196 = vrot.slane %v4170, 6
        %v4197 = vrot.slane %v4171, 2
        %v4198 = vrot.slane %v4171, 4
        %v4199 = vrot.slane %v4171, 6
        %v4200 = vrot.slane %v4172, 2
        %v4201 = vrot.slane %v4172, 4
        %v4202 = vrot.slane %v4172, 6
        %v4203 = vrot.slane %v4173, 2
        %v4204 = vrot.slane %v4173, 4
        %v4205 = vrot.slane %v4173, 6
        %vm4230 = vcmask 517120
        %v4231 = vsel %vm4230, %v4166, -inf
        %v4232 = vrot.slane %v4231, 4
        %v4233 = vmax.f32 %v4231, %v4232
        %v4234 = vrot.slane %v4233, 2
        %v4235 = vmax.f32 %v4233, %v4234
        %v4236 = vrot.slane %v4235, 1
        %v4237 = vmax.f32 %v4235, %v4236
        %v4238 = vsel %vm4230, %v4182, -inf
        %v4239 = vrot.slane %v4238, 4
        %v4240 = vmax.f32 %v4238, %v4239
        %v4241 = vrot.slane %v4240, 2
        %v4242 = vmax.f32 %v4240, %v4241
        %v4243 = vrot.slane %v4242, 1
        %v4244 = vmax.f32 %v4242, %v4243
        %v4245 = vsel %vm4230, %v4183, -inf
        %v4246 = vrot.slane %v4245, 4
        %v4247 = vmax.f32 %v4245, %v4246
        %v4248 = vrot.slane %v4247, 2
        %v4249 = vmax.f32 %v4247, %v4248
        %v4250 = vrot.slane %v4249, 1
        %v4251 = vmax.f32 %v4249, %v4250
        %v4252 = vsel %vm4230, %v4184, -inf
        %v4253 = vrot.slane %v4252, 4
        %v4254 = vmax.f32 %v4252, %v4253
        %v4255 = vrot.slane %v4254, 2
        %v4256 = vmax.f32 %v4254, %v4255
        %v4257 = vrot.slane %v4256, 1
        %v4258 = vmax.f32 %v4256, %v4257
        %v4259 = vsel %vm4230, %v4167, -inf
        %v4260 = vrot.slane %v4259, 4
        %v4261 = vmax.f32 %v4259, %v4260
        %v4262 = vrot.slane %v4261, 2
        %v4263 = vmax.f32 %v4261, %v4262
        %v4264 = vrot.slane %v4263, 1
        %v4265 = vmax.f32 %v4263, %v4264
        %v4266 = vsel %vm4230, %v4185, -inf
        %v4267 = vrot.slane %v4266, 4
        %v4268 = vmax.f32 %v4266, %v4267
        %v4269 = vrot.slane %v4268, 2
        %v4270 = vmax.f32 %v4268, %v4269
        %v4271 = vrot.slane %v4270, 1
        %v4272 = vmax.f32 %v4270, %v4271
        %v4273 = vsel %vm4230, %v4186, -inf
        %v4274 = vrot.slane %v4273, 4
        %v4275 = vmax.f32 %v4273, %v4274
        %v4276 = vrot.slane %v4275, 2
        %v4277 = vmax.f32 %v4275, %v4276
        %v4278 = vrot.slane %v4277, 1
        %v4279 = vmax.f32 %v4277, %v4278
        %v4280 = vsel %vm4230, %v4187, -inf
        %v4281 = vrot.slane %v4280, 4
        %v4282 = vmax.f32 %v4280, %v4281
        %v4283 = vrot.slane %v4282, 2
        %v4284 = vmax.f32 %v4282, %v4283
        %v4285 = vrot.slane %v4284, 1
        %v4286 = vmax.f32 %v4284, %v4285
        %v4287 = vsel %vm4230, %v4168, -inf
        %v4288 = vrot.slane %v4287, 4
        %v4289 = vmax.f32 %v4287, %v4288
        %v4290 = vrot.slane %v4289, 2
        %v4291 = vmax.f32 %v4289, %v4290
        %v4292 = vrot.slane %v4291, 1
        %v4293 = vmax.f32 %v4291, %v4292
        %v4294 = vsel %vm4230, %v4188, -inf
        %v4295 = vrot.slane %v4294, 4
        %v4296 = vmax.f32 %v4294, %v4295
        %v4297 = vrot.slane %v4296, 2
        %v4298 = vmax.f32 %v4296, %v4297
        %v4299 = vrot.slane %v4298, 1
        %v4300 = vmax.f32 %v4298, %v4299
        %v4301 = vsel %vm4230, %v4189, -inf
        %v4302 = vrot.slane %v4301, 4
        %v4303 = vmax.f32 %v4301, %v4302
        %v4304 = vrot.slane %v4303, 2
        %v4305 = vmax.f32 %v4303, %v4304
        %v4306 = vrot.slane %v4305, 1
        %v4307 = vmax.f32 %v4305, %v4306
        %v4308 = vsel %vm4230, %v4190, -inf
        %v4309 = vrot.slane %v4308, 4
        %v4310 = vmax.f32 %v4308, %v4309
        %v4311 = vrot.slane %v4310, 2
        %v4312 = vmax.f32 %v4310, %v4311
        %v4313 = vrot.slane %v4312, 1
        %v4314 = vmax.f32 %v4312, %v4313
        %v4315 = vsel %vm4230, %v4169, -inf
        %v4316 = vrot.slane %v4315, 4
        %v4317 = vmax.f32 %v4315, %v4316
        %v4318 = vrot.slane %v4317, 2
        %v4319 = vmax.f32 %v4317, %v4318
        %v4320 = vrot.slane %v4319, 1
        %v4321 = vmax.f32 %v4319, %v4320
        %v4322 = vsel %vm4230, %v4191, -inf
        %v4323 = vrot.slane %v4322, 4
        %v4324 = vmax.f32 %v4322, %v4323
        %v4325 = vrot.slane %v4324, 2
        %v4326 = vmax.f32 %v4324, %v4325
        %v4327 = vrot.slane %v4326, 1
        %v4328 = vmax.f32 %v4326, %v4327
        %v4329 = vsel %vm4230, %v4192, -inf
        %v4330 = vrot.slane %v4329, 4
        %v4331 = vmax.f32 %v4329, %v4330
        %v4332 = vrot.slane %v4331, 2
        %v4333 = vmax.f32 %v4331, %v4332
        %v4334 = vrot.slane %v4333, 1
        %v4335 = vmax.f32 %v4333, %v4334
        %v4336 = vsel %vm4230, %v4193, -inf
        %v4337 = vrot.slane %v4336, 4
        %v4338 = vmax.f32 %v4336, %v4337
        %v4339 = vrot.slane %v4338, 2
        %v4340 = vmax.f32 %v4338, %v4339
        %v4341 = vrot.slane %v4340, 1
        %v4342 = vmax.f32 %v4340, %v4341
        %v4343 = vsel %vm4230, %v4170, -inf
        %v4344 = vrot.slane %v4343, 4
        %v4345 = vmax.f32 %v4343, %v4344
        %v4346 = vrot.slane %v4345, 2
        %v4347 = vmax.f32 %v4345, %v4346
        %v4348 = vrot.slane %v4347, 1
        %v4349 = vmax.f32 %v4347, %v4348
        %v4350 = vsel %vm4230, %v4194, -inf
        %v4351 = vrot.slane %v4350, 4
        %v4352 = vmax.f32 %v4350, %v4351
        %v4353 = vrot.slane %v4352, 2
        %v4354 = vmax.f32 %v4352, %v4353
        %v4355 = vrot.slane %v4354, 1
        %v4356 = vmax.f32 %v4354, %v4355
        %v4357 = vsel %vm4230, %v4195, -inf
        %v4358 = vrot.slane %v4357, 4
        %v4359 = vmax.f32 %v4357, %v4358
        %v4360 = vrot.slane %v4359, 2
        %v4361 = vmax.f32 %v4359, %v4360
        %v4362 = vrot.slane %v4361, 1
        %v4363 = vmax.f32 %v4361, %v4362
        %v4364 = vsel %vm4230, %v4196, -inf
        %v4365 = vrot.slane %v4364, 4
        %v4366 = vmax.f32 %v4364, %v4365
        %v4367 = vrot.slane %v4366, 2
        %v4368 = vmax.f32 %v4366, %v4367
        %v4369 = vrot.slane %v4368, 1
        %v4370 = vmax.f32 %v4368, %v4369
        %v4371 = vsel %vm4230, %v4171, -inf
        %v4372 = vrot.slane %v4371, 4
        %v4373 = vmax.f32 %v4371, %v4372
        %v4374 = vrot.slane %v4373, 2
        %v4375 = vmax.f32 %v4373, %v4374
        %v4376 = vrot.slane %v4375, 1
        %v4377 = vmax.f32 %v4375, %v4376
        %v4378 = vsel %vm4230, %v4197, -inf
        %v4379 = vrot.slane %v4378, 4
        %v4380 = vmax.f32 %v4378, %v4379
        %v4381 = vrot.slane %v4380, 2
        %v4382 = vmax.f32 %v4380, %v4381
        %v4383 = vrot.slane %v4382, 1
        %v4384 = vmax.f32 %v4382, %v4383
        %v4385 = vsel %vm4230, %v4198, -inf
        %v4386 = vrot.slane %v4385, 4
        %v4387 = vmax.f32 %v4385, %v4386
        %v4388 = vrot.slane %v4387, 2
        %v4389 = vmax.f32 %v4387, %v4388
        %v4390 = vrot.slane %v4389, 1
        %v4391 = vmax.f32 %v4389, %v4390
        %v4392 = vsel %vm4230, %v4199, -inf
        %v4393 = vrot.slane %v4392, 4
        %v4394 = vmax.f32 %v4392, %v4393
        %v4395 = vrot.slane %v4394, 2
        %v4396 = vmax.f32 %v4394, %v4395
        %v4397 = vrot.slane %v4396, 1
        %v4398 = vmax.f32 %v4396, %v4397
        %v4399 = vsel %vm4230, %v4172, -inf
        %v4400 = vrot.slane %v4399, 4
        %v4401 = vmax.f32 %v4399, %v4400
        %v4402 = vrot.slane %v4401, 2
        %v4403 = vmax.f32 %v4401, %v4402
        %v4404 = vrot.slane %v4403, 1
        %v4405 = vmax.f32 %v4403, %v4404
        %v4406 = vsel %vm4230, %v4200, -inf
        %v4407 = vrot.slane %v4406, 4
        %v4408 = vmax.f32 %v4406, %v4407
        %v4409 = vrot.slane %v4408, 2
        %v4410 = vmax.f32 %v4408, %v4409
        %v4411 = vrot.slane %v4410, 1
        %v4412 = vmax.f32 %v4410, %v4411
        %v4413 = vsel %vm4230, %v4201, -inf
        %v4414 = vrot.slane %v4413, 4
        %v4415 = vmax.f32 %v4413, %v4414
        %v4416 = vrot.slane %v4415, 2
        %v4417 = vmax.f32 %v4415, %v4416
        %v4418 = vrot.slane %v4417, 1
        %v4419 = vmax.f32 %v4417, %v4418
        %v4420 = vsel %vm4230, %v4202, -inf
        %v4421 = vrot.slane %v4420, 4
        %v4422 = vmax.f32 %v4420, %v4421
        %v4423 = vrot.slane %v4422, 2
        %v4424 = vmax.f32 %v4422, %v4423
        %v4425 = vrot.slane %v4424, 1
        %v4426 = vmax.f32 %v4424, %v4425
        %v4427 = vsel %vm4230, %v4173, -inf
        %v4428 = vrot.slane %v4427, 4
        %v4429 = vmax.f32 %v4427, %v4428
        %v4430 = vrot.slane %v4429, 2
        %v4431 = vmax.f32 %v4429, %v4430
        %v4432 = vrot.slane %v4431, 1
        %v4433 = vmax.f32 %v4431, %v4432
        %v4434 = vsel %vm4230, %v4203, -inf
        %v4435 = vrot.slane %v4434, 4
        %v4436 = vmax.f32 %v4434, %v4435
        %v4437 = vrot.slane %v4436, 2
        %v4438 = vmax.f32 %v4436, %v4437
        %v4439 = vrot.slane %v4438, 1
        %v4440 = vmax.f32 %v4438, %v4439
        %v4441 = vsel %vm4230, %v4204, -inf
        %v4442 = vrot.slane %v4441, 4
        %v4443 = vmax.f32 %v4441, %v4442
        %v4444 = vrot.slane %v4443, 2
        %v4445 = vmax.f32 %v4443, %v4444
        %v4446 = vrot.slane %v4445, 1
        %v4447 = vmax.f32 %v4445, %v4446
        %v4448 = vsel %vm4230, %v4205, -inf
        %v4449 = vrot.slane %v4448, 4
        %v4450 = vmax.f32 %v4448, %v4449
        %v4451 = vrot.slane %v4450, 2
        %v4452 = vmax.f32 %v4450, %v4451
        %v4453 = vrot.slane %v4452, 1
        %v4454 = vmax.f32 %v4452, %v4453
        %v4455 = vsel %vm3865, %v4237, -inf
        %v4456 = vsel %vm3865, %v4265, -inf
        %v4457 = vmax.f32 %v4455, %v4456
        %v4458 = vsel %vm3865, %v4244, -inf
        %v4459 = vsel %vm3865, %v4272, -inf
        %v4460 = vmax.f32 %v4458, %v4459
        %v4461 = vsel %vm3865, %v4251, -inf
        %v4462 = vsel %vm3865, %v4279, -inf
        %v4463 = vmax.f32 %v4461, %v4462
        %v4464 = vsel %vm3865, %v4258, -inf
        %v4465 = vsel %vm3865, %v4286, -inf
        %v4466 = vmax.f32 %v4464, %v4465
        %v4467 = vsel %vm3865, %v4293, -inf
        %v4468 = vsel %vm3865, %v4321, -inf
        %v4469 = vmax.f32 %v4467, %v4468
        %v4470 = vsel %vm3865, %v4300, -inf
        %v4471 = vsel %vm3865, %v4328, -inf
        %v4472 = vmax.f32 %v4470, %v4471
        %v4473 = vsel %vm3865, %v4307, -inf
        %v4474 = vsel %vm3865, %v4335, -inf
        %v4475 = vmax.f32 %v4473, %v4474
        %v4476 = vsel %vm3865, %v4314, -inf
        %v4477 = vsel %vm3865, %v4342, -inf
        %v4478 = vmax.f32 %v4476, %v4477
        %v4479 = vsel %vm3865, %v4349, -inf
        %v4480 = vsel %vm3865, %v4377, -inf
        %v4481 = vmax.f32 %v4479, %v4480
        %v4482 = vsel %vm3865, %v4356, -inf
        %v4483 = vsel %vm3865, %v4384, -inf
        %v4484 = vmax.f32 %v4482, %v4483
        %v4485 = vsel %vm3865, %v4363, -inf
        %v4486 = vsel %vm3865, %v4391, -inf
        %v4487 = vmax.f32 %v4485, %v4486
        %v4488 = vsel %vm3865, %v4370, -inf
        %v4489 = vsel %vm3865, %v4398, -inf
        %v4490 = vmax.f32 %v4488, %v4489
        %v4491 = vsel %vm3865, %v4405, -inf
        %v4492 = vsel %vm3865, %v4433, -inf
        %v4493 = vmax.f32 %v4491, %v4492
        %v4494 = vsel %vm3865, %v4412, -inf
        %v4495 = vsel %vm3865, %v4440, -inf
        %v4496 = vmax.f32 %v4494, %v4495
        %v4497 = vsel %vm3865, %v4419, -inf
        %v4498 = vsel %vm3865, %v4447, -inf
        %v4499 = vmax.f32 %v4497, %v4498
        %v4500 = vsel %vm3865, %v4426, -inf
        %v4501 = vsel %vm3865, %v4454, -inf
        %v4502 = vmax.f32 %v4500, %v4501
        %v4519 = vsel %vm3547, %v4460, %v4457
        %v4520 = vsel %vm3549, %v4463, %v4519
        %v4521 = vsel %vm3551, %v4466, %v4520
        %v4522 = vsel %vm3547, %v4472, %v4469
        %v4523 = vsel %vm3549, %v4475, %v4522
        %v4524 = vsel %vm3551, %v4478, %v4523
        %v4525 = vsel %vm3547, %v4484, %v4481
        %v4526 = vsel %vm3549, %v4487, %v4525
        %v4527 = vsel %vm3551, %v4490, %v4526
        %v4528 = vsel %vm3547, %v4496, %v4493
        %v4529 = vsel %vm3549, %v4499, %v4528
        %v4530 = vsel %vm3551, %v4502, %v4529
        %v4535 = vsel %vm614, 0.0, %v4521
        %v4536 = vsel %vm614, 0.0, %v4524
        %v4537 = vsel %vm614, 0.0, %v4527
        %v4538 = vsel %vm614, 0.0, %v4530
        %vm4539 = vcmask 1044480
        %v4540 = vsel %vm4539, %v4535, 0.0
        %v4541 = vsel %vm4539, %v4536, 0.0
        %v4542 = vsel %vm4539, %v4537, 0.0
        %v4543 = vsel %vm4539, %v4538, 0.0
        %v4547 = vrot.slane %v4540, 1
        %v4548 = vrot.slane %v4541, 1
        %v4549 = vrot.slane %v4542, 1
        %4550 = vrot.lane.b32.xlu0 %v774, 64
        %v4551 = vpop.permute.xlu0 %4550
        %4552 = vrot.lane.b32.xlu0 %v4547, 64
        %v4553 = vpop.permute.xlu0 %4552
        %4554 = vrot.lane.b32.xlu0 %v4548, 64
        %v4555 = vpop.permute.xlu0 %4554
        %4556 = vrot.lane.b32.xlu0 %v4549, 64
        %v4557 = vpop.permute.xlu0 %4556
        %v4562 = vrot.slane %v4540, 2
        %v4563 = vrot.slane %v4541, 2
        %v4564 = vrot.slane %v4542, 2
        %4570 = vrot.lane.b32.xlu0 %v4540, 64
        %v4571 = vpop.permute.xlu0 %4570
        %4572 = vrot.lane.b32.xlu0 %v4541, 64
        %v4573 = vpop.permute.xlu0 %4572
        %4574 = vrot.lane.b32.xlu0 %v4542, 64
        %v4575 = vpop.permute.xlu0 %4574
        %4576 = vrot.lane.b32.xlu0 %v4543, 64
        %v4577 = vpop.permute.xlu0 %4576
        %v4582 = vrot.slane %v4543, 1
        %v4587 = vrot.slane %v4543, 2
        %4588 = vrot.lane.b32.xlu0 %v4562, 64
        %v4589 = vpop.permute.xlu0 %4588
        %4590 = vrot.lane.b32.xlu0 %v4563, 64
        %v4591 = vpop.permute.xlu0 %4590
        %4592 = vrot.lane.b32.xlu0 %v4564, 64
        %v4593 = vpop.permute.xlu0 %4592
        %4594 = vrot.lane.b32.xlu0 %v4587, 64
        %v4595 = vpop.permute.xlu0 %4594
        %4600 = vrot.lane.b32.xlu0 %v4582, 64
        %v4601 = vpop.permute.xlu0 %4600
        %v4603 = vsel %vm3865, 0.0, %v4551
        %v4604 = vsel %vm3865, %v4540, %v4553
        %v4605 = vsel %vm3865, %v4541, %v4555
        %v4606 = vsel %vm3865, %v4542, %v4557
        %v4607 = vsel %vm3865, %v945, %v4571
        %v4608 = vsel %vm3865, %v4562, %v4573
        %v4609 = vsel %vm3865, %v4563, %v4575
        %v4610 = vsel %vm3865, %v4564, %v4577
        %v4611 = vsel %vm3865, %v4547, %v4589
        %v4612 = vsel %vm3865, %v4548, %v4591
        %v4613 = vsel %vm3865, %v4549, %v4593
        %v4614 = vsel %vm3865, %v4582, %v4595
        %v4615 = vsel %vm3865, %v4543, %v4601
        %v4629 = vrot.slane %v4607, 4
        %v4630 = vrot.slane %v4605, 4
        %v4631 = vrot.slane %v4608, 4
        %v4632 = vrot.slane %v4606, 4
        %v4633 = vrot.slane %v4609, 4
        %v4634 = vrot.slane %v4615, 4
        %v4635 = vrot.slane %v4610, 4
        %v4636 = vrot.slane %v4603, 4
        %vm4637 = vcmask 1043456
        %v4638 = vsel %vm4637, %v4603, %v4629
        %v4639 = vsel %vm4637, %v4611, %v4630
        %v4640 = vsel %vm4637, %v4604, %v4631
        %v4641 = vsel %vm4637, %v4612, %v4632
        %v4642 = vsel %vm4637, %v4605, %v4633
        %v4643 = vsel %vm4637, %v4613, %v4634
        %v4644 = vsel %vm4637, %v4606, %v4635
        %v4645 = vsel %vm4637, %v4614, %v4636
        %4646 = vst [vmem:[#allocation1] ss:$2 sm:$0xff] %v4638
        %s4647 = scalar_lea.vmem [#allocation1], 1
        %4648 = vst [vmem:[%s4647] ss:$2 sm:$0xff] %v4640
        %s4649 = scalar_lea.vmem [#allocation1], 16
        %4650 = vst [vmem:[%s4649] ss:$2 sm:$0xff] %v4639
        %s4651 = scalar_lea.vmem [#allocation1], 17
        %4652 = vst [vmem:[%s4651] ss:$2 sm:$0xff] %v4641
        %s4653 = scalar_lea.vmem [#allocation1], 32
        %4654 = vst [vmem:[%s4653] ss:$2 sm:$0xff] %v4563
        %s4655 = scalar_lea.vmem [#allocation1], 33
        %4656 = vst [vmem:[%s4655] ss:$2 sm:$0xff] %v4564
        %s4657 = scalar_lea.vmem [#allocation1], 48
        %4658 = vst [vmem:[%s4657] ss:$2 sm:$0xff] %v4642
        %s4659 = scalar_lea.vmem [#allocation1], 49
        %4660 = vst [vmem:[%s4659] ss:$2 sm:$0xff] %v4644
        %v4661 = vld.sshfl [vmem:[#allocation1] sm:$0xff pattern:$0x75316420]
        %v4662 = vld.sshfl [vmem:[#allocation1 + $0x8] sm:$0xff pattern:$0x75316420]
        %v4663 = vld.sshfl [vmem:[#allocation1 + $0x10] sm:$0xff pattern:$0x75316420]
        %v4664 = vld.sshfl [vmem:[#allocation1 + $0x18] sm:$0xff pattern:$0x75316420]
        %v4665 = vld.sshfl [vmem:[#allocation1 + $0x20] sm:$0xff pattern:$0x75316420]
        %v4666 = vld.sshfl [vmem:[#allocation1 + $0x30] sm:$0xff pattern:$0x75316420]
        %v4667 = vld.sshfl [vmem:[#allocation1 + $0x38] sm:$0xff pattern:$0x75316420]
        %4668 = vst [vmem:[#allocation1] ss:$2 sm:$0xff] %v4643
        %4669 = vst [vmem:[%s4647] ss:$2 sm:$0xff] %v4645
        %4670 = vst [vmem:[%s4649] ss:$2 sm:$0xff] %v4587
        %4671 = vst [vmem:[%s4651] ss:$2 sm:$0xff] %v945
        %v4672 = vld.sshfl [vmem:[#allocation1] sm:$0xff pattern:$0x75316420]
        %v4673 = vld.sshfl [vmem:[#allocation1 + $0x8] sm:$0xff pattern:$0x75316420]
        %v4674 = vld.sshfl [vmem:[#allocation1 + $0x10] sm:$0xff pattern:$0x75316420]
        %v4685 = vpack.c.bf16 %v4666, %v4661
        %v4686 = vpack.c.bf16 %v4667, %v4662
        %v4687 = vpack.c.bf16 %v4672, %v4663
        %v4688 = vpack.c.bf16 %v4673, %v4664
        %v4689 = vpack.c.bf16 %v4674, %v4665
        %v4690 = vld [vmem:[%s5] sm:$0xf]
        %v4691 = vld [vmem:[%s5 + $0x4] sm:$0xf]
        %v4692 = vld [vmem:[%s5 + $0x8] sm:$0xf]
        %v4693 = vld [vmem:[%s5 + $0xc] sm:$0xf]
        %v4694 = vld [vmem:[%s5 + $0x10] sm:$0xf]
        %v4695 = vld [vmem:[%s5 + $0x14] sm:$0xf]
        %v4696 = vld [vmem:[%s5 + $0x18] sm:$0xf]
        %v4697 = vld [vmem:[%s5 + $0x1c] sm:$0xf]
        %v4698 = vld [vmem:[%s5 + $0x20] sm:$0xf]
        %v4699 = vld [vmem:[%s5 + $0x24] sm:$0xf]
        %v4700 = vld [vmem:[%s5 + $0x28] sm:$0xf]
        %v4701 = vld [vmem:[%s5 + $0x2c] sm:$0xf]
        %v4702 = vld [vmem:[%s5 + $0x30] sm:$0xf]
        %v4703 = vld [vmem:[%s5 + $0x34] sm:$0xf]
        %v4704 = vld [vmem:[%s5 + $0x38] sm:$0xf]
        %v4705 = vld [vmem:[%s5 + $0x3c] sm:$0xf]
        %v4706 = vld [vmem:[%s5 + $0x40] sm:$0xf]
        %v4707 = vld [vmem:[%s5 + $0x44] sm:$0xf]
        %v4708 = vld [vmem:[%s5 + $0x48] sm:$0xf]
        %v4709 = vld [vmem:[%s5 + $0x4c] sm:$0xf]
        %v4710 = vld [vmem:[%s5 + $0x50] sm:$0xf]
        %v4711 = vld [vmem:[%s5 + $0x54] sm:$0xf]
        %v4712 = vld [vmem:[%s5 + $0x58] sm:$0xf]
        %v4713 = vld [vmem:[%s5 + $0x5c] sm:$0xf]
        %v4714 = vld [vmem:[%s5 + $0x60] sm:$0xf]
        %v4715 = vld [vmem:[%s5 + $0x64] sm:$0xf]
        %v4716 = vld [vmem:[%s5 + $0x68] sm:$0xf]
        %v4717 = vld [vmem:[%s5 + $0x6c] sm:$0xf]
        %v4718 = vld [vmem:[%s5 + $0x70] sm:$0xf]
        %v4719 = vld [vmem:[%s5 + $0x74] sm:$0xf]
        %v4720 = vld [vmem:[%s5 + $0x78] sm:$0xf]
        %v4721 = vld [vmem:[%s5 + $0x7c] sm:$0xf]
        %v4722 = vld [vmem:[%s5 + $0x80] sm:$0xf]
        %v4723 = vld [vmem:[%s5 + $0x84] sm:$0xf]
        %v4724 = vld [vmem:[%s5 + $0x88] sm:$0xf]
        %v4725 = vld [vmem:[%s5 + $0x8c] sm:$0xf]
        %v4726 = vld [vmem:[%s5 + $0x90] sm:$0xf]
        %v4727 = vld [vmem:[%s5 + $0x94] sm:$0xf]
        %v4728 = vld [vmem:[%s5 + $0x98] sm:$0xf]
        %v4729 = vld [vmem:[%s5 + $0x9c] sm:$0xf]
        %v4730 = vld [vmem:[%s5 + $0xa0] sm:$0xf]
        %v4731 = vld [vmem:[%s5 + $0xa4] sm:$0xf]
        %v4732 = vld [vmem:[%s5 + $0xa8] sm:$0xf]
        %v4733 = vld [vmem:[%s5 + $0xac] sm:$0xf]
        %v4734 = vld [vmem:[%s5 + $0xb0] sm:$0xf]
        %v4735 = vld [vmem:[%s5 + $0xb4] sm:$0xf]
        %v4736 = vld [vmem:[%s5 + $0xb8] sm:$0xf]
        %v4737 = vld [vmem:[%s5 + $0xbc] sm:$0xf]
        %v4738 = vld [vmem:[%s5 + $0xc0] sm:$0xf]
        %v4739 = vld [vmem:[%s5 + $0xc4] sm:$0xf]
        %v4740 = vld [vmem:[%s5 + $0xc8] sm:$0xf]
        %v4741 = vld [vmem:[%s5 + $0xcc] sm:$0xf]
        %v4742 = vld [vmem:[%s5 + $0xd0] sm:$0xf]
        %v4743 = vld [vmem:[%s5 + $0xd4] sm:$0xf]
        %v4744 = vld [vmem:[%s5 + $0xd8] sm:$0xf]
        %v4745 = vld [vmem:[%s5 + $0xdc] sm:$0xf]
        %v4746 = vld [vmem:[%s5 + $0xe0] sm:$0xf]
        %v4747 = vld [vmem:[%s5 + $0xe4] sm:$0xf]
        %v4748 = vld [vmem:[%s5 + $0xe8] sm:$0xf]
        %v4749 = vld [vmem:[%s5 + $0xec] sm:$0xf]
        %v4750 = vld [vmem:[%s5 + $0xf0] sm:$0xf]
        %v4751 = vld [vmem:[%s5 + $0xf4] sm:$0xf]
        %v4752 = vld [vmem:[%s5 + $0xf8] sm:$0xf]
        %v4753 = vld [vmem:[%s5 + $0xfc] sm:$0xf]
        %v4754 = vld [vmem:[%s5 + $0x100] sm:$0xf]
        %v4755 = vld [vmem:[%s5 + $0x104] sm:$0xf]
        %v4756 = vld [vmem:[%s5 + $0x108] sm:$0xf]
        %v4757 = vld [vmem:[%s5 + $0x10c] sm:$0xf]
        %v4758 = vld [vmem:[%s5 + $0x110] sm:$0xf]
        %v4759 = vld [vmem:[%s5 + $0x114] sm:$0xf]
        %v4760 = vld [vmem:[%s5 + $0x118] sm:$0xf]
        %v4761 = vld [vmem:[%s5 + $0x11c] sm:$0xf]
        %v4762 = vld [vmem:[%s6] sm:$0x1]
        %v4764 = vperm.slane %v4762, 0
        %v4838 = vunpack.c.l.b16 %v4690
        %v4839 = vunpack.c.l.b16 %v4691
        %v4840 = vunpack.c.l.b16 %v4692
        %v4841 = vunpack.c.l.b16 %v4693
        %v4842 = vunpack.c.l.b16 %v4694
        %v4843 = vunpack.c.l.b16 %v4695
        %v4844 = vunpack.c.l.b16 %v4696
        %v4845 = vunpack.c.l.b16 %v4697
        %v4846 = vunpack.c.l.b16 %v4698
        %v4847 = vunpack.c.l.b16 %v4699
        %v4848 = vunpack.c.l.b16 %v4700
        %v4849 = vunpack.c.l.b16 %v4701
        %v4850 = vunpack.c.l.b16 %v4702
        %v4851 = vunpack.c.l.b16 %v4703
        %v4852 = vunpack.c.l.b16 %v4704
        %v4853 = vunpack.c.l.b16 %v4705
        %v4854 = vunpack.c.l.b16 %v4706
        %v4855 = vunpack.c.l.b16 %v4707
        %v4856 = vunpack.c.l.b16 %v4708
        %v4857 = vunpack.c.l.b16 %v4709
        %v4858 = vunpack.c.l.b16 %v4710
        %v4859 = vunpack.c.l.b16 %v4711
        %v4860 = vunpack.c.l.b16 %v4712
        %v4861 = vunpack.c.l.b16 %v4713
        %v4862 = vunpack.c.l.b16 %v4714
        %v4863 = vunpack.c.l.b16 %v4715
        %v4864 = vunpack.c.l.b16 %v4716
        %v4865 = vunpack.c.l.b16 %v4717
        %v4866 = vunpack.c.l.b16 %v4718
        %v4867 = vunpack.c.l.b16 %v4719
        %v4868 = vunpack.c.l.b16 %v4720
        %v4869 = vunpack.c.l.b16 %v4721
        %v4870 = vunpack.c.l.b16 %v4722
        %v4871 = vunpack.c.l.b16 %v4723
        %v4872 = vunpack.c.l.b16 %v4724
        %v4873 = vunpack.c.l.b16 %v4725
        %v4874 = vunpack.c.l.b16 %v4726
        %v4875 = vunpack.c.l.b16 %v4727
        %v4876 = vunpack.c.l.b16 %v4728
        %v4877 = vunpack.c.l.b16 %v4729
        %v4878 = vunpack.c.l.b16 %v4730
        %v4879 = vunpack.c.l.b16 %v4731
        %v4880 = vunpack.c.l.b16 %v4732
        %v4881 = vunpack.c.l.b16 %v4733
        %v4882 = vunpack.c.l.b16 %v4734
        %v4883 = vunpack.c.l.b16 %v4735
        %v4884 = vunpack.c.l.b16 %v4736
        %v4885 = vunpack.c.l.b16 %v4737
        %v4886 = vunpack.c.l.b16 %v4738
        %v4887 = vunpack.c.l.b16 %v4739
        %v4888 = vunpack.c.l.b16 %v4740
        %v4889 = vunpack.c.l.b16 %v4741
        %v4890 = vunpack.c.l.b16 %v4742
        %v4891 = vunpack.c.l.b16 %v4743
        %v4892 = vunpack.c.l.b16 %v4744
        %v4893 = vunpack.c.l.b16 %v4745
        %v4894 = vunpack.c.l.b16 %v4746
        %v4895 = vunpack.c.l.b16 %v4747
        %v4896 = vunpack.c.l.b16 %v4748
        %v4897 = vunpack.c.l.b16 %v4749
        %v4898 = vunpack.c.l.b16 %v4750
        %v4899 = vunpack.c.l.b16 %v4751
        %v4900 = vunpack.c.l.b16 %v4752
        %v4901 = vunpack.c.l.b16 %v4753
        %v4902 = vunpack.c.l.b16 %v4754
        %v4903 = vunpack.c.l.b16 %v4755
        %v4904 = vunpack.c.l.b16 %v4756
        %v4905 = vunpack.c.l.b16 %v4757
        %v4906 = vunpack.c.l.b16 %v4758
        %v4907 = vunpack.c.l.b16 %v4759
        %v4908 = vunpack.c.l.b16 %v4760
        %v4909 = vunpack.c.l.b16 %v4761
        %v4910 = vpack.c.b16 %v4839, %v4838
        %v4911 = vpack.c.b16 %v4841, %v4840
        %v4912 = vpack.c.b16 %v4843, %v4842
        %v4913 = vpack.c.b16 %v4845, %v4844
        %v4914 = vpack.c.b16 %v4847, %v4846
        %v4915 = vpack.c.b16 %v4849, %v4848
        %v4916 = vpack.c.b16 %v4851, %v4850
        %v4917 = vpack.c.b16 %v4853, %v4852
        %v4918 = vpack.c.b16 %v4855, %v4854
        %v4919 = vpack.c.b16 %v4857, %v4856
        %v4920 = vpack.c.b16 %v4859, %v4858
        %v4921 = vpack.c.b16 %v4861, %v4860
        %v4922 = vpack.c.b16 %v4863, %v4862
        %v4923 = vpack.c.b16 %v4865, %v4864
        %v4924 = vpack.c.b16 %v4867, %v4866
        %v4925 = vpack.c.b16 %v4869, %v4868
        %v4926 = vpack.c.b16 %v4871, %v4870
        %v4927 = vpack.c.b16 %v4873, %v4872
        %v4928 = vpack.c.b16 %v4875, %v4874
        %v4929 = vpack.c.b16 %v4877, %v4876
        %v4930 = vpack.c.b16 %v4879, %v4878
        %v4931 = vpack.c.b16 %v4881, %v4880
        %v4932 = vpack.c.b16 %v4883, %v4882
        %v4933 = vpack.c.b16 %v4885, %v4884
        %v4934 = vpack.c.b16 %v4887, %v4886
        %v4935 = vpack.c.b16 %v4889, %v4888
        %v4936 = vpack.c.b16 %v4891, %v4890
        %v4937 = vpack.c.b16 %v4893, %v4892
        %v4938 = vpack.c.b16 %v4895, %v4894
        %v4939 = vpack.c.b16 %v4897, %v4896
        %v4940 = vpack.c.b16 %v4899, %v4898
        %v4941 = vpack.c.b16 %v4901, %v4900
        %v4942 = vpack.c.b16 %v4903, %v4902
        %v4943 = vpack.c.b16 %v4905, %v4904
        %v4944 = vpack.c.b16 %v4907, %v4906
        %v4945 = vpack.c.b16 %v4909, %v4908
        %v4983 = vsel %vm3865, %v4689, 0
        %4985 = vmatpush.bf16.msra.mxu0 %v4917
        %4986 = vmatpush.bf16.msra.mxu0 %v4916
        %4987 = vmatpush.bf16.msra.mxu0 %v4915
        %4988 = vmatpush.bf16.msra.mxu0 %v4914
        %4989 = vmatpush.bf16.msra.mxu0 %v4913
        %4990 = vmatpush.bf16.msra.mxu0 %v4912
        %4991 = vmatpush.bf16.msra.mxu0 %v4911
        %4992 = vmatpush.bf16.msra.mxu0 %v4910
        %4993 = vmatmul.bf16.gmra.mxu0 %v4685
        %v4994 = vpop.f32.mrf.mxu0
        %v4995 = vadd.f32 %v4764, %v4994
        %v4996 = vpop.f32.mrf.mxu0
        %v4997 = vadd.f32 %v4764, %v4996
        %4998 = vdwg.mxu0
        %4999 = vmatpush.bf16.msra.mxu0 %v4925
        %5000 = vmatpush.bf16.msra.mxu0 %v4924
        %5001 = vmatpush.bf16.msra.mxu0 %v4923
        %5002 = vmatpush.bf16.msra.mxu0 %v4922
        %5003 = vmatpush.bf16.msra.mxu0 %v4921
        %5004 = vmatpush.bf16.msra.mxu0 %v4920
        %5005 = vmatpush.bf16.msra.mxu0 %v4919
        %5006 = vmatpush.bf16.msra.mxu0 %v4918
        %5007 = vmatmul.bf16.gmra.mxu0 %v4686
        %v5008 = vpop.f32.mrf.mxu0
        %v5009 = vadd.f32 %v4995, %v5008
        %v5010 = vpop.f32.mrf.mxu0
        %v5011 = vadd.f32 %v4997, %v5010
        %5012 = vdwg.mxu0
        %5013 = vmatpush.bf16.msra.mxu0 %v4933
        %5014 = vmatpush.bf16.msra.mxu0 %v4932
        %5015 = vmatpush.bf16.msra.mxu0 %v4931
        %5016 = vmatpush.bf16.msra.mxu0 %v4930
        %5017 = vmatpush.bf16.msra.mxu0 %v4929
        %5018 = vmatpush.bf16.msra.mxu0 %v4928
        %5019 = vmatpush.bf16.msra.mxu0 %v4927
        %5020 = vmatpush.bf16.msra.mxu0 %v4926
        %5021 = vmatmul.bf16.gmra.mxu0 %v4687
        %v5022 = vpop.f32.mrf.mxu0
        %v5023 = vadd.f32 %v5009, %v5022
        %v5024 = vpop.f32.mrf.mxu0
        %v5025 = vadd.f32 %v5011, %v5024
        %5026 = vdwg.mxu0
        %5027 = vmatpush.bf16.msra.mxu0 %v4941
        %5028 = vmatpush.bf16.msra.mxu0 %v4940
        %5029 = vmatpush.bf16.msra.mxu0 %v4939
        %5030 = vmatpush.bf16.msra.mxu0 %v4938
        %5031 = vmatpush.bf16.msra.mxu0 %v4937
        %5032 = vmatpush.bf16.msra.mxu0 %v4936
        %5033 = vmatpush.bf16.msra.mxu0 %v4935
        %5034 = vmatpush.bf16.msra.mxu0 %v4934
        %5035 = vmatmul.bf16.gmra.mxu0 %v4688
        %v5036 = vpop.f32.mrf.mxu0
        %v5037 = vadd.f32 %v5023, %v5036
        %v5038 = vpop.f32.mrf.mxu0
        %v5039 = vadd.f32 %v5025, %v5038
        %5040 = vdwg.mxu0
        %5041 = vmatpush.bf16.msra.mxu0 0
        %5042 = vmatpush.bf16.msra.mxu0 0
        %5043 = vmatpush.bf16.msra.mxu0 0
        %5044 = vmatpush.bf16.msra.mxu0 0
        %5045 = vmatpush.bf16.msra.mxu0 %v4945
        %5046 = vmatpush.bf16.msra.mxu0 %v4944
        %5047 = vmatpush.bf16.msra.mxu0 %v4943
        %5048 = vmatpush.bf16.msra.mxu0 %v4942
        %5049 = vmatmul.bf16.gmra.mxu0 %v4983
        %v5050 = vpop.f32.mrf.mxu0
        %v5051 = vadd.f32 %v5037, %v5050
        %v5052 = vpop.f32.mrf.mxu0
        %v5053 = vadd.f32 %v5039, %v5052
        %5054 = vdwg.mxu0
        %v5055 = vmax.f32 %v5051, 0.0
        %v5056 = vmax.f32 %v5053, 0.0
        %v5057 = vpack.c.bf16 %v5056, %v5055
        %v5058 = vld [vmem:[%s7] sm:$0xff]
        %v5059 = vld [vmem:[%s7 + $0x8] sm:$0xff]
        %v5060 = vld [vmem:[%s7 + $0x10] sm:$0xff]
        %v5061 = vld [vmem:[%s7 + $0x18] sm:$0xff]
        %v5062 = vld [vmem:[%s7 + $0x20] sm:$0xff]
        %v5063 = vld [vmem:[%s7 + $0x28] sm:$0xff]
        %v5064 = vld [vmem:[%s7 + $0x30] sm:$0xff]
        %v5065 = vld [vmem:[%s7 + $0x38] sm:$0xff]
        %v5066 = vld [vmem:[%s7 + $0x40] sm:$0xff]
        %v5067 = vld [vmem:[%s7 + $0x48] sm:$0xff]
        %v5068 = vld [vmem:[%s7 + $0x50] sm:$0xff]
        %v5069 = vld [vmem:[%s7 + $0x58] sm:$0xff]
        %v5070 = vld [vmem:[%s7 + $0x60] sm:$0xff]
        %v5071 = vld [vmem:[%s7 + $0x68] sm:$0xff]
        %v5072 = vld [vmem:[%s7 + $0x70] sm:$0xff]
        %v5073 = vld [vmem:[%s7 + $0x78] sm:$0xff]
        %v5074 = vld [vmem:[%s8] sm:$0x3]
        %v5076 = vperm.slane %v5074, 0
        %v5077 = vperm.slane %v5074, 1
        %v5096 = vunpack.c.l.b16 %v5058
        %v5097 = vunpack.c.h.b16 %v5058
        %v5098 = vunpack.c.l.b16 %v5059
        %v5099 = vunpack.c.h.b16 %v5059
        %v5100 = vunpack.c.l.b16 %v5060
        %v5101 = vunpack.c.h.b16 %v5060
        %v5102 = vunpack.c.l.b16 %v5061
        %v5103 = vunpack.c.h.b16 %v5061
        %v5104 = vunpack.c.l.b16 %v5062
        %v5105 = vunpack.c.h.b16 %v5062
        %v5106 = vunpack.c.l.b16 %v5063
        %v5107 = vunpack.c.h.b16 %v5063
        %v5108 = vunpack.c.l.b16 %v5064
        %v5109 = vunpack.c.h.b16 %v5064
        %v5110 = vunpack.c.l.b16 %v5065
        %v5111 = vunpack.c.h.b16 %v5065
        %v5112 = vunpack.c.l.b16 %v5066
        %v5113 = vunpack.c.h.b16 %v5066
        %v5114 = vunpack.c.l.b16 %v5067
        %v5115 = vunpack.c.h.b16 %v5067
        %v5116 = vunpack.c.l.b16 %v5068
        %v5117 = vunpack.c.h.b16 %v5068
        %v5118 = vunpack.c.l.b16 %v5069
        %v5119 = vunpack.c.h.b16 %v5069
        %v5120 = vunpack.c.l.b16 %v5070
        %v5121 = vunpack.c.h.b16 %v5070
        %v5122 = vunpack.c.l.b16 %v5071
        %v5123 = vunpack.c.h.b16 %v5071
        %v5124 = vunpack.c.l.b16 %v5072
        %v5125 = vunpack.c.h.b16 %v5072
        %v5126 = vunpack.c.l.b16 %v5073
        %v5127 = vunpack.c.h.b16 %v5073
        %v5128 = vpack.c.b16 %v5098, %v5096
        %v5129 = vpack.c.b16 %v5099, %v5097
        %v5130 = vpack.c.b16 %v5102, %v5100
        %v5131 = vpack.c.b16 %v5103, %v5101
        %v5132 = vpack.c.b16 %v5106, %v5104
        %v5133 = vpack.c.b16 %v5107, %v5105
        %v5134 = vpack.c.b16 %v5110, %v5108
        %v5135 = vpack.c.b16 %v5111, %v5109
        %v5136 = vpack.c.b16 %v5114, %v5112
        %v5137 = vpack.c.b16 %v5115, %v5113
        %v5138 = vpack.c.b16 %v5118, %v5116
        %v5139 = vpack.c.b16 %v5119, %v5117
        %v5140 = vpack.c.b16 %v5122, %v5120
        %v5141 = vpack.c.b16 %v5123, %v5121
        %v5142 = vpack.c.b16 %v5126, %v5124
        %v5143 = vpack.c.b16 %v5127, %v5125
        %5160 = vmatpush.bf16.msra.mxu0 %v5142
        %5161 = vmatpush.bf16.msra.mxu0 %v5140
        %5162 = vmatpush.bf16.msra.mxu0 %v5138
        %5163 = vmatpush.bf16.msra.mxu0 %v5136
        %5164 = vmatpush.bf16.msra.mxu0 %v5134
        %5165 = vmatpush.bf16.msra.mxu0 %v5132
        %5166 = vmatpush.bf16.msra.mxu0 %v5130
        %5167 = vmatpush.bf16.msra.mxu0 %v5128
        %5168 = vmatmul.bf16.gmra.mxu0 %v5057
        %v5169 = vpop.f32.mrf.mxu0
        %v5170 = vadd.f32 %v5076, %v5169
        %v5171 = vpop.f32.mrf.mxu0
        %v5172 = vadd.f32 %v5076, %v5171
        %5173 = vdwg.mxu0
        %5174 = vmatpush.bf16.msra.mxu0 %v5143
        %5175 = vmatpush.bf16.msra.mxu0 %v5141
        %5176 = vmatpush.bf16.msra.mxu0 %v5139
        %5177 = vmatpush.bf16.msra.mxu0 %v5137
        %5178 = vmatpush.bf16.msra.mxu0 %v5135
        %5179 = vmatpush.bf16.msra.mxu0 %v5133
        %5180 = vmatpush.bf16.msra.mxu0 %v5131
        %5181 = vmatpush.bf16.msra.mxu0 %v5129
        %5182 = vmatmul.bf16.gmra.mxu0 %v5057
        %v5183 = vpop.f32.mrf.mxu0
        %v5184 = vadd.f32 %v5077, %v5183
        %v5185 = vpop.f32.mrf.mxu0
        %v5186 = vadd.f32 %v5077, %v5185
        %5187 = vdwg.mxu0
        %v5192 = vrot.slane %v5184, 4
        %v5193 = vrot.slane %v5186, 4
        %v5194 = vsel %vm4637, %v5170, %v5192
        %v5195 = vsel %vm4637, %v5192, %v5170
        %v5196 = vrot.slane %v5195, 4
        %v5197 = vsel %vm4637, %v5172, %v5193
        %v5198 = vsel %vm4637, %v5193, %v5172
        %v5199 = vrot.slane %v5198, 4
        %v5200 = vrot.slane %v5194, 3
        %v5201 = vrot.slane %v5196, 3
        %v5202 = vrot.slane %v5197, 3
        %v5203 = vrot.slane %v5199, 3
        %v5204 = vsel %vm614, %v5194, %v5200
        %vm5205 = vcmask 1041409
        %v5206 = vsel %vm5205, %v5194, %v5200
        %v5207 = vrot.slane %v5206, 1
        %v5208 = vsel %vm3547, %v5194, %v5200
        %v5209 = vrot.slane %v5208, 2
        %v5210 = vsel %vm3549, %v5194, %v5200
        %v5211 = vrot.slane %v5210, 3
        %v5212 = vsel %vm614, %v5196, %v5201
        %v5213 = vsel %vm5205, %v5196, %v5201
        %v5214 = vrot.slane %v5213, 1
        %v5215 = vsel %vm3547, %v5196, %v5201
        %v5216 = vrot.slane %v5215, 2
        %v5217 = vsel %vm3549, %v5196, %v5201
        %v5218 = vrot.slane %v5217, 3
        %v5219 = vsel %vm614, %v5197, %v5202
        %v5220 = vsel %vm5205, %v5197, %v5202
        %v5221 = vrot.slane %v5220, 1
        %v5222 = vsel %vm3547, %v5197, %v5202
        %v5223 = vrot.slane %v5222, 2
        %v5224 = vsel %vm3549, %v5197, %v5202
        %v5225 = vrot.slane %v5224, 3
        %v5226 = vsel %vm614, %v5199, %v5203
        %v5227 = vsel %vm5205, %v5199, %v5203
        %v5228 = vrot.slane %v5227, 1
        %v5229 = vsel %vm3547, %v5199, %v5203
        %v5230 = vrot.slane %v5229, 2
        %v5231 = vsel %vm3549, %v5199, %v5203
        %v5232 = vrot.slane %v5231, 3
        %v5249 = vperm.slane %v5204, 0
        %v5250 = vperm.slane %v5207, 0
        %v5251 = vperm.slane %v5209, 0
        %v5252 = vperm.slane %v5211, 0
        %v5253 = vperm.slane %v5212, 0
        %v5254 = vperm.slane %v5214, 0
        %v5255 = vperm.slane %v5216, 0
        %v5256 = vperm.slane %v5218, 0
        %v5257 = vperm.slane %v5219, 0
        %v5258 = vperm.slane %v5221, 0
        %v5259 = vperm.slane %v5223, 0
        %v5260 = vperm.slane %v5225, 0
        %v5261 = vperm.slane %v5226, 0
        %v5262 = vperm.slane %v5228, 0
        %v5263 = vperm.slane %v5230, 0
        %v5264 = vperm.slane %v5232, 0
        %5265 = vrot.lane.b32.xlu0 %v5249, 64
        %v5266 = vpop.permute.xlu0 %5265
        %5267 = vrot.lane.b32.xlu0 %v5250, 64
        %v5268 = vpop.permute.xlu0 %5267
        %5269 = vrot.lane.b32.xlu0 %v5251, 64
        %v5270 = vpop.permute.xlu0 %5269
        %5271 = vrot.lane.b32.xlu0 %v5252, 64
        %v5272 = vpop.permute.xlu0 %5271
        %5273 = vrot.lane.b32.xlu0 %v5253, 64
        %v5274 = vpop.permute.xlu0 %5273
        %5275 = vrot.lane.b32.xlu0 %v5254, 64
        %v5276 = vpop.permute.xlu0 %5275
        %5277 = vrot.lane.b32.xlu0 %v5255, 64
        %v5278 = vpop.permute.xlu0 %5277
        %5279 = vrot.lane.b32.xlu0 %v5256, 64
        %v5280 = vpop.permute.xlu0 %5279
        %5281 = vrot.lane.b32.xlu0 %v5257, 64
        %v5282 = vpop.permute.xlu0 %5281
        %5283 = vrot.lane.b32.xlu0 %v5258, 64
        %v5284 = vpop.permute.xlu0 %5283
        %5285 = vrot.lane.b32.xlu0 %v5259, 64
        %v5286 = vpop.permute.xlu0 %5285
        %5287 = vrot.lane.b32.xlu0 %v5260, 64
        %v5288 = vpop.permute.xlu0 %5287
        %5289 = vrot.lane.b32.xlu0 %v5261, 64
        %v5290 = vpop.permute.xlu0 %5289
        %5291 = vrot.lane.b32.xlu0 %v5262, 64
        %v5292 = vpop.permute.xlu0 %5291
        %5293 = vrot.lane.b32.xlu0 %v5263, 64
        %v5294 = vpop.permute.xlu0 %5293
        %5295 = vrot.lane.b32.xlu0 %v5264, 64
        %v5296 = vpop.permute.xlu0 %5295
        %v5313 = vsel %vm614, %v5204, %v5266
        %v5314 = vsel %vm614, %v5207, %v5268
        %v5315 = vsel %vm614, %v5209, %v5270
        %v5316 = vsel %vm614, %v5211, %v5272
        %v5317 = vsel %vm614, %v5212, %v5274
        %v5318 = vsel %vm614, %v5214, %v5276
        %v5319 = vsel %vm614, %v5216, %v5278
        %v5320 = vsel %vm614, %v5218, %v5280
        %v5321 = vsel %vm614, %v5219, %v5282
        %v5322 = vsel %vm614, %v5221, %v5284
        %v5323 = vsel %vm614, %v5223, %v5286
        %v5324 = vsel %vm614, %v5225, %v5288
        %v5325 = vsel %vm614, %v5226, %v5290
        %v5326 = vsel %vm614, %v5228, %v5292
        %v5327 = vsel %vm614, %v5230, %v5294
        %v5328 = vsel %vm614, %v5232, %v5296
        %v5329 = vrot.slane %v5204, 1
        %v5330 = vrot.slane %v5207, 1
        %v5331 = vrot.slane %v5209, 1
        %v5332 = vrot.slane %v5211, 1
        %v5333 = vrot.slane %v5212, 1
        %v5334 = vrot.slane %v5214, 1
        %v5335 = vrot.slane %v5216, 1
        %v5336 = vrot.slane %v5218, 1
        %v5337 = vrot.slane %v5219, 1
        %v5338 = vrot.slane %v5221, 1
        %v5339 = vrot.slane %v5223, 1
        %v5340 = vrot.slane %v5225, 1
        %v5341 = vrot.slane %v5226, 1
        %v5342 = vrot.slane %v5228, 1
        %v5343 = vrot.slane %v5230, 1
        %v5344 = vrot.slane %v5232, 1
        %5361 = vrot.lane.b32.xlu0 %v5204, 64
        %v5362 = vpop.permute.xlu0 %5361
        %5363 = vrot.lane.b32.xlu0 %v5207, 64
        %v5364 = vpop.permute.xlu0 %5363
        %5365 = vrot.lane.b32.xlu0 %v5209, 64
        %v5366 = vpop.permute.xlu0 %5365
        %5367 = vrot.lane.b32.xlu0 %v5211, 64
        %v5368 = vpop.permute.xlu0 %5367
        %5369 = vrot.lane.b32.xlu0 %v5212, 64
        %v5370 = vpop.permute.xlu0 %5369
        %5371 = vrot.lane.b32.xlu0 %v5214, 64
        %v5372 = vpop.permute.xlu0 %5371
        %5373 = vrot.lane.b32.xlu0 %v5216, 64
        %v5374 = vpop.permute.xlu0 %5373
        %5375 = vrot.lane.b32.xlu0 %v5218, 64
        %v5376 = vpop.permute.xlu0 %5375
        %5377 = vrot.lane.b32.xlu0 %v5219, 64
        %v5378 = vpop.permute.xlu0 %5377
        %5379 = vrot.lane.b32.xlu0 %v5221, 64
        %v5380 = vpop.permute.xlu0 %5379
        %5381 = vrot.lane.b32.xlu0 %v5223, 64
        %v5382 = vpop.permute.xlu0 %5381
        %5383 = vrot.lane.b32.xlu0 %v5225, 64
        %v5384 = vpop.permute.xlu0 %5383
        %5385 = vrot.lane.b32.xlu0 %v5226, 64
        %v5386 = vpop.permute.xlu0 %5385
        %5387 = vrot.lane.b32.xlu0 %v5228, 64
        %v5388 = vpop.permute.xlu0 %5387
        %5389 = vrot.lane.b32.xlu0 %v5230, 64
        %v5390 = vpop.permute.xlu0 %5389
        %5391 = vrot.lane.b32.xlu0 %v5232, 64
        %v5392 = vpop.permute.xlu0 %5391
        %v5393 = vrot.slane %v5362, 1
        %v5394 = vrot.slane %v5364, 1
        %v5395 = vrot.slane %v5366, 1
        %v5396 = vrot.slane %v5368, 1
        %v5397 = vrot.slane %v5370, 1
        %v5398 = vrot.slane %v5372, 1
        %v5399 = vrot.slane %v5374, 1
        %v5400 = vrot.slane %v5376, 1
        %v5401 = vrot.slane %v5378, 1
        %v5402 = vrot.slane %v5380, 1
        %v5403 = vrot.slane %v5382, 1
        %v5404 = vrot.slane %v5384, 1
        %v5405 = vrot.slane %v5386, 1
        %v5406 = vrot.slane %v5388, 1
        %v5407 = vrot.slane %v5390, 1
        %v5408 = vrot.slane %v5392, 1
        %v5409 = vperm.slane %v5393, 0
        %v5410 = vperm.slane %v5394, 0
        %v5411 = vperm.slane %v5395, 0
        %v5412 = vperm.slane %v5396, 0
        %v5413 = vperm.slane %v5397, 0
        %v5414 = vperm.slane %v5398, 0
        %v5415 = vperm.slane %v5399, 0
        %v5416 = vperm.slane %v5400, 0
        %v5417 = vperm.slane %v5401, 0
        %v5418 = vperm.slane %v5402, 0
        %v5419 = vperm.slane %v5403, 0
        %v5420 = vperm.slane %v5404, 0
        %v5421 = vperm.slane %v5405, 0
        %v5422 = vperm.slane %v5406, 0
        %v5423 = vperm.slane %v5407, 0
        %v5424 = vperm.slane %v5408, 0
        %v5441 = vsel %vm614, %v5329, %v5409
        %v5442 = vsel %vm614, %v5330, %v5410
        %v5443 = vsel %vm614, %v5331, %v5411
        %v5444 = vsel %vm614, %v5332, %v5412
        %v5445 = vsel %vm614, %v5333, %v5413
        %v5446 = vsel %vm614, %v5334, %v5414
        %v5447 = vsel %vm614, %v5335, %v5415
        %v5448 = vsel %vm614, %v5336, %v5416
        %v5449 = vsel %vm614, %v5337, %v5417
        %v5450 = vsel %vm614, %v5338, %v5418
        %v5451 = vsel %vm614, %v5339, %v5419
        %v5452 = vsel %vm614, %v5340, %v5420
        %v5453 = vsel %vm614, %v5341, %v5421
        %v5454 = vsel %vm614, %v5342, %v5422
        %v5455 = vsel %vm614, %v5343, %v5423
        %v5456 = vsel %vm614, %v5344, %v5424
        %5489 = vst [vmem:[#allocation1] ss:$4 sm:$0xff] %v5313
        %s5490 = scalar_lea.vmem [#allocation1], 1
        %5491 = vst [vmem:[%s5490] ss:$4 sm:$0xff] %v5314
        %s5492 = scalar_lea.vmem [#allocation1], 2
        %5493 = vst [vmem:[%s5492] ss:$4 sm:$0xff] %v5315
        %s5494 = scalar_lea.vmem [#allocation1], 3
        %5495 = vst [vmem:[%s5494] ss:$4 sm:$0xff] %v5316
        %v5496 = vld.sshfl [vmem:[#allocation1] sm:$0xff pattern:$0x73625140]
        %s5497 = scalar_lea.vmem [#allocation1], 32
        %5498 = vst [vmem:[%s5497] ss:$4 sm:$0xff] %v5441
        %s5499 = scalar_lea.vmem [#allocation1], 33
        %5500 = vst [vmem:[%s5499] ss:$4 sm:$0xff] %v5442
        %s5501 = scalar_lea.vmem [#allocation1], 34
        %5502 = vst [vmem:[%s5501] ss:$4 sm:$0xff] %v5443
        %s5503 = scalar_lea.vmem [#allocation1], 35
        %5504 = vst [vmem:[%s5503] ss:$4 sm:$0xff] %v5444
        %v5505 = vld.sshfl [vmem:[#allocation1 + $0x20] sm:$0xff pattern:$0x73625140]
        %5506 = vst [vmem:[#allocation1] ss:$4 sm:$0xff] %v5317
        %5507 = vst [vmem:[%s5490] ss:$4 sm:$0xff] %v5318
        %5508 = vst [vmem:[%s5492] ss:$4 sm:$0xff] %v5319
        %5509 = vst [vmem:[%s5494] ss:$4 sm:$0xff] %v5320
        %v5510 = vld.sshfl [vmem:[#allocation1] sm:$0xff pattern:$0x73625140]
        %5511 = vst [vmem:[%s5497] ss:$4 sm:$0xff] %v5445
        %5512 = vst [vmem:[%s5499] ss:$4 sm:$0xff] %v5446
        %5513 = vst [vmem:[%s5501] ss:$4 sm:$0xff] %v5447
        %5514 = vst [vmem:[%s5503] ss:$4 sm:$0xff] %v5448
        %v5515 = vld.sshfl [vmem:[#allocation1 + $0x20] sm:$0xff pattern:$0x73625140]
        %5516 = vst [vmem:[#allocation1] ss:$4 sm:$0xff] %v5321
        %5517 = vst [vmem:[%s5490] ss:$4 sm:$0xff] %v5322
        %5518 = vst [vmem:[%s5492] ss:$4 sm:$0xff] %v5323
        %5519 = vst [vmem:[%s5494] ss:$4 sm:$0xff] %v5324
        %v5520 = vld.sshfl [vmem:[#allocation1] sm:$0xff pattern:$0x73625140]
        %5521 = vst [vmem:[%s5497] ss:$4 sm:$0xff] %v5449
        %5522 = vst [vmem:[%s5499] ss:$4 sm:$0xff] %v5450
        %5523 = vst [vmem:[%s5501] ss:$4 sm:$0xff] %v5451
        %5524 = vst [vmem:[%s5503] ss:$4 sm:$0xff] %v5452
        %v5525 = vld.sshfl [vmem:[#allocation1 + $0x20] sm:$0xff pattern:$0x73625140]
        %5526 = vst [vmem:[#allocation1] ss:$4 sm:$0xff] %v5325
        %5527 = vst [vmem:[%s5490] ss:$4 sm:$0xff] %v5326
        %5528 = vst [vmem:[%s5492] ss:$4 sm:$0xff] %v5327
        %5529 = vst [vmem:[%s5494] ss:$4 sm:$0xff] %v5328
        %v5530 = vld.sshfl [vmem:[#allocation1] sm:$0xff pattern:$0x73625140]
        %5531 = vst [vmem:[%s5497] ss:$4 sm:$0xff] %v5453
        %5532 = vst [vmem:[%s5499] ss:$4 sm:$0xff] %v5454
        %5533 = vst [vmem:[%s5501] ss:$4 sm:$0xff] %v5455
        %5534 = vst [vmem:[%s5503] ss:$4 sm:$0xff] %v5456
        %v5535 = vld.sshfl [vmem:[#allocation1 + $0x20] sm:$0xff pattern:$0x73625140]
        %5544 = vrot.lane.b32.xlu0 %v4166, 64
        %v5545 = vpop.permute.xlu0 %5544
        %5546 = vrot.lane.b32.xlu0 %v4167, 64
        %v5547 = vpop.permute.xlu0 %5546
        %5548 = vrot.lane.b32.xlu0 %v4168, 64
        %v5549 = vpop.permute.xlu0 %5548
        %5550 = vrot.lane.b32.xlu0 %v4169, 64
        %v5551 = vpop.permute.xlu0 %5550
        %5552 = vrot.lane.b32.xlu0 %v4170, 64
        %v5553 = vpop.permute.xlu0 %5552
        %5554 = vrot.lane.b32.xlu0 %v4171, 64
        %v5555 = vpop.permute.xlu0 %5554
        %5556 = vrot.lane.b32.xlu0 %v4172, 64
        %v5557 = vpop.permute.xlu0 %5556
        %5558 = vrot.lane.b32.xlu0 %v4173, 64
        %v5559 = vpop.permute.xlu0 %5558
        %v5568 = vsel %vm3865, %v5496, %v5545
        %v5569 = vsel %vm3865, %v5505, %v5547
        %v5570 = vsel %vm3865, %v5510, %v5549
        %v5571 = vsel %vm3865, %v5515, %v5551
        %v5572 = vsel %vm3865, %v5520, %v5553
        %v5573 = vsel %vm3865, %v5525, %v5555
        %v5574 = vsel %vm3865, %v5530, %v5557
        %v5575 = vsel %vm3865, %v5535, %v5559
        %v5584 = vrot.slane %v5568, 7
        %v5585 = vrot.slane %v5569, 7
        %v5586 = vrot.slane %v5570, 7
        %v5587 = vrot.slane %v5571, 7
        %v5588 = vrot.slane %v5572, 7
        %v5589 = vrot.slane %v5573, 7
        %v5590 = vrot.slane %v5574, 7
        %v5591 = vrot.slane %v5575, 7
        %v5600 = vsel %vm614, 0.0, %v5584
        %v5601 = vsel %vm614, 0.0, %v5585
        %v5602 = vsel %vm614, 0.0, %v5586
        %v5603 = vsel %vm614, 0.0, %v5587
        %v5604 = vsel %vm614, 0.0, %v5588
        %v5605 = vsel %vm614, 0.0, %v5589
        %v5606 = vsel %vm614, 0.0, %v5590
        %v5607 = vsel %vm614, 0.0, %v5591
        %v5608 = vsel %vm614, %v5584, 0.0
        %v5609 = vsel %vm614, %v5585, 0.0
        %v5610 = vsel %vm614, %v5586, 0.0
        %v5611 = vsel %vm614, %v5587, 0.0
        %v5612 = vsel %vm614, %v5588, 0.0
        %v5613 = vsel %vm614, %v5589, 0.0
        %v5614 = vsel %vm614, %v5590, 0.0
        %v5615 = vsel %vm614, %v5591, 0.0
        %v5630 = vrot.slane %v5600, 1
        %v5631 = vrot.slane %v5608, 1
        %v5632 = vsel %vm773, %v5630, %v5631
        %v5633 = vrot.slane %v5601, 1
        %v5634 = vrot.slane %v5609, 1
        %v5635 = vsel %vm773, %v5633, %v5634
        %v5636 = vrot.slane %v5602, 1
        %v5637 = vrot.slane %v5610, 1
        %v5638 = vsel %vm773, %v5636, %v5637
        %v5639 = vrot.slane %v5603, 1
        %v5640 = vrot.slane %v5611, 1
        %v5641 = vsel %vm773, %v5639, %v5640
        %v5642 = vrot.slane %v5604, 1
        %v5643 = vrot.slane %v5612, 1
        %v5644 = vsel %vm773, %v5642, %v5643
        %v5645 = vrot.slane %v5605, 1
        %v5646 = vrot.slane %v5613, 1
        %v5647 = vsel %vm773, %v5645, %v5646
        %v5648 = vrot.slane %v5606, 1
        %v5649 = vrot.slane %v5614, 1
        %v5650 = vsel %vm773, %v5648, %v5649
        %v5659 = vrot.slane %v5600, 2
        %v5660 = vrot.slane %v5608, 2
        %v5661 = vsel %vm944, %v5659, %v5660
        %v5662 = vrot.slane %v5601, 2
        %v5663 = vrot.slane %v5609, 2
        %v5664 = vsel %vm944, %v5662, %v5663
        %v5665 = vrot.slane %v5602, 2
        %v5666 = vrot.slane %v5610, 2
        %v5667 = vsel %vm944, %v5665, %v5666
        %v5668 = vrot.slane %v5603, 2
        %v5669 = vrot.slane %v5611, 2
        %v5670 = vsel %vm944, %v5668, %v5669
        %v5671 = vrot.slane %v5604, 2
        %v5672 = vrot.slane %v5612, 2
        %v5673 = vsel %vm944, %v5671, %v5672
        %v5674 = vrot.slane %v5605, 2
        %v5675 = vrot.slane %v5613, 2
        %v5676 = vsel %vm944, %v5674, %v5675
        %v5677 = vrot.slane %v5606, 2
        %v5678 = vrot.slane %v5614, 2
        %v5679 = vsel %vm944, %v5677, %v5678
        %v5689 = vrot.slane %v5607, 1
        %v5690 = vrot.slane %v5615, 1
        %v5691 = vsel %vm773, %v5689, %v5690
        %v5693 = vrot.slane %v5607, 2
        %v5694 = vrot.slane %v5615, 2
        %v5695 = vsel %vm944, %v5693, %v5694
        %v5697 = vpack.c.bf16 %v5600, 0.0
        %v5698 = vpack.c.bf16 %v5632, %v775
        %v5699 = vpack.c.bf16 %v5661, %v946
        %v5700 = vpack.c.bf16 %v5601, %v5600
        %v5701 = vpack.c.bf16 %v5635, %v5632
        %v5702 = vpack.c.bf16 %v5664, %v5661
        %v5703 = vpack.c.bf16 %v5602, %v5601
        %v5704 = vpack.c.bf16 %v5638, %v5635
        %v5705 = vpack.c.bf16 %v5667, %v5664
        %v5706 = vpack.c.bf16 %v5603, %v5602
        %v5707 = vpack.c.bf16 %v5641, %v5638
        %v5708 = vpack.c.bf16 %v5670, %v5667
        %v5709 = vpack.c.bf16 %v5604, %v5603
        %v5710 = vpack.c.bf16 %v5644, %v5641
        %v5711 = vpack.c.bf16 %v5673, %v5670
        %v5712 = vpack.c.bf16 %v5605, %v5604
        %v5713 = vpack.c.bf16 %v5647, %v5644
        %v5714 = vpack.c.bf16 %v5676, %v5673
        %v5715 = vpack.c.bf16 %v5606, %v5605
        %v5716 = vpack.c.bf16 %v5650, %v5647
        %v5717 = vpack.c.bf16 %v5679, %v5676
        %v5718 = vpack.c.bf16 %v5607, %v5606
        %v5719 = vpack.c.bf16 %v5691, %v5650
        %v5720 = vpack.c.bf16 %v5695, %v5679
        %v5721 = vpack.c.bf16 0.0, %v5607
        %v5722 = vpack.c.bf16 %v775, %v5691
        %v5723 = vpack.c.bf16 %v946, %v5695
        %v5724 = vld [vmem:[%s9] sm:$0xf]
        %v5725 = vld [vmem:[%s9 + $0x4] sm:$0xf]
        %v5726 = vld [vmem:[%s9 + $0x8] sm:$0xf]
        %v5727 = vld [vmem:[%s9 + $0xc] sm:$0xf]
        %v5728 = vld [vmem:[%s9 + $0x10] sm:$0xf]
        %v5729 = vld [vmem:[%s9 + $0x14] sm:$0xf]
        %v5730 = vld [vmem:[%s9 + $0x18] sm:$0xf]
        %v5731 = vld [vmem:[%s9 + $0x1c] sm:$0xf]
        %v5732 = vld [vmem:[%s9 + $0x20] sm:$0xf]
        %v5733 = vld [vmem:[%s9 + $0x24] sm:$0xf]
        %v5734 = vld [vmem:[%s9 + $0x28] sm:$0xf]
        %v5735 = vld [vmem:[%s9 + $0x2c] sm:$0xf]
        %v5736 = vld [vmem:[%s9 + $0x30] sm:$0xf]
        %v5737 = vld [vmem:[%s9 + $0x34] sm:$0xf]
        %v5738 = vld [vmem:[%s9 + $0x38] sm:$0xf]
        %v5739 = vld [vmem:[%s9 + $0x3c] sm:$0xf]
        %v5740 = vld [vmem:[%s9 + $0x40] sm:$0xf]
        %v5741 = vld [vmem:[%s9 + $0x44] sm:$0xf]
        %v5742 = vld [vmem:[%s9 + $0x48] sm:$0xf]
        %v5743 = vld [vmem:[%s9 + $0x4c] sm:$0xf]
        %v5744 = vld [vmem:[%s9 + $0x50] sm:$0xf]
        %v5745 = vld [vmem:[%s9 + $0x54] sm:$0xf]
        %v5746 = vld [vmem:[%s9 + $0x58] sm:$0xf]
        %v5747 = vld [vmem:[%s9 + $0x5c] sm:$0xf]
        %v5748 = vld [vmem:[%s9 + $0x60] sm:$0xf]
        %v5749 = vld [vmem:[%s9 + $0x64] sm:$0xf]
        %v5750 = vld [vmem:[%s9 + $0x68] sm:$0xf]
        %v5751 = vld [vmem:[%s9 + $0x6c] sm:$0xf]
        %v5752 = vld [vmem:[%s9 + $0x70] sm:$0xf]
        %v5753 = vld [vmem:[%s9 + $0x74] sm:$0xf]
        %v5754 = vld [vmem:[%s9 + $0x78] sm:$0xf]
        %v5755 = vld [vmem:[%s9 + $0x7c] sm:$0xf]
        %v5756 = vld [vmem:[%s9 + $0x80] sm:$0xf]
        %v5757 = vld [vmem:[%s9 + $0x84] sm:$0xf]
        %v5758 = vld [vmem:[%s9 + $0x88] sm:$0xf]
        %v5759 = vld [vmem:[%s9 + $0x8c] sm:$0xf]
        %v5760 = vld [vmem:[%s9 + $0x90] sm:$0xf]
        %v5761 = vld [vmem:[%s9 + $0x94] sm:$0xf]
        %v5762 = vld [vmem:[%s9 + $0x98] sm:$0xf]
        %v5763 = vld [vmem:[%s9 + $0x9c] sm:$0xf]
        %v5764 = vld [vmem:[%s9 + $0xa0] sm:$0xf]
        %v5765 = vld [vmem:[%s9 + $0xa4] sm:$0xf]
        %v5766 = vld [vmem:[%s9 + $0xa8] sm:$0xf]
        %v5767 = vld [vmem:[%s9 + $0xac] sm:$0xf]
        %v5768 = vld [vmem:[%s9 + $0xb0] sm:$0xf]
        %v5769 = vld [vmem:[%s9 + $0xb4] sm:$0xf]
        %v5770 = vld [vmem:[%s9 + $0xb8] sm:$0xf]
        %v5771 = vld [vmem:[%s9 + $0xbc] sm:$0xf]
        %v5772 = vld [vmem:[%s9 + $0xc0] sm:$0xf]
        %v5773 = vld [vmem:[%s9 + $0xc4] sm:$0xf]
        %v5774 = vld [vmem:[%s9 + $0xc8] sm:$0xf]
        %v5775 = vld [vmem:[%s9 + $0xcc] sm:$0xf]
        %v5776 = vld [vmem:[%s9 + $0xd0] sm:$0xf]
        %v5777 = vld [vmem:[%s9 + $0xd4] sm:$0xf]
        %v5778 = vld [vmem:[%s9 + $0xd8] sm:$0xf]
        %v5779 = vld [vmem:[%s9 + $0xdc] sm:$0xf]
        %v5780 = vld [vmem:[%s9 + $0xe0] sm:$0xf]
        %v5781 = vld [vmem:[%s9 + $0xe4] sm:$0xf]
        %v5782 = vld [vmem:[%s9 + $0xe8] sm:$0xf]
        %v5783 = vld [vmem:[%s9 + $0xec] sm:$0xf]
        %v5784 = vld [vmem:[%s9 + $0xf0] sm:$0xf]
        %v5785 = vld [vmem:[%s9 + $0xf4] sm:$0xf]
        %v5786 = vld [vmem:[%s9 + $0xf8] sm:$0xf]
        %v5787 = vld [vmem:[%s9 + $0xfc] sm:$0xf]
        %v5788 = vld [vmem:[%s9 + $0x100] sm:$0xf]
        %v5789 = vld [vmem:[%s9 + $0x104] sm:$0xf]
        %v5790 = vld [vmem:[%s9 + $0x108] sm:$0xf]
        %v5791 = vld [vmem:[%s9 + $0x10c] sm:$0xf]
        %v5792 = vld [vmem:[%s9 + $0x110] sm:$0xf]
        %v5793 = vld [vmem:[%s9 + $0x114] sm:$0xf]
        %v5794 = vld [vmem:[%s9 + $0x118] sm:$0xf]
        %v5795 = vld [vmem:[%s9 + $0x11c] sm:$0xf]
        %v5796 = vld [vmem:[%s9 + $0x120] sm:$0xf]
        %v5797 = vld [vmem:[%s9 + $0x124] sm:$0xf]
        %v5798 = vld [vmem:[%s9 + $0x128] sm:$0xf]
        %v5799 = vld [vmem:[%s9 + $0x12c] sm:$0xf]
        %v5800 = vld [vmem:[%s9 + $0x130] sm:$0xf]
        %v5801 = vld [vmem:[%s9 + $0x134] sm:$0xf]
        %v5802 = vld [vmem:[%s9 + $0x138] sm:$0xf]
        %v5803 = vld [vmem:[%s9 + $0x13c] sm:$0xf]
        %v5804 = vld [vmem:[%s9 + $0x140] sm:$0xf]
        %v5805 = vld [vmem:[%s9 + $0x144] sm:$0xf]
        %v5806 = vld [vmem:[%s9 + $0x148] sm:$0xf]
        %v5807 = vld [vmem:[%s9 + $0x14c] sm:$0xf]
        %v5808 = vld [vmem:[%s9 + $0x150] sm:$0xf]
        %v5809 = vld [vmem:[%s9 + $0x154] sm:$0xf]
        %v5810 = vld [vmem:[%s9 + $0x158] sm:$0xf]
        %v5811 = vld [vmem:[%s9 + $0x15c] sm:$0xf]
        %v5812 = vld [vmem:[%s9 + $0x160] sm:$0xf]
        %v5813 = vld [vmem:[%s9 + $0x164] sm:$0xf]
        %v5814 = vld [vmem:[%s9 + $0x168] sm:$0xf]
        %v5815 = vld [vmem:[%s9 + $0x16c] sm:$0xf]
        %v5816 = vld [vmem:[%s9 + $0x170] sm:$0xf]
        %v5817 = vld [vmem:[%s9 + $0x174] sm:$0xf]
        %v5818 = vld [vmem:[%s9 + $0x178] sm:$0xf]
        %v5819 = vld [vmem:[%s9 + $0x17c] sm:$0xf]
        %v5820 = vld [vmem:[%s9 + $0x180] sm:$0xf]
        %v5821 = vld [vmem:[%s9 + $0x184] sm:$0xf]
        %v5822 = vld [vmem:[%s9 + $0x188] sm:$0xf]
        %v5823 = vld [vmem:[%s9 + $0x18c] sm:$0xf]
        %v5824 = vld [vmem:[%s9 + $0x190] sm:$0xf]
        %v5825 = vld [vmem:[%s9 + $0x194] sm:$0xf]
        %v5826 = vld [vmem:[%s9 + $0x198] sm:$0xf]
        %v5827 = vld [vmem:[%s9 + $0x19c] sm:$0xf]
        %v5828 = vld [vmem:[%s9 + $0x1a0] sm:$0xf]
        %v5829 = vld [vmem:[%s9 + $0x1a4] sm:$0xf]
        %v5830 = vld [vmem:[%s9 + $0x1a8] sm:$0xf]
        %v5831 = vld [vmem:[%s9 + $0x1ac] sm:$0xf]
        %v5832 = vld [vmem:[%s9 + $0x1b0] sm:$0xf]
        %v5833 = vld [vmem:[%s9 + $0x1b4] sm:$0xf]
        %v5834 = vld [vmem:[%s9 + $0x1b8] sm:$0xf]
        %v5835 = vld [vmem:[%s9 + $0x1bc] sm:$0xf]
        %v5836 = vld [vmem:[%s9 + $0x1c0] sm:$0xf]
        %v5837 = vld [vmem:[%s9 + $0x1c4] sm:$0xf]
        %v5838 = vld [vmem:[%s9 + $0x1c8] sm:$0xf]
        %v5839 = vld [vmem:[%s9 + $0x1cc] sm:$0xf]
        %v5840 = vld [vmem:[%s9 + $0x1d0] sm:$0xf]
        %v5841 = vld [vmem:[%s9 + $0x1d4] sm:$0xf]
        %v5842 = vld [vmem:[%s9 + $0x1d8] sm:$0xf]
        %v5843 = vld [vmem:[%s9 + $0x1dc] sm:$0xf]
        %v5844 = vld [vmem:[%s9 + $0x1e0] sm:$0xf]
        %v5845 = vld [vmem:[%s9 + $0x1e4] sm:$0xf]
        %v5846 = vld [vmem:[%s9 + $0x1e8] sm:$0xf]
        %v5847 = vld [vmem:[%s9 + $0x1ec] sm:$0xf]
        %v5848 = vld [vmem:[%s9 + $0x1f0] sm:$0xf]
        %v5849 = vld [vmem:[%s9 + $0x1f4] sm:$0xf]
        %v5850 = vld [vmem:[%s9 + $0x1f8] sm:$0xf]
        %v5851 = vld [vmem:[%s9 + $0x1fc] sm:$0xf]
        %v5852 = vld [vmem:[%s9 + $0x200] sm:$0xf]
        %v5853 = vld [vmem:[%s9 + $0x204] sm:$0xf]
        %v5854 = vld [vmem:[%s9 + $0x208] sm:$0xf]
        %v5855 = vld [vmem:[%s9 + $0x20c] sm:$0xf]
        %v5856 = vld [vmem:[%s9 + $0x210] sm:$0xf]
        %v5857 = vld [vmem:[%s9 + $0x214] sm:$0xf]
        %v5858 = vld [vmem:[%s9 + $0x218] sm:$0xf]
        %v5859 = vld [vmem:[%s9 + $0x21c] sm:$0xf]
        %v5860 = vld [vmem:[%s9 + $0x220] sm:$0xf]
        %v5861 = vld [vmem:[%s9 + $0x224] sm:$0xf]
        %v5862 = vld [vmem:[%s9 + $0x228] sm:$0xf]
        %v5863 = vld [vmem:[%s9 + $0x22c] sm:$0xf]
        %v5864 = vld [vmem:[%s9 + $0x230] sm:$0xf]
        %v5865 = vld [vmem:[%s9 + $0x234] sm:$0xf]
        %v5866 = vld [vmem:[%s9 + $0x238] sm:$0xf]
        %v5867 = vld [vmem:[%s9 + $0x23c] sm:$0xf]
        %v5868 = vld [vmem:[%s10] sm:$0x1]
        %v5870 = vperm.slane %v5868, 0
        %v6016 = vunpack.c.l.b16 %v5724
        %v6017 = vunpack.c.l.b16 %v5725
        %v6018 = vunpack.c.l.b16 %v5726
        %v6019 = vunpack.c.l.b16 %v5727
        %v6020 = vunpack.c.l.b16 %v5728
        %v6021 = vunpack.c.l.b16 %v5729
        %v6022 = vunpack.c.l.b16 %v5730
        %v6023 = vunpack.c.l.b16 %v5731
        %v6024 = vunpack.c.l.b16 %v5732
        %v6025 = vunpack.c.l.b16 %v5733
        %v6026 = vunpack.c.l.b16 %v5734
        %v6027 = vunpack.c.l.b16 %v5735
        %v6028 = vunpack.c.l.b16 %v5736
        %v6029 = vunpack.c.l.b16 %v5737
        %v6030 = vunpack.c.l.b16 %v5738
        %v6031 = vunpack.c.l.b16 %v5739
        %v6032 = vunpack.c.l.b16 %v5740
        %v6033 = vunpack.c.l.b16 %v5741
        %v6034 = vunpack.c.l.b16 %v5742
        %v6035 = vunpack.c.l.b16 %v5743
        %v6036 = vunpack.c.l.b16 %v5744
        %v6037 = vunpack.c.l.b16 %v5745
        %v6038 = vunpack.c.l.b16 %v5746
        %v6039 = vunpack.c.l.b16 %v5747
        %v6040 = vunpack.c.l.b16 %v5748
        %v6041 = vunpack.c.l.b16 %v5749
        %v6042 = vunpack.c.l.b16 %v5750
        %v6043 = vunpack.c.l.b16 %v5751
        %v6044 = vunpack.c.l.b16 %v5752
        %v6045 = vunpack.c.l.b16 %v5753
        %v6046 = vunpack.c.l.b16 %v5754
        %v6047 = vunpack.c.l.b16 %v5755
        %v6048 = vunpack.c.l.b16 %v5756
        %v6049 = vunpack.c.l.b16 %v5757
        %v6050 = vunpack.c.l.b16 %v5758
        %v6051 = vunpack.c.l.b16 %v5759
        %v6052 = vunpack.c.l.b16 %v5760
        %v6053 = vunpack.c.l.b16 %v5761
        %v6054 = vunpack.c.l.b16 %v5762
        %v6055 = vunpack.c.l.b16 %v5763
        %v6056 = vunpack.c.l.b16 %v5764
        %v6057 = vunpack.c.l.b16 %v5765
        %v6058 = vunpack.c.l.b16 %v5766
        %v6059 = vunpack.c.l.b16 %v5767
        %v6060 = vunpack.c.l.b16 %v5768
        %v6061 = vunpack.c.l.b16 %v5769
        %v6062 = vunpack.c.l.b16 %v5770
        %v6063 = vunpack.c.l.b16 %v5771
        %v6064 = vunpack.c.l.b16 %v5772
        %v6065 = vunpack.c.l.b16 %v5773
        %v6066 = vunpack.c.l.b16 %v5774
        %v6067 = vunpack.c.l.b16 %v5775
        %v6068 = vunpack.c.l.b16 %v5776
        %v6069 = vunpack.c.l.b16 %v5777
        %v6070 = vunpack.c.l.b16 %v5778
        %v6071 = vunpack.c.l.b16 %v5779
        %v6072 = vunpack.c.l.b16 %v5780
        %v6073 = vunpack.c.l.b16 %v5781
        %v6074 = vunpack.c.l.b16 %v5782
        %v6075 = vunpack.c.l.b16 %v5783
        %v6076 = vunpack.c.l.b16 %v5784
        %v6077 = vunpack.c.l.b16 %v5785
        %v6078 = vunpack.c.l.b16 %v5786
        %v6079 = vunpack.c.l.b16 %v5787
        %v6080 = vunpack.c.l.b16 %v5788
        %v6081 = vunpack.c.l.b16 %v5789
        %v6082 = vunpack.c.l.b16 %v5790
        %v6083 = vunpack.c.l.b16 %v5791
        %v6084 = vunpack.c.l.b16 %v5792
        %v6085 = vunpack.c.l.b16 %v5793
        %v6086 = vunpack.c.l.b16 %v5794
        %v6087 = vunpack.c.l.b16 %v5795
        %v6088 = vunpack.c.l.b16 %v5796
        %v6089 = vunpack.c.l.b16 %v5797
        %v6090 = vunpack.c.l.b16 %v5798
        %v6091 = vunpack.c.l.b16 %v5799
        %v6092 = vunpack.c.l.b16 %v5800
        %v6093 = vunpack.c.l.b16 %v5801
        %v6094 = vunpack.c.l.b16 %v5802
        %v6095 = vunpack.c.l.b16 %v5803
        %v6096 = vunpack.c.l.b16 %v5804
        %v6097 = vunpack.c.l.b16 %v5805
        %v6098 = vunpack.c.l.b16 %v5806
        %v6099 = vunpack.c.l.b16 %v5807
        %v6100 = vunpack.c.l.b16 %v5808
        %v6101 = vunpack.c.l.b16 %v5809
        %v6102 = vunpack.c.l.b16 %v5810
        %v6103 = vunpack.c.l.b16 %v5811
        %v6104 = vunpack.c.l.b16 %v5812
        %v6105 = vunpack.c.l.b16 %v5813
        %v6106 = vunpack.c.l.b16 %v5814
        %v6107 = vunpack.c.l.b16 %v5815
        %v6108 = vunpack.c.l.b16 %v5816
        %v6109 = vunpack.c.l.b16 %v5817
        %v6110 = vunpack.c.l.b16 %v5818
        %v6111 = vunpack.c.l.b16 %v5819
        %v6112 = vunpack.c.l.b16 %v5820
        %v6113 = vunpack.c.l.b16 %v5821
        %v6114 = vunpack.c.l.b16 %v5822
        %v6115 = vunpack.c.l.b16 %v5823
        %v6116 = vunpack.c.l.b16 %v5824
        %v6117 = vunpack.c.l.b16 %v5825
        %v6118 = vunpack.c.l.b16 %v5826
        %v6119 = vunpack.c.l.b16 %v5827
        %v6120 = vunpack.c.l.b16 %v5828
        %v6121 = vunpack.c.l.b16 %v5829
        %v6122 = vunpack.c.l.b16 %v5830
        %v6123 = vunpack.c.l.b16 %v5831
        %v6124 = vunpack.c.l.b16 %v5832
        %v6125 = vunpack.c.l.b16 %v5833
        %v6126 = vunpack.c.l.b16 %v5834
        %v6127 = vunpack.c.l.b16 %v5835
        %v6128 = vunpack.c.l.b16 %v5836
        %v6129 = vunpack.c.l.b16 %v5837
        %v6130 = vunpack.c.l.b16 %v5838
        %v6131 = vunpack.c.l.b16 %v5839
        %v6132 = vunpack.c.l.b16 %v5840
        %v6133 = vunpack.c.l.b16 %v5841
        %v6134 = vunpack.c.l.b16 %v5842
        %v6135 = vunpack.c.l.b16 %v5843
        %v6136 = vunpack.c.l.b16 %v5844
        %v6137 = vunpack.c.l.b16 %v5845
        %v6138 = vunpack.c.l.b16 %v5846
        %v6139 = vunpack.c.l.b16 %v5847
        %v6140 = vunpack.c.l.b16 %v5848
        %v6141 = vunpack.c.l.b16 %v5849
        %v6142 = vunpack.c.l.b16 %v5850
        %v6143 = vunpack.c.l.b16 %v5851
        %v6144 = vunpack.c.l.b16 %v5852
        %v6145 = vunpack.c.l.b16 %v5853
        %v6146 = vunpack.c.l.b16 %v5854
        %v6147 = vunpack.c.l.b16 %v5855
        %v6148 = vunpack.c.l.b16 %v5856
        %v6149 = vunpack.c.l.b16 %v5857
        %v6150 = vunpack.c.l.b16 %v5858
        %v6151 = vunpack.c.l.b16 %v5859
        %v6152 = vunpack.c.l.b16 %v5860
        %v6153 = vunpack.c.l.b16 %v5861
        %v6154 = vunpack.c.l.b16 %v5862
        %v6155 = vunpack.c.l.b16 %v5863
        %v6156 = vunpack.c.l.b16 %v5864
        %v6157 = vunpack.c.l.b16 %v5865
        %v6158 = vunpack.c.l.b16 %v5866
        %v6159 = vunpack.c.l.b16 %v5867
        %v6160 = vpack.c.b16 %v6017, %v6016
        %v6161 = vpack.c.b16 %v6019, %v6018
        %v6162 = vpack.c.b16 %v6021, %v6020
        %v6163 = vpack.c.b16 %v6023, %v6022
        %v6164 = vpack.c.b16 %v6025, %v6024
        %v6165 = vpack.c.b16 %v6027, %v6026
        %v6166 = vpack.c.b16 %v6029, %v6028
        %v6167 = vpack.c.b16 %v6031, %v6030
        %v6168 = vpack.c.b16 %v6033, %v6032
        %v6169 = vpack.c.b16 %v6035, %v6034
        %v6170 = vpack.c.b16 %v6037, %v6036
        %v6171 = vpack.c.b16 %v6039, %v6038
        %v6172 = vpack.c.b16 %v6041, %v6040
        %v6173 = vpack.c.b16 %v6043, %v6042
        %v6174 = vpack.c.b16 %v6045, %v6044
        %v6175 = vpack.c.b16 %v6047, %v6046
        %v6176 = vpack.c.b16 %v6049, %v6048
        %v6177 = vpack.c.b16 %v6051, %v6050
        %v6178 = vpack.c.b16 %v6053, %v6052
        %v6179 = vpack.c.b16 %v6055, %v6054
        %v6180 = vpack.c.b16 %v6057, %v6056
        %v6181 = vpack.c.b16 %v6059, %v6058
        %v6182 = vpack.c.b16 %v6061, %v6060
        %v6183 = vpack.c.b16 %v6063, %v6062
        %v6184 = vpack.c.b16 %v6065, %v6064
        %v6185 = vpack.c.b16 %v6067, %v6066
        %v6186 = vpack.c.b16 %v6069, %v6068
        %v6187 = vpack.c.b16 %v6071, %v6070
        %v6188 = vpack.c.b16 %v6073, %v6072
        %v6189 = vpack.c.b16 %v6075, %v6074
        %v6190 = vpack.c.b16 %v6077, %v6076
        %v6191 = vpack.c.b16 %v6079, %v6078
        %v6192 = vpack.c.b16 %v6081, %v6080
        %v6193 = vpack.c.b16 %v6083, %v6082
        %v6194 = vpack.c.b16 %v6085, %v6084
        %v6195 = vpack.c.b16 %v6087, %v6086
        %v6196 = vpack.c.b16 %v6089, %v6088
        %v6197 = vpack.c.b16 %v6091, %v6090
        %v6198 = vpack.c.b16 %v6093, %v6092
        %v6199 = vpack.c.b16 %v6095, %v6094
        %v6200 = vpack.c.b16 %v6097, %v6096
        %v6201 = vpack.c.b16 %v6099, %v6098
        %v6202 = vpack.c.b16 %v6101, %v6100
        %v6203 = vpack.c.b16 %v6103, %v6102
        %v6204 = vpack.c.b16 %v6105, %v6104
        %v6205 = vpack.c.b16 %v6107, %v6106
        %v6206 = vpack.c.b16 %v6109, %v6108
        %v6207 = vpack.c.b16 %v6111, %v6110
        %v6208 = vpack.c.b16 %v6113, %v6112
        %v6209 = vpack.c.b16 %v6115, %v6114
        %v6210 = vpack.c.b16 %v6117, %v6116
        %v6211 = vpack.c.b16 %v6119, %v6118
        %v6212 = vpack.c.b16 %v6121, %v6120
        %v6213 = vpack.c.b16 %v6123, %v6122
        %v6214 = vpack.c.b16 %v6125, %v6124
        %v6215 = vpack.c.b16 %v6127, %v6126
        %v6216 = vpack.c.b16 %v6129, %v6128
        %v6217 = vpack.c.b16 %v6131, %v6130
        %v6218 = vpack.c.b16 %v6133, %v6132
        %v6219 = vpack.c.b16 %v6135, %v6134
        %v6220 = vpack.c.b16 %v6137, %v6136
        %v6221 = vpack.c.b16 %v6139, %v6138
        %v6222 = vpack.c.b16 %v6141, %v6140
        %v6223 = vpack.c.b16 %v6143, %v6142
        %v6224 = vpack.c.b16 %v6145, %v6144
        %v6225 = vpack.c.b16 %v6147, %v6146
        %v6226 = vpack.c.b16 %v6149, %v6148
        %v6227 = vpack.c.b16 %v6151, %v6150
        %v6228 = vpack.c.b16 %v6153, %v6152
        %v6229 = vpack.c.b16 %v6155, %v6154
        %v6230 = vpack.c.b16 %v6157, %v6156
        %v6231 = vpack.c.b16 %v6159, %v6158
        %6304 = vmatpush.bf16.msra.mxu0 %v6167
        %6305 = vmatpush.bf16.msra.mxu0 %v6166
        %6306 = vmatpush.bf16.msra.mxu0 %v6165
        %6307 = vmatpush.bf16.msra.mxu0 %v6164
        %6308 = vmatpush.bf16.msra.mxu0 %v6163
        %6309 = vmatpush.bf16.msra.mxu0 %v6162
        %6310 = vmatpush.bf16.msra.mxu0 %v6161
        %6311 = vmatpush.bf16.msra.mxu0 %v6160
        %6312 = vmatmul.bf16.gmra.mxu0 %v5697
        %v6313 = vpop.f32.mrf.mxu0
        %v6314 = vadd.f32 %v5870, %v6313
        %v6315 = vpop.f32.mrf.mxu0
        %v6316 = vadd.f32 %v5870, %v6315
        %6317 = vmatmul.bf16.gmra.mxu0 %v5703
        %v6318 = vpop.f32.mrf.mxu0
        %v6319 = vadd.f32 %v5870, %v6318
        %v6320 = vpop.f32.mrf.mxu0
        %v6321 = vadd.f32 %v5870, %v6320
        %6322 = vmatmul.bf16.gmra.mxu0 %v5709
        %v6323 = vpop.f32.mrf.mxu0
        %v6324 = vadd.f32 %v5870, %v6323
        %v6325 = vpop.f32.mrf.mxu0
        %v6326 = vadd.f32 %v5870, %v6325
        %6327 = vmatmul.bf16.gmra.mxu0 %v5715
        %v6328 = vpop.f32.mrf.mxu0
        %v6329 = vadd.f32 %v5870, %v6328
        %v6330 = vpop.f32.mrf.mxu0
        %v6331 = vadd.f32 %v5870, %v6330
        %6332 = vdwg.mxu0
        %6333 = vmatpush.bf16.msra.mxu0 %v6175
        %6334 = vmatpush.bf16.msra.mxu0 %v6174
        %6335 = vmatpush.bf16.msra.mxu0 %v6173
        %6336 = vmatpush.bf16.msra.mxu0 %v6172
        %6337 = vmatpush.bf16.msra.mxu0 %v6171
        %6338 = vmatpush.bf16.msra.mxu0 %v6170
        %6339 = vmatpush.bf16.msra.mxu0 %v6169
        %6340 = vmatpush.bf16.msra.mxu0 %v6168
        %6341 = vmatmul.bf16.gmra.mxu0 %v5698
        %v6342 = vpop.f32.mrf.mxu0
        %v6343 = vadd.f32 %v6314, %v6342
        %v6344 = vpop.f32.mrf.mxu0
        %v6345 = vadd.f32 %v6316, %v6344
        %6346 = vmatmul.bf16.gmra.mxu0 %v5704
        %v6347 = vpop.f32.mrf.mxu0
        %v6348 = vadd.f32 %v6319, %v6347
        %v6349 = vpop.f32.mrf.mxu0
        %v6350 = vadd.f32 %v6321, %v6349
        %6351 = vmatmul.bf16.gmra.mxu0 %v5710
        %v6352 = vpop.f32.mrf.mxu0
        %v6353 = vadd.f32 %v6324, %v6352
        %v6354 = vpop.f32.mrf.mxu0
        %v6355 = vadd.f32 %v6326, %v6354
        %6356 = vmatmul.bf16.gmra.mxu0 %v5716
        %v6357 = vpop.f32.mrf.mxu0
        %v6358 = vadd.f32 %v6329, %v6357
        %v6359 = vpop.f32.mrf.mxu0
        %v6360 = vadd.f32 %v6331, %v6359
        %6361 = vdwg.mxu0
        %6362 = vmatpush.bf16.msra.mxu0 %v6183
        %6363 = vmatpush.bf16.msra.mxu0 %v6182
        %6364 = vmatpush.bf16.msra.mxu0 %v6181
        %6365 = vmatpush.bf16.msra.mxu0 %v6180
        %6366 = vmatpush.bf16.msra.mxu0 %v6179
        %6367 = vmatpush.bf16.msra.mxu0 %v6178
        %6368 = vmatpush.bf16.msra.mxu0 %v6177
        %6369 = vmatpush.bf16.msra.mxu0 %v6176
        %6370 = vmatmul.bf16.gmra.mxu0 %v5699
        %v6371 = vpop.f32.mrf.mxu0
        %v6372 = vadd.f32 %v6343, %v6371
        %v6373 = vpop.f32.mrf.mxu0
        %v6374 = vadd.f32 %v6345, %v6373
        %6375 = vmatmul.bf16.gmra.mxu0 %v5705
        %v6376 = vpop.f32.mrf.mxu0
        %v6377 = vadd.f32 %v6348, %v6376
        %v6378 = vpop.f32.mrf.mxu0
        %v6379 = vadd.f32 %v6350, %v6378
        %6380 = vmatmul.bf16.gmra.mxu0 %v5711
        %v6381 = vpop.f32.mrf.mxu0
        %v6382 = vadd.f32 %v6353, %v6381
        %v6383 = vpop.f32.mrf.mxu0
        %v6384 = vadd.f32 %v6355, %v6383
        %6385 = vmatmul.bf16.gmra.mxu0 %v5717
        %v6386 = vpop.f32.mrf.mxu0
        %v6387 = vadd.f32 %v6358, %v6386
        %v6388 = vpop.f32.mrf.mxu0
        %v6389 = vadd.f32 %v6360, %v6388
        %6390 = vdwg.mxu0
        %6391 = vmatpush.bf16.msra.mxu0 %v6191
        %6392 = vmatpush.bf16.msra.mxu0 %v6190
        %6393 = vmatpush.bf16.msra.mxu0 %v6189
        %6394 = vmatpush.bf16.msra.mxu0 %v6188
        %6395 = vmatpush.bf16.msra.mxu0 %v6187
        %6396 = vmatpush.bf16.msra.mxu0 %v6186
        %6397 = vmatpush.bf16.msra.mxu0 %v6185
        %6398 = vmatpush.bf16.msra.mxu0 %v6184
        %6399 = vmatmul.bf16.gmra.mxu0 %v5700
        %v6400 = vpop.f32.mrf.mxu0
        %v6401 = vadd.f32 %v6372, %v6400
        %v6402 = vpop.f32.mrf.mxu0
        %v6403 = vadd.f32 %v6374, %v6402
        %6404 = vmatmul.bf16.gmra.mxu0 %v5706
        %v6405 = vpop.f32.mrf.mxu0
        %v6406 = vadd.f32 %v6377, %v6405
        %v6407 = vpop.f32.mrf.mxu0
        %v6408 = vadd.f32 %v6379, %v6407
        %6409 = vmatmul.bf16.gmra.mxu0 %v5712
        %v6410 = vpop.f32.mrf.mxu0
        %v6411 = vadd.f32 %v6382, %v6410
        %v6412 = vpop.f32.mrf.mxu0
        %v6413 = vadd.f32 %v6384, %v6412
        %6414 = vmatmul.bf16.gmra.mxu0 %v5718
        %v6415 = vpop.f32.mrf.mxu0
        %v6416 = vadd.f32 %v6387, %v6415
        %v6417 = vpop.f32.mrf.mxu0
        %v6418 = vadd.f32 %v6389, %v6417
        %6419 = vdwg.mxu0
        %6420 = vmatpush.bf16.msra.mxu0 %v6199
        %6421 = vmatpush.bf16.msra.mxu0 %v6198
        %6422 = vmatpush.bf16.msra.mxu0 %v6197
        %6423 = vmatpush.bf16.msra.mxu0 %v6196
        %6424 = vmatpush.bf16.msra.mxu0 %v6195
        %6425 = vmatpush.bf16.msra.mxu0 %v6194
        %6426 = vmatpush.bf16.msra.mxu0 %v6193
        %6427 = vmatpush.bf16.msra.mxu0 %v6192
        %6428 = vmatmul.bf16.gmra.mxu0 %v5701
        %v6429 = vpop.f32.mrf.mxu0
        %v6430 = vadd.f32 %v6401, %v6429
        %v6431 = vpop.f32.mrf.mxu0
        %v6432 = vadd.f32 %v6403, %v6431
        %6433 = vmatmul.bf16.gmra.mxu0 %v5707
        %v6434 = vpop.f32.mrf.mxu0
        %v6435 = vadd.f32 %v6406, %v6434
        %v6436 = vpop.f32.mrf.mxu0
        %v6437 = vadd.f32 %v6408, %v6436
        %6438 = vmatmul.bf16.gmra.mxu0 %v5713
        %v6439 = vpop.f32.mrf.mxu0
        %v6440 = vadd.f32 %v6411, %v6439
        %v6441 = vpop.f32.mrf.mxu0
        %v6442 = vadd.f32 %v6413, %v6441
        %6443 = vmatmul.bf16.gmra.mxu0 %v5719
        %v6444 = vpop.f32.mrf.mxu0
        %v6445 = vadd.f32 %v6416, %v6444
        %v6446 = vpop.f32.mrf.mxu0
        %v6447 = vadd.f32 %v6418, %v6446
        %6448 = vdwg.mxu0
        %6449 = vmatpush.bf16.msra.mxu0 %v6207
        %6450 = vmatpush.bf16.msra.mxu0 %v6206
        %6451 = vmatpush.bf16.msra.mxu0 %v6205
        %6452 = vmatpush.bf16.msra.mxu0 %v6204
        %6453 = vmatpush.bf16.msra.mxu0 %v6203
        %6454 = vmatpush.bf16.msra.mxu0 %v6202
        %6455 = vmatpush.bf16.msra.mxu0 %v6201
        %6456 = vmatpush.bf16.msra.mxu0 %v6200
        %6457 = vmatmul.bf16.gmra.mxu0 %v5702
        %v6458 = vpop.f32.mrf.mxu0
        %v6459 = vadd.f32 %v6430, %v6458
        %v6460 = vpop.f32.mrf.mxu0
        %v6461 = vadd.f32 %v6432, %v6460
        %6462 = vmatmul.bf16.gmra.mxu0 %v5708
        %v6463 = vpop.f32.mrf.mxu0
        %v6464 = vadd.f32 %v6435, %v6463
        %v6465 = vpop.f32.mrf.mxu0
        %v6466 = vadd.f32 %v6437, %v6465
        %6467 = vmatmul.bf16.gmra.mxu0 %v5714
        %v6468 = vpop.f32.mrf.mxu0
        %v6469 = vadd.f32 %v6440, %v6468
        %v6470 = vpop.f32.mrf.mxu0
        %v6471 = vadd.f32 %v6442, %v6470
        %6472 = vmatmul.bf16.gmra.mxu0 %v5720
        %v6473 = vpop.f32.mrf.mxu0
        %v6474 = vadd.f32 %v6445, %v6473
        %v6475 = vpop.f32.mrf.mxu0
        %v6476 = vadd.f32 %v6447, %v6475
        %6477 = vdwg.mxu0
        %6478 = vmatpush.bf16.msra.mxu0 %v6215
        %6479 = vmatpush.bf16.msra.mxu0 %v6214
        %6480 = vmatpush.bf16.msra.mxu0 %v6213
        %6481 = vmatpush.bf16.msra.mxu0 %v6212
        %6482 = vmatpush.bf16.msra.mxu0 %v6211
        %6483 = vmatpush.bf16.msra.mxu0 %v6210
        %6484 = vmatpush.bf16.msra.mxu0 %v6209
        %6485 = vmatpush.bf16.msra.mxu0 %v6208
        %6486 = vmatmul.bf16.gmra.mxu0 %v5703
        %v6487 = vpop.f32.mrf.mxu0
        %v6488 = vadd.f32 %v6459, %v6487
        %v6489 = vpop.f32.mrf.mxu0
        %v6490 = vadd.f32 %v6461, %v6489
        %6491 = vmatmul.bf16.gmra.mxu0 %v5709
        %v6492 = vpop.f32.mrf.mxu0
        %v6493 = vadd.f32 %v6464, %v6492
        %v6494 = vpop.f32.mrf.mxu0
        %v6495 = vadd.f32 %v6466, %v6494
        %6496 = vmatmul.bf16.gmra.mxu0 %v5715
        %v6497 = vpop.f32.mrf.mxu0
        %v6498 = vadd.f32 %v6469, %v6497
        %v6499 = vpop.f32.mrf.mxu0
        %v6500 = vadd.f32 %v6471, %v6499
        %6501 = vmatmul.bf16.gmra.mxu0 %v5721
        %v6502 = vpop.f32.mrf.mxu0
        %v6503 = vadd.f32 %v6474, %v6502
        %v6504 = vpop.f32.mrf.mxu0
        %v6505 = vadd.f32 %v6476, %v6504
        %6506 = vdwg.mxu0
        %6507 = vmatpush.bf16.msra.mxu0 %v6223
        %6508 = vmatpush.bf16.msra.mxu0 %v6222
        %6509 = vmatpush.bf16.msra.mxu0 %v6221
        %6510 = vmatpush.bf16.msra.mxu0 %v6220
        %6511 = vmatpush.bf16.msra.mxu0 %v6219
        %6512 = vmatpush.bf16.msra.mxu0 %v6218
        %6513 = vmatpush.bf16.msra.mxu0 %v6217
        %6514 = vmatpush.bf16.msra.mxu0 %v6216
        %6515 = vmatmul.bf16.gmra.mxu0 %v5704
        %v6516 = vpop.f32.mrf.mxu0
        %v6517 = vadd.f32 %v6488, %v6516
        %v6518 = vpop.f32.mrf.mxu0
        %v6519 = vadd.f32 %v6490, %v6518
        %6520 = vmatmul.bf16.gmra.mxu0 %v5710
        %v6521 = vpop.f32.mrf.mxu0
        %v6522 = vadd.f32 %v6493, %v6521
        %v6523 = vpop.f32.mrf.mxu0
        %v6524 = vadd.f32 %v6495, %v6523
        %6525 = vmatmul.bf16.gmra.mxu0 %v5716
        %v6526 = vpop.f32.mrf.mxu0
        %v6527 = vadd.f32 %v6498, %v6526
        %v6528 = vpop.f32.mrf.mxu0
        %v6529 = vadd.f32 %v6500, %v6528
        %6530 = vmatmul.bf16.gmra.mxu0 %v5722
        %v6531 = vpop.f32.mrf.mxu0
        %v6532 = vadd.f32 %v6503, %v6531
        %v6533 = vpop.f32.mrf.mxu0
        %v6534 = vadd.f32 %v6505, %v6533
        %6535 = vdwg.mxu0
        %6536 = vmatpush.bf16.msra.mxu0 %v6231
        %6537 = vmatpush.bf16.msra.mxu0 %v6230
        %6538 = vmatpush.bf16.msra.mxu0 %v6229
        %6539 = vmatpush.bf16.msra.mxu0 %v6228
        %6540 = vmatpush.bf16.msra.mxu0 %v6227
        %6541 = vmatpush.bf16.msra.mxu0 %v6226
        %6542 = vmatpush.bf16.msra.mxu0 %v6225
        %6543 = vmatpush.bf16.msra.mxu0 %v6224
        %6544 = vmatmul.bf16.gmra.mxu0 %v5705
        %v6545 = vpop.f32.mrf.mxu0
        %v6546 = vadd.f32 %v6517, %v6545
        %v6547 = vpop.f32.mrf.mxu0
        %v6548 = vadd.f32 %v6519, %v6547
        %6549 = vmatmul.bf16.gmra.mxu0 %v5711
        %v6550 = vpop.f32.mrf.mxu0
        %v6551 = vadd.f32 %v6522, %v6550
        %v6552 = vpop.f32.mrf.mxu0
        %v6553 = vadd.f32 %v6524, %v6552
        %6554 = vmatmul.bf16.gmra.mxu0 %v5717
        %v6555 = vpop.f32.mrf.mxu0
        %v6556 = vadd.f32 %v6527, %v6555
        %v6557 = vpop.f32.mrf.mxu0
        %v6558 = vadd.f32 %v6529, %v6557
        %6559 = vmatmul.bf16.gmra.mxu0 %v5723
        %v6560 = vpop.f32.mrf.mxu0
        %v6561 = vadd.f32 %v6532, %v6560
        %v6562 = vpop.f32.mrf.mxu0
        %v6563 = vadd.f32 %v6534, %v6562
        %6564 = vdwg.mxu0
        %v6565 = vmax.f32 %v6546, 0.0
        %v6566 = vmax.f32 %v6548, 0.0
        %v6567 = vmax.f32 %v6551, 0.0
        %v6568 = vmax.f32 %v6553, 0.0
        %v6569 = vmax.f32 %v6556, 0.0
        %v6570 = vmax.f32 %v6558, 0.0
        %v6571 = vmax.f32 %v6561, 0.0
        %v6572 = vmax.f32 %v6563, 0.0
        %v6573 = vpack.c.bf16 %v6566, %v6565
        %v6574 = vpack.c.bf16 %v6568, %v6567
        %v6575 = vpack.c.bf16 %v6570, %v6569
        %v6576 = vpack.c.bf16 %v6572, %v6571
        %v6577 = vld [vmem:[%s11] sm:$0xf]
        %v6578 = vld [vmem:[%s11 + $0x4] sm:$0xf]
        %v6579 = vld [vmem:[%s11 + $0x8] sm:$0xf]
        %v6580 = vld [vmem:[%s11 + $0xc] sm:$0xf]
        %v6581 = vld [vmem:[%s11 + $0x10] sm:$0xf]
        %v6582 = vld [vmem:[%s11 + $0x14] sm:$0xf]
        %v6583 = vld [vmem:[%s11 + $0x18] sm:$0xf]
        %v6584 = vld [vmem:[%s11 + $0x1c] sm:$0xf]
        %v6585 = vld [vmem:[%s12] sm:$0x1]
        %v6587 = vperm.slane %v6585, 0
        %v6597 = vunpack.c.l.b16 %v6577
        %v6598 = vunpack.c.l.b16 %v6578
        %v6599 = vunpack.c.l.b16 %v6579
        %v6600 = vunpack.c.l.b16 %v6580
        %v6601 = vunpack.c.l.b16 %v6581
        %v6602 = vunpack.c.l.b16 %v6582
        %v6603 = vunpack.c.l.b16 %v6583
        %v6604 = vunpack.c.l.b16 %v6584
        %v6605 = vpack.c.b16 %v6598, %v6597
        %v6606 = vpack.c.b16 %v6600, %v6599
        %v6607 = vpack.c.b16 %v6602, %v6601
        %v6608 = vpack.c.b16 %v6604, %v6603
        %v6614 = vsel %vm3865, %v6573, 0
        %v6617 = vsel %vm3865, %v6574, 0
        %v6620 = vsel %vm3865, %v6575, 0
        %v6623 = vsel %vm3865, %v6576, 0
        %6625 = vmatpush.bf16.msra.mxu0 0
        %6626 = vmatpush.bf16.msra.mxu0 0
        %6627 = vmatpush.bf16.msra.mxu0 0
        %6628 = vmatpush.bf16.msra.mxu0 0
        %6629 = vmatpush.bf16.msra.mxu0 %v6608
        %6630 = vmatpush.bf16.msra.mxu0 %v6607
        %6631 = vmatpush.bf16.msra.mxu0 %v6606
        %6632 = vmatpush.bf16.msra.mxu0 %v6605
        %6633 = vmatmul.bf16.gmra.mxu0 %v6614
        %v6634 = vpop.f32.mrf.mxu0
        %v6635 = vadd.f32 %v6587, %v6634
        %v6636 = vpop.f32.mrf.mxu0
        %v6637 = vadd.f32 %v6587, %v6636
        %6638 = vmatmul.bf16.gmra.mxu0 %v6617
        %v6639 = vpop.f32.mrf.mxu0
        %v6640 = vadd.f32 %v6587, %v6639
        %v6641 = vpop.f32.mrf.mxu0
        %v6642 = vadd.f32 %v6587, %v6641
        %6643 = vmatmul.bf16.gmra.mxu0 %v6620
        %v6644 = vpop.f32.mrf.mxu0
        %v6645 = vadd.f32 %v6587, %v6644
        %v6646 = vpop.f32.mrf.mxu0
        %v6647 = vadd.f32 %v6587, %v6646
        %6648 = vmatmul.bf16.gmra.mxu0 %v6623
        %v6649 = vpop.f32.mrf.mxu0
        %v6650 = vadd.f32 %v6587, %v6649
        %v6651 = vpop.f32.mrf.mxu0
        %v6652 = vadd.f32 %v6587, %v6651
        %6653 = vdwg.mxu0
        %v6662 = vrot.slane %v6635, 1
        %v6663 = vrot.slane %v6635, 2
        %v6664 = vrot.slane %v6635, 3
        %v6665 = vrot.slane %v6635, 4
        %v6666 = vrot.slane %v6635, 5
        %v6667 = vrot.slane %v6635, 6
        %v6668 = vrot.slane %v6635, 7
        %v6669 = vrot.slane %v6637, 1
        %v6670 = vrot.slane %v6637, 2
        %v6671 = vrot.slane %v6637, 3
        %v6672 = vrot.slane %v6637, 4
        %v6673 = vrot.slane %v6637, 5
        %v6674 = vrot.slane %v6637, 6
        %v6675 = vrot.slane %v6637, 7
        %v6676 = vrot.slane %v6640, 1
        %v6677 = vrot.slane %v6640, 2
        %v6678 = vrot.slane %v6640, 3
        %v6679 = vrot.slane %v6640, 4
        %v6680 = vrot.slane %v6640, 5
        %v6681 = vrot.slane %v6640, 6
        %v6682 = vrot.slane %v6640, 7
        %v6683 = vrot.slane %v6642, 1
        %v6684 = vrot.slane %v6642, 2
        %v6685 = vrot.slane %v6642, 3
        %v6686 = vrot.slane %v6642, 4
        %v6687 = vrot.slane %v6642, 5
        %v6688 = vrot.slane %v6642, 6
        %v6689 = vrot.slane %v6642, 7
        %v6690 = vrot.slane %v6645, 1
        %v6691 = vrot.slane %v6645, 2
        %v6692 = vrot.slane %v6645, 3
        %v6693 = vrot.slane %v6645, 4
        %v6694 = vrot.slane %v6645, 5
        %v6695 = vrot.slane %v6645, 6
        %v6696 = vrot.slane %v6645, 7
        %v6697 = vrot.slane %v6647, 1
        %v6698 = vrot.slane %v6647, 2
        %v6699 = vrot.slane %v6647, 3
        %v6700 = vrot.slane %v6647, 4
        %v6701 = vrot.slane %v6647, 5
        %v6702 = vrot.slane %v6647, 6
        %v6703 = vrot.slane %v6647, 7
        %v6704 = vrot.slane %v6650, 1
        %v6705 = vrot.slane %v6650, 2
        %v6706 = vrot.slane %v6650, 3
        %v6707 = vrot.slane %v6650, 4
        %v6708 = vrot.slane %v6650, 5
        %v6709 = vrot.slane %v6650, 6
        %v6710 = vrot.slane %v6650, 7
        %v6711 = vrot.slane %v6652, 1
        %v6712 = vrot.slane %v6652, 2
        %v6713 = vrot.slane %v6652, 3
        %v6714 = vrot.slane %v6652, 4
        %v6715 = vrot.slane %v6652, 5
        %v6716 = vrot.slane %v6652, 6
        %v6717 = vrot.slane %v6652, 7
        %v6774 = vperm.slane %v6635, 0
        %v6775 = vperm.slane %v6662, 0
        %v6776 = vperm.slane %v6663, 0
        %v6777 = vperm.slane %v6664, 0
        %v6778 = vperm.slane %v6665, 0
        %v6779 = vperm.slane %v6666, 0
        %v6780 = vperm.slane %v6667, 0
        %v6781 = vperm.slane %v6668, 0
        %v6782 = vperm.slane %v6637, 0
        %v6783 = vperm.slane %v6669, 0
        %v6784 = vperm.slane %v6670, 0
        %v6785 = vperm.slane %v6671, 0
        %v6786 = vperm.slane %v6672, 0
        %v6787 = vperm.slane %v6673, 0
        %v6788 = vperm.slane %v6674, 0
        %v6789 = vperm.slane %v6675, 0
        %v6790 = vperm.slane %v6640, 0
        %v6791 = vperm.slane %v6676, 0
        %v6792 = vperm.slane %v6677, 0
        %v6793 = vperm.slane %v6678, 0
        %v6794 = vperm.slane %v6679, 0
        %v6795 = vperm.slane %v6680, 0
        %v6796 = vperm.slane %v6681, 0
        %v6797 = vperm.slane %v6682, 0
        %v6798 = vperm.slane %v6642, 0
        %v6799 = vperm.slane %v6683, 0
        %v6800 = vperm.slane %v6684, 0
        %v6801 = vperm.slane %v6685, 0
        %v6802 = vperm.slane %v6686, 0
        %v6803 = vperm.slane %v6687, 0
        %v6804 = vperm.slane %v6688, 0
        %v6805 = vperm.slane %v6689, 0
        %v6806 = vperm.slane %v6645, 0
        %v6807 = vperm.slane %v6690, 0
        %v6808 = vperm.slane %v6691, 0
        %v6809 = vperm.slane %v6692, 0
        %v6810 = vperm.slane %v6693, 0
        %v6811 = vperm.slane %v6694, 0
        %v6812 = vperm.slane %v6695, 0
        %v6813 = vperm.slane %v6696, 0
        %v6814 = vperm.slane %v6647, 0
        %v6815 = vperm.slane %v6697, 0
        %v6816 = vperm.slane %v6698, 0
        %v6817 = vperm.slane %v6699, 0
        %v6818 = vperm.slane %v6700, 0
        %v6819 = vperm.slane %v6701, 0
        %v6820 = vperm.slane %v6702, 0
        %v6821 = vperm.slane %v6703, 0
        %v6822 = vperm.slane %v6650, 0
        %v6823 = vperm.slane %v6704, 0
        %v6824 = vperm.slane %v6705, 0
        %v6825 = vperm.slane %v6706, 0
        %v6826 = vperm.slane %v6707, 0
        %v6827 = vperm.slane %v6708, 0
        %v6828 = vperm.slane %v6709, 0
        %v6829 = vperm.slane %v6710, 0
        %v6830 = vperm.slane %v6652, 0
        %v6831 = vperm.slane %v6711, 0
        %v6832 = vperm.slane %v6712, 0
        %v6833 = vperm.slane %v6713, 0
        %v6834 = vperm.slane %v6714, 0
        %v6835 = vperm.slane %v6715, 0
        %v6836 = vperm.slane %v6716, 0
        %v6837 = vperm.slane %v6717, 0
        %6838 = vrot.lane.b32.xlu0 %v6774, 96
        %v6839 = vpop.permute.xlu0 %6838
        %6840 = vrot.lane.b32.xlu0 %v6775, 96
        %v6841 = vpop.permute.xlu0 %6840
        %6842 = vrot.lane.b32.xlu0 %v6776, 96
        %v6843 = vpop.permute.xlu0 %6842
        %6844 = vrot.lane.b32.xlu0 %v6777, 96
        %v6845 = vpop.permute.xlu0 %6844
        %6846 = vrot.lane.b32.xlu0 %v6778, 96
        %v6847 = vpop.permute.xlu0 %6846
        %6848 = vrot.lane.b32.xlu0 %v6779, 96
        %v6849 = vpop.permute.xlu0 %6848
        %6850 = vrot.lane.b32.xlu0 %v6780, 96
        %v6851 = vpop.permute.xlu0 %6850
        %6852 = vrot.lane.b32.xlu0 %v6781, 96
        %v6853 = vpop.permute.xlu0 %6852
        %6854 = vrot.lane.b32.xlu0 %v6782, 96
        %v6855 = vpop.permute.xlu0 %6854
        %6856 = vrot.lane.b32.xlu0 %v6783, 96
        %v6857 = vpop.permute.xlu0 %6856
        %6858 = vrot.lane.b32.xlu0 %v6784, 96
        %v6859 = vpop.permute.xlu0 %6858
        %6860 = vrot.lane.b32.xlu0 %v6785, 96
        %v6861 = vpop.permute.xlu0 %6860
        %6862 = vrot.lane.b32.xlu0 %v6786, 96
        %v6863 = vpop.permute.xlu0 %6862
        %6864 = vrot.lane.b32.xlu0 %v6787, 96
        %v6865 = vpop.permute.xlu0 %6864
        %6866 = vrot.lane.b32.xlu0 %v6788, 96
        %v6867 = vpop.permute.xlu0 %6866
        %6868 = vrot.lane.b32.xlu0 %v6789, 96
        %v6869 = vpop.permute.xlu0 %6868
        %6870 = vrot.lane.b32.xlu0 %v6790, 96
        %v6871 = vpop.permute.xlu0 %6870
        %6872 = vrot.lane.b32.xlu0 %v6791, 96
        %v6873 = vpop.permute.xlu0 %6872
        %6874 = vrot.lane.b32.xlu0 %v6792, 96
        %v6875 = vpop.permute.xlu0 %6874
        %6876 = vrot.lane.b32.xlu0 %v6793, 96
        %v6877 = vpop.permute.xlu0 %6876
        %6878 = vrot.lane.b32.xlu0 %v6794, 96
        %v6879 = vpop.permute.xlu0 %6878
        %6880 = vrot.lane.b32.xlu0 %v6795, 96
        %v6881 = vpop.permute.xlu0 %6880
        %6882 = vrot.lane.b32.xlu0 %v6796, 96
        %v6883 = vpop.permute.xlu0 %6882
        %6884 = vrot.lane.b32.xlu0 %v6797, 96
        %v6885 = vpop.permute.xlu0 %6884
        %6886 = vrot.lane.b32.xlu0 %v6798, 96
        %v6887 = vpop.permute.xlu0 %6886
        %6888 = vrot.lane.b32.xlu0 %v6799, 96
        %v6889 = vpop.permute.xlu0 %6888
        %6890 = vrot.lane.b32.xlu0 %v6800, 96
        %v6891 = vpop.permute.xlu0 %6890
        %6892 = vrot.lane.b32.xlu0 %v6801, 96
        %v6893 = vpop.permute.xlu0 %6892
        %6894 = vrot.lane.b32.xlu0 %v6802, 96
        %v6895 = vpop.permute.xlu0 %6894
        %6896 = vrot.lane.b32.xlu0 %v6803, 96
        %v6897 = vpop.permute.xlu0 %6896
        %6898 = vrot.lane.b32.xlu0 %v6804, 96
        %v6899 = vpop.permute.xlu0 %6898
        %6900 = vrot.lane.b32.xlu0 %v6805, 96
        %v6901 = vpop.permute.xlu0 %6900
        %6902 = vrot.lane.b32.xlu0 %v6806, 96
        %v6903 = vpop.permute.xlu0 %6902
        %6904 = vrot.lane.b32.xlu0 %v6807, 96
        %v6905 = vpop.permute.xlu0 %6904
        %6906 = vrot.lane.b32.xlu0 %v6808, 96
        %v6907 = vpop.permute.xlu0 %6906
        %6908 = vrot.lane.b32.xlu0 %v6809, 96
        %v6909 = vpop.permute.xlu0 %6908
        %6910 = vrot.lane.b32.xlu0 %v6810, 96
        %v6911 = vpop.permute.xlu0 %6910
        %6912 = vrot.lane.b32.xlu0 %v6811, 96
        %v6913 = vpop.permute.xlu0 %6912
        %6914 = vrot.lane.b32.xlu0 %v6812, 96
        %v6915 = vpop.permute.xlu0 %6914
        %6916 = vrot.lane.b32.xlu0 %v6813, 96
        %v6917 = vpop.permute.xlu0 %6916
        %6918 = vrot.lane.b32.xlu0 %v6814, 96
        %v6919 = vpop.permute.xlu0 %6918
        %6920 = vrot.lane.b32.xlu0 %v6815, 96
        %v6921 = vpop.permute.xlu0 %6920
        %6922 = vrot.lane.b32.xlu0 %v6816, 96
        %v6923 = vpop.permute.xlu0 %6922
        %6924 = vrot.lane.b32.xlu0 %v6817, 96
        %v6925 = vpop.permute.xlu0 %6924
        %6926 = vrot.lane.b32.xlu0 %v6818, 96
        %v6927 = vpop.permute.xlu0 %6926
        %6928 = vrot.lane.b32.xlu0 %v6819, 96
        %v6929 = vpop.permute.xlu0 %6928
        %6930 = vrot.lane.b32.xlu0 %v6820, 96
        %v6931 = vpop.permute.xlu0 %6930
        %6932 = vrot.lane.b32.xlu0 %v6821, 96
        %v6933 = vpop.permute.xlu0 %6932
        %6934 = vrot.lane.b32.xlu0 %v6822, 96
        %v6935 = vpop.permute.xlu0 %6934
        %6936 = vrot.lane.b32.xlu0 %v6823, 96
        %v6937 = vpop.permute.xlu0 %6936
        %6938 = vrot.lane.b32.xlu0 %v6824, 96
        %v6939 = vpop.permute.xlu0 %6938
        %6940 = vrot.lane.b32.xlu0 %v6825, 96
        %v6941 = vpop.permute.xlu0 %6940
        %6942 = vrot.lane.b32.xlu0 %v6826, 96
        %v6943 = vpop.permute.xlu0 %6942
        %6944 = vrot.lane.b32.xlu0 %v6827, 96
        %v6945 = vpop.permute.xlu0 %6944
        %6946 = vrot.lane.b32.xlu0 %v6828, 96
        %v6947 = vpop.permute.xlu0 %6946
        %6948 = vrot.lane.b32.xlu0 %v6829, 96
        %v6949 = vpop.permute.xlu0 %6948
        %6950 = vrot.lane.b32.xlu0 %v6830, 96
        %v6951 = vpop.permute.xlu0 %6950
        %6952 = vrot.lane.b32.xlu0 %v6831, 96
        %v6953 = vpop.permute.xlu0 %6952
        %6954 = vrot.lane.b32.xlu0 %v6832, 96
        %v6955 = vpop.permute.xlu0 %6954
        %6956 = vrot.lane.b32.xlu0 %v6833, 96
        %v6957 = vpop.permute.xlu0 %6956
        %6958 = vrot.lane.b32.xlu0 %v6834, 96
        %v6959 = vpop.permute.xlu0 %6958
        %6960 = vrot.lane.b32.xlu0 %v6835, 96
        %v6961 = vpop.permute.xlu0 %6960
        %6962 = vrot.lane.b32.xlu0 %v6836, 96
        %v6963 = vpop.permute.xlu0 %6962
        %6964 = vrot.lane.b32.xlu0 %v6837, 96
        %v6965 = vpop.permute.xlu0 %6964
        %v7030 = vsel %vm614, %v6635, %v6839
        %v7031 = vsel %vm614, %v6662, %v6841
        %v7032 = vsel %vm614, %v6663, %v6843
        %v7033 = vsel %vm614, %v6664, %v6845
        %v7034 = vsel %vm614, %v6665, %v6847
        %v7035 = vsel %vm614, %v6666, %v6849
        %v7036 = vsel %vm614, %v6667, %v6851
        %v7037 = vsel %vm614, %v6668, %v6853
        %v7038 = vsel %vm614, %v6637, %v6855
        %v7039 = vsel %vm614, %v6669, %v6857
        %v7040 = vsel %vm614, %v6670, %v6859
        %v7041 = vsel %vm614, %v6671, %v6861
        %v7042 = vsel %vm614, %v6672, %v6863
        %v7043 = vsel %vm614, %v6673, %v6865
        %v7044 = vsel %vm614, %v6674, %v6867
        %v7045 = vsel %vm614, %v6675, %v6869
        %v7046 = vsel %vm614, %v6640, %v6871
        %v7047 = vsel %vm614, %v6676, %v6873
        %v7048 = vsel %vm614, %v6677, %v6875
        %v7049 = vsel %vm614, %v6678, %v6877
        %v7050 = vsel %vm614, %v6679, %v6879
        %v7051 = vsel %vm614, %v6680, %v6881
        %v7052 = vsel %vm614, %v6681, %v6883
        %v7053 = vsel %vm614, %v6682, %v6885
        %v7054 = vsel %vm614, %v6642, %v6887
        %v7055 = vsel %vm614, %v6683, %v6889
        %v7056 = vsel %vm614, %v6684, %v6891
        %v7057 = vsel %vm614, %v6685, %v6893
        %v7058 = vsel %vm614, %v6686, %v6895
        %v7059 = vsel %vm614, %v6687, %v6897
        %v7060 = vsel %vm614, %v6688, %v6899
        %v7061 = vsel %vm614, %v6689, %v6901
        %v7062 = vsel %vm614, %v6645, %v6903
        %v7063 = vsel %vm614, %v6690, %v6905
        %v7064 = vsel %vm614, %v6691, %v6907
        %v7065 = vsel %vm614, %v6692, %v6909
        %v7066 = vsel %vm614, %v6693, %v6911
        %v7067 = vsel %vm614, %v6694, %v6913
        %v7068 = vsel %vm614, %v6695, %v6915
        %v7069 = vsel %vm614, %v6696, %v6917
        %v7070 = vsel %vm614, %v6647, %v6919
        %v7071 = vsel %vm614, %v6697, %v6921
        %v7072 = vsel %vm614, %v6698, %v6923
        %v7073 = vsel %vm614, %v6699, %v6925
        %v7074 = vsel %vm614, %v6700, %v6927
        %v7075 = vsel %vm614, %v6701, %v6929
        %v7076 = vsel %vm614, %v6702, %v6931
        %v7077 = vsel %vm614, %v6703, %v6933
        %v7078 = vsel %vm614, %v6650, %v6935
        %v7079 = vsel %vm614, %v6704, %v6937
        %v7080 = vsel %vm614, %v6705, %v6939
        %v7081 = vsel %vm614, %v6706, %v6941
        %v7082 = vsel %vm614, %v6707, %v6943
        %v7083 = vsel %vm614, %v6708, %v6945
        %v7084 = vsel %vm614, %v6709, %v6947
        %v7085 = vsel %vm614, %v6710, %v6949
        %v7086 = vsel %vm614, %v6652, %v6951
        %v7087 = vsel %vm614, %v6711, %v6953
        %v7088 = vsel %vm614, %v6712, %v6955
        %v7089 = vsel %vm614, %v6713, %v6957
        %v7090 = vsel %vm614, %v6714, %v6959
        %v7091 = vsel %vm614, %v6715, %v6961
        %v7092 = vsel %vm614, %v6716, %v6963
        %v7093 = vsel %vm614, %v6717, %v6965
        %7158 = vrot.lane.b32.xlu0 %v7030, 64
        %v7159 = vpop.permute.xlu0 %7158
        %7160 = vrot.lane.b32.xlu0 %v7031, 64
        %v7161 = vpop.permute.xlu0 %7160
        %7162 = vrot.lane.b32.xlu0 %v7032, 64
        %v7163 = vpop.permute.xlu0 %7162
        %7164 = vrot.lane.b32.xlu0 %v7033, 64
        %v7165 = vpop.permute.xlu0 %7164
        %7166 = vrot.lane.b32.xlu0 %v7034, 64
        %v7167 = vpop.permute.xlu0 %7166
        %7168 = vrot.lane.b32.xlu0 %v7035, 64
        %v7169 = vpop.permute.xlu0 %7168
        %7170 = vrot.lane.b32.xlu0 %v7036, 64
        %v7171 = vpop.permute.xlu0 %7170
        %7172 = vrot.lane.b32.xlu0 %v7037, 64
        %v7173 = vpop.permute.xlu0 %7172
        %7174 = vrot.lane.b32.xlu0 %v7038, 64
        %v7175 = vpop.permute.xlu0 %7174
        %7176 = vrot.lane.b32.xlu0 %v7039, 64
        %v7177 = vpop.permute.xlu0 %7176
        %7178 = vrot.lane.b32.xlu0 %v7040, 64
        %v7179 = vpop.permute.xlu0 %7178
        %7180 = vrot.lane.b32.xlu0 %v7041, 64
        %v7181 = vpop.permute.xlu0 %7180
        %7182 = vrot.lane.b32.xlu0 %v7042, 64
        %v7183 = vpop.permute.xlu0 %7182
        %7184 = vrot.lane.b32.xlu0 %v7043, 64
        %v7185 = vpop.permute.xlu0 %7184
        %7186 = vrot.lane.b32.xlu0 %v7044, 64
        %v7187 = vpop.permute.xlu0 %7186
        %7188 = vrot.lane.b32.xlu0 %v7045, 64
        %v7189 = vpop.permute.xlu0 %7188
        %7190 = vrot.lane.b32.xlu0 %v7046, 64
        %v7191 = vpop.permute.xlu0 %7190
        %7192 = vrot.lane.b32.xlu0 %v7047, 64
        %v7193 = vpop.permute.xlu0 %7192
        %7194 = vrot.lane.b32.xlu0 %v7048, 64
        %v7195 = vpop.permute.xlu0 %7194
        %7196 = vrot.lane.b32.xlu0 %v7049, 64
        %v7197 = vpop.permute.xlu0 %7196
        %7198 = vrot.lane.b32.xlu0 %v7050, 64
        %v7199 = vpop.permute.xlu0 %7198
        %7200 = vrot.lane.b32.xlu0 %v7051, 64
        %v7201 = vpop.permute.xlu0 %7200
        %7202 = vrot.lane.b32.xlu0 %v7052, 64
        %v7203 = vpop.permute.xlu0 %7202
        %7204 = vrot.lane.b32.xlu0 %v7053, 64
        %v7205 = vpop.permute.xlu0 %7204
        %7206 = vrot.lane.b32.xlu0 %v7054, 64
        %v7207 = vpop.permute.xlu0 %7206
        %7208 = vrot.lane.b32.xlu0 %v7055, 64
        %v7209 = vpop.permute.xlu0 %7208
        %7210 = vrot.lane.b32.xlu0 %v7056, 64
        %v7211 = vpop.permute.xlu0 %7210
        %7212 = vrot.lane.b32.xlu0 %v7057, 64
        %v7213 = vpop.permute.xlu0 %7212
        %7214 = vrot.lane.b32.xlu0 %v7058, 64
        %v7215 = vpop.permute.xlu0 %7214
        %7216 = vrot.lane.b32.xlu0 %v7059, 64
        %v7217 = vpop.permute.xlu0 %7216
        %7218 = vrot.lane.b32.xlu0 %v7060, 64
        %v7219 = vpop.permute.xlu0 %7218
        %7220 = vrot.lane.b32.xlu0 %v7061, 64
        %v7221 = vpop.permute.xlu0 %7220
        %7222 = vrot.lane.b32.xlu0 %v7062, 64
        %v7223 = vpop.permute.xlu0 %7222
        %7224 = vrot.lane.b32.xlu0 %v7063, 64
        %v7225 = vpop.permute.xlu0 %7224
        %7226 = vrot.lane.b32.xlu0 %v7064, 64
        %v7227 = vpop.permute.xlu0 %7226
        %7228 = vrot.lane.b32.xlu0 %v7065, 64
        %v7229 = vpop.permute.xlu0 %7228
        %7230 = vrot.lane.b32.xlu0 %v7066, 64
        %v7231 = vpop.permute.xlu0 %7230
        %7232 = vrot.lane.b32.xlu0 %v7067, 64
        %v7233 = vpop.permute.xlu0 %7232
        %7234 = vrot.lane.b32.xlu0 %v7068, 64
        %v7235 = vpop.permute.xlu0 %7234
        %7236 = vrot.lane.b32.xlu0 %v7069, 64
        %v7237 = vpop.permute.xlu0 %7236
        %7238 = vrot.lane.b32.xlu0 %v7070, 64
        %v7239 = vpop.permute.xlu0 %7238
        %7240 = vrot.lane.b32.xlu0 %v7071, 64
        %v7241 = vpop.permute.xlu0 %7240
        %7242 = vrot.lane.b32.xlu0 %v7072, 64
        %v7243 = vpop.permute.xlu0 %7242
        %7244 = vrot.lane.b32.xlu0 %v7073, 64
        %v7245 = vpop.permute.xlu0 %7244
        %7246 = vrot.lane.b32.xlu0 %v7074, 64
        %v7247 = vpop.permute.xlu0 %7246
        %7248 = vrot.lane.b32.xlu0 %v7075, 64
        %v7249 = vpop.permute.xlu0 %7248
        %7250 = vrot.lane.b32.xlu0 %v7076, 64
        %v7251 = vpop.permute.xlu0 %7250
        %7252 = vrot.lane.b32.xlu0 %v7077, 64
        %v7253 = vpop.permute.xlu0 %7252
        %7254 = vrot.lane.b32.xlu0 %v7078, 64
        %v7255 = vpop.permute.xlu0 %7254
        %7256 = vrot.lane.b32.xlu0 %v7079, 64
        %v7257 = vpop.permute.xlu0 %7256
        %7258 = vrot.lane.b32.xlu0 %v7080, 64
        %v7259 = vpop.permute.xlu0 %7258
        %7260 = vrot.lane.b32.xlu0 %v7081, 64
        %v7261 = vpop.permute.xlu0 %7260
        %7262 = vrot.lane.b32.xlu0 %v7082, 64
        %v7263 = vpop.permute.xlu0 %7262
        %7264 = vrot.lane.b32.xlu0 %v7083, 64
        %v7265 = vpop.permute.xlu0 %7264
        %7266 = vrot.lane.b32.xlu0 %v7084, 64
        %v7267 = vpop.permute.xlu0 %7266
        %7268 = vrot.lane.b32.xlu0 %v7085, 64
        %v7269 = vpop.permute.xlu0 %7268
        %7270 = vrot.lane.b32.xlu0 %v7086, 64
        %v7271 = vpop.permute.xlu0 %7270
        %7272 = vrot.lane.b32.xlu0 %v7087, 64
        %v7273 = vpop.permute.xlu0 %7272
        %7274 = vrot.lane.b32.xlu0 %v7088, 64
        %v7275 = vpop.permute.xlu0 %7274
        %7276 = vrot.lane.b32.xlu0 %v7089, 64
        %v7277 = vpop.permute.xlu0 %7276
        %7278 = vrot.lane.b32.xlu0 %v7090, 64
        %v7279 = vpop.permute.xlu0 %7278
        %7280 = vrot.lane.b32.xlu0 %v7091, 64
        %v7281 = vpop.permute.xlu0 %7280
        %7282 = vrot.lane.b32.xlu0 %v7092, 64
        %v7283 = vpop.permute.xlu0 %7282
        %7284 = vrot.lane.b32.xlu0 %v7093, 64
        %v7285 = vpop.permute.xlu0 %7284
        %7286 = vst [vmem:[#allocation1] ss:$4 sm:$0xff] %v7030
        %s7287 = scalar_lea.vmem [#allocation1], 1
        %7288 = vst [vmem:[%s7287] ss:$4 sm:$0xff] %v7031
        %s7289 = scalar_lea.vmem [#allocation1], 2
        %7290 = vst [vmem:[%s7289] ss:$4 sm:$0xff] %v7032
        %s7291 = scalar_lea.vmem [#allocation1], 3
        %7292 = vst [vmem:[%s7291] ss:$4 sm:$0xff] %v7033
        %s7293 = scalar_lea.vmem [#allocation1], 32
        %7294 = vst [vmem:[%s7293] ss:$4 sm:$0xff] %v7034
        %s7295 = scalar_lea.vmem [#allocation1], 33
        %7296 = vst [vmem:[%s7295] ss:$4 sm:$0xff] %v7035
        %s7297 = scalar_lea.vmem [#allocation1], 34
        %7298 = vst [vmem:[%s7297] ss:$4 sm:$0xff] %v7036
        %s7299 = scalar_lea.vmem [#allocation1], 35
        %7300 = vst [vmem:[%s7299] ss:$4 sm:$0xff] %v7037
        %v7301 = vld.sshfl [vmem:[#allocation1] sm:$0xff pattern:$0x73625140]
        %v7302 = vld.sshfl [vmem:[#allocation1 + $0x20] sm:$0xff pattern:$0x73625140]
        %7303 = vst [vmem:[#allocation1] ss:$4 sm:$0xff] %v7159
        %7304 = vst [vmem:[%s7287] ss:$4 sm:$0xff] %v7161
        %7305 = vst [vmem:[%s7289] ss:$4 sm:$0xff] %v7163
        %7306 = vst [vmem:[%s7291] ss:$4 sm:$0xff] %v7165
        %7307 = vst [vmem:[%s7293] ss:$4 sm:$0xff] %v7167
        %7308 = vst [vmem:[%s7295] ss:$4 sm:$0xff] %v7169
        %7309 = vst [vmem:[%s7297] ss:$4 sm:$0xff] %v7171
        %7310 = vst [vmem:[%s7299] ss:$4 sm:$0xff] %v7173
        %v7311 = vld.sshfl [vmem:[#allocation1] sm:$0xff pattern:$0x73625140]
        %v7312 = vld.sshfl [vmem:[#allocation1 + $0x20] sm:$0xff pattern:$0x73625140]
        %7313 = vst [vmem:[#allocation1] ss:$4 sm:$0xff] %v7038
        %7314 = vst [vmem:[%s7287] ss:$4 sm:$0xff] %v7039
        %7315 = vst [vmem:[%s7289] ss:$4 sm:$0xff] %v7040
        %7316 = vst [vmem:[%s7291] ss:$4 sm:$0xff] %v7041
        %7317 = vst [vmem:[%s7293] ss:$4 sm:$0xff] %v7042
        %7318 = vst [vmem:[%s7295] ss:$4 sm:$0xff] %v7043
        %7319 = vst [vmem:[%s7297] ss:$4 sm:$0xff] %v7044
        %7320 = vst [vmem:[%s7299] ss:$4 sm:$0xff] %v7045
        %v7321 = vld.sshfl [vmem:[#allocation1] sm:$0xff pattern:$0x73625140]
        %v7322 = vld.sshfl [vmem:[#allocation1 + $0x20] sm:$0xff pattern:$0x73625140]
        %7323 = vst [vmem:[#allocation1] ss:$4 sm:$0xff] %v7175
        %7324 = vst [vmem:[%s7287] ss:$4 sm:$0xff] %v7177
        %7325 = vst [vmem:[%s7289] ss:$4 sm:$0xff] %v7179
        %7326 = vst [vmem:[%s7291] ss:$4 sm:$0xff] %v7181
        %7327 = vst [vmem:[%s7293] ss:$4 sm:$0xff] %v7183
        %7328 = vst [vmem:[%s7295] ss:$4 sm:$0xff] %v7185
        %7329 = vst [vmem:[%s7297] ss:$4 sm:$0xff] %v7187
        %7330 = vst [vmem:[%s7299] ss:$4 sm:$0xff] %v7189
        %v7331 = vld.sshfl [vmem:[#allocation1] sm:$0xff pattern:$0x73625140]
        %v7332 = vld.sshfl [vmem:[#allocation1 + $0x20] sm:$0xff pattern:$0x73625140]
        %7333 = vst [vmem:[#allocation1] ss:$4 sm:$0xff] %v7046
        %7334 = vst [vmem:[%s7287] ss:$4 sm:$0xff] %v7047
        %7335 = vst [vmem:[%s7289] ss:$4 sm:$0xff] %v7048
        %7336 = vst [vmem:[%s7291] ss:$4 sm:$0xff] %v7049
        %7337 = vst [vmem:[%s7293] ss:$4 sm:$0xff] %v7050
        %7338 = vst [vmem:[%s7295] ss:$4 sm:$0xff] %v7051
        %7339 = vst [vmem:[%s7297] ss:$4 sm:$0xff] %v7052
        %7340 = vst [vmem:[%s7299] ss:$4 sm:$0xff] %v7053
        %v7341 = vld.sshfl [vmem:[#allocation1] sm:$0xff pattern:$0x73625140]
        %v7342 = vld.sshfl [vmem:[#allocation1 + $0x20] sm:$0xff pattern:$0x73625140]
        %7343 = vst [vmem:[#allocation1] ss:$4 sm:$0xff] %v7191
        %7344 = vst [vmem:[%s7287] ss:$4 sm:$0xff] %v7193
        %7345 = vst [vmem:[%s7289] ss:$4 sm:$0xff] %v7195
        %7346 = vst [vmem:[%s7291] ss:$4 sm:$0xff] %v7197
        %7347 = vst [vmem:[%s7293] ss:$4 sm:$0xff] %v7199
        %7348 = vst [vmem:[%s7295] ss:$4 sm:$0xff] %v7201
        %7349 = vst [vmem:[%s7297] ss:$4 sm:$0xff] %v7203
        %7350 = vst [vmem:[%s7299] ss:$4 sm:$0xff] %v7205
        %v7351 = vld.sshfl [vmem:[#allocation1] sm:$0xff pattern:$0x73625140]
        %v7352 = vld.sshfl [vmem:[#allocation1 + $0x20] sm:$0xff pattern:$0x73625140]
        %7353 = vst [vmem:[#allocation1] ss:$4 sm:$0xff] %v7054
        %7354 = vst [vmem:[%s7287] ss:$4 sm:$0xff] %v7055
        %7355 = vst [vmem:[%s7289] ss:$4 sm:$0xff] %v7056
        %7356 = vst [vmem:[%s7291] ss:$4 sm:$0xff] %v7057
        %7357 = vst [vmem:[%s7293] ss:$4 sm:$0xff] %v7058
        %7358 = vst [vmem:[%s7295] ss:$4 sm:$0xff] %v7059
        %7359 = vst [vmem:[%s7297] ss:$4 sm:$0xff] %v7060
        %7360 = vst [vmem:[%s7299] ss:$4 sm:$0xff] %v7061
        %v7361 = vld.sshfl [vmem:[#allocation1] sm:$0xff pattern:$0x73625140]
        %v7362 = vld.sshfl [vmem:[#allocation1 + $0x20] sm:$0xff pattern:$0x73625140]
        %7363 = vst [vmem:[#allocation1] ss:$4 sm:$0xff] %v7207
        %7364 = vst [vmem:[%s7287] ss:$4 sm:$0xff] %v7209
        %7365 = vst [vmem:[%s7289] ss:$4 sm:$0xff] %v7211
        %7366 = vst [vmem:[%s7291] ss:$4 sm:$0xff] %v7213
        %7367 = vst [vmem:[%s7293] ss:$4 sm:$0xff] %v7215
        %7368 = vst [vmem:[%s7295] ss:$4 sm:$0xff] %v7217
        %7369 = vst [vmem:[%s7297] ss:$4 sm:$0xff] %v7219
        %7370 = vst [vmem:[%s7299] ss:$4 sm:$0xff] %v7221
        %v7371 = vld.sshfl [vmem:[#allocation1] sm:$0xff pattern:$0x73625140]
        %v7372 = vld.sshfl [vmem:[#allocation1 + $0x20] sm:$0xff pattern:$0x73625140]
        %7373 = vst [vmem:[#allocation1] ss:$4 sm:$0xff] %v7062
        %7374 = vst [vmem:[%s7287] ss:$4 sm:$0xff] %v7063
        %7375 = vst [vmem:[%s7289] ss:$4 sm:$0xff] %v7064
        %7376 = vst [vmem:[%s7291] ss:$4 sm:$0xff] %v7065
        %7377 = vst [vmem:[%s7293] ss:$4 sm:$0xff] %v7066
        %7378 = vst [vmem:[%s7295] ss:$4 sm:$0xff] %v7067
        %7379 = vst [vmem:[%s7297] ss:$4 sm:$0xff] %v7068
        %7380 = vst [vmem:[%s7299] ss:$4 sm:$0xff] %v7069
        %v7381 = vld.sshfl [vmem:[#allocation1] sm:$0xff pattern:$0x73625140]
        %v7382 = vld.sshfl [vmem:[#allocation1 + $0x20] sm:$0xff pattern:$0x73625140]
        %7383 = vst [vmem:[#allocation1] ss:$4 sm:$0xff] %v7223
        %7384 = vst [vmem:[%s7287] ss:$4 sm:$0xff] %v7225
        %7385 = vst [vmem:[%s7289] ss:$4 sm:$0xff] %v7227
        %7386 = vst [vmem:[%s7291] ss:$4 sm:$0xff] %v7229
        %7387 = vst [vmem:[%s7293] ss:$4 sm:$0xff] %v7231
        %7388 = vst [vmem:[%s7295] ss:$4 sm:$0xff] %v7233
        %7389 = vst [vmem:[%s7297] ss:$4 sm:$0xff] %v7235
        %7390 = vst [vmem:[%s7299] ss:$4 sm:$0xff] %v7237
        %v7391 = vld.sshfl [vmem:[#allocation1] sm:$0xff pattern:$0x73625140]
        %v7392 = vld.sshfl [vmem:[#allocation1 + $0x20] sm:$0xff pattern:$0x73625140]
        %7393 = vst [vmem:[#allocation1] ss:$4 sm:$0xff] %v7070
        %7394 = vst [vmem:[%s7287] ss:$4 sm:$0xff] %v7071
        %7395 = vst [vmem:[%s7289] ss:$4 sm:$0xff] %v7072
        %7396 = vst [vmem:[%s7291] ss:$4 sm:$0xff] %v7073
        %7397 = vst [vmem:[%s7293] ss:$4 sm:$0xff] %v7074
        %7398 = vst [vmem:[%s7295] ss:$4 sm:$0xff] %v7075
        %7399 = vst [vmem:[%s7297] ss:$4 sm:$0xff] %v7076
        %7400 = vst [vmem:[%s7299] ss:$4 sm:$0xff] %v7077
        %v7401 = vld.sshfl [vmem:[#allocation1] sm:$0xff pattern:$0x73625140]
        %v7402 = vld.sshfl [vmem:[#allocation1 + $0x20] sm:$0xff pattern:$0x73625140]
        %7403 = vst [vmem:[#allocation1] ss:$4 sm:$0xff] %v7239
        %7404 = vst [vmem:[%s7287] ss:$4 sm:$0xff] %v7241
        %7405 = vst [vmem:[%s7289] ss:$4 sm:$0xff] %v7243
        %7406 = vst [vmem:[%s7291] ss:$4 sm:$0xff] %v7245
        %7407 = vst [vmem:[%s7293] ss:$4 sm:$0xff] %v7247
        %7408 = vst [vmem:[%s7295] ss:$4 sm:$0xff] %v7249
        %7409 = vst [vmem:[%s7297] ss:$4 sm:$0xff] %v7251
        %7410 = vst [vmem:[%s7299] ss:$4 sm:$0xff] %v7253
        %v7411 = vld.sshfl [vmem:[#allocation1] sm:$0xff pattern:$0x73625140]
        %v7412 = vld.sshfl [vmem:[#allocation1 + $0x20] sm:$0xff pattern:$0x73625140]
        %7413 = vst [vmem:[#allocation1] ss:$4 sm:$0xff] %v7078
        %7414 = vst [vmem:[%s7287] ss:$4 sm:$0xff] %v7079
        %7415 = vst [vmem:[%s7289] ss:$4 sm:$0xff] %v7080
        %7416 = vst [vmem:[%s7291] ss:$4 sm:$0xff] %v7081
        %7417 = vst [vmem:[%s7293] ss:$4 sm:$0xff] %v7082
        %7418 = vst [vmem:[%s7295] ss:$4 sm:$0xff] %v7083
        %7419 = vst [vmem:[%s7297] ss:$4 sm:$0xff] %v7084
        %7420 = vst [vmem:[%s7299] ss:$4 sm:$0xff] %v7085
        %v7421 = vld.sshfl [vmem:[#allocation1] sm:$0xff pattern:$0x73625140]
        %v7422 = vld.sshfl [vmem:[#allocation1 + $0x20] sm:$0xff pattern:$0x73625140]
        %7423 = vst [vmem:[#allocation1] ss:$4 sm:$0xff] %v7255
        %7424 = vst [vmem:[%s7287] ss:$4 sm:$0xff] %v7257
        %7425 = vst [vmem:[%s7289] ss:$4 sm:$0xff] %v7259
        %7426 = vst [vmem:[%s7291] ss:$4 sm:$0xff] %v7261
        %7427 = vst [vmem:[%s7293] ss:$4 sm:$0xff] %v7263
        %7428 = vst [vmem:[%s7295] ss:$4 sm:$0xff] %v7265
        %7429 = vst [vmem:[%s7297] ss:$4 sm:$0xff] %v7267
        %7430 = vst [vmem:[%s7299] ss:$4 sm:$0xff] %v7269
        %v7431 = vld.sshfl [vmem:[#allocation1] sm:$0xff pattern:$0x73625140]
        %v7432 = vld.sshfl [vmem:[#allocation1 + $0x20] sm:$0xff pattern:$0x73625140]
        %7433 = vst [vmem:[#allocation1] ss:$4 sm:$0xff] %v7086
        %7434 = vst [vmem:[%s7287] ss:$4 sm:$0xff] %v7087
        %7435 = vst [vmem:[%s7289] ss:$4 sm:$0xff] %v7088
        %7436 = vst [vmem:[%s7291] ss:$4 sm:$0xff] %v7089
        %7437 = vst [vmem:[%s7293] ss:$4 sm:$0xff] %v7090
        %7438 = vst [vmem:[%s7295] ss:$4 sm:$0xff] %v7091
        %7439 = vst [vmem:[%s7297] ss:$4 sm:$0xff] %v7092
        %7440 = vst [vmem:[%s7299] ss:$4 sm:$0xff] %v7093
        %v7441 = vld.sshfl [vmem:[#allocation1] sm:$0xff pattern:$0x73625140]
        %v7442 = vld.sshfl [vmem:[#allocation1 + $0x20] sm:$0xff pattern:$0x73625140]
        %7443 = vst [vmem:[#allocation1] ss:$4 sm:$0xff] %v7271
        %7444 = vst [vmem:[%s7287] ss:$4 sm:$0xff] %v7273
        %7445 = vst [vmem:[%s7289] ss:$4 sm:$0xff] %v7275
        %7446 = vst [vmem:[%s7291] ss:$4 sm:$0xff] %v7277
        %7447 = vst [vmem:[%s7293] ss:$4 sm:$0xff] %v7279
        %7448 = vst [vmem:[%s7295] ss:$4 sm:$0xff] %v7281
        %7449 = vst [vmem:[%s7297] ss:$4 sm:$0xff] %v7283
        %7450 = vst [vmem:[%s7299] ss:$4 sm:$0xff] %v7285
        %v7451 = vld.sshfl [vmem:[#allocation1] sm:$0xff pattern:$0x73625140]
        %v7452 = vld.sshfl [vmem:[#allocation1 + $0x20] sm:$0xff pattern:$0x73625140]
        %7485 = vrot.lane.b32.xlu0 %v2138, 32
        %v7486 = vpop.permute.xlu0 %7485
        %7487 = vrot.lane.b32.xlu0 %v2139, 32
        %v7488 = vpop.permute.xlu0 %7487
        %7489 = vrot.lane.b32.xlu0 %v2140, 32
        %v7490 = vpop.permute.xlu0 %7489
        %7491 = vrot.lane.b32.xlu0 %v2141, 32
        %v7492 = vpop.permute.xlu0 %7491
        %7493 = vrot.lane.b32.xlu0 %v2142, 32
        %v7494 = vpop.permute.xlu0 %7493
        %7495 = vrot.lane.b32.xlu0 %v2143, 32
        %v7496 = vpop.permute.xlu0 %7495
        %7497 = vrot.lane.b32.xlu0 %v2144, 32
        %v7498 = vpop.permute.xlu0 %7497
        %7499 = vrot.lane.b32.xlu0 %v2145, 32
        %v7500 = vpop.permute.xlu0 %7499
        %7501 = vrot.lane.b32.xlu0 %v2146, 32
        %v7502 = vpop.permute.xlu0 %7501
        %7503 = vrot.lane.b32.xlu0 %v2147, 32
        %v7504 = vpop.permute.xlu0 %7503
        %7505 = vrot.lane.b32.xlu0 %v2148, 32
        %v7506 = vpop.permute.xlu0 %7505
        %7507 = vrot.lane.b32.xlu0 %v2149, 32
        %v7508 = vpop.permute.xlu0 %7507
        %7509 = vrot.lane.b32.xlu0 %v2150, 32
        %v7510 = vpop.permute.xlu0 %7509
        %7511 = vrot.lane.b32.xlu0 %v2151, 32
        %v7512 = vpop.permute.xlu0 %7511
        %7513 = vrot.lane.b32.xlu0 %v2152, 32
        %v7514 = vpop.permute.xlu0 %7513
        %7515 = vrot.lane.b32.xlu0 %v2153, 32
        %v7516 = vpop.permute.xlu0 %7515
        %7517 = vrot.lane.b32.xlu0 %v2154, 32
        %v7518 = vpop.permute.xlu0 %7517
        %7519 = vrot.lane.b32.xlu0 %v2155, 32
        %v7520 = vpop.permute.xlu0 %7519
        %7521 = vrot.lane.b32.xlu0 %v2156, 32
        %v7522 = vpop.permute.xlu0 %7521
        %7523 = vrot.lane.b32.xlu0 %v2157, 32
        %v7524 = vpop.permute.xlu0 %7523
        %7525 = vrot.lane.b32.xlu0 %v2158, 32
        %v7526 = vpop.permute.xlu0 %7525
        %7527 = vrot.lane.b32.xlu0 %v2159, 32
        %v7528 = vpop.permute.xlu0 %7527
        %7529 = vrot.lane.b32.xlu0 %v2160, 32
        %v7530 = vpop.permute.xlu0 %7529
        %7531 = vrot.lane.b32.xlu0 %v2161, 32
        %v7532 = vpop.permute.xlu0 %7531
        %7533 = vrot.lane.b32.xlu0 %v2162, 32
        %v7534 = vpop.permute.xlu0 %7533
        %7535 = vrot.lane.b32.xlu0 %v2163, 32
        %v7536 = vpop.permute.xlu0 %7535
        %7537 = vrot.lane.b32.xlu0 %v2164, 32
        %v7538 = vpop.permute.xlu0 %7537
        %7539 = vrot.lane.b32.xlu0 %v2165, 32
        %v7540 = vpop.permute.xlu0 %7539
        %7541 = vrot.lane.b32.xlu0 %v2166, 32
        %v7542 = vpop.permute.xlu0 %7541
        %7543 = vrot.lane.b32.xlu0 %v2167, 32
        %v7544 = vpop.permute.xlu0 %7543
        %7545 = vrot.lane.b32.xlu0 %v2168, 32
        %v7546 = vpop.permute.xlu0 %7545
        %7547 = vrot.lane.b32.xlu0 %v2169, 32
        %v7548 = vpop.permute.xlu0 %7547
        %v7581 = vsel %vm1923, %v7301, %v7486
        %v7582 = vsel %vm1923, %v7302, %v7488
        %v7583 = vsel %vm1923, %v7311, %v7490
        %v7584 = vsel %vm1923, %v7312, %v7492
        %v7585 = vsel %vm1923, %v7321, %v7494
        %v7586 = vsel %vm1923, %v7322, %v7496
        %v7587 = vsel %vm1923, %v7331, %v7498
        %v7588 = vsel %vm1923, %v7332, %v7500
        %v7589 = vsel %vm1923, %v7341, %v7502
        %v7590 = vsel %vm1923, %v7342, %v7504
        %v7591 = vsel %vm1923, %v7351, %v7506
        %v7592 = vsel %vm1923, %v7352, %v7508
        %v7593 = vsel %vm1923, %v7361, %v7510
        %v7594 = vsel %vm1923, %v7362, %v7512
        %v7595 = vsel %vm1923, %v7371, %v7514
        %v7596 = vsel %vm1923, %v7372, %v7516
        %v7597 = vsel %vm1923, %v7381, %v7518
        %v7598 = vsel %vm1923, %v7382, %v7520
        %v7599 = vsel %vm1923, %v7391, %v7522
        %v7600 = vsel %vm1923, %v7392, %v7524
        %v7601 = vsel %vm1923, %v7401, %v7526
        %v7602 = vsel %vm1923, %v7402, %v7528
        %v7603 = vsel %vm1923, %v7411, %v7530
        %v7604 = vsel %vm1923, %v7412, %v7532
        %v7605 = vsel %vm1923, %v7421, %v7534
        %v7606 = vsel %vm1923, %v7422, %v7536
        %v7607 = vsel %vm1923, %v7431, %v7538
        %v7608 = vsel %vm1923, %v7432, %v7540
        %v7609 = vsel %vm1923, %v7441, %v7542
        %v7610 = vsel %vm1923, %v7442, %v7544
        %v7611 = vsel %vm1923, %v7451, %v7546
        %v7612 = vsel %vm1923, %v7452, %v7548
        %v7645 = vrot.slane %v7581, 7
        %v7646 = vrot.slane %v7582, 7
        %v7647 = vsel %vm614, %v7645, %v7646
        %v7648 = vrot.slane %v7583, 7
        %v7649 = vrot.slane %v7584, 7
        %v7650 = vsel %vm614, %v7648, %v7649
        %v7651 = vrot.slane %v7585, 7
        %v7652 = vrot.slane %v7586, 7
        %v7653 = vsel %vm614, %v7651, %v7652
        %v7654 = vrot.slane %v7587, 7
        %v7655 = vrot.slane %v7588, 7
        %v7656 = vsel %vm614, %v7654, %v7655
        %v7657 = vrot.slane %v7589, 7
        %v7658 = vrot.slane %v7590, 7
        %v7659 = vsel %vm614, %v7657, %v7658
        %v7660 = vrot.slane %v7591, 7
        %v7661 = vrot.slane %v7592, 7
        %v7662 = vsel %vm614, %v7660, %v7661
        %v7663 = vrot.slane %v7593, 7
        %v7664 = vrot.slane %v7594, 7
        %v7665 = vsel %vm614, %v7663, %v7664
        %v7666 = vrot.slane %v7595, 7
        %v7667 = vrot.slane %v7596, 7
        %v7668 = vsel %vm614, %v7666, %v7667
        %v7669 = vrot.slane %v7597, 7
        %v7670 = vrot.slane %v7598, 7
        %v7671 = vsel %vm614, %v7669, %v7670
        %v7672 = vrot.slane %v7599, 7
        %v7673 = vrot.slane %v7600, 7
        %v7674 = vsel %vm614, %v7672, %v7673
        %v7675 = vrot.slane %v7601, 7
        %v7676 = vrot.slane %v7602, 7
        %v7677 = vsel %vm614, %v7675, %v7676
        %v7678 = vrot.slane %v7603, 7
        %v7679 = vrot.slane %v7604, 7
        %v7680 = vsel %vm614, %v7678, %v7679
        %v7681 = vrot.slane %v7605, 7
        %v7682 = vrot.slane %v7606, 7
        %v7683 = vsel %vm614, %v7681, %v7682
        %v7684 = vrot.slane %v7607, 7
        %v7685 = vrot.slane %v7608, 7
        %v7686 = vsel %vm614, %v7684, %v7685
        %v7687 = vrot.slane %v7609, 7
        %v7688 = vrot.slane %v7610, 7
        %v7689 = vsel %vm614, %v7687, %v7688
        %v7690 = vrot.slane %v7611, 7
        %v7691 = vrot.slane %v7612, 7
        %v7692 = vsel %vm614, %v7690, %v7691
        %v7741 = vsel %vm614, 0.0, %v7645
        %v7742 = vsel %vm614, 0.0, %v7648
        %v7743 = vsel %vm614, 0.0, %v7651
        %v7744 = vsel %vm614, 0.0, %v7654
        %v7745 = vsel %vm614, 0.0, %v7657
        %v7746 = vsel %vm614, 0.0, %v7660
        %v7747 = vsel %vm614, 0.0, %v7663
        %v7748 = vsel %vm614, 0.0, %v7666
        %v7749 = vsel %vm614, 0.0, %v7669
        %v7750 = vsel %vm614, 0.0, %v7672
        %v7751 = vsel %vm614, 0.0, %v7675
        %v7752 = vsel %vm614, 0.0, %v7678
        %v7753 = vsel %vm614, 0.0, %v7681
        %v7754 = vsel %vm614, 0.0, %v7684
        %v7755 = vsel %vm614, 0.0, %v7687
        %v7756 = vsel %vm614, 0.0, %v7690
        %v7757 = vsel %vm614, %v7646, 0.0
        %v7758 = vsel %vm614, %v7649, 0.0
        %v7759 = vsel %vm614, %v7652, 0.0
        %v7760 = vsel %vm614, %v7655, 0.0
        %v7761 = vsel %vm614, %v7658, 0.0
        %v7762 = vsel %vm614, %v7661, 0.0
        %v7763 = vsel %vm614, %v7664, 0.0
        %v7764 = vsel %vm614, %v7667, 0.0
        %v7765 = vsel %vm614, %v7670, 0.0
        %v7766 = vsel %vm614, %v7673, 0.0
        %v7767 = vsel %vm614, %v7676, 0.0
        %v7768 = vsel %vm614, %v7679, 0.0
        %v7769 = vsel %vm614, %v7682, 0.0
        %v7770 = vsel %vm614, %v7685, 0.0
        %v7771 = vsel %vm614, %v7688, 0.0
        %v7772 = vsel %vm614, %v7691, 0.0
        %v7803 = vrot.slane %v7741, 1
        %v7804 = vrot.slane %v7647, 1
        %v7805 = vsel %vm773, %v7803, %v7804
        %v7806 = vrot.slane %v7757, 1
        %v7807 = vsel %vm773, %v7804, %v7806
        %v7808 = vrot.slane %v7742, 1
        %v7809 = vrot.slane %v7650, 1
        %v7810 = vsel %vm773, %v7808, %v7809
        %v7811 = vrot.slane %v7758, 1
        %v7812 = vsel %vm773, %v7809, %v7811
        %v7813 = vrot.slane %v7743, 1
        %v7814 = vrot.slane %v7653, 1
        %v7815 = vsel %vm773, %v7813, %v7814
        %v7816 = vrot.slane %v7759, 1
        %v7817 = vsel %vm773, %v7814, %v7816
        %v7818 = vrot.slane %v7744, 1
        %v7819 = vrot.slane %v7656, 1
        %v7820 = vsel %vm773, %v7818, %v7819
        %v7821 = vrot.slane %v7760, 1
        %v7822 = vsel %vm773, %v7819, %v7821
        %v7823 = vrot.slane %v7745, 1
        %v7824 = vrot.slane %v7659, 1
        %v7825 = vsel %vm773, %v7823, %v7824
        %v7826 = vrot.slane %v7761, 1
        %v7827 = vsel %vm773, %v7824, %v7826
        %v7828 = vrot.slane %v7746, 1
        %v7829 = vrot.slane %v7662, 1
        %v7830 = vsel %vm773, %v7828, %v7829
        %v7831 = vrot.slane %v7762, 1
        %v7832 = vsel %vm773, %v7829, %v7831
        %v7833 = vrot.slane %v7747, 1
        %v7834 = vrot.slane %v7665, 1
        %v7835 = vsel %vm773, %v7833, %v7834
        %v7836 = vrot.slane %v7763, 1
        %v7837 = vsel %vm773, %v7834, %v7836
        %v7838 = vrot.slane %v7748, 1
        %v7839 = vrot.slane %v7668, 1
        %v7840 = vsel %vm773, %v7838, %v7839
        %v7841 = vrot.slane %v7764, 1
        %v7842 = vsel %vm773, %v7839, %v7841
        %v7843 = vrot.slane %v7749, 1
        %v7844 = vrot.slane %v7671, 1
        %v7845 = vsel %vm773, %v7843, %v7844
        %v7846 = vrot.slane %v7765, 1
        %v7847 = vsel %vm773, %v7844, %v7846
        %v7848 = vrot.slane %v7750, 1
        %v7849 = vrot.slane %v7674, 1
        %v7850 = vsel %vm773, %v7848, %v7849
        %v7851 = vrot.slane %v7766, 1
        %v7852 = vsel %vm773, %v7849, %v7851
        %v7853 = vrot.slane %v7751, 1
        %v7854 = vrot.slane %v7677, 1
        %v7855 = vsel %vm773, %v7853, %v7854
        %v7856 = vrot.slane %v7767, 1
        %v7857 = vsel %vm773, %v7854, %v7856
        %v7858 = vrot.slane %v7752, 1
        %v7859 = vrot.slane %v7680, 1
        %v7860 = vsel %vm773, %v7858, %v7859
        %v7861 = vrot.slane %v7768, 1
        %v7862 = vsel %vm773, %v7859, %v7861
        %v7863 = vrot.slane %v7753, 1
        %v7864 = vrot.slane %v7683, 1
        %v7865 = vsel %vm773, %v7863, %v7864
        %v7866 = vrot.slane %v7769, 1
        %v7867 = vsel %vm773, %v7864, %v7866
        %v7868 = vrot.slane %v7754, 1
        %v7869 = vrot.slane %v7686, 1
        %v7870 = vsel %vm773, %v7868, %v7869
        %v7871 = vrot.slane %v7770, 1
        %v7872 = vsel %vm773, %v7869, %v7871
        %v7873 = vrot.slane %v7755, 1
        %v7874 = vrot.slane %v7689, 1
        %v7875 = vsel %vm773, %v7873, %v7874
        %v7876 = vrot.slane %v7771, 1
        %v7877 = vsel %vm773, %v7874, %v7876
        %7878 = vrot.lane.b32.xlu0 %v775, 64
        %v7879 = vpop.permute.xlu0 %7878
        %7880 = vrot.lane.b32.xlu0 %v7805, 64
        %v7881 = vpop.permute.xlu0 %7880
        %7882 = vrot.lane.b32.xlu0 %v7807, 64
        %v7883 = vpop.permute.xlu0 %7882
        %7884 = vrot.lane.b32.xlu0 %v7810, 64
        %v7885 = vpop.permute.xlu0 %7884
        %7886 = vrot.lane.b32.xlu0 %v7812, 64
        %v7887 = vpop.permute.xlu0 %7886
        %7888 = vrot.lane.b32.xlu0 %v7815, 64
        %v7889 = vpop.permute.xlu0 %7888
        %7890 = vrot.lane.b32.xlu0 %v7817, 64
        %v7891 = vpop.permute.xlu0 %7890
        %7892 = vrot.lane.b32.xlu0 %v7820, 64
        %v7893 = vpop.permute.xlu0 %7892
        %7894 = vrot.lane.b32.xlu0 %v7822, 64
        %v7895 = vpop.permute.xlu0 %7894
        %7896 = vrot.lane.b32.xlu0 %v7825, 64
        %v7897 = vpop.permute.xlu0 %7896
        %7898 = vrot.lane.b32.xlu0 %v7827, 64
        %v7899 = vpop.permute.xlu0 %7898
        %7900 = vrot.lane.b32.xlu0 %v7830, 64
        %v7901 = vpop.permute.xlu0 %7900
        %7902 = vrot.lane.b32.xlu0 %v7832, 64
        %v7903 = vpop.permute.xlu0 %7902
        %7904 = vrot.lane.b32.xlu0 %v7835, 64
        %v7905 = vpop.permute.xlu0 %7904
        %7906 = vrot.lane.b32.xlu0 %v7837, 64
        %v7907 = vpop.permute.xlu0 %7906
        %7908 = vrot.lane.b32.xlu0 %v7840, 64
        %v7909 = vpop.permute.xlu0 %7908
        %7910 = vrot.lane.b32.xlu0 %v7842, 64
        %v7911 = vpop.permute.xlu0 %7910
        %7912 = vrot.lane.b32.xlu0 %v7845, 64
        %v7913 = vpop.permute.xlu0 %7912
        %7914 = vrot.lane.b32.xlu0 %v7847, 64
        %v7915 = vpop.permute.xlu0 %7914
        %7916 = vrot.lane.b32.xlu0 %v7850, 64
        %v7917 = vpop.permute.xlu0 %7916
        %7918 = vrot.lane.b32.xlu0 %v7852, 64
        %v7919 = vpop.permute.xlu0 %7918
        %7920 = vrot.lane.b32.xlu0 %v7855, 64
        %v7921 = vpop.permute.xlu0 %7920
        %7922 = vrot.lane.b32.xlu0 %v7857, 64
        %v7923 = vpop.permute.xlu0 %7922
        %7924 = vrot.lane.b32.xlu0 %v7860, 64
        %v7925 = vpop.permute.xlu0 %7924
        %7926 = vrot.lane.b32.xlu0 %v7862, 64
        %v7927 = vpop.permute.xlu0 %7926
        %7928 = vrot.lane.b32.xlu0 %v7865, 64
        %v7929 = vpop.permute.xlu0 %7928
        %7930 = vrot.lane.b32.xlu0 %v7867, 64
        %v7931 = vpop.permute.xlu0 %7930
        %7932 = vrot.lane.b32.xlu0 %v7870, 64
        %v7933 = vpop.permute.xlu0 %7932
        %7934 = vrot.lane.b32.xlu0 %v7872, 64
        %v7935 = vpop.permute.xlu0 %7934
        %7936 = vrot.lane.b32.xlu0 %v7875, 64
        %v7937 = vpop.permute.xlu0 %7936
        %7938 = vrot.lane.b32.xlu0 %v7877, 64
        %v7939 = vpop.permute.xlu0 %7938
        %v7971 = vrot.slane %v7741, 2
        %v7972 = vrot.slane %v7647, 2
        %v7973 = vsel %vm944, %v7971, %v7972
        %v7974 = vrot.slane %v7757, 2
        %v7975 = vsel %vm944, %v7972, %v7974
        %v7976 = vrot.slane %v7742, 2
        %v7977 = vrot.slane %v7650, 2
        %v7978 = vsel %vm944, %v7976, %v7977
        %v7979 = vrot.slane %v7758, 2
        %v7980 = vsel %vm944, %v7977, %v7979
        %v7981 = vrot.slane %v7743, 2
        %v7982 = vrot.slane %v7653, 2
        %v7983 = vsel %vm944, %v7981, %v7982
        %v7984 = vrot.slane %v7759, 2
        %v7985 = vsel %vm944, %v7982, %v7984
        %v7986 = vrot.slane %v7744, 2
        %v7987 = vrot.slane %v7656, 2
        %v7988 = vsel %vm944, %v7986, %v7987
        %v7989 = vrot.slane %v7760, 2
        %v7990 = vsel %vm944, %v7987, %v7989
        %v7991 = vrot.slane %v7745, 2
        %v7992 = vrot.slane %v7659, 2
        %v7993 = vsel %vm944, %v7991, %v7992
        %v7994 = vrot.slane %v7761, 2
        %v7995 = vsel %vm944, %v7992, %v7994
        %v7996 = vrot.slane %v7746, 2
        %v7997 = vrot.slane %v7662, 2
        %v7998 = vsel %vm944, %v7996, %v7997
        %v7999 = vrot.slane %v7762, 2
        %v8000 = vsel %vm944, %v7997, %v7999
        %v8001 = vrot.slane %v7747, 2
        %v8002 = vrot.slane %v7665, 2
        %v8003 = vsel %vm944, %v8001, %v8002
        %v8004 = vrot.slane %v7763, 2
        %v8005 = vsel %vm944, %v8002, %v8004
        %v8006 = vrot.slane %v7748, 2
        %v8007 = vrot.slane %v7668, 2
        %v8008 = vsel %vm944, %v8006, %v8007
        %v8009 = vrot.slane %v7764, 2
        %v8010 = vsel %vm944, %v8007, %v8009
        %v8011 = vrot.slane %v7749, 2
        %v8012 = vrot.slane %v7671, 2
        %v8013 = vsel %vm944, %v8011, %v8012
        %v8014 = vrot.slane %v7765, 2
        %v8015 = vsel %vm944, %v8012, %v8014
        %v8016 = vrot.slane %v7750, 2
        %v8017 = vrot.slane %v7674, 2
        %v8018 = vsel %vm944, %v8016, %v8017
        %v8019 = vrot.slane %v7766, 2
        %v8020 = vsel %vm944, %v8017, %v8019
        %v8021 = vrot.slane %v7751, 2
        %v8022 = vrot.slane %v7677, 2
        %v8023 = vsel %vm944, %v8021, %v8022
        %v8024 = vrot.slane %v7767, 2
        %v8025 = vsel %vm944, %v8022, %v8024
        %v8026 = vrot.slane %v7752, 2
        %v8027 = vrot.slane %v7680, 2
        %v8028 = vsel %vm944, %v8026, %v8027
        %v8029 = vrot.slane %v7768, 2
        %v8030 = vsel %vm944, %v8027, %v8029
        %v8031 = vrot.slane %v7753, 2
        %v8032 = vrot.slane %v7683, 2
        %v8033 = vsel %vm944, %v8031, %v8032
        %v8034 = vrot.slane %v7769, 2
        %v8035 = vsel %vm944, %v8032, %v8034
        %v8036 = vrot.slane %v7754, 2
        %v8037 = vrot.slane %v7686, 2
        %v8038 = vsel %vm944, %v8036, %v8037
        %v8039 = vrot.slane %v7770, 2
        %v8040 = vsel %vm944, %v8037, %v8039
        %v8041 = vrot.slane %v7755, 2
        %v8042 = vrot.slane %v7689, 2
        %v8043 = vsel %vm944, %v8041, %v8042
        %v8044 = vrot.slane %v7771, 2
        %v8045 = vsel %vm944, %v8042, %v8044
        %8077 = vrot.lane.b32.xlu0 %v7741, 64
        %v8078 = vpop.permute.xlu0 %8077
        %8079 = vrot.lane.b32.xlu0 %v7647, 64
        %v8080 = vpop.permute.xlu0 %8079
        %8081 = vrot.lane.b32.xlu0 %v7742, 64
        %v8082 = vpop.permute.xlu0 %8081
        %8083 = vrot.lane.b32.xlu0 %v7650, 64
        %v8084 = vpop.permute.xlu0 %8083
        %8085 = vrot.lane.b32.xlu0 %v7743, 64
        %v8086 = vpop.permute.xlu0 %8085
        %8087 = vrot.lane.b32.xlu0 %v7653, 64
        %v8088 = vpop.permute.xlu0 %8087
        %8089 = vrot.lane.b32.xlu0 %v7744, 64
        %v8090 = vpop.permute.xlu0 %8089
        %8091 = vrot.lane.b32.xlu0 %v7656, 64
        %v8092 = vpop.permute.xlu0 %8091
        %8093 = vrot.lane.b32.xlu0 %v7745, 64
        %v8094 = vpop.permute.xlu0 %8093
        %8095 = vrot.lane.b32.xlu0 %v7659, 64
        %v8096 = vpop.permute.xlu0 %8095
        %8097 = vrot.lane.b32.xlu0 %v7746, 64
        %v8098 = vpop.permute.xlu0 %8097
        %8099 = vrot.lane.b32.xlu0 %v7662, 64
        %v8100 = vpop.permute.xlu0 %8099
        %8101 = vrot.lane.b32.xlu0 %v7747, 64
        %v8102 = vpop.permute.xlu0 %8101
        %8103 = vrot.lane.b32.xlu0 %v7665, 64
        %v8104 = vpop.permute.xlu0 %8103
        %8105 = vrot.lane.b32.xlu0 %v7748, 64
        %v8106 = vpop.permute.xlu0 %8105
        %8107 = vrot.lane.b32.xlu0 %v7668, 64
        %v8108 = vpop.permute.xlu0 %8107
        %8109 = vrot.lane.b32.xlu0 %v7749, 64
        %v8110 = vpop.permute.xlu0 %8109
        %8111 = vrot.lane.b32.xlu0 %v7671, 64
        %v8112 = vpop.permute.xlu0 %8111
        %8113 = vrot.lane.b32.xlu0 %v7750, 64
        %v8114 = vpop.permute.xlu0 %8113
        %8115 = vrot.lane.b32.xlu0 %v7674, 64
        %v8116 = vpop.permute.xlu0 %8115
        %8117 = vrot.lane.b32.xlu0 %v7751, 64
        %v8118 = vpop.permute.xlu0 %8117
        %8119 = vrot.lane.b32.xlu0 %v7677, 64
        %v8120 = vpop.permute.xlu0 %8119
        %8121 = vrot.lane.b32.xlu0 %v7752, 64
        %v8122 = vpop.permute.xlu0 %8121
        %8123 = vrot.lane.b32.xlu0 %v7680, 64
        %v8124 = vpop.permute.xlu0 %8123
        %8125 = vrot.lane.b32.xlu0 %v7753, 64
        %v8126 = vpop.permute.xlu0 %8125
        %8127 = vrot.lane.b32.xlu0 %v7683, 64
        %v8128 = vpop.permute.xlu0 %8127
        %8129 = vrot.lane.b32.xlu0 %v7754, 64
        %v8130 = vpop.permute.xlu0 %8129
        %8131 = vrot.lane.b32.xlu0 %v7686, 64
        %v8132 = vpop.permute.xlu0 %8131
        %8133 = vrot.lane.b32.xlu0 %v7755, 64
        %v8134 = vpop.permute.xlu0 %8133
        %8135 = vrot.lane.b32.xlu0 %v7689, 64
        %v8136 = vpop.permute.xlu0 %8135
        %8137 = vrot.lane.b32.xlu0 %v7756, 64
        %v8138 = vpop.permute.xlu0 %8137
        %8139 = vrot.lane.b32.xlu0 %v7692, 64
        %v8140 = vpop.permute.xlu0 %8139
        %v8174 = vrot.slane %v7756, 1
        %v8175 = vrot.slane %v7692, 1
        %v8176 = vsel %vm773, %v8174, %v8175
        %v8177 = vrot.slane %v7772, 1
        %v8178 = vsel %vm773, %v8175, %v8177
        %v8211 = vrot.slane %v7756, 2
        %v8212 = vrot.slane %v7692, 2
        %v8213 = vsel %vm944, %v8211, %v8212
        %v8214 = vrot.slane %v7772, 2
        %v8215 = vsel %vm944, %v8212, %v8214
        %8216 = vrot.lane.b32.xlu0 %v7973, 64
        %v8217 = vpop.permute.xlu0 %8216
        %8218 = vrot.lane.b32.xlu0 %v7975, 64
        %v8219 = vpop.permute.xlu0 %8218
        %8220 = vrot.lane.b32.xlu0 %v7978, 64
        %v8221 = vpop.permute.xlu0 %8220
        %8222 = vrot.lane.b32.xlu0 %v7980, 64
        %v8223 = vpop.permute.xlu0 %8222
        %8224 = vrot.lane.b32.xlu0 %v7983, 64
        %v8225 = vpop.permute.xlu0 %8224
        %8226 = vrot.lane.b32.xlu0 %v7985, 64
        %v8227 = vpop.permute.xlu0 %8226
        %8228 = vrot.lane.b32.xlu0 %v7988, 64
        %v8229 = vpop.permute.xlu0 %8228
        %8230 = vrot.lane.b32.xlu0 %v7990, 64
        %v8231 = vpop.permute.xlu0 %8230
        %8232 = vrot.lane.b32.xlu0 %v7993, 64
        %v8233 = vpop.permute.xlu0 %8232
        %8234 = vrot.lane.b32.xlu0 %v7995, 64
        %v8235 = vpop.permute.xlu0 %8234
        %8236 = vrot.lane.b32.xlu0 %v7998, 64
        %v8237 = vpop.permute.xlu0 %8236
        %8238 = vrot.lane.b32.xlu0 %v8000, 64
        %v8239 = vpop.permute.xlu0 %8238
        %8240 = vrot.lane.b32.xlu0 %v8003, 64
        %v8241 = vpop.permute.xlu0 %8240
        %8242 = vrot.lane.b32.xlu0 %v8005, 64
        %v8243 = vpop.permute.xlu0 %8242
        %8244 = vrot.lane.b32.xlu0 %v8008, 64
        %v8245 = vpop.permute.xlu0 %8244
        %8246 = vrot.lane.b32.xlu0 %v8010, 64
        %v8247 = vpop.permute.xlu0 %8246
        %8248 = vrot.lane.b32.xlu0 %v8013, 64
        %v8249 = vpop.permute.xlu0 %8248
        %8250 = vrot.lane.b32.xlu0 %v8015, 64
        %v8251 = vpop.permute.xlu0 %8250
        %8252 = vrot.lane.b32.xlu0 %v8018, 64
        %v8253 = vpop.permute.xlu0 %8252
        %8254 = vrot.lane.b32.xlu0 %v8020, 64
        %v8255 = vpop.permute.xlu0 %8254
        %8256 = vrot.lane.b32.xlu0 %v8023, 64
        %v8257 = vpop.permute.xlu0 %8256
        %8258 = vrot.lane.b32.xlu0 %v8025, 64
        %v8259 = vpop.permute.xlu0 %8258
        %8260 = vrot.lane.b32.xlu0 %v8028, 64
        %v8261 = vpop.permute.xlu0 %8260
        %8262 = vrot.lane.b32.xlu0 %v8030, 64
        %v8263 = vpop.permute.xlu0 %8262
        %8264 = vrot.lane.b32.xlu0 %v8033, 64
        %v8265 = vpop.permute.xlu0 %8264
        %8266 = vrot.lane.b32.xlu0 %v8035, 64
        %v8267 = vpop.permute.xlu0 %8266
        %8268 = vrot.lane.b32.xlu0 %v8038, 64
        %v8269 = vpop.permute.xlu0 %8268
        %8270 = vrot.lane.b32.xlu0 %v8040, 64
        %v8271 = vpop.permute.xlu0 %8270
        %8272 = vrot.lane.b32.xlu0 %v8043, 64
        %v8273 = vpop.permute.xlu0 %8272
        %8274 = vrot.lane.b32.xlu0 %v8045, 64
        %v8275 = vpop.permute.xlu0 %8274
        %8276 = vrot.lane.b32.xlu0 %v8213, 64
        %v8277 = vpop.permute.xlu0 %8276
        %8278 = vrot.lane.b32.xlu0 %v8215, 64
        %v8279 = vpop.permute.xlu0 %8278
        %8312 = vrot.lane.b32.xlu0 %v8176, 64
        %v8313 = vpop.permute.xlu0 %8312
        %8314 = vrot.lane.b32.xlu0 %v8178, 64
        %v8315 = vpop.permute.xlu0 %8314
        %v8320 = vsel %vm3865, 0.0, %v7879
        %v8321 = vsel %vm3865, %v7741, %v7881
        %v8322 = vsel %vm3865, %v7647, %v7883
        %v8323 = vsel %vm3865, %v7742, %v7885
        %v8324 = vsel %vm3865, %v7650, %v7887
        %v8325 = vsel %vm3865, %v7743, %v7889
        %v8326 = vsel %vm3865, %v7653, %v7891
        %v8327 = vsel %vm3865, %v7744, %v7893
        %v8328 = vsel %vm3865, %v7656, %v7895
        %v8329 = vsel %vm3865, %v7745, %v7897
        %v8330 = vsel %vm3865, %v7659, %v7899
        %v8331 = vsel %vm3865, %v7746, %v7901
        %v8332 = vsel %vm3865, %v7662, %v7903
        %v8333 = vsel %vm3865, %v7747, %v7905
        %v8334 = vsel %vm3865, %v7665, %v7907
        %v8335 = vsel %vm3865, %v7748, %v7909
        %v8336 = vsel %vm3865, %v7668, %v7911
        %v8337 = vsel %vm3865, %v7749, %v7913
        %v8338 = vsel %vm3865, %v7671, %v7915
        %v8339 = vsel %vm3865, %v7750, %v7917
        %v8340 = vsel %vm3865, %v7674, %v7919
        %v8341 = vsel %vm3865, %v7751, %v7921
        %v8342 = vsel %vm3865, %v7677, %v7923
        %v8343 = vsel %vm3865, %v7752, %v7925
        %v8344 = vsel %vm3865, %v7680, %v7927
        %v8345 = vsel %vm3865, %v7753, %v7929
        %v8346 = vsel %vm3865, %v7683, %v7931
        %v8347 = vsel %vm3865, %v7754, %v7933
        %v8348 = vsel %vm3865, %v7686, %v7935
        %v8349 = vsel %vm3865, %v7755, %v7937
        %v8350 = vsel %vm3865, %v7689, %v7939
        %v8351 = vsel %vm3865, %v946, %v8078
        %v8352 = vsel %vm3865, %v946, %v8080
        %v8353 = vsel %vm3865, %v7973, %v8082
        %v8354 = vsel %vm3865, %v7975, %v8084
        %v8355 = vsel %vm3865, %v7978, %v8086
        %v8356 = vsel %vm3865, %v7980, %v8088
        %v8357 = vsel %vm3865, %v7983, %v8090
        %v8358 = vsel %vm3865, %v7985, %v8092
        %v8359 = vsel %vm3865, %v7988, %v8094
        %v8360 = vsel %vm3865, %v7990, %v8096
        %v8361 = vsel %vm3865, %v7993, %v8098
        %v8362 = vsel %vm3865, %v7995, %v8100
        %v8363 = vsel %vm3865, %v7998, %v8102
        %v8364 = vsel %vm3865, %v8000, %v8104
        %v8365 = vsel %vm3865, %v8003, %v8106
        %v8366 = vsel %vm3865, %v8005, %v8108
        %v8367 = vsel %vm3865, %v8008, %v8110
        %v8368 = vsel %vm3865, %v8010, %v8112
        %v8369 = vsel %vm3865, %v8013, %v8114
        %v8370 = vsel %vm3865, %v8015, %v8116
        %v8371 = vsel %vm3865, %v8018, %v8118
        %v8372 = vsel %vm3865, %v8020, %v8120
        %v8373 = vsel %vm3865, %v8023, %v8122
        %v8374 = vsel %vm3865, %v8025, %v8124
        %v8375 = vsel %vm3865, %v8028, %v8126
        %v8376 = vsel %vm3865, %v8030, %v8128
        %v8377 = vsel %vm3865, %v8033, %v8130
        %v8378 = vsel %vm3865, %v8035, %v8132
        %v8379 = vsel %vm3865, %v8038, %v8134
        %v8380 = vsel %vm3865, %v8040, %v8136
        %v8381 = vsel %vm3865, %v8043, %v8138
        %v8382 = vsel %vm3865, %v8045, %v8140
        %v8383 = vsel %vm3865, %v7805, %v8217
        %v8384 = vsel %vm3865, %v7807, %v8219
        %v8385 = vsel %vm3865, %v7810, %v8221
        %v8386 = vsel %vm3865, %v7812, %v8223
        %v8387 = vsel %vm3865, %v7815, %v8225
        %v8388 = vsel %vm3865, %v7817, %v8227
        %v8389 = vsel %vm3865, %v7820, %v8229
        %v8390 = vsel %vm3865, %v7822, %v8231
        %v8391 = vsel %vm3865, %v7825, %v8233
        %v8392 = vsel %vm3865, %v7827, %v8235
        %v8393 = vsel %vm3865, %v7830, %v8237
        %v8394 = vsel %vm3865, %v7832, %v8239
        %v8395 = vsel %vm3865, %v7835, %v8241
        %v8396 = vsel %vm3865, %v7837, %v8243
        %v8397 = vsel %vm3865, %v7840, %v8245
        %v8398 = vsel %vm3865, %v7842, %v8247
        %v8399 = vsel %vm3865, %v7845, %v8249
        %v8400 = vsel %vm3865, %v7847, %v8251
        %v8401 = vsel %vm3865, %v7850, %v8253
        %v8402 = vsel %vm3865, %v7852, %v8255
        %v8403 = vsel %vm3865, %v7855, %v8257
        %v8404 = vsel %vm3865, %v7857, %v8259
        %v8405 = vsel %vm3865, %v7860, %v8261
        %v8406 = vsel %vm3865, %v7862, %v8263
        %v8407 = vsel %vm3865, %v7865, %v8265
        %v8408 = vsel %vm3865, %v7867, %v8267
        %v8409 = vsel %vm3865, %v7870, %v8269
        %v8410 = vsel %vm3865, %v7872, %v8271
        %v8411 = vsel %vm3865, %v7875, %v8273
        %v8412 = vsel %vm3865, %v7877, %v8275
        %v8413 = vsel %vm3865, %v8176, %v8277
        %v8414 = vsel %vm3865, %v8178, %v8279
        %v8415 = vsel %vm3865, %v7756, %v8313
        %v8416 = vsel %vm3865, %v7692, %v8315
        %v8417 = vpack.c.bf16 %v8320, %v8320
        %v8418 = vpack.c.bf16 %v8352, %v8351
        %v8419 = vpack.c.bf16 %v8384, %v8383
        %v8420 = vpack.c.bf16 %v8324, %v8323
        %v8421 = vpack.c.bf16 %v7980, %v7978
        %v8422 = vpack.c.bf16 %v8322, %v8321
        %v8423 = vpack.c.bf16 %v8354, %v8353
        %v8424 = vpack.c.bf16 %v8386, %v8385
        %v8425 = vpack.c.bf16 %v8326, %v8325
        %v8426 = vpack.c.bf16 %v7985, %v7983
        %v8427 = vpack.c.bf16 %v8356, %v8355
        %v8428 = vpack.c.bf16 %v8388, %v8387
        %v8429 = vpack.c.bf16 %v8328, %v8327
        %v8430 = vpack.c.bf16 %v7990, %v7988
        %v8431 = vpack.c.bf16 %v8358, %v8357
        %v8432 = vpack.c.bf16 %v8390, %v8389
        %v8433 = vpack.c.bf16 %v8330, %v8329
        %v8434 = vpack.c.bf16 %v7995, %v7993
        %v8435 = vpack.c.bf16 %v8360, %v8359
        %v8436 = vpack.c.bf16 %v8392, %v8391
        %v8437 = vpack.c.bf16 %v8332, %v8331
        %v8438 = vpack.c.bf16 %v8000, %v7998
        %v8439 = vpack.c.bf16 %v8362, %v8361
        %v8440 = vpack.c.bf16 %v8394, %v8393
        %v8441 = vpack.c.bf16 %v8334, %v8333
        %v8442 = vpack.c.bf16 %v8005, %v8003
        %v8443 = vpack.c.bf16 %v8364, %v8363
        %v8444 = vpack.c.bf16 %v8396, %v8395
        %v8445 = vpack.c.bf16 %v8336, %v8335
        %v8446 = vpack.c.bf16 %v8010, %v8008
        %v8447 = vpack.c.bf16 %v8366, %v8365
        %v8448 = vpack.c.bf16 %v8398, %v8397
        %v8449 = vpack.c.bf16 %v8338, %v8337
        %v8450 = vpack.c.bf16 %v8015, %v8013
        %v8451 = vpack.c.bf16 %v8368, %v8367
        %v8452 = vpack.c.bf16 %v8400, %v8399
        %v8453 = vpack.c.bf16 %v8340, %v8339
        %v8454 = vpack.c.bf16 %v8020, %v8018
        %v8455 = vpack.c.bf16 %v8370, %v8369
        %v8456 = vpack.c.bf16 %v8402, %v8401
        %v8457 = vpack.c.bf16 %v8342, %v8341
        %v8458 = vpack.c.bf16 %v8025, %v8023
        %v8459 = vpack.c.bf16 %v8372, %v8371
        %v8460 = vpack.c.bf16 %v8404, %v8403
        %v8461 = vpack.c.bf16 %v8344, %v8343
        %v8462 = vpack.c.bf16 %v8030, %v8028
        %v8463 = vpack.c.bf16 %v8374, %v8373
        %v8464 = vpack.c.bf16 %v8406, %v8405
        %v8465 = vpack.c.bf16 %v8346, %v8345
        %v8466 = vpack.c.bf16 %v8035, %v8033
        %v8467 = vpack.c.bf16 %v8376, %v8375
        %v8468 = vpack.c.bf16 %v8408, %v8407
        %v8469 = vpack.c.bf16 %v8348, %v8347
        %v8470 = vpack.c.bf16 %v8040, %v8038
        %v8471 = vpack.c.bf16 %v8378, %v8377
        %v8472 = vpack.c.bf16 %v8410, %v8409
        %v8473 = vpack.c.bf16 %v8350, %v8349
        %v8474 = vpack.c.bf16 %v8045, %v8043
        %v8475 = vpack.c.bf16 %v8380, %v8379
        %v8476 = vpack.c.bf16 %v8412, %v8411
        %v8477 = vpack.c.bf16 %v8416, %v8415
        %v8478 = vpack.c.bf16 %v8215, %v8213
        %v8479 = vpack.c.bf16 %v8382, %v8381
        %v8480 = vpack.c.bf16 %v8414, %v8413
        %v8481 = vpack.c.bf16 %v946, %v946
        %v8482 = vld [vmem:[%s13] sm:$0xf]
        %v8483 = vld [vmem:[%s13 + $0x4] sm:$0xf]
        %v8484 = vld [vmem:[%s13 + $0x8] sm:$0xf]
        %v8485 = vld [vmem:[%s13 + $0xc] sm:$0xf]
        %v8486 = vld [vmem:[%s13 + $0x10] sm:$0xf]
        %v8487 = vld [vmem:[%s13 + $0x14] sm:$0xf]
        %v8488 = vld [vmem:[%s13 + $0x18] sm:$0xf]
        %v8489 = vld [vmem:[%s13 + $0x1c] sm:$0xf]
        %v8490 = vld [vmem:[%s13 + $0x20] sm:$0xf]
        %v8491 = vld [vmem:[%s13 + $0x24] sm:$0xf]
        %v8492 = vld [vmem:[%s13 + $0x28] sm:$0xf]
        %v8493 = vld [vmem:[%s13 + $0x2c] sm:$0xf]
        %v8494 = vld [vmem:[%s13 + $0x30] sm:$0xf]
        %v8495 = vld [vmem:[%s13 + $0x34] sm:$0xf]
        %v8496 = vld [vmem:[%s13 + $0x38] sm:$0xf]
        %v8497 = vld [vmem:[%s13 + $0x3c] sm:$0xf]
        %v8498 = vld [vmem:[%s13 + $0x40] sm:$0xf]
        %v8499 = vld [vmem:[%s13 + $0x44] sm:$0xf]
        %v8500 = vld [vmem:[%s13 + $0x48] sm:$0xf]
        %v8501 = vld [vmem:[%s13 + $0x4c] sm:$0xf]
        %v8502 = vld [vmem:[%s13 + $0x50] sm:$0xf]
        %v8503 = vld [vmem:[%s13 + $0x54] sm:$0xf]
        %v8504 = vld [vmem:[%s13 + $0x58] sm:$0xf]
        %v8505 = vld [vmem:[%s13 + $0x5c] sm:$0xf]
        %v8506 = vld [vmem:[%s13 + $0x60] sm:$0xf]
        %v8507 = vld [vmem:[%s13 + $0x64] sm:$0xf]
        %v8508 = vld [vmem:[%s13 + $0x68] sm:$0xf]
        %v8509 = vld [vmem:[%s13 + $0x6c] sm:$0xf]
        %v8510 = vld [vmem:[%s13 + $0x70] sm:$0xf]
        %v8511 = vld [vmem:[%s13 + $0x74] sm:$0xf]
        %v8512 = vld [vmem:[%s13 + $0x78] sm:$0xf]
        %v8513 = vld [vmem:[%s13 + $0x7c] sm:$0xf]
        %v8514 = vld [vmem:[%s13 + $0x80] sm:$0xf]
        %v8515 = vld [vmem:[%s13 + $0x84] sm:$0xf]
        %v8516 = vld [vmem:[%s13 + $0x88] sm:$0xf]
        %v8517 = vld [vmem:[%s13 + $0x8c] sm:$0xf]
        %v8518 = vld [vmem:[%s13 + $0x90] sm:$0xf]
        %v8519 = vld [vmem:[%s13 + $0x94] sm:$0xf]
        %v8520 = vld [vmem:[%s13 + $0x98] sm:$0xf]
        %v8521 = vld [vmem:[%s13 + $0x9c] sm:$0xf]
        %v8522 = vld [vmem:[%s13 + $0xa0] sm:$0xf]
        %v8523 = vld [vmem:[%s13 + $0xa4] sm:$0xf]
        %v8524 = vld [vmem:[%s13 + $0xa8] sm:$0xf]
        %v8525 = vld [vmem:[%s13 + $0xac] sm:$0xf]
        %v8526 = vld [vmem:[%s13 + $0xb0] sm:$0xf]
        %v8527 = vld [vmem:[%s13 + $0xb4] sm:$0xf]
        %v8528 = vld [vmem:[%s13 + $0xb8] sm:$0xf]
        %v8529 = vld [vmem:[%s13 + $0xbc] sm:$0xf]
        %v8530 = vld [vmem:[%s13 + $0xc0] sm:$0xf]
        %v8531 = vld [vmem:[%s13 + $0xc4] sm:$0xf]
        %v8532 = vld [vmem:[%s13 + $0xc8] sm:$0xf]
        %v8533 = vld [vmem:[%s13 + $0xcc] sm:$0xf]
        %v8534 = vld [vmem:[%s13 + $0xd0] sm:$0xf]
        %v8535 = vld [vmem:[%s13 + $0xd4] sm:$0xf]
        %v8536 = vld [vmem:[%s13 + $0xd8] sm:$0xf]
        %v8537 = vld [vmem:[%s13 + $0xdc] sm:$0xf]
        %v8538 = vld [vmem:[%s13 + $0xe0] sm:$0xf]
        %v8539 = vld [vmem:[%s13 + $0xe4] sm:$0xf]
        %v8540 = vld [vmem:[%s13 + $0xe8] sm:$0xf]
        %v8541 = vld [vmem:[%s13 + $0xec] sm:$0xf]
        %v8542 = vld [vmem:[%s13 + $0xf0] sm:$0xf]
        %v8543 = vld [vmem:[%s13 + $0xf4] sm:$0xf]
        %v8544 = vld [vmem:[%s13 + $0xf8] sm:$0xf]
        %v8545 = vld [vmem:[%s13 + $0xfc] sm:$0xf]
        %v8546 = vld [vmem:[%s13 + $0x100] sm:$0xf]
        %v8547 = vld [vmem:[%s13 + $0x104] sm:$0xf]
        %v8548 = vld [vmem:[%s13 + $0x108] sm:$0xf]
        %v8549 = vld [vmem:[%s13 + $0x10c] sm:$0xf]
        %v8550 = vld [vmem:[%s13 + $0x110] sm:$0xf]
        %v8551 = vld [vmem:[%s13 + $0x114] sm:$0xf]
        %v8552 = vld [vmem:[%s13 + $0x118] sm:$0xf]
        %v8553 = vld [vmem:[%s13 + $0x11c] sm:$0xf]
        %v8554 = vld [vmem:[%s14] sm:$0x1]
        %v8556 = vperm.slane %v8554, 0
        %v8630 = vunpack.c.l.b16 %v8482
        %v8631 = vunpack.c.l.b16 %v8483
        %v8632 = vunpack.c.l.b16 %v8484
        %v8633 = vunpack.c.l.b16 %v8485
        %v8634 = vunpack.c.l.b16 %v8486
        %v8635 = vunpack.c.l.b16 %v8487
        %v8636 = vunpack.c.l.b16 %v8488
        %v8637 = vunpack.c.l.b16 %v8489
        %v8638 = vunpack.c.l.b16 %v8490
        %v8639 = vunpack.c.l.b16 %v8491
        %v8640 = vunpack.c.l.b16 %v8492
        %v8641 = vunpack.c.l.b16 %v8493
        %v8642 = vunpack.c.l.b16 %v8494
        %v8643 = vunpack.c.l.b16 %v8495
        %v8644 = vunpack.c.l.b16 %v8496
        %v8645 = vunpack.c.l.b16 %v8497
        %v8646 = vunpack.c.l.b16 %v8498
        %v8647 = vunpack.c.l.b16 %v8499
        %v8648 = vunpack.c.l.b16 %v8500
        %v8649 = vunpack.c.l.b16 %v8501
        %v8650 = vunpack.c.l.b16 %v8502
        %v8651 = vunpack.c.l.b16 %v8503
        %v8652 = vunpack.c.l.b16 %v8504
        %v8653 = vunpack.c.l.b16 %v8505
        %v8654 = vunpack.c.l.b16 %v8506
        %v8655 = vunpack.c.l.b16 %v8507
        %v8656 = vunpack.c.l.b16 %v8508
        %v8657 = vunpack.c.l.b16 %v8509
        %v8658 = vunpack.c.l.b16 %v8510
        %v8659 = vunpack.c.l.b16 %v8511
        %v8660 = vunpack.c.l.b16 %v8512
        %v8661 = vunpack.c.l.b16 %v8513
        %v8662 = vunpack.c.l.b16 %v8514
        %v8663 = vunpack.c.l.b16 %v8515
        %v8664 = vunpack.c.l.b16 %v8516
        %v8665 = vunpack.c.l.b16 %v8517
        %v8666 = vunpack.c.l.b16 %v8518
        %v8667 = vunpack.c.l.b16 %v8519
        %v8668 = vunpack.c.l.b16 %v8520
        %v8669 = vunpack.c.l.b16 %v8521
        %v8670 = vunpack.c.l.b16 %v8522
        %v8671 = vunpack.c.l.b16 %v8523
        %v8672 = vunpack.c.l.b16 %v8524
        %v8673 = vunpack.c.l.b16 %v8525
        %v8674 = vunpack.c.l.b16 %v8526
        %v8675 = vunpack.c.l.b16 %v8527
        %v8676 = vunpack.c.l.b16 %v8528
        %v8677 = vunpack.c.l.b16 %v8529
        %v8678 = vunpack.c.l.b16 %v8530
        %v8679 = vunpack.c.l.b16 %v8531
        %v8680 = vunpack.c.l.b16 %v8532
        %v8681 = vunpack.c.l.b16 %v8533
        %v8682 = vunpack.c.l.b16 %v8534
        %v8683 = vunpack.c.l.b16 %v8535
        %v8684 = vunpack.c.l.b16 %v8536
        %v8685 = vunpack.c.l.b16 %v8537
        %v8686 = vunpack.c.l.b16 %v8538
        %v8687 = vunpack.c.l.b16 %v8539
        %v8688 = vunpack.c.l.b16 %v8540
        %v8689 = vunpack.c.l.b16 %v8541
        %v8690 = vunpack.c.l.b16 %v8542
        %v8691 = vunpack.c.l.b16 %v8543
        %v8692 = vunpack.c.l.b16 %v8544
        %v8693 = vunpack.c.l.b16 %v8545
        %v8694 = vunpack.c.l.b16 %v8546
        %v8695 = vunpack.c.l.b16 %v8547
        %v8696 = vunpack.c.l.b16 %v8548
        %v8697 = vunpack.c.l.b16 %v8549
        %v8698 = vunpack.c.l.b16 %v8550
        %v8699 = vunpack.c.l.b16 %v8551
        %v8700 = vunpack.c.l.b16 %v8552
        %v8701 = vunpack.c.l.b16 %v8553
        %v8702 = vpack.c.b16 %v8631, %v8630
        %v8703 = vpack.c.b16 %v8633, %v8632
        %v8704 = vpack.c.b16 %v8635, %v8634
        %v8705 = vpack.c.b16 %v8637, %v8636
        %v8706 = vpack.c.b16 %v8639, %v8638
        %v8707 = vpack.c.b16 %v8641, %v8640
        %v8708 = vpack.c.b16 %v8643, %v8642
        %v8709 = vpack.c.b16 %v8645, %v8644
        %v8710 = vpack.c.b16 %v8647, %v8646
        %v8711 = vpack.c.b16 %v8649, %v8648
        %v8712 = vpack.c.b16 %v8651, %v8650
        %v8713 = vpack.c.b16 %v8653, %v8652
        %v8714 = vpack.c.b16 %v8655, %v8654
        %v8715 = vpack.c.b16 %v8657, %v8656
        %v8716 = vpack.c.b16 %v8659, %v8658
        %v8717 = vpack.c.b16 %v8661, %v8660
        %v8718 = vpack.c.b16 %v8663, %v8662
        %v8719 = vpack.c.b16 %v8665, %v8664
        %v8720 = vpack.c.b16 %v8667, %v8666
        %v8721 = vpack.c.b16 %v8669, %v8668
        %v8722 = vpack.c.b16 %v8671, %v8670
        %v8723 = vpack.c.b16 %v8673, %v8672
        %v8724 = vpack.c.b16 %v8675, %v8674
        %v8725 = vpack.c.b16 %v8677, %v8676
        %v8726 = vpack.c.b16 %v8679, %v8678
        %v8727 = vpack.c.b16 %v8681, %v8680
        %v8728 = vpack.c.b16 %v8683, %v8682
        %v8729 = vpack.c.b16 %v8685, %v8684
        %v8730 = vpack.c.b16 %v8687, %v8686
        %v8731 = vpack.c.b16 %v8689, %v8688
        %v8732 = vpack.c.b16 %v8691, %v8690
        %v8733 = vpack.c.b16 %v8693, %v8692
        %v8734 = vpack.c.b16 %v8695, %v8694
        %v8735 = vpack.c.b16 %v8697, %v8696
        %v8736 = vpack.c.b16 %v8699, %v8698
        %v8737 = vpack.c.b16 %v8701, %v8700
        %v8775 = vsel %vm3865, %v8421, 0
        %v8778 = vsel %vm3865, %v8426, 0
        %v8781 = vsel %vm3865, %v8430, 0
        %v8784 = vsel %vm3865, %v8434, 0
        %v8787 = vsel %vm3865, %v8438, 0
        %v8790 = vsel %vm3865, %v8442, 0
        %v8793 = vsel %vm3865, %v8446, 0
        %v8796 = vsel %vm3865, %v8450, 0
        %v8799 = vsel %vm3865, %v8454, 0
        %v8802 = vsel %vm3865, %v8458, 0
        %v8805 = vsel %vm3865, %v8462, 0
        %v8808 = vsel %vm3865, %v8466, 0
        %v8811 = vsel %vm3865, %v8470, 0
        %v8814 = vsel %vm3865, %v8474, 0
        %v8817 = vsel %vm3865, %v8478, 0
        %v8820 = vsel %vm3865, %v8481, 0
        %8822 = vmatpush.bf16.msra.mxu0 %v8709
        %8823 = vmatpush.bf16.msra.mxu0 %v8708
        %8824 = vmatpush.bf16.msra.mxu0 %v8707
        %8825 = vmatpush.bf16.msra.mxu0 %v8706
        %8826 = vmatpush.bf16.msra.mxu0 %v8705
        %8827 = vmatpush.bf16.msra.mxu0 %v8704
        %8828 = vmatpush.bf16.msra.mxu0 %v8703
        %8829 = vmatpush.bf16.msra.mxu0 %v8702
        %8830 = vmatmul.bf16.gmra.mxu0 %v8417
        %v8831 = vpop.f32.mrf.mxu0
        %v8832 = vadd.f32 %v8556, %v8831
        %v8833 = vpop.f32.mrf.mxu0
        %v8834 = vadd.f32 %v8556, %v8833
        %8835 = vmatmul.bf16.gmra.mxu0 %v8422
        %v8836 = vpop.f32.mrf.mxu0
        %v8837 = vadd.f32 %v8556, %v8836
        %v8838 = vpop.f32.mrf.mxu0
        %v8839 = vadd.f32 %v8556, %v8838
        %8840 = vmatmul.bf16.gmra.mxu0 %v8420
        %v8841 = vpop.f32.mrf.mxu0
        %v8842 = vadd.f32 %v8556, %v8841
        %v8843 = vpop.f32.mrf.mxu0
        %v8844 = vadd.f32 %v8556, %v8843
        %8845 = vmatmul.bf16.gmra.mxu0 %v8425
        %v8846 = vpop.f32.mrf.mxu0
        %v8847 = vadd.f32 %v8556, %v8846
        %v8848 = vpop.f32.mrf.mxu0
        %v8849 = vadd.f32 %v8556, %v8848
        %8850 = vmatmul.bf16.gmra.mxu0 %v8429
        %v8851 = vpop.f32.mrf.mxu0
        %v8852 = vadd.f32 %v8556, %v8851
        %v8853 = vpop.f32.mrf.mxu0
        %v8854 = vadd.f32 %v8556, %v8853
        %8855 = vmatmul.bf16.gmra.mxu0 %v8433
        %v8856 = vpop.f32.mrf.mxu0
        %v8857 = vadd.f32 %v8556, %v8856
        %v8858 = vpop.f32.mrf.mxu0
        %v8859 = vadd.f32 %v8556, %v8858
        %8860 = vmatmul.bf16.gmra.mxu0 %v8437
        %v8861 = vpop.f32.mrf.mxu0
        %v8862 = vadd.f32 %v8556, %v8861
        %v8863 = vpop.f32.mrf.mxu0
        %v8864 = vadd.f32 %v8556, %v8863
        %8865 = vmatmul.bf16.gmra.mxu0 %v8441
        %v8866 = vpop.f32.mrf.mxu0
        %v8867 = vadd.f32 %v8556, %v8866
        %v8868 = vpop.f32.mrf.mxu0
        %v8869 = vadd.f32 %v8556, %v8868
        %8870 = vmatmul.bf16.gmra.mxu0 %v8445
        %v8871 = vpop.f32.mrf.mxu0
        %v8872 = vadd.f32 %v8556, %v8871
        %v8873 = vpop.f32.mrf.mxu0
        %v8874 = vadd.f32 %v8556, %v8873
        %8875 = vmatmul.bf16.gmra.mxu0 %v8449
        %v8876 = vpop.f32.mrf.mxu0
        %v8877 = vadd.f32 %v8556, %v8876
        %v8878 = vpop.f32.mrf.mxu0
        %v8879 = vadd.f32 %v8556, %v8878
        %8880 = vmatmul.bf16.gmra.mxu0 %v8453
        %v8881 = vpop.f32.mrf.mxu0
        %v8882 = vadd.f32 %v8556, %v8881
        %v8883 = vpop.f32.mrf.mxu0
        %v8884 = vadd.f32 %v8556, %v8883
        %8885 = vmatmul.bf16.gmra.mxu0 %v8457
        %v8886 = vpop.f32.mrf.mxu0
        %v8887 = vadd.f32 %v8556, %v8886
        %v8888 = vpop.f32.mrf.mxu0
        %v8889 = vadd.f32 %v8556, %v8888
        %8890 = vmatmul.bf16.gmra.mxu0 %v8461
        %v8891 = vpop.f32.mrf.mxu0
        %v8892 = vadd.f32 %v8556, %v8891
        %v8893 = vpop.f32.mrf.mxu0
        %v8894 = vadd.f32 %v8556, %v8893
        %8895 = vmatmul.bf16.gmra.mxu0 %v8465
        %v8896 = vpop.f32.mrf.mxu0
        %v8897 = vadd.f32 %v8556, %v8896
        %v8898 = vpop.f32.mrf.mxu0
        %v8899 = vadd.f32 %v8556, %v8898
        %8900 = vmatmul.bf16.gmra.mxu0 %v8469
        %v8901 = vpop.f32.mrf.mxu0
        %v8902 = vadd.f32 %v8556, %v8901
        %v8903 = vpop.f32.mrf.mxu0
        %v8904 = vadd.f32 %v8556, %v8903
        %8905 = vmatmul.bf16.gmra.mxu0 %v8473
        %v8906 = vpop.f32.mrf.mxu0
        %v8907 = vadd.f32 %v8556, %v8906
        %v8908 = vpop.f32.mrf.mxu0
        %v8909 = vadd.f32 %v8556, %v8908
        %8910 = vdwg.mxu0
        %8911 = vmatpush.bf16.msra.mxu0 %v8717
        %8912 = vmatpush.bf16.msra.mxu0 %v8716
        %8913 = vmatpush.bf16.msra.mxu0 %v8715
        %8914 = vmatpush.bf16.msra.mxu0 %v8714
        %8915 = vmatpush.bf16.msra.mxu0 %v8713
        %8916 = vmatpush.bf16.msra.mxu0 %v8712
        %8917 = vmatpush.bf16.msra.mxu0 %v8711
        %8918 = vmatpush.bf16.msra.mxu0 %v8710
        %8919 = vmatmul.bf16.gmra.mxu0 %v8418
        %v8920 = vpop.f32.mrf.mxu0
        %v8921 = vadd.f32 %v8832, %v8920
        %v8922 = vpop.f32.mrf.mxu0
        %v8923 = vadd.f32 %v8834, %v8922
        %8924 = vmatmul.bf16.gmra.mxu0 %v8423
        %v8925 = vpop.f32.mrf.mxu0
        %v8926 = vadd.f32 %v8837, %v8925
        %v8927 = vpop.f32.mrf.mxu0
        %v8928 = vadd.f32 %v8839, %v8927
        %8929 = vmatmul.bf16.gmra.mxu0 %v8427
        %v8930 = vpop.f32.mrf.mxu0
        %v8931 = vadd.f32 %v8842, %v8930
        %v8932 = vpop.f32.mrf.mxu0
        %v8933 = vadd.f32 %v8844, %v8932
        %8934 = vmatmul.bf16.gmra.mxu0 %v8431
        %v8935 = vpop.f32.mrf.mxu0
        %v8936 = vadd.f32 %v8847, %v8935
        %v8937 = vpop.f32.mrf.mxu0
        %v8938 = vadd.f32 %v8849, %v8937
        %8939 = vmatmul.bf16.gmra.mxu0 %v8435
        %v8940 = vpop.f32.mrf.mxu0
        %v8941 = vadd.f32 %v8852, %v8940
        %v8942 = vpop.f32.mrf.mxu0
        %v8943 = vadd.f32 %v8854, %v8942
        %8944 = vmatmul.bf16.gmra.mxu0 %v8439
        %v8945 = vpop.f32.mrf.mxu0
        %v8946 = vadd.f32 %v8857, %v8945
        %v8947 = vpop.f32.mrf.mxu0
        %v8948 = vadd.f32 %v8859, %v8947
        %8949 = vmatmul.bf16.gmra.mxu0 %v8443
        %v8950 = vpop.f32.mrf.mxu0
        %v8951 = vadd.f32 %v8862, %v8950
        %v8952 = vpop.f32.mrf.mxu0
        %v8953 = vadd.f32 %v8864, %v8952
        %8954 = vmatmul.bf16.gmra.mxu0 %v8447
        %v8955 = vpop.f32.mrf.mxu0
        %v8956 = vadd.f32 %v8867, %v8955
        %v8957 = vpop.f32.mrf.mxu0
        %v8958 = vadd.f32 %v8869, %v8957
        %8959 = vmatmul.bf16.gmra.mxu0 %v8451
        %v8960 = vpop.f32.mrf.mxu0
        %v8961 = vadd.f32 %v8872, %v8960
        %v8962 = vpop.f32.mrf.mxu0
        %v8963 = vadd.f32 %v8874, %v8962
        %8964 = vmatmul.bf16.gmra.mxu0 %v8455
        %v8965 = vpop.f32.mrf.mxu0
        %v8966 = vadd.f32 %v8877, %v8965
        %v8967 = vpop.f32.mrf.mxu0
        %v8968 = vadd.f32 %v8879, %v8967
        %8969 = vmatmul.bf16.gmra.mxu0 %v8459
        %v8970 = vpop.f32.mrf.mxu0
        %v8971 = vadd.f32 %v8882, %v8970
        %v8972 = vpop.f32.mrf.mxu0
        %v8973 = vadd.f32 %v8884, %v8972
        %8974 = vmatmul.bf16.gmra.mxu0 %v8463
        %v8975 = vpop.f32.mrf.mxu0
        %v8976 = vadd.f32 %v8887, %v8975
        %v8977 = vpop.f32.mrf.mxu0
        %v8978 = vadd.f32 %v8889, %v8977
        %8979 = vmatmul.bf16.gmra.mxu0 %v8467
        %v8980 = vpop.f32.mrf.mxu0
        %v8981 = vadd.f32 %v8892, %v8980
        %v8982 = vpop.f32.mrf.mxu0
        %v8983 = vadd.f32 %v8894, %v8982
        %8984 = vmatmul.bf16.gmra.mxu0 %v8471
        %v8985 = vpop.f32.mrf.mxu0
        %v8986 = vadd.f32 %v8897, %v8985
        %v8987 = vpop.f32.mrf.mxu0
        %v8988 = vadd.f32 %v8899, %v8987
        %8989 = vmatmul.bf16.gmra.mxu0 %v8475
        %v8990 = vpop.f32.mrf.mxu0
        %v8991 = vadd.f32 %v8902, %v8990
        %v8992 = vpop.f32.mrf.mxu0
        %v8993 = vadd.f32 %v8904, %v8992
        %8994 = vmatmul.bf16.gmra.mxu0 %v8479
        %v8995 = vpop.f32.mrf.mxu0
        %v8996 = vadd.f32 %v8907, %v8995
        %v8997 = vpop.f32.mrf.mxu0
        %v8998 = vadd.f32 %v8909, %v8997
        %8999 = vdwg.mxu0
        %9000 = vmatpush.bf16.msra.mxu0 %v8725
        %9001 = vmatpush.bf16.msra.mxu0 %v8724
        %9002 = vmatpush.bf16.msra.mxu0 %v8723
        %9003 = vmatpush.bf16.msra.mxu0 %v8722
        %9004 = vmatpush.bf16.msra.mxu0 %v8721
        %9005 = vmatpush.bf16.msra.mxu0 %v8720
        %9006 = vmatpush.bf16.msra.mxu0 %v8719
        %9007 = vmatpush.bf16.msra.mxu0 %v8718
        %9008 = vmatmul.bf16.gmra.mxu0 %v8419
        %v9009 = vpop.f32.mrf.mxu0
        %v9010 = vadd.f32 %v8921, %v9009
        %v9011 = vpop.f32.mrf.mxu0
        %v9012 = vadd.f32 %v8923, %v9011
        %9013 = vmatmul.bf16.gmra.mxu0 %v8424
        %v9014 = vpop.f32.mrf.mxu0
        %v9015 = vadd.f32 %v8926, %v9014
        %v9016 = vpop.f32.mrf.mxu0
        %v9017 = vadd.f32 %v8928, %v9016
        %9018 = vmatmul.bf16.gmra.mxu0 %v8428
        %v9019 = vpop.f32.mrf.mxu0
        %v9020 = vadd.f32 %v8931, %v9019
        %v9021 = vpop.f32.mrf.mxu0
        %v9022 = vadd.f32 %v8933, %v9021
        %9023 = vmatmul.bf16.gmra.mxu0 %v8432
        %v9024 = vpop.f32.mrf.mxu0
        %v9025 = vadd.f32 %v8936, %v9024
        %v9026 = vpop.f32.mrf.mxu0
        %v9027 = vadd.f32 %v8938, %v9026
        %9028 = vmatmul.bf16.gmra.mxu0 %v8436
        %v9029 = vpop.f32.mrf.mxu0
        %v9030 = vadd.f32 %v8941, %v9029
        %v9031 = vpop.f32.mrf.mxu0
        %v9032 = vadd.f32 %v8943, %v9031
        %9033 = vmatmul.bf16.gmra.mxu0 %v8440
        %v9034 = vpop.f32.mrf.mxu0
        %v9035 = vadd.f32 %v8946, %v9034
        %v9036 = vpop.f32.mrf.mxu0
        %v9037 = vadd.f32 %v8948, %v9036
        %9038 = vmatmul.bf16.gmra.mxu0 %v8444
        %v9039 = vpop.f32.mrf.mxu0
        %v9040 = vadd.f32 %v8951, %v9039
        %v9041 = vpop.f32.mrf.mxu0
        %v9042 = vadd.f32 %v8953, %v9041
        %9043 = vmatmul.bf16.gmra.mxu0 %v8448
        %v9044 = vpop.f32.mrf.mxu0
        %v9045 = vadd.f32 %v8956, %v9044
        %v9046 = vpop.f32.mrf.mxu0
        %v9047 = vadd.f32 %v8958, %v9046
        %9048 = vmatmul.bf16.gmra.mxu0 %v8452
        %v9049 = vpop.f32.mrf.mxu0
        %v9050 = vadd.f32 %v8961, %v9049
        %v9051 = vpop.f32.mrf.mxu0
        %v9052 = vadd.f32 %v8963, %v9051
        %9053 = vmatmul.bf16.gmra.mxu0 %v8456
        %v9054 = vpop.f32.mrf.mxu0
        %v9055 = vadd.f32 %v8966, %v9054
        %v9056 = vpop.f32.mrf.mxu0
        %v9057 = vadd.f32 %v8968, %v9056
        %9058 = vmatmul.bf16.gmra.mxu0 %v8460
        %v9059 = vpop.f32.mrf.mxu0
        %v9060 = vadd.f32 %v8971, %v9059
        %v9061 = vpop.f32.mrf.mxu0
        %v9062 = vadd.f32 %v8973, %v9061
        %9063 = vmatmul.bf16.gmra.mxu0 %v8464
        %v9064 = vpop.f32.mrf.mxu0
        %v9065 = vadd.f32 %v8976, %v9064
        %v9066 = vpop.f32.mrf.mxu0
        %v9067 = vadd.f32 %v8978, %v9066
        %9068 = vmatmul.bf16.gmra.mxu0 %v8468
        %v9069 = vpop.f32.mrf.mxu0
        %v9070 = vadd.f32 %v8981, %v9069
        %v9071 = vpop.f32.mrf.mxu0
        %v9072 = vadd.f32 %v8983, %v9071
        %9073 = vmatmul.bf16.gmra.mxu0 %v8472
        %v9074 = vpop.f32.mrf.mxu0
        %v9075 = vadd.f32 %v8986, %v9074
        %v9076 = vpop.f32.mrf.mxu0
        %v9077 = vadd.f32 %v8988, %v9076
        %9078 = vmatmul.bf16.gmra.mxu0 %v8476
        %v9079 = vpop.f32.mrf.mxu0
        %v9080 = vadd.f32 %v8991, %v9079
        %v9081 = vpop.f32.mrf.mxu0
        %v9082 = vadd.f32 %v8993, %v9081
        %9083 = vmatmul.bf16.gmra.mxu0 %v8480
        %v9084 = vpop.f32.mrf.mxu0
        %v9085 = vadd.f32 %v8996, %v9084
        %v9086 = vpop.f32.mrf.mxu0
        %v9087 = vadd.f32 %v8998, %v9086
        %9088 = vdwg.mxu0
        %9089 = vmatpush.bf16.msra.mxu0 %v8733
        %9090 = vmatpush.bf16.msra.mxu0 %v8732
        %9091 = vmatpush.bf16.msra.mxu0 %v8731
        %9092 = vmatpush.bf16.msra.mxu0 %v8730
        %9093 = vmatpush.bf16.msra.mxu0 %v8729
        %9094 = vmatpush.bf16.msra.mxu0 %v8728
        %9095 = vmatpush.bf16.msra.mxu0 %v8727
        %9096 = vmatpush.bf16.msra.mxu0 %v8726
        %9097 = vmatmul.bf16.gmra.mxu0 %v8420
        %v9098 = vpop.f32.mrf.mxu0
        %v9099 = vadd.f32 %v9010, %v9098
        %v9100 = vpop.f32.mrf.mxu0
        %v9101 = vadd.f32 %v9012, %v9100
        %9102 = vmatmul.bf16.gmra.mxu0 %v8425
        %v9103 = vpop.f32.mrf.mxu0
        %v9104 = vadd.f32 %v9015, %v9103
        %v9105 = vpop.f32.mrf.mxu0
        %v9106 = vadd.f32 %v9017, %v9105
        %9107 = vmatmul.bf16.gmra.mxu0 %v8429
        %v9108 = vpop.f32.mrf.mxu0
        %v9109 = vadd.f32 %v9020, %v9108
        %v9110 = vpop.f32.mrf.mxu0
        %v9111 = vadd.f32 %v9022, %v9110
        %9112 = vmatmul.bf16.gmra.mxu0 %v8433
        %v9113 = vpop.f32.mrf.mxu0
        %v9114 = vadd.f32 %v9025, %v9113
        %v9115 = vpop.f32.mrf.mxu0
        %v9116 = vadd.f32 %v9027, %v9115
        %9117 = vmatmul.bf16.gmra.mxu0 %v8437
        %v9118 = vpop.f32.mrf.mxu0
        %v9119 = vadd.f32 %v9030, %v9118
        %v9120 = vpop.f32.mrf.mxu0
        %v9121 = vadd.f32 %v9032, %v9120
        %9122 = vmatmul.bf16.gmra.mxu0 %v8441
        %v9123 = vpop.f32.mrf.mxu0
        %v9124 = vadd.f32 %v9035, %v9123
        %v9125 = vpop.f32.mrf.mxu0
        %v9126 = vadd.f32 %v9037, %v9125
        %9127 = vmatmul.bf16.gmra.mxu0 %v8445
        %v9128 = vpop.f32.mrf.mxu0
        %v9129 = vadd.f32 %v9040, %v9128
        %v9130 = vpop.f32.mrf.mxu0
        %v9131 = vadd.f32 %v9042, %v9130
        %9132 = vmatmul.bf16.gmra.mxu0 %v8449
        %v9133 = vpop.f32.mrf.mxu0
        %v9134 = vadd.f32 %v9045, %v9133
        %v9135 = vpop.f32.mrf.mxu0
        %v9136 = vadd.f32 %v9047, %v9135
        %9137 = vmatmul.bf16.gmra.mxu0 %v8453
        %v9138 = vpop.f32.mrf.mxu0
        %v9139 = vadd.f32 %v9050, %v9138
        %v9140 = vpop.f32.mrf.mxu0
        %v9141 = vadd.f32 %v9052, %v9140
        %9142 = vmatmul.bf16.gmra.mxu0 %v8457
        %v9143 = vpop.f32.mrf.mxu0
        %v9144 = vadd.f32 %v9055, %v9143
        %v9145 = vpop.f32.mrf.mxu0
        %v9146 = vadd.f32 %v9057, %v9145
        %9147 = vmatmul.bf16.gmra.mxu0 %v8461
        %v9148 = vpop.f32.mrf.mxu0
        %v9149 = vadd.f32 %v9060, %v9148
        %v9150 = vpop.f32.mrf.mxu0
        %v9151 = vadd.f32 %v9062, %v9150
        %9152 = vmatmul.bf16.gmra.mxu0 %v8465
        %v9153 = vpop.f32.mrf.mxu0
        %v9154 = vadd.f32 %v9065, %v9153
        %v9155 = vpop.f32.mrf.mxu0
        %v9156 = vadd.f32 %v9067, %v9155
        %9157 = vmatmul.bf16.gmra.mxu0 %v8469
        %v9158 = vpop.f32.mrf.mxu0
        %v9159 = vadd.f32 %v9070, %v9158
        %v9160 = vpop.f32.mrf.mxu0
        %v9161 = vadd.f32 %v9072, %v9160
        %9162 = vmatmul.bf16.gmra.mxu0 %v8473
        %v9163 = vpop.f32.mrf.mxu0
        %v9164 = vadd.f32 %v9075, %v9163
        %v9165 = vpop.f32.mrf.mxu0
        %v9166 = vadd.f32 %v9077, %v9165
        %9167 = vmatmul.bf16.gmra.mxu0 %v8477
        %v9168 = vpop.f32.mrf.mxu0
        %v9169 = vadd.f32 %v9080, %v9168
        %v9170 = vpop.f32.mrf.mxu0
        %v9171 = vadd.f32 %v9082, %v9170
        %9172 = vmatmul.bf16.gmra.mxu0 %v8417
        %v9173 = vpop.f32.mrf.mxu0
        %v9174 = vadd.f32 %v9085, %v9173
        %v9175 = vpop.f32.mrf.mxu0
        %v9176 = vadd.f32 %v9087, %v9175
        %9177 = vdwg.mxu0
        %9178 = vmatpush.bf16.msra.mxu0 0
        %9179 = vmatpush.bf16.msra.mxu0 0
        %9180 = vmatpush.bf16.msra.mxu0 0
        %9181 = vmatpush.bf16.msra.mxu0 0
        %9182 = vmatpush.bf16.msra.mxu0 %v8737
        %9183 = vmatpush.bf16.msra.mxu0 %v8736
        %9184 = vmatpush.bf16.msra.mxu0 %v8735
        %9185 = vmatpush.bf16.msra.mxu0 %v8734
        %9186 = vmatmul.bf16.gmra.mxu0 %v8775
        %v9187 = vpop.f32.mrf.mxu0
        %v9188 = vadd.f32 %v9099, %v9187
        %v9189 = vpop.f32.mrf.mxu0
        %v9190 = vadd.f32 %v9101, %v9189
        %9191 = vmatmul.bf16.gmra.mxu0 %v8778
        %v9192 = vpop.f32.mrf.mxu0
        %v9193 = vadd.f32 %v9104, %v9192
        %v9194 = vpop.f32.mrf.mxu0
        %v9195 = vadd.f32 %v9106, %v9194
        %9196 = vmatmul.bf16.gmra.mxu0 %v8781
        %v9197 = vpop.f32.mrf.mxu0
        %v9198 = vadd.f32 %v9109, %v9197
        %v9199 = vpop.f32.mrf.mxu0
        %v9200 = vadd.f32 %v9111, %v9199
        %9201 = vmatmul.bf16.gmra.mxu0 %v8784
        %v9202 = vpop.f32.mrf.mxu0
        %v9203 = vadd.f32 %v9114, %v9202
        %v9204 = vpop.f32.mrf.mxu0
        %v9205 = vadd.f32 %v9116, %v9204
        %9206 = vmatmul.bf16.gmra.mxu0 %v8787
        %v9207 = vpop.f32.mrf.mxu0
        %v9208 = vadd.f32 %v9119, %v9207
        %v9209 = vpop.f32.mrf.mxu0
        %v9210 = vadd.f32 %v9121, %v9209
        %9211 = vmatmul.bf16.gmra.mxu0 %v8790
        %v9212 = vpop.f32.mrf.mxu0
        %v9213 = vadd.f32 %v9124, %v9212
        %v9214 = vpop.f32.mrf.mxu0
        %v9215 = vadd.f32 %v9126, %v9214
        %9216 = vmatmul.bf16.gmra.mxu0 %v8793
        %v9217 = vpop.f32.mrf.mxu0
        %v9218 = vadd.f32 %v9129, %v9217
        %v9219 = vpop.f32.mrf.mxu0
        %v9220 = vadd.f32 %v9131, %v9219
        %9221 = vmatmul.bf16.gmra.mxu0 %v8796
        %v9222 = vpop.f32.mrf.mxu0
        %v9223 = vadd.f32 %v9134, %v9222
        %v9224 = vpop.f32.mrf.mxu0
        %v9225 = vadd.f32 %v9136, %v9224
        %9226 = vmatmul.bf16.gmra.mxu0 %v8799
        %v9227 = vpop.f32.mrf.mxu0
        %v9228 = vadd.f32 %v9139, %v9227
        %v9229 = vpop.f32.mrf.mxu0
        %v9230 = vadd.f32 %v9141, %v9229
        %9231 = vmatmul.bf16.gmra.mxu0 %v8802
        %v9232 = vpop.f32.mrf.mxu0
        %v9233 = vadd.f32 %v9144, %v9232
        %v9234 = vpop.f32.mrf.mxu0
        %v9235 = vadd.f32 %v9146, %v9234
        %9236 = vmatmul.bf16.gmra.mxu0 %v8805
        %v9237 = vpop.f32.mrf.mxu0
        %v9238 = vadd.f32 %v9149, %v9237
        %v9239 = vpop.f32.mrf.mxu0
        %v9240 = vadd.f32 %v9151, %v9239
        %9241 = vmatmul.bf16.gmra.mxu0 %v8808
        %v9242 = vpop.f32.mrf.mxu0
        %v9243 = vadd.f32 %v9154, %v9242
        %v9244 = vpop.f32.mrf.mxu0
        %v9245 = vadd.f32 %v9156, %v9244
        %9246 = vmatmul.bf16.gmra.mxu0 %v8811
        %v9247 = vpop.f32.mrf.mxu0
        %v9248 = vadd.f32 %v9159, %v9247
        %v9249 = vpop.f32.mrf.mxu0
        %v9250 = vadd.f32 %v9161, %v9249
        %9251 = vmatmul.bf16.gmra.mxu0 %v8814
        %v9252 = vpop.f32.mrf.mxu0
        %v9253 = vadd.f32 %v9164, %v9252
        %v9254 = vpop.f32.mrf.mxu0
        %v9255 = vadd.f32 %v9166, %v9254
        %9256 = vmatmul.bf16.gmra.mxu0 %v8817
        %v9257 = vpop.f32.mrf.mxu0
        %v9258 = vadd.f32 %v9169, %v9257
        %v9259 = vpop.f32.mrf.mxu0
        %v9260 = vadd.f32 %v9171, %v9259
        %9261 = vmatmul.bf16.gmra.mxu0 %v8820
        %v9262 = vpop.f32.mrf.mxu0
        %v9263 = vadd.f32 %v9174, %v9262
        %v9264 = vpop.f32.mrf.mxu0
        %v9265 = vadd.f32 %v9176, %v9264
        %9266 = vdwg.mxu0
        %v9267 = vmax.f32 %v9188, 0.0
        %v9268 = vmax.f32 %v9190, 0.0
        %v9269 = vmax.f32 %v9193, 0.0
        %v9270 = vmax.f32 %v9195, 0.0
        %v9271 = vmax.f32 %v9198, 0.0
        %v9272 = vmax.f32 %v9200, 0.0
        %v9273 = vmax.f32 %v9203, 0.0
        %v9274 = vmax.f32 %v9205, 0.0
        %v9275 = vmax.f32 %v9208, 0.0
        %v9276 = vmax.f32 %v9210, 0.0
        %v9277 = vmax.f32 %v9213, 0.0
        %v9278 = vmax.f32 %v9215, 0.0
        %v9279 = vmax.f32 %v9218, 0.0
        %v9280 = vmax.f32 %v9220, 0.0
        %v9281 = vmax.f32 %v9223, 0.0
        %v9282 = vmax.f32 %v9225, 0.0
        %v9283 = vmax.f32 %v9228, 0.0
        %v9284 = vmax.f32 %v9230, 0.0
        %v9285 = vmax.f32 %v9233, 0.0
        %v9286 = vmax.f32 %v9235, 0.0
        %v9287 = vmax.f32 %v9238, 0.0
        %v9288 = vmax.f32 %v9240, 0.0
        %v9289 = vmax.f32 %v9243, 0.0
        %v9290 = vmax.f32 %v9245, 0.0
        %v9291 = vmax.f32 %v9248, 0.0
        %v9292 = vmax.f32 %v9250, 0.0
        %v9293 = vmax.f32 %v9253, 0.0
        %v9294 = vmax.f32 %v9255, 0.0
        %v9295 = vmax.f32 %v9258, 0.0
        %v9296 = vmax.f32 %v9260, 0.0
        %v9297 = vmax.f32 %v9263, 0.0
        %v9298 = vmax.f32 %v9265, 0.0
        %v9331 = vrot.slane %v9267, 7
        %v9332 = vrot.slane %v9268, 7
        %v9333 = vsel %vm614, %v9331, %v9332
        %v9334 = vrot.slane %v9269, 7
        %v9335 = vrot.slane %v9270, 7
        %v9336 = vsel %vm614, %v9334, %v9335
        %v9337 = vrot.slane %v9271, 7
        %v9338 = vrot.slane %v9272, 7
        %v9339 = vsel %vm614, %v9337, %v9338
        %v9340 = vrot.slane %v9273, 7
        %v9341 = vrot.slane %v9274, 7
        %v9342 = vsel %vm614, %v9340, %v9341
        %v9343 = vrot.slane %v9275, 7
        %v9344 = vrot.slane %v9276, 7
        %v9345 = vsel %vm614, %v9343, %v9344
        %v9346 = vrot.slane %v9277, 7
        %v9347 = vrot.slane %v9278, 7
        %v9348 = vsel %vm614, %v9346, %v9347
        %v9349 = vrot.slane %v9279, 7
        %v9350 = vrot.slane %v9280, 7
        %v9351 = vsel %vm614, %v9349, %v9350
        %v9352 = vrot.slane %v9281, 7
        %v9353 = vrot.slane %v9282, 7
        %v9354 = vsel %vm614, %v9352, %v9353
        %v9355 = vrot.slane %v9283, 7
        %v9356 = vrot.slane %v9284, 7
        %v9357 = vsel %vm614, %v9355, %v9356
        %v9358 = vrot.slane %v9285, 7
        %v9359 = vrot.slane %v9286, 7
        %v9360 = vsel %vm614, %v9358, %v9359
        %v9361 = vrot.slane %v9287, 7
        %v9362 = vrot.slane %v9288, 7
        %v9363 = vsel %vm614, %v9361, %v9362
        %v9364 = vrot.slane %v9289, 7
        %v9365 = vrot.slane %v9290, 7
        %v9366 = vsel %vm614, %v9364, %v9365
        %v9367 = vrot.slane %v9291, 7
        %v9368 = vrot.slane %v9292, 7
        %v9369 = vsel %vm614, %v9367, %v9368
        %v9370 = vrot.slane %v9293, 7
        %v9371 = vrot.slane %v9294, 7
        %v9372 = vsel %vm614, %v9370, %v9371
        %v9373 = vrot.slane %v9295, 7
        %v9374 = vrot.slane %v9296, 7
        %v9375 = vsel %vm614, %v9373, %v9374
        %v9376 = vrot.slane %v9297, 7
        %v9377 = vrot.slane %v9298, 7
        %v9378 = vsel %vm614, %v9376, %v9377
        %v9426 = vsel %vm614, 0.0, %v9331
        %v9427 = vsel %vm614, 0.0, %v9334
        %v9428 = vsel %vm614, 0.0, %v9337
        %v9429 = vsel %vm614, 0.0, %v9340
        %v9430 = vsel %vm614, 0.0, %v9343
        %v9431 = vsel %vm614, 0.0, %v9346
        %v9432 = vsel %vm614, 0.0, %v9349
        %v9433 = vsel %vm614, 0.0, %v9352
        %v9434 = vsel %vm614, 0.0, %v9355
        %v9435 = vsel %vm614, 0.0, %v9358
        %v9436 = vsel %vm614, 0.0, %v9361
        %v9437 = vsel %vm614, 0.0, %v9364
        %v9438 = vsel %vm614, 0.0, %v9367
        %v9439 = vsel %vm614, 0.0, %v9370
        %v9440 = vsel %vm614, 0.0, %v9373
        %v9441 = vsel %vm614, 0.0, %v9376
        %v9442 = vsel %vm614, %v9332, 0.0
        %v9443 = vsel %vm614, %v9335, 0.0
        %v9444 = vsel %vm614, %v9338, 0.0
        %v9445 = vsel %vm614, %v9341, 0.0
        %v9446 = vsel %vm614, %v9344, 0.0
        %v9447 = vsel %vm614, %v9347, 0.0
        %v9448 = vsel %vm614, %v9350, 0.0
        %v9449 = vsel %vm614, %v9353, 0.0
        %v9450 = vsel %vm614, %v9356, 0.0
        %v9451 = vsel %vm614, %v9359, 0.0
        %v9452 = vsel %vm614, %v9362, 0.0
        %v9453 = vsel %vm614, %v9365, 0.0
        %v9454 = vsel %vm614, %v9368, 0.0
        %v9455 = vsel %vm614, %v9371, 0.0
        %v9456 = vsel %vm614, %v9374, 0.0
        %v9457 = vsel %vm614, %v9377, 0.0
        %v9488 = vrot.slane %v9426, 1
        %v9489 = vrot.slane %v9333, 1
        %v9490 = vsel %vm773, %v9488, %v9489
        %v9491 = vrot.slane %v9442, 1
        %v9492 = vsel %vm773, %v9489, %v9491
        %v9493 = vrot.slane %v9427, 1
        %v9494 = vrot.slane %v9336, 1
        %v9495 = vsel %vm773, %v9493, %v9494
        %v9496 = vrot.slane %v9443, 1
        %v9497 = vsel %vm773, %v9494, %v9496
        %v9498 = vrot.slane %v9428, 1
        %v9499 = vrot.slane %v9339, 1
        %v9500 = vsel %vm773, %v9498, %v9499
        %v9501 = vrot.slane %v9444, 1
        %v9502 = vsel %vm773, %v9499, %v9501
        %v9503 = vrot.slane %v9429, 1
        %v9504 = vrot.slane %v9342, 1
        %v9505 = vsel %vm773, %v9503, %v9504
        %v9506 = vrot.slane %v9445, 1
        %v9507 = vsel %vm773, %v9504, %v9506
        %v9508 = vrot.slane %v9430, 1
        %v9509 = vrot.slane %v9345, 1
        %v9510 = vsel %vm773, %v9508, %v9509
        %v9511 = vrot.slane %v9446, 1
        %v9512 = vsel %vm773, %v9509, %v9511
        %v9513 = vrot.slane %v9431, 1
        %v9514 = vrot.slane %v9348, 1
        %v9515 = vsel %vm773, %v9513, %v9514
        %v9516 = vrot.slane %v9447, 1
        %v9517 = vsel %vm773, %v9514, %v9516
        %v9518 = vrot.slane %v9432, 1
        %v9519 = vrot.slane %v9351, 1
        %v9520 = vsel %vm773, %v9518, %v9519
        %v9521 = vrot.slane %v9448, 1
        %v9522 = vsel %vm773, %v9519, %v9521
        %v9523 = vrot.slane %v9433, 1
        %v9524 = vrot.slane %v9354, 1
        %v9525 = vsel %vm773, %v9523, %v9524
        %v9526 = vrot.slane %v9449, 1
        %v9527 = vsel %vm773, %v9524, %v9526
        %v9528 = vrot.slane %v9434, 1
        %v9529 = vrot.slane %v9357, 1
        %v9530 = vsel %vm773, %v9528, %v9529
        %v9531 = vrot.slane %v9450, 1
        %v9532 = vsel %vm773, %v9529, %v9531
        %v9533 = vrot.slane %v9435, 1
        %v9534 = vrot.slane %v9360, 1
        %v9535 = vsel %vm773, %v9533, %v9534
        %v9536 = vrot.slane %v9451, 1
        %v9537 = vsel %vm773, %v9534, %v9536
        %v9538 = vrot.slane %v9436, 1
        %v9539 = vrot.slane %v9363, 1
        %v9540 = vsel %vm773, %v9538, %v9539
        %v9541 = vrot.slane %v9452, 1
        %v9542 = vsel %vm773, %v9539, %v9541
        %v9543 = vrot.slane %v9437, 1
        %v9544 = vrot.slane %v9366, 1
        %v9545 = vsel %vm773, %v9543, %v9544
        %v9546 = vrot.slane %v9453, 1
        %v9547 = vsel %vm773, %v9544, %v9546
        %v9548 = vrot.slane %v9438, 1
        %v9549 = vrot.slane %v9369, 1
        %v9550 = vsel %vm773, %v9548, %v9549
        %v9551 = vrot.slane %v9454, 1
        %v9552 = vsel %vm773, %v9549, %v9551
        %v9553 = vrot.slane %v9439, 1
        %v9554 = vrot.slane %v9372, 1
        %v9555 = vsel %vm773, %v9553, %v9554
        %v9556 = vrot.slane %v9455, 1
        %v9557 = vsel %vm773, %v9554, %v9556
        %v9558 = vrot.slane %v9440, 1
        %v9559 = vrot.slane %v9375, 1
        %v9560 = vsel %vm773, %v9558, %v9559
        %v9561 = vrot.slane %v9456, 1
        %v9562 = vsel %vm773, %v9559, %v9561
        %9563 = vrot.lane.b32.xlu0 %v9490, 32
        %v9564 = vpop.permute.xlu0 %9563
        %9565 = vrot.lane.b32.xlu0 %v9492, 32
        %v9566 = vpop.permute.xlu0 %9565
        %9567 = vrot.lane.b32.xlu0 %v9495, 32
        %v9568 = vpop.permute.xlu0 %9567
        %9569 = vrot.lane.b32.xlu0 %v9497, 32
        %v9570 = vpop.permute.xlu0 %9569
        %9571 = vrot.lane.b32.xlu0 %v9500, 32
        %v9572 = vpop.permute.xlu0 %9571
        %9573 = vrot.lane.b32.xlu0 %v9502, 32
        %v9574 = vpop.permute.xlu0 %9573
        %9575 = vrot.lane.b32.xlu0 %v9505, 32
        %v9576 = vpop.permute.xlu0 %9575
        %9577 = vrot.lane.b32.xlu0 %v9507, 32
        %v9578 = vpop.permute.xlu0 %9577
        %9579 = vrot.lane.b32.xlu0 %v9510, 32
        %v9580 = vpop.permute.xlu0 %9579
        %9581 = vrot.lane.b32.xlu0 %v9512, 32
        %v9582 = vpop.permute.xlu0 %9581
        %9583 = vrot.lane.b32.xlu0 %v9515, 32
        %v9584 = vpop.permute.xlu0 %9583
        %9585 = vrot.lane.b32.xlu0 %v9517, 32
        %v9586 = vpop.permute.xlu0 %9585
        %9587 = vrot.lane.b32.xlu0 %v9520, 32
        %v9588 = vpop.permute.xlu0 %9587
        %9589 = vrot.lane.b32.xlu0 %v9522, 32
        %v9590 = vpop.permute.xlu0 %9589
        %9591 = vrot.lane.b32.xlu0 %v9525, 32
        %v9592 = vpop.permute.xlu0 %9591
        %9593 = vrot.lane.b32.xlu0 %v9527, 32
        %v9594 = vpop.permute.xlu0 %9593
        %9595 = vrot.lane.b32.xlu0 %v9530, 32
        %v9596 = vpop.permute.xlu0 %9595
        %9597 = vrot.lane.b32.xlu0 %v9532, 32
        %v9598 = vpop.permute.xlu0 %9597
        %9599 = vrot.lane.b32.xlu0 %v9535, 32
        %v9600 = vpop.permute.xlu0 %9599
        %9601 = vrot.lane.b32.xlu0 %v9537, 32
        %v9602 = vpop.permute.xlu0 %9601
        %9603 = vrot.lane.b32.xlu0 %v9540, 32
        %v9604 = vpop.permute.xlu0 %9603
        %9605 = vrot.lane.b32.xlu0 %v9542, 32
        %v9606 = vpop.permute.xlu0 %9605
        %9607 = vrot.lane.b32.xlu0 %v9545, 32
        %v9608 = vpop.permute.xlu0 %9607
        %9609 = vrot.lane.b32.xlu0 %v9547, 32
        %v9610 = vpop.permute.xlu0 %9609
        %9611 = vrot.lane.b32.xlu0 %v9550, 32
        %v9612 = vpop.permute.xlu0 %9611
        %9613 = vrot.lane.b32.xlu0 %v9552, 32
        %v9614 = vpop.permute.xlu0 %9613
        %9615 = vrot.lane.b32.xlu0 %v9555, 32
        %v9616 = vpop.permute.xlu0 %9615
        %9617 = vrot.lane.b32.xlu0 %v9557, 32
        %v9618 = vpop.permute.xlu0 %9617
        %9619 = vrot.lane.b32.xlu0 %v9560, 32
        %v9620 = vpop.permute.xlu0 %9619
        %9621 = vrot.lane.b32.xlu0 %v9562, 32
        %v9622 = vpop.permute.xlu0 %9621
        %v9653 = vrot.slane %v9426, 2
        %v9654 = vrot.slane %v9333, 2
        %v9655 = vsel %vm944, %v9653, %v9654
        %v9656 = vrot.slane %v9442, 2
        %v9657 = vsel %vm944, %v9654, %v9656
        %v9658 = vrot.slane %v9427, 2
        %v9659 = vrot.slane %v9336, 2
        %v9660 = vsel %vm944, %v9658, %v9659
        %v9661 = vrot.slane %v9443, 2
        %v9662 = vsel %vm944, %v9659, %v9661
        %v9663 = vrot.slane %v9428, 2
        %v9664 = vrot.slane %v9339, 2
        %v9665 = vsel %vm944, %v9663, %v9664
        %v9666 = vrot.slane %v9444, 2
        %v9667 = vsel %vm944, %v9664, %v9666
        %v9668 = vrot.slane %v9429, 2
        %v9669 = vrot.slane %v9342, 2
        %v9670 = vsel %vm944, %v9668, %v9669
        %v9671 = vrot.slane %v9445, 2
        %v9672 = vsel %vm944, %v9669, %v9671
        %v9673 = vrot.slane %v9430, 2
        %v9674 = vrot.slane %v9345, 2
        %v9675 = vsel %vm944, %v9673, %v9674
        %v9676 = vrot.slane %v9446, 2
        %v9677 = vsel %vm944, %v9674, %v9676
        %v9678 = vrot.slane %v9431, 2
        %v9679 = vrot.slane %v9348, 2
        %v9680 = vsel %vm944, %v9678, %v9679
        %v9681 = vrot.slane %v9447, 2
        %v9682 = vsel %vm944, %v9679, %v9681
        %v9683 = vrot.slane %v9432, 2
        %v9684 = vrot.slane %v9351, 2
        %v9685 = vsel %vm944, %v9683, %v9684
        %v9686 = vrot.slane %v9448, 2
        %v9687 = vsel %vm944, %v9684, %v9686
        %v9688 = vrot.slane %v9433, 2
        %v9689 = vrot.slane %v9354, 2
        %v9690 = vsel %vm944, %v9688, %v9689
        %v9691 = vrot.slane %v9449, 2
        %v9692 = vsel %vm944, %v9689, %v9691
        %v9693 = vrot.slane %v9434, 2
        %v9694 = vrot.slane %v9357, 2
        %v9695 = vsel %vm944, %v9693, %v9694
        %v9696 = vrot.slane %v9450, 2
        %v9697 = vsel %vm944, %v9694, %v9696
        %v9698 = vrot.slane %v9435, 2
        %v9699 = vrot.slane %v9360, 2
        %v9700 = vsel %vm944, %v9698, %v9699
        %v9701 = vrot.slane %v9451, 2
        %v9702 = vsel %vm944, %v9699, %v9701
        %v9703 = vrot.slane %v9436, 2
        %v9704 = vrot.slane %v9363, 2
        %v9705 = vsel %vm944, %v9703, %v9704
        %v9706 = vrot.slane %v9452, 2
        %v9707 = vsel %vm944, %v9704, %v9706
        %v9708 = vrot.slane %v9437, 2
        %v9709 = vrot.slane %v9366, 2
        %v9710 = vsel %vm944, %v9708, %v9709
        %v9711 = vrot.slane %v9453, 2
        %v9712 = vsel %vm944, %v9709, %v9711
        %v9713 = vrot.slane %v9438, 2
        %v9714 = vrot.slane %v9369, 2
        %v9715 = vsel %vm944, %v9713, %v9714
        %v9716 = vrot.slane %v9454, 2
        %v9717 = vsel %vm944, %v9714, %v9716
        %v9718 = vrot.slane %v9439, 2
        %v9719 = vrot.slane %v9372, 2
        %v9720 = vsel %vm944, %v9718, %v9719
        %v9721 = vrot.slane %v9455, 2
        %v9722 = vsel %vm944, %v9719, %v9721
        %v9723 = vrot.slane %v9440, 2
        %v9724 = vrot.slane %v9375, 2
        %v9725 = vsel %vm944, %v9723, %v9724
        %v9726 = vrot.slane %v9456, 2
        %v9727 = vsel %vm944, %v9724, %v9726
        %9728 = vrot.lane.b32.xlu0 %v9655, 64
        %v9729 = vpop.permute.xlu0 %9728
        %9730 = vrot.lane.b32.xlu0 %v9657, 64
        %v9731 = vpop.permute.xlu0 %9730
        %9732 = vrot.lane.b32.xlu0 %v9660, 64
        %v9733 = vpop.permute.xlu0 %9732
        %9734 = vrot.lane.b32.xlu0 %v9662, 64
        %v9735 = vpop.permute.xlu0 %9734
        %9736 = vrot.lane.b32.xlu0 %v9665, 64
        %v9737 = vpop.permute.xlu0 %9736
        %9738 = vrot.lane.b32.xlu0 %v9667, 64
        %v9739 = vpop.permute.xlu0 %9738
        %9740 = vrot.lane.b32.xlu0 %v9670, 64
        %v9741 = vpop.permute.xlu0 %9740
        %9742 = vrot.lane.b32.xlu0 %v9672, 64
        %v9743 = vpop.permute.xlu0 %9742
        %9744 = vrot.lane.b32.xlu0 %v9675, 64
        %v9745 = vpop.permute.xlu0 %9744
        %9746 = vrot.lane.b32.xlu0 %v9677, 64
        %v9747 = vpop.permute.xlu0 %9746
        %9748 = vrot.lane.b32.xlu0 %v9680, 64
        %v9749 = vpop.permute.xlu0 %9748
        %9750 = vrot.lane.b32.xlu0 %v9682, 64
        %v9751 = vpop.permute.xlu0 %9750
        %9752 = vrot.lane.b32.xlu0 %v9685, 64
        %v9753 = vpop.permute.xlu0 %9752
        %9754 = vrot.lane.b32.xlu0 %v9687, 64
        %v9755 = vpop.permute.xlu0 %9754
        %9756 = vrot.lane.b32.xlu0 %v9690, 64
        %v9757 = vpop.permute.xlu0 %9756
        %9758 = vrot.lane.b32.xlu0 %v9692, 64
        %v9759 = vpop.permute.xlu0 %9758
        %9760 = vrot.lane.b32.xlu0 %v9695, 64
        %v9761 = vpop.permute.xlu0 %9760
        %9762 = vrot.lane.b32.xlu0 %v9697, 64
        %v9763 = vpop.permute.xlu0 %9762
        %9764 = vrot.lane.b32.xlu0 %v9700, 64
        %v9765 = vpop.permute.xlu0 %9764
        %9766 = vrot.lane.b32.xlu0 %v9702, 64
        %v9767 = vpop.permute.xlu0 %9766
        %9768 = vrot.lane.b32.xlu0 %v9705, 64
        %v9769 = vpop.permute.xlu0 %9768
        %9770 = vrot.lane.b32.xlu0 %v9707, 64
        %v9771 = vpop.permute.xlu0 %9770
        %9772 = vrot.lane.b32.xlu0 %v9710, 64
        %v9773 = vpop.permute.xlu0 %9772
        %9774 = vrot.lane.b32.xlu0 %v9712, 64
        %v9775 = vpop.permute.xlu0 %9774
        %9776 = vrot.lane.b32.xlu0 %v9715, 64
        %v9777 = vpop.permute.xlu0 %9776
        %9778 = vrot.lane.b32.xlu0 %v9717, 64
        %v9779 = vpop.permute.xlu0 %9778
        %9780 = vrot.lane.b32.xlu0 %v9720, 64
        %v9781 = vpop.permute.xlu0 %9780
        %9782 = vrot.lane.b32.xlu0 %v9722, 64
        %v9783 = vpop.permute.xlu0 %9782
        %9784 = vrot.lane.b32.xlu0 %v9725, 64
        %v9785 = vpop.permute.xlu0 %9784
        %9786 = vrot.lane.b32.xlu0 %v9727, 64
        %v9787 = vpop.permute.xlu0 %9786
        %9819 = vrot.lane.b32.xlu0 %v9426, 96
        %v9820 = vpop.permute.xlu0 %9819
        %9821 = vrot.lane.b32.xlu0 %v9333, 96
        %v9822 = vpop.permute.xlu0 %9821
        %9823 = vrot.lane.b32.xlu0 %v9427, 96
        %v9824 = vpop.permute.xlu0 %9823
        %9825 = vrot.lane.b32.xlu0 %v9336, 96
        %v9826 = vpop.permute.xlu0 %9825
        %9827 = vrot.lane.b32.xlu0 %v9428, 96
        %v9828 = vpop.permute.xlu0 %9827
        %9829 = vrot.lane.b32.xlu0 %v9339, 96
        %v9830 = vpop.permute.xlu0 %9829
        %9831 = vrot.lane.b32.xlu0 %v9429, 96
        %v9832 = vpop.permute.xlu0 %9831
        %9833 = vrot.lane.b32.xlu0 %v9342, 96
        %v9834 = vpop.permute.xlu0 %9833
        %9835 = vrot.lane.b32.xlu0 %v9430, 96
        %v9836 = vpop.permute.xlu0 %9835
        %9837 = vrot.lane.b32.xlu0 %v9345, 96
        %v9838 = vpop.permute.xlu0 %9837
        %9839 = vrot.lane.b32.xlu0 %v9431, 96
        %v9840 = vpop.permute.xlu0 %9839
        %9841 = vrot.lane.b32.xlu0 %v9348, 96
        %v9842 = vpop.permute.xlu0 %9841
        %9843 = vrot.lane.b32.xlu0 %v9432, 96
        %v9844 = vpop.permute.xlu0 %9843
        %9845 = vrot.lane.b32.xlu0 %v9351, 96
        %v9846 = vpop.permute.xlu0 %9845
        %9847 = vrot.lane.b32.xlu0 %v9433, 96
        %v9848 = vpop.permute.xlu0 %9847
        %9849 = vrot.lane.b32.xlu0 %v9354, 96
        %v9850 = vpop.permute.xlu0 %9849
        %9851 = vrot.lane.b32.xlu0 %v9434, 96
        %v9852 = vpop.permute.xlu0 %9851
        %9853 = vrot.lane.b32.xlu0 %v9357, 96
        %v9854 = vpop.permute.xlu0 %9853
        %9855 = vrot.lane.b32.xlu0 %v9435, 96
        %v9856 = vpop.permute.xlu0 %9855
        %9857 = vrot.lane.b32.xlu0 %v9360, 96
        %v9858 = vpop.permute.xlu0 %9857
        %9859 = vrot.lane.b32.xlu0 %v9436, 96
        %v9860 = vpop.permute.xlu0 %9859
        %9861 = vrot.lane.b32.xlu0 %v9363, 96
        %v9862 = vpop.permute.xlu0 %9861
        %9863 = vrot.lane.b32.xlu0 %v9437, 96
        %v9864 = vpop.permute.xlu0 %9863
        %9865 = vrot.lane.b32.xlu0 %v9366, 96
        %v9866 = vpop.permute.xlu0 %9865
        %9867 = vrot.lane.b32.xlu0 %v9438, 96
        %v9868 = vpop.permute.xlu0 %9867
        %9869 = vrot.lane.b32.xlu0 %v9369, 96
        %v9870 = vpop.permute.xlu0 %9869
        %9871 = vrot.lane.b32.xlu0 %v9439, 96
        %v9872 = vpop.permute.xlu0 %9871
        %9873 = vrot.lane.b32.xlu0 %v9372, 96
        %v9874 = vpop.permute.xlu0 %9873
        %9875 = vrot.lane.b32.xlu0 %v9440, 96
        %v9876 = vpop.permute.xlu0 %9875
        %9877 = vrot.lane.b32.xlu0 %v9375, 96
        %v9878 = vpop.permute.xlu0 %9877
        %9879 = vrot.lane.b32.xlu0 %v9441, 96
        %v9880 = vpop.permute.xlu0 %9879
        %9881 = vrot.lane.b32.xlu0 %v9378, 96
        %v9882 = vpop.permute.xlu0 %9881
        %v9916 = vrot.slane %v9441, 1
        %v9917 = vrot.slane %v9378, 1
        %v9918 = vsel %vm773, %v9916, %v9917
        %v9919 = vrot.slane %v9457, 1
        %v9920 = vsel %vm773, %v9917, %v9919
        %v9953 = vrot.slane %v9441, 2
        %v9954 = vrot.slane %v9378, 2
        %v9955 = vsel %vm944, %v9953, %v9954
        %v9956 = vrot.slane %v9457, 2
        %v9957 = vsel %vm944, %v9954, %v9956
        %9958 = vrot.lane.b32.xlu0 %v9655, 32
        %v9959 = vpop.permute.xlu0 %9958
        %9960 = vrot.lane.b32.xlu0 %v9657, 32
        %v9961 = vpop.permute.xlu0 %9960
        %9962 = vrot.lane.b32.xlu0 %v9660, 32
        %v9963 = vpop.permute.xlu0 %9962
        %9964 = vrot.lane.b32.xlu0 %v9662, 32
        %v9965 = vpop.permute.xlu0 %9964
        %9966 = vrot.lane.b32.xlu0 %v9665, 32
        %v9967 = vpop.permute.xlu0 %9966
        %9968 = vrot.lane.b32.xlu0 %v9667, 32
        %v9969 = vpop.permute.xlu0 %9968
        %9970 = vrot.lane.b32.xlu0 %v9670, 32
        %v9971 = vpop.permute.xlu0 %9970
        %9972 = vrot.lane.b32.xlu0 %v9672, 32
        %v9973 = vpop.permute.xlu0 %9972
        %9974 = vrot.lane.b32.xlu0 %v9675, 32
        %v9975 = vpop.permute.xlu0 %9974
        %9976 = vrot.lane.b32.xlu0 %v9677, 32
        %v9977 = vpop.permute.xlu0 %9976
        %9978 = vrot.lane.b32.xlu0 %v9680, 32
        %v9979 = vpop.permute.xlu0 %9978
        %9980 = vrot.lane.b32.xlu0 %v9682, 32
        %v9981 = vpop.permute.xlu0 %9980
        %9982 = vrot.lane.b32.xlu0 %v9685, 32
        %v9983 = vpop.permute.xlu0 %9982
        %9984 = vrot.lane.b32.xlu0 %v9687, 32
        %v9985 = vpop.permute.xlu0 %9984
        %9986 = vrot.lane.b32.xlu0 %v9690, 32
        %v9987 = vpop.permute.xlu0 %9986
        %9988 = vrot.lane.b32.xlu0 %v9692, 32
        %v9989 = vpop.permute.xlu0 %9988
        %9990 = vrot.lane.b32.xlu0 %v9695, 32
        %v9991 = vpop.permute.xlu0 %9990
        %9992 = vrot.lane.b32.xlu0 %v9697, 32
        %v9993 = vpop.permute.xlu0 %9992
        %9994 = vrot.lane.b32.xlu0 %v9700, 32
        %v9995 = vpop.permute.xlu0 %9994
        %9996 = vrot.lane.b32.xlu0 %v9702, 32
        %v9997 = vpop.permute.xlu0 %9996
        %9998 = vrot.lane.b32.xlu0 %v9705, 32
        %v9999 = vpop.permute.xlu0 %9998
        %10000 = vrot.lane.b32.xlu0 %v9707, 32
        %v10001 = vpop.permute.xlu0 %10000
        %10002 = vrot.lane.b32.xlu0 %v9710, 32
        %v10003 = vpop.permute.xlu0 %10002
        %10004 = vrot.lane.b32.xlu0 %v9712, 32
        %v10005 = vpop.permute.xlu0 %10004
        %10006 = vrot.lane.b32.xlu0 %v9715, 32
        %v10007 = vpop.permute.xlu0 %10006
        %10008 = vrot.lane.b32.xlu0 %v9717, 32
        %v10009 = vpop.permute.xlu0 %10008
        %10010 = vrot.lane.b32.xlu0 %v9720, 32
        %v10011 = vpop.permute.xlu0 %10010
        %10012 = vrot.lane.b32.xlu0 %v9722, 32
        %v10013 = vpop.permute.xlu0 %10012
        %10014 = vrot.lane.b32.xlu0 %v9725, 32
        %v10015 = vpop.permute.xlu0 %10014
        %10016 = vrot.lane.b32.xlu0 %v9727, 32
        %v10017 = vpop.permute.xlu0 %10016
        %10018 = vrot.lane.b32.xlu0 %v9955, 32
        %v10019 = vpop.permute.xlu0 %10018
        %10020 = vrot.lane.b32.xlu0 %v9957, 32
        %v10021 = vpop.permute.xlu0 %10020
        %10054 = vrot.lane.b32.xlu0 %v9427, 64
        %v10055 = vpop.permute.xlu0 %10054
        %10056 = vrot.lane.b32.xlu0 %v9336, 64
        %v10057 = vpop.permute.xlu0 %10056
        %10058 = vrot.lane.b32.xlu0 %v9428, 64
        %v10059 = vpop.permute.xlu0 %10058
        %10060 = vrot.lane.b32.xlu0 %v9339, 64
        %v10061 = vpop.permute.xlu0 %10060
        %10062 = vrot.lane.b32.xlu0 %v9429, 64
        %v10063 = vpop.permute.xlu0 %10062
        %10064 = vrot.lane.b32.xlu0 %v9342, 64
        %v10065 = vpop.permute.xlu0 %10064
        %10066 = vrot.lane.b32.xlu0 %v9430, 64
        %v10067 = vpop.permute.xlu0 %10066
        %10068 = vrot.lane.b32.xlu0 %v9345, 64
        %v10069 = vpop.permute.xlu0 %10068
        %10070 = vrot.lane.b32.xlu0 %v9431, 64
        %v10071 = vpop.permute.xlu0 %10070
        %10072 = vrot.lane.b32.xlu0 %v9348, 64
        %v10073 = vpop.permute.xlu0 %10072
        %10074 = vrot.lane.b32.xlu0 %v9432, 64
        %v10075 = vpop.permute.xlu0 %10074
        %10076 = vrot.lane.b32.xlu0 %v9351, 64
        %v10077 = vpop.permute.xlu0 %10076
        %10078 = vrot.lane.b32.xlu0 %v9433, 64
        %v10079 = vpop.permute.xlu0 %10078
        %10080 = vrot.lane.b32.xlu0 %v9354, 64
        %v10081 = vpop.permute.xlu0 %10080
        %10082 = vrot.lane.b32.xlu0 %v9434, 64
        %v10083 = vpop.permute.xlu0 %10082
        %10084 = vrot.lane.b32.xlu0 %v9357, 64
        %v10085 = vpop.permute.xlu0 %10084
        %10086 = vrot.lane.b32.xlu0 %v9435, 64
        %v10087 = vpop.permute.xlu0 %10086
        %10088 = vrot.lane.b32.xlu0 %v9360, 64
        %v10089 = vpop.permute.xlu0 %10088
        %10090 = vrot.lane.b32.xlu0 %v9436, 64
        %v10091 = vpop.permute.xlu0 %10090
        %10092 = vrot.lane.b32.xlu0 %v9363, 64
        %v10093 = vpop.permute.xlu0 %10092
        %10094 = vrot.lane.b32.xlu0 %v9437, 64
        %v10095 = vpop.permute.xlu0 %10094
        %10096 = vrot.lane.b32.xlu0 %v9366, 64
        %v10097 = vpop.permute.xlu0 %10096
        %10098 = vrot.lane.b32.xlu0 %v9438, 64
        %v10099 = vpop.permute.xlu0 %10098
        %10100 = vrot.lane.b32.xlu0 %v9369, 64
        %v10101 = vpop.permute.xlu0 %10100
        %10102 = vrot.lane.b32.xlu0 %v9439, 64
        %v10103 = vpop.permute.xlu0 %10102
        %10104 = vrot.lane.b32.xlu0 %v9372, 64
        %v10105 = vpop.permute.xlu0 %10104
        %10106 = vrot.lane.b32.xlu0 %v9440, 64
        %v10107 = vpop.permute.xlu0 %10106
        %10108 = vrot.lane.b32.xlu0 %v9375, 64
        %v10109 = vpop.permute.xlu0 %10108
        %10110 = vrot.lane.b32.xlu0 %v9441, 64
        %v10111 = vpop.permute.xlu0 %10110
        %10112 = vrot.lane.b32.xlu0 %v9378, 64
        %v10113 = vpop.permute.xlu0 %10112
        %10144 = vrot.lane.b32.xlu0 %v9495, 96
        %v10145 = vpop.permute.xlu0 %10144
        %10146 = vrot.lane.b32.xlu0 %v9497, 96
        %v10147 = vpop.permute.xlu0 %10146
        %10148 = vrot.lane.b32.xlu0 %v9500, 96
        %v10149 = vpop.permute.xlu0 %10148
        %10150 = vrot.lane.b32.xlu0 %v9502, 96
        %v10151 = vpop.permute.xlu0 %10150
        %10152 = vrot.lane.b32.xlu0 %v9505, 96
        %v10153 = vpop.permute.xlu0 %10152
        %10154 = vrot.lane.b32.xlu0 %v9507, 96
        %v10155 = vpop.permute.xlu0 %10154
        %10156 = vrot.lane.b32.xlu0 %v9510, 96
        %v10157 = vpop.permute.xlu0 %10156
        %10158 = vrot.lane.b32.xlu0 %v9512, 96
        %v10159 = vpop.permute.xlu0 %10158
        %10160 = vrot.lane.b32.xlu0 %v9515, 96
        %v10161 = vpop.permute.xlu0 %10160
        %10162 = vrot.lane.b32.xlu0 %v9517, 96
        %v10163 = vpop.permute.xlu0 %10162
        %10164 = vrot.lane.b32.xlu0 %v9520, 96
        %v10165 = vpop.permute.xlu0 %10164
        %10166 = vrot.lane.b32.xlu0 %v9522, 96
        %v10167 = vpop.permute.xlu0 %10166
        %10168 = vrot.lane.b32.xlu0 %v9525, 96
        %v10169 = vpop.permute.xlu0 %10168
        %10170 = vrot.lane.b32.xlu0 %v9527, 96
        %v10171 = vpop.permute.xlu0 %10170
        %10172 = vrot.lane.b32.xlu0 %v9530, 96
        %v10173 = vpop.permute.xlu0 %10172
        %10174 = vrot.lane.b32.xlu0 %v9532, 96
        %v10175 = vpop.permute.xlu0 %10174
        %10176 = vrot.lane.b32.xlu0 %v9535, 96
        %v10177 = vpop.permute.xlu0 %10176
        %10178 = vrot.lane.b32.xlu0 %v9537, 96
        %v10179 = vpop.permute.xlu0 %10178
        %10180 = vrot.lane.b32.xlu0 %v9540, 96
        %v10181 = vpop.permute.xlu0 %10180
        %10182 = vrot.lane.b32.xlu0 %v9542, 96
        %v10183 = vpop.permute.xlu0 %10182
        %10184 = vrot.lane.b32.xlu0 %v9545, 96
        %v10185 = vpop.permute.xlu0 %10184
        %10186 = vrot.lane.b32.xlu0 %v9547, 96
        %v10187 = vpop.permute.xlu0 %10186
        %10188 = vrot.lane.b32.xlu0 %v9550, 96
        %v10189 = vpop.permute.xlu0 %10188
        %10190 = vrot.lane.b32.xlu0 %v9552, 96
        %v10191 = vpop.permute.xlu0 %10190
        %10192 = vrot.lane.b32.xlu0 %v9555, 96
        %v10193 = vpop.permute.xlu0 %10192
        %10194 = vrot.lane.b32.xlu0 %v9557, 96
        %v10195 = vpop.permute.xlu0 %10194
        %10196 = vrot.lane.b32.xlu0 %v9560, 96
        %v10197 = vpop.permute.xlu0 %10196
        %10198 = vrot.lane.b32.xlu0 %v9562, 96
        %v10199 = vpop.permute.xlu0 %10198
        %10200 = vrot.lane.b32.xlu0 %v9918, 96
        %v10201 = vpop.permute.xlu0 %10200
        %10202 = vrot.lane.b32.xlu0 %v9920, 96
        %v10203 = vpop.permute.xlu0 %10202
        %v10264 = vsel %vm1923, %v9426, %v9564
        %v10265 = vsel %vm1923, %v9333, %v9566
        %v10266 = vsel %vm1923, %v9427, %v9568
        %v10267 = vsel %vm1923, %v9336, %v9570
        %v10268 = vsel %vm1923, %v9428, %v9572
        %v10269 = vsel %vm1923, %v9339, %v9574
        %v10270 = vsel %vm1923, %v9429, %v9576
        %v10271 = vsel %vm1923, %v9342, %v9578
        %v10272 = vsel %vm1923, %v9430, %v9580
        %v10273 = vsel %vm1923, %v9345, %v9582
        %v10274 = vsel %vm1923, %v9431, %v9584
        %v10275 = vsel %vm1923, %v9348, %v9586
        %v10276 = vsel %vm1923, %v9432, %v9588
        %v10277 = vsel %vm1923, %v9351, %v9590
        %v10278 = vsel %vm1923, %v9433, %v9592
        %v10279 = vsel %vm1923, %v9354, %v9594
        %v10280 = vsel %vm1923, %v9434, %v9596
        %v10281 = vsel %vm1923, %v9357, %v9598
        %v10282 = vsel %vm1923, %v9435, %v9600
        %v10283 = vsel %vm1923, %v9360, %v9602
        %v10284 = vsel %vm1923, %v9436, %v9604
        %v10285 = vsel %vm1923, %v9363, %v9606
        %v10286 = vsel %vm1923, %v9437, %v9608
        %v10287 = vsel %vm1923, %v9366, %v9610
        %v10288 = vsel %vm1923, %v9438, %v9612
        %v10289 = vsel %vm1923, %v9369, %v9614
        %v10290 = vsel %vm1923, %v9439, %v9616
        %v10291 = vsel %vm1923, %v9372, %v9618
        %v10292 = vsel %vm1923, %v9440, %v9620
        %v10293 = vsel %vm1923, %v9375, %v9622
        %v10294 = vsel %vm3865, %v10264, %v9729
        %v10295 = vsel %vm3865, %v10265, %v9731
        %v10296 = vsel %vm3865, %v10266, %v9733
        %v10297 = vsel %vm3865, %v10267, %v9735
        %v10298 = vsel %vm3865, %v10268, %v9737
        %v10299 = vsel %vm3865, %v10269, %v9739
        %v10300 = vsel %vm3865, %v10270, %v9741
        %v10301 = vsel %vm3865, %v10271, %v9743
        %v10302 = vsel %vm3865, %v10272, %v9745
        %v10303 = vsel %vm3865, %v10273, %v9747
        %v10304 = vsel %vm3865, %v10274, %v9749
        %v10305 = vsel %vm3865, %v10275, %v9751
        %v10306 = vsel %vm3865, %v10276, %v9753
        %v10307 = vsel %vm3865, %v10277, %v9755
        %v10308 = vsel %vm3865, %v10278, %v9757
        %v10309 = vsel %vm3865, %v10279, %v9759
        %v10310 = vsel %vm3865, %v10280, %v9761
        %v10311 = vsel %vm3865, %v10281, %v9763
        %v10312 = vsel %vm3865, %v10282, %v9765
        %v10313 = vsel %vm3865, %v10283, %v9767
        %v10314 = vsel %vm3865, %v10284, %v9769
        %v10315 = vsel %vm3865, %v10285, %v9771
        %v10316 = vsel %vm3865, %v10286, %v9773
        %v10317 = vsel %vm3865, %v10287, %v9775
        %v10318 = vsel %vm3865, %v10288, %v9777
        %v10319 = vsel %vm3865, %v10289, %v9779
        %v10320 = vsel %vm3865, %v10290, %v9781
        %v10321 = vsel %vm3865, %v10291, %v9783
        %v10322 = vsel %vm3865, %v10292, %v9785
        %v10323 = vsel %vm3865, %v10293, %v9787
        %v10324 = vsel %vm3874, %v3866, %v9820
        %v10325 = vsel %vm3874, %v3866, %v9822
        %v10326 = vsel %vm3874, %v10294, %v9824
        %v10327 = vsel %vm3874, %v10295, %v9826
        %v10328 = vsel %vm3874, %v10296, %v9828
        %v10329 = vsel %vm3874, %v10297, %v9830
        %v10330 = vsel %vm3874, %v10298, %v9832
        %v10331 = vsel %vm3874, %v10299, %v9834
        %v10332 = vsel %vm3874, %v10300, %v9836
        %v10333 = vsel %vm3874, %v10301, %v9838
        %v10334 = vsel %vm3874, %v10302, %v9840
        %v10335 = vsel %vm3874, %v10303, %v9842
        %v10336 = vsel %vm3874, %v10304, %v9844
        %v10337 = vsel %vm3874, %v10305, %v9846
        %v10338 = vsel %vm3874, %v10306, %v9848
        %v10339 = vsel %vm3874, %v10307, %v9850
        %v10340 = vsel %vm3874, %v10308, %v9852
        %v10341 = vsel %vm3874, %v10309, %v9854
        %v10342 = vsel %vm3874, %v10310, %v9856
        %v10343 = vsel %vm3874, %v10311, %v9858
        %v10344 = vsel %vm3874, %v10312, %v9860
        %v10345 = vsel %vm3874, %v10313, %v9862
        %v10346 = vsel %vm3874, %v10314, %v9864
        %v10347 = vsel %vm3874, %v10315, %v9866
        %v10348 = vsel %vm3874, %v10316, %v9868
        %v10349 = vsel %vm3874, %v10317, %v9870
        %v10350 = vsel %vm3874, %v10318, %v9872
        %v10351 = vsel %vm3874, %v10319, %v9874
        %v10352 = vsel %vm3874, %v10320, %v9876
        %v10353 = vsel %vm3874, %v10321, %v9878
        %v10354 = vsel %vm3874, %v10322, %v9880
        %v10355 = vsel %vm3874, %v10323, %v9882
        %v10356 = vsel %vm1923, %v9490, %v9959
        %v10357 = vsel %vm1923, %v9492, %v9961
        %v10358 = vsel %vm1923, %v9495, %v9963
        %v10359 = vsel %vm1923, %v9497, %v9965
        %v10360 = vsel %vm1923, %v9500, %v9967
        %v10361 = vsel %vm1923, %v9502, %v9969
        %v10362 = vsel %vm1923, %v9505, %v9971
        %v10363 = vsel %vm1923, %v9507, %v9973
        %v10364 = vsel %vm1923, %v9510, %v9975
        %v10365 = vsel %vm1923, %v9512, %v9977
        %v10366 = vsel %vm1923, %v9515, %v9979
        %v10367 = vsel %vm1923, %v9517, %v9981
        %v10368 = vsel %vm1923, %v9520, %v9983
        %v10369 = vsel %vm1923, %v9522, %v9985
        %v10370 = vsel %vm1923, %v9525, %v9987
        %v10371 = vsel %vm1923, %v9527, %v9989
        %v10372 = vsel %vm1923, %v9530, %v9991
        %v10373 = vsel %vm1923, %v9532, %v9993
        %v10374 = vsel %vm1923, %v9535, %v9995
        %v10375 = vsel %vm1923, %v9537, %v9997
        %v10376 = vsel %vm1923, %v9540, %v9999
        %v10377 = vsel %vm1923, %v9542, %v10001
        %v10378 = vsel %vm1923, %v9545, %v10003
        %v10379 = vsel %vm1923, %v9547, %v10005
        %v10380 = vsel %vm1923, %v9550, %v10007
        %v10381 = vsel %vm1923, %v9552, %v10009
        %v10382 = vsel %vm1923, %v9555, %v10011
        %v10383 = vsel %vm1923, %v9557, %v10013
        %v10384 = vsel %vm1923, %v9560, %v10015
        %v10385 = vsel %vm1923, %v9562, %v10017
        %v10386 = vsel %vm1923, %v9918, %v10019
        %v10387 = vsel %vm1923, %v9920, %v10021
        %v10388 = vsel %vm3865, %v10356, %v10055
        %v10389 = vsel %vm3865, %v10357, %v10057
        %v10390 = vsel %vm3865, %v10358, %v10059
        %v10391 = vsel %vm3865, %v10359, %v10061
        %v10392 = vsel %vm3865, %v10360, %v10063
        %v10393 = vsel %vm3865, %v10361, %v10065
        %v10394 = vsel %vm3865, %v10362, %v10067
        %v10395 = vsel %vm3865, %v10363, %v10069
        %v10396 = vsel %vm3865, %v10364, %v10071
        %v10397 = vsel %vm3865, %v10365, %v10073
        %v10398 = vsel %vm3865, %v10366, %v10075
        %v10399 = vsel %vm3865, %v10367, %v10077
        %v10400 = vsel %vm3865, %v10368, %v10079
        %v10401 = vsel %vm3865, %v10369, %v10081
        %v10402 = vsel %vm3865, %v10370, %v10083
        %v10403 = vsel %vm3865, %v10371, %v10085
        %v10404 = vsel %vm3865, %v10372, %v10087
        %v10405 = vsel %vm3865, %v10373, %v10089
        %v10406 = vsel %vm3865, %v10374, %v10091
        %v10407 = vsel %vm3865, %v10375, %v10093
        %v10408 = vsel %vm3865, %v10376, %v10095
        %v10409 = vsel %vm3865, %v10377, %v10097
        %v10410 = vsel %vm3865, %v10378, %v10099
        %v10411 = vsel %vm3865, %v10379, %v10101
        %v10412 = vsel %vm3865, %v10380, %v10103
        %v10413 = vsel %vm3865, %v10381, %v10105
        %v10414 = vsel %vm3865, %v10382, %v10107
        %v10415 = vsel %vm3865, %v10383, %v10109
        %v10416 = vsel %vm3865, %v10384, %v10111
        %v10417 = vsel %vm3865, %v10385, %v10113
        %v10418 = vsel %vm3865, %v10386, %v3816
        %v10419 = vsel %vm3865, %v10387, %v3816
        %v10420 = vsel %vm3874, %v10388, %v10145
        %v10421 = vsel %vm3874, %v10389, %v10147
        %v10422 = vsel %vm3874, %v10390, %v10149
        %v10423 = vsel %vm3874, %v10391, %v10151
        %v10424 = vsel %vm3874, %v10392, %v10153
        %v10425 = vsel %vm3874, %v10393, %v10155
        %v10426 = vsel %vm3874, %v10394, %v10157
        %v10427 = vsel %vm3874, %v10395, %v10159
        %v10428 = vsel %vm3874, %v10396, %v10161
        %v10429 = vsel %vm3874, %v10397, %v10163
        %v10430 = vsel %vm3874, %v10398, %v10165
        %v10431 = vsel %vm3874, %v10399, %v10167
        %v10432 = vsel %vm3874, %v10400, %v10169
        %v10433 = vsel %vm3874, %v10401, %v10171
        %v10434 = vsel %vm3874, %v10402, %v10173
        %v10435 = vsel %vm3874, %v10403, %v10175
        %v10436 = vsel %vm3874, %v10404, %v10177
        %v10437 = vsel %vm3874, %v10405, %v10179
        %v10438 = vsel %vm3874, %v10406, %v10181
        %v10439 = vsel %vm3874, %v10407, %v10183
        %v10440 = vsel %vm3874, %v10408, %v10185
        %v10441 = vsel %vm3874, %v10409, %v10187
        %v10442 = vsel %vm3874, %v10410, %v10189
        %v10443 = vsel %vm3874, %v10411, %v10191
        %v10444 = vsel %vm3874, %v10412, %v10193
        %v10445 = vsel %vm3874, %v10413, %v10195
        %v10446 = vsel %vm3874, %v10414, %v10197
        %v10447 = vsel %vm3874, %v10415, %v10199
        %v10448 = vsel %vm3874, %v10416, %v10201
        %v10449 = vsel %vm3874, %v10417, %v10203
        %v10450 = vsel %vm3874, %v10418, %v3840
        %v10451 = vsel %vm3874, %v10419, %v3840
        %v10452 = vpack.c.bf16 %v10325, %v10324
        %v10453 = vpack.c.bf16 %v10421, %v10420
        %v10454 = vpack.c.bf16 %v9662, %v9660
        %v10455 = vpack.c.bf16 %v10327, %v10326
        %v10456 = vpack.c.bf16 %v10423, %v10422
        %v10457 = vpack.c.bf16 %v9667, %v9665
        %v10458 = vpack.c.bf16 %v10329, %v10328
        %v10459 = vpack.c.bf16 %v10425, %v10424
        %v10460 = vpack.c.bf16 %v9672, %v9670
        %v10461 = vpack.c.bf16 %v10331, %v10330
        %v10462 = vpack.c.bf16 %v10427, %v10426
        %v10463 = vpack.c.bf16 %v9677, %v9675
        %v10464 = vpack.c.bf16 %v10333, %v10332
        %v10465 = vpack.c.bf16 %v10429, %v10428
        %v10466 = vpack.c.bf16 %v9682, %v9680
        %v10467 = vpack.c.bf16 %v10335, %v10334
        %v10468 = vpack.c.bf16 %v10431, %v10430
        %v10469 = vpack.c.bf16 %v9687, %v9685
        %v10470 = vpack.c.bf16 %v10337, %v10336
        %v10471 = vpack.c.bf16 %v10433, %v10432
        %v10472 = vpack.c.bf16 %v9692, %v9690
        %v10473 = vpack.c.bf16 %v10339, %v10338
        %v10474 = vpack.c.bf16 %v10435, %v10434
        %v10475 = vpack.c.bf16 %v9697, %v9695
        %v10476 = vpack.c.bf16 %v10341, %v10340
        %v10477 = vpack.c.bf16 %v10437, %v10436
        %v10478 = vpack.c.bf16 %v9702, %v9700
        %v10479 = vpack.c.bf16 %v10343, %v10342
        %v10480 = vpack.c.bf16 %v10439, %v10438
        %v10481 = vpack.c.bf16 %v9707, %v9705
        %v10482 = vpack.c.bf16 %v10345, %v10344
        %v10483 = vpack.c.bf16 %v10441, %v10440
        %v10484 = vpack.c.bf16 %v9712, %v9710
        %v10485 = vpack.c.bf16 %v10347, %v10346
        %v10486 = vpack.c.bf16 %v10443, %v10442
        %v10487 = vpack.c.bf16 %v9717, %v9715
        %v10488 = vpack.c.bf16 %v10349, %v10348
        %v10489 = vpack.c.bf16 %v10445, %v10444
        %v10490 = vpack.c.bf16 %v9722, %v9720
        %v10491 = vpack.c.bf16 %v10351, %v10350
        %v10492 = vpack.c.bf16 %v10447, %v10446
        %v10493 = vpack.c.bf16 %v9727, %v9725
        %v10494 = vpack.c.bf16 %v10353, %v10352
        %v10495 = vpack.c.bf16 %v10449, %v10448
        %v10496 = vpack.c.bf16 %v9957, %v9955
        %v10497 = vpack.c.bf16 %v10355, %v10354
        %v10498 = vpack.c.bf16 %v10451, %v10450
        %v10499 = vld [vmem:[%s15] sm:$0xf]
        %v10500 = vld [vmem:[%s15 + $0x4] sm:$0xf]
        %v10501 = vld [vmem:[%s15 + $0x8] sm:$0xf]
        %v10502 = vld [vmem:[%s15 + $0xc] sm:$0xf]
        %v10503 = vld [vmem:[%s15 + $0x10] sm:$0xf]
        %v10504 = vld [vmem:[%s15 + $0x14] sm:$0xf]
        %v10505 = vld [vmem:[%s15 + $0x18] sm:$0xf]
        %v10506 = vld [vmem:[%s15 + $0x1c] sm:$0xf]
        %v10507 = vld [vmem:[%s15 + $0x20] sm:$0xf]
        %v10508 = vld [vmem:[%s15 + $0x24] sm:$0xf]
        %v10509 = vld [vmem:[%s15 + $0x28] sm:$0xf]
        %v10510 = vld [vmem:[%s15 + $0x2c] sm:$0xf]
        %v10511 = vld [vmem:[%s15 + $0x30] sm:$0xf]
        %v10512 = vld [vmem:[%s15 + $0x34] sm:$0xf]
        %v10513 = vld [vmem:[%s15 + $0x38] sm:$0xf]
        %v10514 = vld [vmem:[%s15 + $0x3c] sm:$0xf]
        %v10515 = vld [vmem:[%s15 + $0x40] sm:$0xf]
        %v10516 = vld [vmem:[%s15 + $0x44] sm:$0xf]
        %v10517 = vld [vmem:[%s15 + $0x48] sm:$0xf]
        %v10518 = vld [vmem:[%s15 + $0x4c] sm:$0xf]
        %v10519 = vld [vmem:[%s15 + $0x50] sm:$0xf]
        %v10520 = vld [vmem:[%s15 + $0x54] sm:$0xf]
        %v10521 = vld [vmem:[%s15 + $0x58] sm:$0xf]
        %v10522 = vld [vmem:[%s15 + $0x5c] sm:$0xf]
        %v10523 = vld [vmem:[%s15 + $0x60] sm:$0xf]
        %v10524 = vld [vmem:[%s15 + $0x64] sm:$0xf]
        %v10525 = vld [vmem:[%s15 + $0x68] sm:$0xf]
        %v10526 = vld [vmem:[%s15 + $0x6c] sm:$0xf]
        %v10527 = vld [vmem:[%s15 + $0x70] sm:$0xf]
        %v10528 = vld [vmem:[%s15 + $0x74] sm:$0xf]
        %v10529 = vld [vmem:[%s15 + $0x78] sm:$0xf]
        %v10530 = vld [vmem:[%s15 + $0x7c] sm:$0xf]
        %v10531 = vld [vmem:[%s15 + $0x80] sm:$0xf]
        %v10532 = vld [vmem:[%s15 + $0x84] sm:$0xf]
        %v10533 = vld [vmem:[%s15 + $0x88] sm:$0xf]
        %v10534 = vld [vmem:[%s15 + $0x8c] sm:$0xf]
        %v10571 = vunpack.c.l.b16 %v10499
        %v10572 = vunpack.c.l.b16 %v10500
        %v10573 = vunpack.c.l.b16 %v10501
        %v10574 = vunpack.c.l.b16 %v10502
        %v10575 = vunpack.c.l.b16 %v10503
        %v10576 = vunpack.c.l.b16 %v10504
        %v10577 = vunpack.c.l.b16 %v10505
        %v10578 = vunpack.c.l.b16 %v10506
        %v10579 = vunpack.c.l.b16 %v10507
        %v10580 = vunpack.c.l.b16 %v10508
        %v10581 = vunpack.c.l.b16 %v10509
        %v10582 = vunpack.c.l.b16 %v10510
        %v10583 = vunpack.c.l.b16 %v10511
        %v10584 = vunpack.c.l.b16 %v10512
        %v10585 = vunpack.c.l.b16 %v10513
        %v10586 = vunpack.c.l.b16 %v10514
        %v10587 = vunpack.c.l.b16 %v10515
        %v10588 = vunpack.c.l.b16 %v10516
        %v10589 = vunpack.c.l.b16 %v10517
        %v10590 = vunpack.c.l.b16 %v10518
        %v10591 = vunpack.c.l.b16 %v10519
        %v10592 = vunpack.c.l.b16 %v10520
        %v10593 = vunpack.c.l.b16 %v10521
        %v10594 = vunpack.c.l.b16 %v10522
        %v10595 = vunpack.c.l.b16 %v10523
        %v10596 = vunpack.c.l.b16 %v10524
        %v10597 = vunpack.c.l.b16 %v10525
        %v10598 = vunpack.c.l.b16 %v10526
        %v10599 = vunpack.c.l.b16 %v10527
        %v10600 = vunpack.c.l.b16 %v10528
        %v10601 = vunpack.c.l.b16 %v10529
        %v10602 = vunpack.c.l.b16 %v10530
        %v10603 = vunpack.c.l.b16 %v10531
        %v10604 = vunpack.c.l.b16 %v10532
        %v10605 = vunpack.c.l.b16 %v10533
        %v10606 = vunpack.c.l.b16 %v10534
        %v10607 = vpack.c.b16 %v10572, %v10571
        %v10608 = vpack.c.b16 %v10574, %v10573
        %v10609 = vpack.c.b16 %v10576, %v10575
        %v10610 = vpack.c.b16 %v10578, %v10577
        %v10611 = vpack.c.b16 %v10580, %v10579
        %v10612 = vpack.c.b16 %v10582, %v10581
        %v10613 = vpack.c.b16 %v10584, %v10583
        %v10614 = vpack.c.b16 %v10586, %v10585
        %v10615 = vpack.c.b16 %v10588, %v10587
        %v10616 = vpack.c.b16 %v10590, %v10589
        %v10617 = vpack.c.b16 %v10592, %v10591
        %v10618 = vpack.c.b16 %v10594, %v10593
        %v10619 = vpack.c.b16 %v10596, %v10595
        %v10620 = vpack.c.b16 %v10598, %v10597
        %v10621 = vpack.c.b16 %v10600, %v10599
        %v10622 = vpack.c.b16 %v10602, %v10601
        %v10623 = vpack.c.b16 %v10604, %v10603
        %v10624 = vpack.c.b16 %v10606, %v10605
        %v10644 = vsel %vm1923, %v10454, 0
        %v10647 = vsel %vm1923, %v10457, 0
        %v10650 = vsel %vm1923, %v10460, 0
        %v10653 = vsel %vm1923, %v10463, 0
        %v10656 = vsel %vm1923, %v10466, 0
        %v10659 = vsel %vm1923, %v10469, 0
        %v10662 = vsel %vm1923, %v10472, 0
        %v10665 = vsel %vm1923, %v10475, 0
        %v10668 = vsel %vm1923, %v10478, 0
        %v10671 = vsel %vm1923, %v10481, 0
        %v10674 = vsel %vm1923, %v10484, 0
        %v10677 = vsel %vm1923, %v10487, 0
        %v10680 = vsel %vm1923, %v10490, 0
        %v10683 = vsel %vm1923, %v10493, 0
        %v10686 = vsel %vm1923, %v10496, 0
        %v10688 = vsel %vm1923, %v8481, 0
        %10690 = vmatpush.bf16.msra.mxu0 %v10614
        %10691 = vmatpush.bf16.msra.mxu0 %v10613
        %10692 = vmatpush.bf16.msra.mxu0 %v10612
        %10693 = vmatpush.bf16.msra.mxu0 %v10611
        %10694 = vmatpush.bf16.msra.mxu0 %v10610
        %10695 = vmatpush.bf16.msra.mxu0 %v10609
        %10696 = vmatpush.bf16.msra.mxu0 %v10608
        %10697 = vmatpush.bf16.msra.mxu0 %v10607
        %10698 = vmatmul.bf16.gmra.mxu0 %v10452
        %v10699 = vpop.f32.mrf.mxu0
        %v10700 = vadd.f32 0.0, %v10699
        %v10701 = vpop.f32.mrf.mxu0
        %v10702 = vadd.f32 0.0, %v10701
        %10703 = vmatmul.bf16.gmra.mxu0 %v10455
        %v10704 = vpop.f32.mrf.mxu0
        %v10705 = vadd.f32 0.0, %v10704
        %v10706 = vpop.f32.mrf.mxu0
        %v10707 = vadd.f32 0.0, %v10706
        %10708 = vmatmul.bf16.gmra.mxu0 %v10458
        %v10709 = vpop.f32.mrf.mxu0
        %v10710 = vadd.f32 0.0, %v10709
        %v10711 = vpop.f32.mrf.mxu0
        %v10712 = vadd.f32 0.0, %v10711
        %10713 = vmatmul.bf16.gmra.mxu0 %v10461
        %v10714 = vpop.f32.mrf.mxu0
        %v10715 = vadd.f32 0.0, %v10714
        %v10716 = vpop.f32.mrf.mxu0
        %v10717 = vadd.f32 0.0, %v10716
        %10718 = vmatmul.bf16.gmra.mxu0 %v10464
        %v10719 = vpop.f32.mrf.mxu0
        %v10720 = vadd.f32 0.0, %v10719
        %v10721 = vpop.f32.mrf.mxu0
        %v10722 = vadd.f32 0.0, %v10721
        %10723 = vmatmul.bf16.gmra.mxu0 %v10467
        %v10724 = vpop.f32.mrf.mxu0
        %v10725 = vadd.f32 0.0, %v10724
        %v10726 = vpop.f32.mrf.mxu0
        %v10727 = vadd.f32 0.0, %v10726
        %10728 = vmatmul.bf16.gmra.mxu0 %v10470
        %v10729 = vpop.f32.mrf.mxu0
        %v10730 = vadd.f32 0.0, %v10729
        %v10731 = vpop.f32.mrf.mxu0
        %v10732 = vadd.f32 0.0, %v10731
        %10733 = vmatmul.bf16.gmra.mxu0 %v10473
        %v10734 = vpop.f32.mrf.mxu0
        %v10735 = vadd.f32 0.0, %v10734
        %v10736 = vpop.f32.mrf.mxu0
        %v10737 = vadd.f32 0.0, %v10736
        %10738 = vmatmul.bf16.gmra.mxu0 %v10476
        %v10739 = vpop.f32.mrf.mxu0
        %v10740 = vadd.f32 0.0, %v10739
        %v10741 = vpop.f32.mrf.mxu0
        %v10742 = vadd.f32 0.0, %v10741
        %10743 = vmatmul.bf16.gmra.mxu0 %v10479
        %v10744 = vpop.f32.mrf.mxu0
        %v10745 = vadd.f32 0.0, %v10744
        %v10746 = vpop.f32.mrf.mxu0
        %v10747 = vadd.f32 0.0, %v10746
        %10748 = vmatmul.bf16.gmra.mxu0 %v10482
        %v10749 = vpop.f32.mrf.mxu0
        %v10750 = vadd.f32 0.0, %v10749
        %v10751 = vpop.f32.mrf.mxu0
        %v10752 = vadd.f32 0.0, %v10751
        %10753 = vmatmul.bf16.gmra.mxu0 %v10485
        %v10754 = vpop.f32.mrf.mxu0
        %v10755 = vadd.f32 0.0, %v10754
        %v10756 = vpop.f32.mrf.mxu0
        %v10757 = vadd.f32 0.0, %v10756
        %10758 = vmatmul.bf16.gmra.mxu0 %v10488
        %v10759 = vpop.f32.mrf.mxu0
        %v10760 = vadd.f32 0.0, %v10759
        %v10761 = vpop.f32.mrf.mxu0
        %v10762 = vadd.f32 0.0, %v10761
        %10763 = vmatmul.bf16.gmra.mxu0 %v10491
        %v10764 = vpop.f32.mrf.mxu0
        %v10765 = vadd.f32 0.0, %v10764
        %v10766 = vpop.f32.mrf.mxu0
        %v10767 = vadd.f32 0.0, %v10766
        %10768 = vmatmul.bf16.gmra.mxu0 %v10494
        %v10769 = vpop.f32.mrf.mxu0
        %v10770 = vadd.f32 0.0, %v10769
        %v10771 = vpop.f32.mrf.mxu0
        %v10772 = vadd.f32 0.0, %v10771
        %10773 = vmatmul.bf16.gmra.mxu0 %v10497
        %v10774 = vpop.f32.mrf.mxu0
        %v10775 = vadd.f32 0.0, %v10774
        %v10776 = vpop.f32.mrf.mxu0
        %v10777 = vadd.f32 0.0, %v10776
        %10778 = vdwg.mxu0
        %10779 = vmatpush.bf16.msra.mxu0 %v10622
        %10780 = vmatpush.bf16.msra.mxu0 %v10621
        %10781 = vmatpush.bf16.msra.mxu0 %v10620
        %10782 = vmatpush.bf16.msra.mxu0 %v10619
        %10783 = vmatpush.bf16.msra.mxu0 %v10618
        %10784 = vmatpush.bf16.msra.mxu0 %v10617
        %10785 = vmatpush.bf16.msra.mxu0 %v10616
        %10786 = vmatpush.bf16.msra.mxu0 %v10615
        %10787 = vmatmul.bf16.gmra.mxu0 %v10453
        %v10788 = vpop.f32.mrf.mxu0
        %v10789 = vadd.f32 %v10700, %v10788
        %v10790 = vpop.f32.mrf.mxu0
        %v10791 = vadd.f32 %v10702, %v10790
        %10792 = vmatmul.bf16.gmra.mxu0 %v10456
        %v10793 = vpop.f32.mrf.mxu0
        %v10794 = vadd.f32 %v10705, %v10793
        %v10795 = vpop.f32.mrf.mxu0
        %v10796 = vadd.f32 %v10707, %v10795
        %10797 = vmatmul.bf16.gmra.mxu0 %v10459
        %v10798 = vpop.f32.mrf.mxu0
        %v10799 = vadd.f32 %v10710, %v10798
        %v10800 = vpop.f32.mrf.mxu0
        %v10801 = vadd.f32 %v10712, %v10800
        %10802 = vmatmul.bf16.gmra.mxu0 %v10462
        %v10803 = vpop.f32.mrf.mxu0
        %v10804 = vadd.f32 %v10715, %v10803
        %v10805 = vpop.f32.mrf.mxu0
        %v10806 = vadd.f32 %v10717, %v10805
        %10807 = vmatmul.bf16.gmra.mxu0 %v10465
        %v10808 = vpop.f32.mrf.mxu0
        %v10809 = vadd.f32 %v10720, %v10808
        %v10810 = vpop.f32.mrf.mxu0
        %v10811 = vadd.f32 %v10722, %v10810
        %10812 = vmatmul.bf16.gmra.mxu0 %v10468
        %v10813 = vpop.f32.mrf.mxu0
        %v10814 = vadd.f32 %v10725, %v10813
        %v10815 = vpop.f32.mrf.mxu0
        %v10816 = vadd.f32 %v10727, %v10815
        %10817 = vmatmul.bf16.gmra.mxu0 %v10471
        %v10818 = vpop.f32.mrf.mxu0
        %v10819 = vadd.f32 %v10730, %v10818
        %v10820 = vpop.f32.mrf.mxu0
        %v10821 = vadd.f32 %v10732, %v10820
        %10822 = vmatmul.bf16.gmra.mxu0 %v10474
        %v10823 = vpop.f32.mrf.mxu0
        %v10824 = vadd.f32 %v10735, %v10823
        %v10825 = vpop.f32.mrf.mxu0
        %v10826 = vadd.f32 %v10737, %v10825
        %10827 = vmatmul.bf16.gmra.mxu0 %v10477
        %v10828 = vpop.f32.mrf.mxu0
        %v10829 = vadd.f32 %v10740, %v10828
        %v10830 = vpop.f32.mrf.mxu0
        %v10831 = vadd.f32 %v10742, %v10830
        %10832 = vmatmul.bf16.gmra.mxu0 %v10480
        %v10833 = vpop.f32.mrf.mxu0
        %v10834 = vadd.f32 %v10745, %v10833
        %v10835 = vpop.f32.mrf.mxu0
        %v10836 = vadd.f32 %v10747, %v10835
        %10837 = vmatmul.bf16.gmra.mxu0 %v10483
        %v10838 = vpop.f32.mrf.mxu0
        %v10839 = vadd.f32 %v10750, %v10838
        %v10840 = vpop.f32.mrf.mxu0
        %v10841 = vadd.f32 %v10752, %v10840
        %10842 = vmatmul.bf16.gmra.mxu0 %v10486
        %v10843 = vpop.f32.mrf.mxu0
        %v10844 = vadd.f32 %v10755, %v10843
        %v10845 = vpop.f32.mrf.mxu0
        %v10846 = vadd.f32 %v10757, %v10845
        %10847 = vmatmul.bf16.gmra.mxu0 %v10489
        %v10848 = vpop.f32.mrf.mxu0
        %v10849 = vadd.f32 %v10760, %v10848
        %v10850 = vpop.f32.mrf.mxu0
        %v10851 = vadd.f32 %v10762, %v10850
        %10852 = vmatmul.bf16.gmra.mxu0 %v10492
        %v10853 = vpop.f32.mrf.mxu0
        %v10854 = vadd.f32 %v10765, %v10853
        %v10855 = vpop.f32.mrf.mxu0
        %v10856 = vadd.f32 %v10767, %v10855
        %10857 = vmatmul.bf16.gmra.mxu0 %v10495
        %v10858 = vpop.f32.mrf.mxu0
        %v10859 = vadd.f32 %v10770, %v10858
        %v10860 = vpop.f32.mrf.mxu0
        %v10861 = vadd.f32 %v10772, %v10860
        %10862 = vmatmul.bf16.gmra.mxu0 %v10498
        %v10863 = vpop.f32.mrf.mxu0
        %v10864 = vadd.f32 %v10775, %v10863
        %v10865 = vpop.f32.mrf.mxu0
        %v10866 = vadd.f32 %v10777, %v10865
        %10867 = vdwg.mxu0
        %10868 = vmatpush.bf16.msra.mxu0 0
        %10869 = vmatpush.bf16.msra.mxu0 0
        %10870 = vmatpush.bf16.msra.mxu0 0
        %10871 = vmatpush.bf16.msra.mxu0 0
        %10872 = vmatpush.bf16.msra.mxu0 0
        %10873 = vmatpush.bf16.msra.mxu0 0
        %10874 = vmatpush.bf16.msra.mxu0 %v10624
        %10875 = vmatpush.bf16.msra.mxu0 %v10623
        %10876 = vmatmul.bf16.gmra.mxu0 %v10644
        %v10877 = vpop.f32.mrf.mxu0
        %v10878 = vadd.f32 %v10789, %v10877
        %v10879 = vpop.f32.mrf.mxu0
        %v10880 = vadd.f32 %v10791, %v10879
        %10881 = vmatmul.bf16.gmra.mxu0 %v10647
        %v10882 = vpop.f32.mrf.mxu0
        %v10883 = vadd.f32 %v10794, %v10882
        %v10884 = vpop.f32.mrf.mxu0
        %v10885 = vadd.f32 %v10796, %v10884
        %10886 = vmatmul.bf16.gmra.mxu0 %v10650
        %v10887 = vpop.f32.mrf.mxu0
        %v10888 = vadd.f32 %v10799, %v10887
        %v10889 = vpop.f32.mrf.mxu0
        %v10890 = vadd.f32 %v10801, %v10889
        %10891 = vmatmul.bf16.gmra.mxu0 %v10653
        %v10892 = vpop.f32.mrf.mxu0
        %v10893 = vadd.f32 %v10804, %v10892
        %v10894 = vpop.f32.mrf.mxu0
        %v10895 = vadd.f32 %v10806, %v10894
        %10896 = vmatmul.bf16.gmra.mxu0 %v10656
        %v10897 = vpop.f32.mrf.mxu0
        %v10898 = vadd.f32 %v10809, %v10897
        %v10899 = vpop.f32.mrf.mxu0
        %v10900 = vadd.f32 %v10811, %v10899
        %10901 = vmatmul.bf16.gmra.mxu0 %v10659
        %v10902 = vpop.f32.mrf.mxu0
        %v10903 = vadd.f32 %v10814, %v10902
        %v10904 = vpop.f32.mrf.mxu0
        %v10905 = vadd.f32 %v10816, %v10904
        %10906 = vmatmul.bf16.gmra.mxu0 %v10662
        %v10907 = vpop.f32.mrf.mxu0
        %v10908 = vadd.f32 %v10819, %v10907
        %v10909 = vpop.f32.mrf.mxu0
        %v10910 = vadd.f32 %v10821, %v10909
        %10911 = vmatmul.bf16.gmra.mxu0 %v10665
        %v10912 = vpop.f32.mrf.mxu0
        %v10913 = vadd.f32 %v10824, %v10912
        %v10914 = vpop.f32.mrf.mxu0
        %v10915 = vadd.f32 %v10826, %v10914
        %10916 = vmatmul.bf16.gmra.mxu0 %v10668
        %v10917 = vpop.f32.mrf.mxu0
        %v10918 = vadd.f32 %v10829, %v10917
        %v10919 = vpop.f32.mrf.mxu0
        %v10920 = vadd.f32 %v10831, %v10919
        %10921 = vmatmul.bf16.gmra.mxu0 %v10671
        %v10922 = vpop.f32.mrf.mxu0
        %v10923 = vadd.f32 %v10834, %v10922
        %v10924 = vpop.f32.mrf.mxu0
        %v10925 = vadd.f32 %v10836, %v10924
        %10926 = vmatmul.bf16.gmra.mxu0 %v10674
        %v10927 = vpop.f32.mrf.mxu0
        %v10928 = vadd.f32 %v10839, %v10927
        %v10929 = vpop.f32.mrf.mxu0
        %v10930 = vadd.f32 %v10841, %v10929
        %10931 = vmatmul.bf16.gmra.mxu0 %v10677
        %v10932 = vpop.f32.mrf.mxu0
        %v10933 = vadd.f32 %v10844, %v10932
        %v10934 = vpop.f32.mrf.mxu0
        %v10935 = vadd.f32 %v10846, %v10934
        %10936 = vmatmul.bf16.gmra.mxu0 %v10680
        %v10937 = vpop.f32.mrf.mxu0
        %v10938 = vadd.f32 %v10849, %v10937
        %v10939 = vpop.f32.mrf.mxu0
        %v10940 = vadd.f32 %v10851, %v10939
        %10941 = vmatmul.bf16.gmra.mxu0 %v10683
        %v10942 = vpop.f32.mrf.mxu0
        %v10943 = vadd.f32 %v10854, %v10942
        %v10944 = vpop.f32.mrf.mxu0
        %v10945 = vadd.f32 %v10856, %v10944
        %10946 = vmatmul.bf16.gmra.mxu0 %v10686
        %v10947 = vpop.f32.mrf.mxu0
        %v10948 = vadd.f32 %v10859, %v10947
        %v10949 = vpop.f32.mrf.mxu0
        %v10950 = vadd.f32 %v10861, %v10949
        %10951 = vmatmul.bf16.gmra.mxu0 %v10688
        %v10952 = vpop.f32.mrf.mxu0
        %v10953 = vadd.f32 %v10864, %v10952
        %v10954 = vpop.f32.mrf.mxu0
        %v10955 = vadd.f32 %v10866, %v10954
        %10956 = vdwg.mxu0
        %v10957 = vld [vmem:[#allocation2] sm:$0x1]
        %10959 = vset.pattern.permute.xlu0 0
        %10960 = vperm.xlu0 %10959, %v10957
        %v10961 = vpop.permute.xlu0 %10960
        %v10963 = vperm.slane %v10961, 0
        %v10964 = vadd.f32 %v10878, %v10963
        %v10965 = vadd.f32 %v10880, %v10963
        %v10966 = vadd.f32 %v10883, %v10963
        %v10967 = vadd.f32 %v10885, %v10963
        %v10968 = vadd.f32 %v10888, %v10963
        %v10969 = vadd.f32 %v10890, %v10963
        %v10970 = vadd.f32 %v10893, %v10963
        %v10971 = vadd.f32 %v10895, %v10963
        %v10972 = vadd.f32 %v10898, %v10963
        %v10973 = vadd.f32 %v10900, %v10963
        %v10974 = vadd.f32 %v10903, %v10963
        %v10975 = vadd.f32 %v10905, %v10963
        %v10976 = vadd.f32 %v10908, %v10963
        %v10977 = vadd.f32 %v10910, %v10963
        %v10978 = vadd.f32 %v10913, %v10963
        %v10979 = vadd.f32 %v10915, %v10963
        %v10980 = vadd.f32 %v10918, %v10963
        %v10981 = vadd.f32 %v10920, %v10963
        %v10982 = vadd.f32 %v10923, %v10963
        %v10983 = vadd.f32 %v10925, %v10963
        %v10984 = vadd.f32 %v10928, %v10963
        %v10985 = vadd.f32 %v10930, %v10963
        %v10986 = vadd.f32 %v10933, %v10963
        %v10987 = vadd.f32 %v10935, %v10963
        %v10988 = vadd.f32 %v10938, %v10963
        %v10989 = vadd.f32 %v10940, %v10963
        %v10990 = vadd.f32 %v10943, %v10963
        %v10991 = vadd.f32 %v10945, %v10963
        %v10992 = vadd.f32 %v10948, %v10963
        %v10993 = vadd.f32 %v10950, %v10963
        %v10994 = vadd.f32 %v10953, %v10963
        %v10995 = vadd.f32 %v10955, %v10963
        %v10996 = vxor.u32 %v10964, 2147483648
        %v10997 = vxor.u32 %v10965, 2147483648
        %v10998 = vxor.u32 %v10966, 2147483648
        %v10999 = vxor.u32 %v10967, 2147483648
        %v11000 = vxor.u32 %v10968, 2147483648
        %v11001 = vxor.u32 %v10969, 2147483648
        %v11002 = vxor.u32 %v10970, 2147483648
        %v11003 = vxor.u32 %v10971, 2147483648
        %v11004 = vxor.u32 %v10972, 2147483648
        %v11005 = vxor.u32 %v10973, 2147483648
        %v11006 = vxor.u32 %v10974, 2147483648
        %v11007 = vxor.u32 %v10975, 2147483648
        %v11008 = vxor.u32 %v10976, 2147483648
        %v11009 = vxor.u32 %v10977, 2147483648
        %v11010 = vxor.u32 %v10978, 2147483648
        %v11011 = vxor.u32 %v10979, 2147483648
        %v11012 = vxor.u32 %v10980, 2147483648
        %v11013 = vxor.u32 %v10981, 2147483648
        %v11014 = vxor.u32 %v10982, 2147483648
        %v11015 = vxor.u32 %v10983, 2147483648
        %v11016 = vxor.u32 %v10984, 2147483648
        %v11017 = vxor.u32 %v10985, 2147483648
        %v11018 = vxor.u32 %v10986, 2147483648
        %v11019 = vxor.u32 %v10987, 2147483648
        %v11020 = vxor.u32 %v10988, 2147483648
        %v11021 = vxor.u32 %v10989, 2147483648
        %v11022 = vxor.u32 %v10990, 2147483648
        %v11023 = vxor.u32 %v10991, 2147483648
        %v11024 = vxor.u32 %v10992, 2147483648
        %v11025 = vxor.u32 %v10993, 2147483648
        %v11026 = vxor.u32 %v10994, 2147483648
        %v11027 = vxor.u32 %v10995, 2147483648
        %v11028 = vmul.f32 %v10996, 1.442695
        %v11029 = vpow.pop %v11028
        %v11030 = vmul.f32 %v10997, 1.442695
        %v11031 = vpow.pop %v11030
        %v11032 = vmul.f32 %v10998, 1.442695
        %v11033 = vpow.pop %v11032
        %v11034 = vmul.f32 %v10999, 1.442695
        %v11035 = vpow.pop %v11034
        %v11036 = vmul.f32 %v11000, 1.442695
        %v11037 = vpow.pop %v11036
        %v11038 = vmul.f32 %v11001, 1.442695
        %v11039 = vpow.pop %v11038
        %v11040 = vmul.f32 %v11002, 1.442695
        %v11041 = vpow.pop %v11040
        %v11042 = vmul.f32 %v11003, 1.442695
        %v11043 = vpow.pop %v11042
        %v11044 = vmul.f32 %v11004, 1.442695
        %v11045 = vpow.pop %v11044
        %v11046 = vmul.f32 %v11005, 1.442695
        %v11047 = vpow.pop %v11046
        %v11048 = vmul.f32 %v11006, 1.442695
        %v11049 = vpow.pop %v11048
        %v11050 = vmul.f32 %v11007, 1.442695
        %v11051 = vpow.pop %v11050
        %v11052 = vmul.f32 %v11008, 1.442695
        %v11053 = vpow.pop %v11052
        %v11054 = vmul.f32 %v11009, 1.442695
        %v11055 = vpow.pop %v11054
        %v11056 = vmul.f32 %v11010, 1.442695
        %v11057 = vpow.pop %v11056
        %v11058 = vmul.f32 %v11011, 1.442695
        %v11059 = vpow.pop %v11058
        %v11060 = vmul.f32 %v11012, 1.442695
        %v11061 = vpow.pop %v11060
        %v11062 = vmul.f32 %v11013, 1.442695
        %v11063 = vpow.pop %v11062
        %v11064 = vmul.f32 %v11014, 1.442695
        %v11065 = vpow.pop %v11064
        %v11066 = vmul.f32 %v11015, 1.442695
        %v11067 = vpow.pop %v11066
        %v11068 = vmul.f32 %v11016, 1.442695
        %v11069 = vpow.pop %v11068
        %v11070 = vmul.f32 %v11017, 1.442695
        %v11071 = vpow.pop %v11070
        %v11072 = vmul.f32 %v11018, 1.442695
        %v11073 = vpow.pop %v11072
        %v11074 = vmul.f32 %v11019, 1.442695
        %v11075 = vpow.pop %v11074
        %v11076 = vmul.f32 %v11020, 1.442695
        %v11077 = vpow.pop %v11076
        %v11078 = vmul.f32 %v11021, 1.442695
        %v11079 = vpow.pop %v11078
        %v11080 = vmul.f32 %v11022, 1.442695
        %v11081 = vpow.pop %v11080
        %v11082 = vmul.f32 %v11023, 1.442695
        %v11083 = vpow.pop %v11082
        %v11084 = vmul.f32 %v11024, 1.442695
        %v11085 = vpow.pop %v11084
        %v11086 = vmul.f32 %v11025, 1.442695
        %v11087 = vpow.pop %v11086
        %v11088 = vmul.f32 %v11026, 1.442695
        %v11089 = vpow.pop %v11088
        %v11090 = vmul.f32 %v11027, 1.442695
        %v11091 = vpow.pop %v11090
        %v11092 = vadd.f32 %v11029, 1.0
        %v11093 = vadd.f32 %v11031, 1.0
        %v11094 = vadd.f32 %v11033, 1.0
        %v11095 = vadd.f32 %v11035, 1.0
        %v11096 = vadd.f32 %v11037, 1.0
        %v11097 = vadd.f32 %v11039, 1.0
        %v11098 = vadd.f32 %v11041, 1.0
        %v11099 = vadd.f32 %v11043, 1.0
        %v11100 = vadd.f32 %v11045, 1.0
        %v11101 = vadd.f32 %v11047, 1.0
        %v11102 = vadd.f32 %v11049, 1.0
        %v11103 = vadd.f32 %v11051, 1.0
        %v11104 = vadd.f32 %v11053, 1.0
        %v11105 = vadd.f32 %v11055, 1.0
        %v11106 = vadd.f32 %v11057, 1.0
        %v11107 = vadd.f32 %v11059, 1.0
        %v11108 = vadd.f32 %v11061, 1.0
        %v11109 = vadd.f32 %v11063, 1.0
        %v11110 = vadd.f32 %v11065, 1.0
        %v11111 = vadd.f32 %v11067, 1.0
        %v11112 = vadd.f32 %v11069, 1.0
        %v11113 = vadd.f32 %v11071, 1.0
        %v11114 = vadd.f32 %v11073, 1.0
        %v11115 = vadd.f32 %v11075, 1.0
        %v11116 = vadd.f32 %v11077, 1.0
        %v11117 = vadd.f32 %v11079, 1.0
        %v11118 = vadd.f32 %v11081, 1.0
        %v11119 = vadd.f32 %v11083, 1.0
        %v11120 = vadd.f32 %v11085, 1.0
        %v11121 = vadd.f32 %v11087, 1.0
        %v11122 = vadd.f32 %v11089, 1.0
        %v11123 = vadd.f32 %v11091, 1.0
        %v11124 = vrcp.pop %v11092
        %v11125 = vmul.f32 %v11092, %v11124
        %v11126 = vsub.f32 1.0, %v11125
        %v11127 = vmul.f32 %v11124, %v11126
        %v11128 = vadd.f32 %v11124, %v11127
        %vm11129 = vweird.f32 %v11092
        %vm11130 = vweird.f32 %v11124
        %vm11131 = vmor %vm11129, %vm11130
        %v11132 = vsel %vm11131, %v11124, %v11128
        %v11133 = vand.u32 2147483647, %v11092
        %vm11134 = vcmp.eq.f32.partialorder %v11133, 8.507059e+37
        %v11135 = vand.u32 %v11092, 2147483648
        %v11136 = vor.u32 1.1754944e-38, %v11135
        %v11137 = vsel %vm11134, %v11136, %v11132
        %v11138 = vmul.f32 1.0, %v11137
        %v11139 = vrcp.pop %v11093
        %v11140 = vmul.f32 %v11093, %v11139
        %v11141 = vsub.f32 1.0, %v11140
        %v11142 = vmul.f32 %v11139, %v11141
        %v11143 = vadd.f32 %v11139, %v11142
        %vm11144 = vweird.f32 %v11093
        %vm11145 = vweird.f32 %v11139
        %vm11146 = vmor %vm11144, %vm11145
        %v11147 = vsel %vm11146, %v11139, %v11143
        %v11148 = vand.u32 2147483647, %v11093
        %vm11149 = vcmp.eq.f32.partialorder %v11148, 8.507059e+37
        %v11150 = vand.u32 %v11093, 2147483648
        %v11151 = vor.u32 1.1754944e-38, %v11150
        %v11152 = vsel %vm11149, %v11151, %v11147
        %v11153 = vmul.f32 1.0, %v11152
        %v11154 = vrcp.pop %v11094
        %v11155 = vmul.f32 %v11094, %v11154
        %v11156 = vsub.f32 1.0, %v11155
        %v11157 = vmul.f32 %v11154, %v11156
        %v11158 = vadd.f32 %v11154, %v11157
        %vm11159 = vweird.f32 %v11094
        %vm11160 = vweird.f32 %v11154
        %vm11161 = vmor %vm11159, %vm11160
        %v11162 = vsel %vm11161, %v11154, %v11158
        %v11163 = vand.u32 2147483647, %v11094
        %vm11164 = vcmp.eq.f32.partialorder %v11163, 8.507059e+37
        %v11165 = vand.u32 %v11094, 2147483648
        %v11166 = vor.u32 1.1754944e-38, %v11165
        %v11167 = vsel %vm11164, %v11166, %v11162
        %v11168 = vmul.f32 1.0, %v11167
        %v11169 = vrcp.pop %v11095
        %v11170 = vmul.f32 %v11095, %v11169
        %v11171 = vsub.f32 1.0, %v11170
        %v11172 = vmul.f32 %v11169, %v11171
        %v11173 = vadd.f32 %v11169, %v11172
        %vm11174 = vweird.f32 %v11095
        %vm11175 = vweird.f32 %v11169
        %vm11176 = vmor %vm11174, %vm11175
        %v11177 = vsel %vm11176, %v11169, %v11173
        %v11178 = vand.u32 2147483647, %v11095
        %vm11179 = vcmp.eq.f32.partialorder %v11178, 8.507059e+37
        %v11180 = vand.u32 %v11095, 2147483648
        %v11181 = vor.u32 1.1754944e-38, %v11180
        %v11182 = vsel %vm11179, %v11181, %v11177
        %v11183 = vmul.f32 1.0, %v11182
        %v11184 = vrcp.pop %v11096
        %v11185 = vmul.f32 %v11096, %v11184
        %v11186 = vsub.f32 1.0, %v11185
        %v11187 = vmul.f32 %v11184, %v11186
        %v11188 = vadd.f32 %v11184, %v11187
        %vm11189 = vweird.f32 %v11096
        %vm11190 = vweird.f32 %v11184
        %vm11191 = vmor %vm11189, %vm11190
        %v11192 = vsel %vm11191, %v11184, %v11188
        %v11193 = vand.u32 2147483647, %v11096
        %vm11194 = vcmp.eq.f32.partialorder %v11193, 8.507059e+37
        %v11195 = vand.u32 %v11096, 2147483648
        %v11196 = vor.u32 1.1754944e-38, %v11195
        %v11197 = vsel %vm11194, %v11196, %v11192
        %v11198 = vmul.f32 1.0, %v11197
        %v11199 = vrcp.pop %v11097
        %v11200 = vmul.f32 %v11097, %v11199
        %v11201 = vsub.f32 1.0, %v11200
        %v11202 = vmul.f32 %v11199, %v11201
        %v11203 = vadd.f32 %v11199, %v11202
        %vm11204 = vweird.f32 %v11097
        %vm11205 = vweird.f32 %v11199
        %vm11206 = vmor %vm11204, %vm11205
        %v11207 = vsel %vm11206, %v11199, %v11203
        %v11208 = vand.u32 2147483647, %v11097
        %vm11209 = vcmp.eq.f32.partialorder %v11208, 8.507059e+37
        %v11210 = vand.u32 %v11097, 2147483648
        %v11211 = vor.u32 1.1754944e-38, %v11210
        %v11212 = vsel %vm11209, %v11211, %v11207
        %v11213 = vmul.f32 1.0, %v11212
        %v11214 = vrcp.pop %v11098
        %v11215 = vmul.f32 %v11098, %v11214
        %v11216 = vsub.f32 1.0, %v11215
        %v11217 = vmul.f32 %v11214, %v11216
        %v11218 = vadd.f32 %v11214, %v11217
        %vm11219 = vweird.f32 %v11098
        %vm11220 = vweird.f32 %v11214
        %vm11221 = vmor %vm11219, %vm11220
        %v11222 = vsel %vm11221, %v11214, %v11218
        %v11223 = vand.u32 2147483647, %v11098
        %vm11224 = vcmp.eq.f32.partialorder %v11223, 8.507059e+37
        %v11225 = vand.u32 %v11098, 2147483648
        %v11226 = vor.u32 1.1754944e-38, %v11225
        %v11227 = vsel %vm11224, %v11226, %v11222
        %v11228 = vmul.f32 1.0, %v11227
        %v11229 = vrcp.pop %v11099
        %v11230 = vmul.f32 %v11099, %v11229
        %v11231 = vsub.f32 1.0, %v11230
        %v11232 = vmul.f32 %v11229, %v11231
        %v11233 = vadd.f32 %v11229, %v11232
        %vm11234 = vweird.f32 %v11099
        %vm11235 = vweird.f32 %v11229
        %vm11236 = vmor %vm11234, %vm11235
        %v11237 = vsel %vm11236, %v11229, %v11233
        %v11238 = vand.u32 2147483647, %v11099
        %vm11239 = vcmp.eq.f32.partialorder %v11238, 8.507059e+37
        %v11240 = vand.u32 %v11099, 2147483648
        %v11241 = vor.u32 1.1754944e-38, %v11240
        %v11242 = vsel %vm11239, %v11241, %v11237
        %v11243 = vmul.f32 1.0, %v11242
        %v11244 = vrcp.pop %v11100
        %v11245 = vmul.f32 %v11100, %v11244
        %v11246 = vsub.f32 1.0, %v11245
        %v11247 = vmul.f32 %v11244, %v11246
        %v11248 = vadd.f32 %v11244, %v11247
        %vm11249 = vweird.f32 %v11100
        %vm11250 = vweird.f32 %v11244
        %vm11251 = vmor %vm11249, %vm11250
        %v11252 = vsel %vm11251, %v11244, %v11248
        %v11253 = vand.u32 2147483647, %v11100
        %vm11254 = vcmp.eq.f32.partialorder %v11253, 8.507059e+37
        %v11255 = vand.u32 %v11100, 2147483648
        %v11256 = vor.u32 1.1754944e-38, %v11255
        %v11257 = vsel %vm11254, %v11256, %v11252
        %v11258 = vmul.f32 1.0, %v11257
        %v11259 = vrcp.pop %v11101
        %v11260 = vmul.f32 %v11101, %v11259
        %v11261 = vsub.f32 1.0, %v11260
        %v11262 = vmul.f32 %v11259, %v11261
        %v11263 = vadd.f32 %v11259, %v11262
        %vm11264 = vweird.f32 %v11101
        %vm11265 = vweird.f32 %v11259
        %vm11266 = vmor %vm11264, %vm11265
        %v11267 = vsel %vm11266, %v11259, %v11263
        %v11268 = vand.u32 2147483647, %v11101
        %vm11269 = vcmp.eq.f32.partialorder %v11268, 8.507059e+37
        %v11270 = vand.u32 %v11101, 2147483648
        %v11271 = vor.u32 1.1754944e-38, %v11270
        %v11272 = vsel %vm11269, %v11271, %v11267
        %v11273 = vmul.f32 1.0, %v11272
        %v11274 = vrcp.pop %v11102
        %v11275 = vmul.f32 %v11102, %v11274
        %v11276 = vsub.f32 1.0, %v11275
        %v11277 = vmul.f32 %v11274, %v11276
        %v11278 = vadd.f32 %v11274, %v11277
        %vm11279 = vweird.f32 %v11102
        %vm11280 = vweird.f32 %v11274
        %vm11281 = vmor %vm11279, %vm11280
        %v11282 = vsel %vm11281, %v11274, %v11278
        %v11283 = vand.u32 2147483647, %v11102
        %vm11284 = vcmp.eq.f32.partialorder %v11283, 8.507059e+37
        %v11285 = vand.u32 %v11102, 2147483648
        %v11286 = vor.u32 1.1754944e-38, %v11285
        %v11287 = vsel %vm11284, %v11286, %v11282
        %v11288 = vmul.f32 1.0, %v11287
        %v11289 = vrcp.pop %v11103
        %v11290 = vmul.f32 %v11103, %v11289
        %v11291 = vsub.f32 1.0, %v11290
        %v11292 = vmul.f32 %v11289, %v11291
        %v11293 = vadd.f32 %v11289, %v11292
        %vm11294 = vweird.f32 %v11103
        %vm11295 = vweird.f32 %v11289
        %vm11296 = vmor %vm11294, %vm11295
        %v11297 = vsel %vm11296, %v11289, %v11293
        %v11298 = vand.u32 2147483647, %v11103
        %vm11299 = vcmp.eq.f32.partialorder %v11298, 8.507059e+37
        %v11300 = vand.u32 %v11103, 2147483648
        %v11301 = vor.u32 1.1754944e-38, %v11300
        %v11302 = vsel %vm11299, %v11301, %v11297
        %v11303 = vmul.f32 1.0, %v11302
        %v11304 = vrcp.pop %v11104
        %v11305 = vmul.f32 %v11104, %v11304
        %v11306 = vsub.f32 1.0, %v11305
        %v11307 = vmul.f32 %v11304, %v11306
        %v11308 = vadd.f32 %v11304, %v11307
        %vm11309 = vweird.f32 %v11104
        %vm11310 = vweird.f32 %v11304
        %vm11311 = vmor %vm11309, %vm11310
        %v11312 = vsel %vm11311, %v11304, %v11308
        %v11313 = vand.u32 2147483647, %v11104
        %vm11314 = vcmp.eq.f32.partialorder %v11313, 8.507059e+37
        %v11315 = vand.u32 %v11104, 2147483648
        %v11316 = vor.u32 1.1754944e-38, %v11315
        %v11317 = vsel %vm11314, %v11316, %v11312
        %v11318 = vmul.f32 1.0, %v11317
        %v11319 = vrcp.pop %v11105
        %v11320 = vmul.f32 %v11105, %v11319
        %v11321 = vsub.f32 1.0, %v11320
        %v11322 = vmul.f32 %v11319, %v11321
        %v11323 = vadd.f32 %v11319, %v11322
        %vm11324 = vweird.f32 %v11105
        %vm11325 = vweird.f32 %v11319
        %vm11326 = vmor %vm11324, %vm11325
        %v11327 = vsel %vm11326, %v11319, %v11323
        %v11328 = vand.u32 2147483647, %v11105
        %vm11329 = vcmp.eq.f32.partialorder %v11328, 8.507059e+37
        %v11330 = vand.u32 %v11105, 2147483648
        %v11331 = vor.u32 1.1754944e-38, %v11330
        %v11332 = vsel %vm11329, %v11331, %v11327
        %v11333 = vmul.f32 1.0, %v11332
        %v11334 = vrcp.pop %v11106
        %v11335 = vmul.f32 %v11106, %v11334
        %v11336 = vsub.f32 1.0, %v11335
        %v11337 = vmul.f32 %v11334, %v11336
        %v11338 = vadd.f32 %v11334, %v11337
        %vm11339 = vweird.f32 %v11106
        %vm11340 = vweird.f32 %v11334
        %vm11341 = vmor %vm11339, %vm11340
        %v11342 = vsel %vm11341, %v11334, %v11338
        %v11343 = vand.u32 2147483647, %v11106
        %vm11344 = vcmp.eq.f32.partialorder %v11343, 8.507059e+37
        %v11345 = vand.u32 %v11106, 2147483648
        %v11346 = vor.u32 1.1754944e-38, %v11345
        %v11347 = vsel %vm11344, %v11346, %v11342
        %v11348 = vmul.f32 1.0, %v11347
        %v11349 = vrcp.pop %v11107
        %v11350 = vmul.f32 %v11107, %v11349
        %v11351 = vsub.f32 1.0, %v11350
        %v11352 = vmul.f32 %v11349, %v11351
        %v11353 = vadd.f32 %v11349, %v11352
        %vm11354 = vweird.f32 %v11107
        %vm11355 = vweird.f32 %v11349
        %vm11356 = vmor %vm11354, %vm11355
        %v11357 = vsel %vm11356, %v11349, %v11353
        %v11358 = vand.u32 2147483647, %v11107
        %vm11359 = vcmp.eq.f32.partialorder %v11358, 8.507059e+37
        %v11360 = vand.u32 %v11107, 2147483648
        %v11361 = vor.u32 1.1754944e-38, %v11360
        %v11362 = vsel %vm11359, %v11361, %v11357
        %v11363 = vmul.f32 1.0, %v11362
        %v11364 = vrcp.pop %v11108
        %v11365 = vmul.f32 %v11108, %v11364
        %v11366 = vsub.f32 1.0, %v11365
        %v11367 = vmul.f32 %v11364, %v11366
        %v11368 = vadd.f32 %v11364, %v11367
        %vm11369 = vweird.f32 %v11108
        %vm11370 = vweird.f32 %v11364
        %vm11371 = vmor %vm11369, %vm11370
        %v11372 = vsel %vm11371, %v11364, %v11368
        %v11373 = vand.u32 2147483647, %v11108
        %vm11374 = vcmp.eq.f32.partialorder %v11373, 8.507059e+37
        %v11375 = vand.u32 %v11108, 2147483648
        %v11376 = vor.u32 1.1754944e-38, %v11375
        %v11377 = vsel %vm11374, %v11376, %v11372
        %v11378 = vmul.f32 1.0, %v11377
        %v11379 = vrcp.pop %v11109
        %v11380 = vmul.f32 %v11109, %v11379
        %v11381 = vsub.f32 1.0, %v11380
        %v11382 = vmul.f32 %v11379, %v11381
        %v11383 = vadd.f32 %v11379, %v11382
        %vm11384 = vweird.f32 %v11109
        %vm11385 = vweird.f32 %v11379
        %vm11386 = vmor %vm11384, %vm11385
        %v11387 = vsel %vm11386, %v11379, %v11383
        %v11388 = vand.u32 2147483647, %v11109
        %vm11389 = vcmp.eq.f32.partialorder %v11388, 8.507059e+37
        %v11390 = vand.u32 %v11109, 2147483648
        %v11391 = vor.u32 1.1754944e-38, %v11390
        %v11392 = vsel %vm11389, %v11391, %v11387
        %v11393 = vmul.f32 1.0, %v11392
        %v11394 = vrcp.pop %v11110
        %v11395 = vmul.f32 %v11110, %v11394
        %v11396 = vsub.f32 1.0, %v11395
        %v11397 = vmul.f32 %v11394, %v11396
        %v11398 = vadd.f32 %v11394, %v11397
        %vm11399 = vweird.f32 %v11110
        %vm11400 = vweird.f32 %v11394
        %vm11401 = vmor %vm11399, %vm11400
        %v11402 = vsel %vm11401, %v11394, %v11398
        %v11403 = vand.u32 2147483647, %v11110
        %vm11404 = vcmp.eq.f32.partialorder %v11403, 8.507059e+37
        %v11405 = vand.u32 %v11110, 2147483648
        %v11406 = vor.u32 1.1754944e-38, %v11405
        %v11407 = vsel %vm11404, %v11406, %v11402
        %v11408 = vmul.f32 1.0, %v11407
        %v11409 = vrcp.pop %v11111
        %v11410 = vmul.f32 %v11111, %v11409
        %v11411 = vsub.f32 1.0, %v11410
        %v11412 = vmul.f32 %v11409, %v11411
        %v11413 = vadd.f32 %v11409, %v11412
        %vm11414 = vweird.f32 %v11111
        %vm11415 = vweird.f32 %v11409
        %vm11416 = vmor %vm11414, %vm11415
        %v11417 = vsel %vm11416, %v11409, %v11413
        %v11418 = vand.u32 2147483647, %v11111
        %vm11419 = vcmp.eq.f32.partialorder %v11418, 8.507059e+37
        %v11420 = vand.u32 %v11111, 2147483648
        %v11421 = vor.u32 1.1754944e-38, %v11420
        %v11422 = vsel %vm11419, %v11421, %v11417
        %v11423 = vmul.f32 1.0, %v11422
        %v11424 = vrcp.pop %v11112
        %v11425 = vmul.f32 %v11112, %v11424
        %v11426 = vsub.f32 1.0, %v11425
        %v11427 = vmul.f32 %v11424, %v11426
        %v11428 = vadd.f32 %v11424, %v11427
        %vm11429 = vweird.f32 %v11112
        %vm11430 = vweird.f32 %v11424
        %vm11431 = vmor %vm11429, %vm11430
        %v11432 = vsel %vm11431, %v11424, %v11428
        %v11433 = vand.u32 2147483647, %v11112
        %vm11434 = vcmp.eq.f32.partialorder %v11433, 8.507059e+37
        %v11435 = vand.u32 %v11112, 2147483648
        %v11436 = vor.u32 1.1754944e-38, %v11435
        %v11437 = vsel %vm11434, %v11436, %v11432
        %v11438 = vmul.f32 1.0, %v11437
        %v11439 = vrcp.pop %v11113
        %v11440 = vmul.f32 %v11113, %v11439
        %v11441 = vsub.f32 1.0, %v11440
        %v11442 = vmul.f32 %v11439, %v11441
        %v11443 = vadd.f32 %v11439, %v11442
        %vm11444 = vweird.f32 %v11113
        %vm11445 = vweird.f32 %v11439
        %vm11446 = vmor %vm11444, %vm11445
        %v11447 = vsel %vm11446, %v11439, %v11443
        %v11448 = vand.u32 2147483647, %v11113
        %vm11449 = vcmp.eq.f32.partialorder %v11448, 8.507059e+37
        %v11450 = vand.u32 %v11113, 2147483648
        %v11451 = vor.u32 1.1754944e-38, %v11450
        %v11452 = vsel %vm11449, %v11451, %v11447
        %v11453 = vmul.f32 1.0, %v11452
        %v11454 = vrcp.pop %v11114
        %v11455 = vmul.f32 %v11114, %v11454
        %v11456 = vsub.f32 1.0, %v11455
        %v11457 = vmul.f32 %v11454, %v11456
        %v11458 = vadd.f32 %v11454, %v11457
        %vm11459 = vweird.f32 %v11114
        %vm11460 = vweird.f32 %v11454
        %vm11461 = vmor %vm11459, %vm11460
        %v11462 = vsel %vm11461, %v11454, %v11458
        %v11463 = vand.u32 2147483647, %v11114
        %vm11464 = vcmp.eq.f32.partialorder %v11463, 8.507059e+37
        %v11465 = vand.u32 %v11114, 2147483648
        %v11466 = vor.u32 1.1754944e-38, %v11465
        %v11467 = vsel %vm11464, %v11466, %v11462
        %v11468 = vmul.f32 1.0, %v11467
        %v11469 = vrcp.pop %v11115
        %v11470 = vmul.f32 %v11115, %v11469
        %v11471 = vsub.f32 1.0, %v11470
        %v11472 = vmul.f32 %v11469, %v11471
        %v11473 = vadd.f32 %v11469, %v11472
        %vm11474 = vweird.f32 %v11115
        %vm11475 = vweird.f32 %v11469
        %vm11476 = vmor %vm11474, %vm11475
        %v11477 = vsel %vm11476, %v11469, %v11473
        %v11478 = vand.u32 2147483647, %v11115
        %vm11479 = vcmp.eq.f32.partialorder %v11478, 8.507059e+37
        %v11480 = vand.u32 %v11115, 2147483648
        %v11481 = vor.u32 1.1754944e-38, %v11480
        %v11482 = vsel %vm11479, %v11481, %v11477
        %v11483 = vmul.f32 1.0, %v11482
        %v11484 = vrcp.pop %v11116
        %v11485 = vmul.f32 %v11116, %v11484
        %v11486 = vsub.f32 1.0, %v11485
        %v11487 = vmul.f32 %v11484, %v11486
        %v11488 = vadd.f32 %v11484, %v11487
        %vm11489 = vweird.f32 %v11116
        %vm11490 = vweird.f32 %v11484
        %vm11491 = vmor %vm11489, %vm11490
        %v11492 = vsel %vm11491, %v11484, %v11488
        %v11493 = vand.u32 2147483647, %v11116
        %vm11494 = vcmp.eq.f32.partialorder %v11493, 8.507059e+37
        %v11495 = vand.u32 %v11116, 2147483648
        %v11496 = vor.u32 1.1754944e-38, %v11495
        %v11497 = vsel %vm11494, %v11496, %v11492
        %v11498 = vmul.f32 1.0, %v11497
        %v11499 = vrcp.pop %v11117
        %v11500 = vmul.f32 %v11117, %v11499
        %v11501 = vsub.f32 1.0, %v11500
        %v11502 = vmul.f32 %v11499, %v11501
        %v11503 = vadd.f32 %v11499, %v11502
        %vm11504 = vweird.f32 %v11117
        %vm11505 = vweird.f32 %v11499
        %vm11506 = vmor %vm11504, %vm11505
        %v11507 = vsel %vm11506, %v11499, %v11503
        %v11508 = vand.u32 2147483647, %v11117
        %vm11509 = vcmp.eq.f32.partialorder %v11508, 8.507059e+37
        %v11510 = vand.u32 %v11117, 2147483648
        %v11511 = vor.u32 1.1754944e-38, %v11510
        %v11512 = vsel %vm11509, %v11511, %v11507
        %v11513 = vmul.f32 1.0, %v11512
        %v11514 = vrcp.pop %v11118
        %v11515 = vmul.f32 %v11118, %v11514
        %v11516 = vsub.f32 1.0, %v11515
        %v11517 = vmul.f32 %v11514, %v11516
        %v11518 = vadd.f32 %v11514, %v11517
        %vm11519 = vweird.f32 %v11118
        %vm11520 = vweird.f32 %v11514
        %vm11521 = vmor %vm11519, %vm11520
        %v11522 = vsel %vm11521, %v11514, %v11518
        %v11523 = vand.u32 2147483647, %v11118
        %vm11524 = vcmp.eq.f32.partialorder %v11523, 8.507059e+37
        %v11525 = vand.u32 %v11118, 2147483648
        %v11526 = vor.u32 1.1754944e-38, %v11525
        %v11527 = vsel %vm11524, %v11526, %v11522
        %v11528 = vmul.f32 1.0, %v11527
        %v11529 = vrcp.pop %v11119
        %v11530 = vmul.f32 %v11119, %v11529
        %v11531 = vsub.f32 1.0, %v11530
        %v11532 = vmul.f32 %v11529, %v11531
        %v11533 = vadd.f32 %v11529, %v11532
        %vm11534 = vweird.f32 %v11119
        %vm11535 = vweird.f32 %v11529
        %vm11536 = vmor %vm11534, %vm11535
        %v11537 = vsel %vm11536, %v11529, %v11533
        %v11538 = vand.u32 2147483647, %v11119
        %vm11539 = vcmp.eq.f32.partialorder %v11538, 8.507059e+37
        %v11540 = vand.u32 %v11119, 2147483648
        %v11541 = vor.u32 1.1754944e-38, %v11540
        %v11542 = vsel %vm11539, %v11541, %v11537
        %v11543 = vmul.f32 1.0, %v11542
        %v11544 = vrcp.pop %v11120
        %v11545 = vmul.f32 %v11120, %v11544
        %v11546 = vsub.f32 1.0, %v11545
        %v11547 = vmul.f32 %v11544, %v11546
        %v11548 = vadd.f32 %v11544, %v11547
        %vm11549 = vweird.f32 %v11120
        %vm11550 = vweird.f32 %v11544
        %vm11551 = vmor %vm11549, %vm11550
        %v11552 = vsel %vm11551, %v11544, %v11548
        %v11553 = vand.u32 2147483647, %v11120
        %vm11554 = vcmp.eq.f32.partialorder %v11553, 8.507059e+37
        %v11555 = vand.u32 %v11120, 2147483648
        %v11556 = vor.u32 1.1754944e-38, %v11555
        %v11557 = vsel %vm11554, %v11556, %v11552
        %v11558 = vmul.f32 1.0, %v11557
        %v11559 = vrcp.pop %v11121
        %v11560 = vmul.f32 %v11121, %v11559
        %v11561 = vsub.f32 1.0, %v11560
        %v11562 = vmul.f32 %v11559, %v11561
        %v11563 = vadd.f32 %v11559, %v11562
        %vm11564 = vweird.f32 %v11121
        %vm11565 = vweird.f32 %v11559
        %vm11566 = vmor %vm11564, %vm11565
        %v11567 = vsel %vm11566, %v11559, %v11563
        %v11568 = vand.u32 2147483647, %v11121
        %vm11569 = vcmp.eq.f32.partialorder %v11568, 8.507059e+37
        %v11570 = vand.u32 %v11121, 2147483648
        %v11571 = vor.u32 1.1754944e-38, %v11570
        %v11572 = vsel %vm11569, %v11571, %v11567
        %v11573 = vmul.f32 1.0, %v11572
        %v11574 = vrcp.pop %v11122
        %v11575 = vmul.f32 %v11122, %v11574
        %v11576 = vsub.f32 1.0, %v11575
        %v11577 = vmul.f32 %v11574, %v11576
        %v11578 = vadd.f32 %v11574, %v11577
        %vm11579 = vweird.f32 %v11122
        %vm11580 = vweird.f32 %v11574
        %vm11581 = vmor %vm11579, %vm11580
        %v11582 = vsel %vm11581, %v11574, %v11578
        %v11583 = vand.u32 2147483647, %v11122
        %vm11584 = vcmp.eq.f32.partialorder %v11583, 8.507059e+37
        %v11585 = vand.u32 %v11122, 2147483648
        %v11586 = vor.u32 1.1754944e-38, %v11585
        %v11587 = vsel %vm11584, %v11586, %v11582
        %v11588 = vmul.f32 1.0, %v11587
        %v11589 = vrcp.pop %v11123
        %v11590 = vmul.f32 %v11123, %v11589
        %v11591 = vsub.f32 1.0, %v11590
        %v11592 = vmul.f32 %v11589, %v11591
        %v11593 = vadd.f32 %v11589, %v11592
        %vm11594 = vweird.f32 %v11123
        %vm11595 = vweird.f32 %v11589
        %vm11596 = vmor %vm11594, %vm11595
        %v11597 = vsel %vm11596, %v11589, %v11593
        %v11598 = vand.u32 2147483647, %v11123
        %vm11599 = vcmp.eq.f32.partialorder %v11598, 8.507059e+37
        %v11600 = vand.u32 %v11123, 2147483648
        %v11601 = vor.u32 1.1754944e-38, %v11600
        %v11602 = vsel %vm11599, %v11601, %v11597
        %v11603 = vmul.f32 1.0, %v11602
        %v11636 = vrot.slane %v11138, 1
        %v11637 = vrot.slane %v11138, 2
        %v11638 = vrot.slane %v11138, 3
        %v11639 = vrot.slane %v11138, 4
        %v11640 = vrot.slane %v11138, 5
        %v11641 = vrot.slane %v11138, 6
        %v11642 = vrot.slane %v11138, 7
        %v11643 = vrot.slane %v11153, 1
        %v11644 = vrot.slane %v11153, 2
        %v11645 = vrot.slane %v11153, 3
        %v11646 = vrot.slane %v11153, 4
        %v11647 = vrot.slane %v11153, 5
        %v11648 = vrot.slane %v11153, 6
        %v11649 = vrot.slane %v11153, 7
        %v11650 = vrot.slane %v11168, 1
        %v11651 = vrot.slane %v11168, 2
        %v11652 = vrot.slane %v11168, 3
        %v11653 = vrot.slane %v11168, 4
        %v11654 = vrot.slane %v11168, 5
        %v11655 = vrot.slane %v11168, 6
        %v11656 = vrot.slane %v11168, 7
        %v11657 = vrot.slane %v11183, 1
        %v11658 = vrot.slane %v11183, 2
        %v11659 = vrot.slane %v11183, 3
        %v11660 = vrot.slane %v11183, 4
        %v11661 = vrot.slane %v11183, 5
        %v11662 = vrot.slane %v11183, 6
        %v11663 = vrot.slane %v11183, 7
        %v11664 = vrot.slane %v11198, 1
        %v11665 = vrot.slane %v11198, 2
        %v11666 = vrot.slane %v11198, 3
        %v11667 = vrot.slane %v11198, 4
        %v11668 = vrot.slane %v11198, 5
        %v11669 = vrot.slane %v11198, 6
        %v11670 = vrot.slane %v11198, 7
        %v11671 = vrot.slane %v11213, 1
        %v11672 = vrot.slane %v11213, 2
        %v11673 = vrot.slane %v11213, 3
        %v11674 = vrot.slane %v11213, 4
        %v11675 = vrot.slane %v11213, 5
        %v11676 = vrot.slane %v11213, 6
        %v11677 = vrot.slane %v11213, 7
        %v11678 = vrot.slane %v11228, 1
        %v11679 = vrot.slane %v11228, 2
        %v11680 = vrot.slane %v11228, 3
        %v11681 = vrot.slane %v11228, 4
        %v11682 = vrot.slane %v11228, 5
        %v11683 = vrot.slane %v11228, 6
        %v11684 = vrot.slane %v11228, 7
        %v11685 = vrot.slane %v11243, 1
        %v11686 = vrot.slane %v11243, 2
        %v11687 = vrot.slane %v11243, 3
        %v11688 = vrot.slane %v11243, 4
        %v11689 = vrot.slane %v11243, 5
        %v11690 = vrot.slane %v11243, 6
        %v11691 = vrot.slane %v11243, 7
        %v11692 = vrot.slane %v11258, 1
        %v11693 = vrot.slane %v11258, 2
        %v11694 = vrot.slane %v11258, 3
        %v11695 = vrot.slane %v11258, 4
        %v11696 = vrot.slane %v11258, 5
        %v11697 = vrot.slane %v11258, 6
        %v11698 = vrot.slane %v11258, 7
        %v11699 = vrot.slane %v11273, 1
        %v11700 = vrot.slane %v11273, 2
        %v11701 = vrot.slane %v11273, 3
        %v11702 = vrot.slane %v11273, 4
        %v11703 = vrot.slane %v11273, 5
        %v11704 = vrot.slane %v11273, 6
        %v11705 = vrot.slane %v11273, 7
        %v11706 = vrot.slane %v11288, 1
        %v11707 = vrot.slane %v11288, 2
        %v11708 = vrot.slane %v11288, 3
        %v11709 = vrot.slane %v11288, 4
        %v11710 = vrot.slane %v11288, 5
        %v11711 = vrot.slane %v11288, 6
        %v11712 = vrot.slane %v11288, 7
        %v11713 = vrot.slane %v11303, 1
        %v11714 = vrot.slane %v11303, 2
        %v11715 = vrot.slane %v11303, 3
        %v11716 = vrot.slane %v11303, 4
        %v11717 = vrot.slane %v11303, 5
        %v11718 = vrot.slane %v11303, 6
        %v11719 = vrot.slane %v11303, 7
        %v11720 = vrot.slane %v11318, 1
        %v11721 = vrot.slane %v11318, 2
        %v11722 = vrot.slane %v11318, 3
        %v11723 = vrot.slane %v11318, 4
        %v11724 = vrot.slane %v11318, 5
        %v11725 = vrot.slane %v11318, 6
        %v11726 = vrot.slane %v11318, 7
        %v11727 = vrot.slane %v11333, 1
        %v11728 = vrot.slane %v11333, 2
        %v11729 = vrot.slane %v11333, 3
        %v11730 = vrot.slane %v11333, 4
        %v11731 = vrot.slane %v11333, 5
        %v11732 = vrot.slane %v11333, 6
        %v11733 = vrot.slane %v11333, 7
        %v11734 = vrot.slane %v11348, 1
        %v11735 = vrot.slane %v11348, 2
        %v11736 = vrot.slane %v11348, 3
        %v11737 = vrot.slane %v11348, 4
        %v11738 = vrot.slane %v11348, 5
        %v11739 = vrot.slane %v11348, 6
        %v11740 = vrot.slane %v11348, 7
        %v11741 = vrot.slane %v11363, 1
        %v11742 = vrot.slane %v11363, 2
        %v11743 = vrot.slane %v11363, 3
        %v11744 = vrot.slane %v11363, 4
        %v11745 = vrot.slane %v11363, 5
        %v11746 = vrot.slane %v11363, 6
        %v11747 = vrot.slane %v11363, 7
        %v11748 = vrot.slane %v11378, 1
        %v11749 = vrot.slane %v11378, 2
        %v11750 = vrot.slane %v11378, 3
        %v11751 = vrot.slane %v11378, 4
        %v11752 = vrot.slane %v11378, 5
        %v11753 = vrot.slane %v11378, 6
        %v11754 = vrot.slane %v11378, 7
        %v11755 = vrot.slane %v11393, 1
        %v11756 = vrot.slane %v11393, 2
        %v11757 = vrot.slane %v11393, 3
        %v11758 = vrot.slane %v11393, 4
        %v11759 = vrot.slane %v11393, 5
        %v11760 = vrot.slane %v11393, 6
        %v11761 = vrot.slane %v11393, 7
        %v11762 = vrot.slane %v11408, 1
        %v11763 = vrot.slane %v11408, 2
        %v11764 = vrot.slane %v11408, 3
        %v11765 = vrot.slane %v11408, 4
        %v11766 = vrot.slane %v11408, 5
        %v11767 = vrot.slane %v11408, 6
        %v11768 = vrot.slane %v11408, 7
        %v11769 = vrot.slane %v11423, 1
        %v11770 = vrot.slane %v11423, 2
        %v11771 = vrot.slane %v11423, 3
        %v11772 = vrot.slane %v11423, 4
        %v11773 = vrot.slane %v11423, 5
        %v11774 = vrot.slane %v11423, 6
        %v11775 = vrot.slane %v11423, 7
        %v11776 = vrot.slane %v11438, 1
        %v11777 = vrot.slane %v11438, 2
        %v11778 = vrot.slane %v11438, 3
        %v11779 = vrot.slane %v11438, 4
        %v11780 = vrot.slane %v11438, 5
        %v11781 = vrot.slane %v11438, 6
        %v11782 = vrot.slane %v11438, 7
        %v11783 = vrot.slane %v11453, 1
        %v11784 = vrot.slane %v11453, 2
        %v11785 = vrot.slane %v11453, 3
        %v11786 = vrot.slane %v11453, 4
        %v11787 = vrot.slane %v11453, 5
        %v11788 = vrot.slane %v11453, 6
        %v11789 = vrot.slane %v11453, 7
        %v11790 = vrot.slane %v11468, 1
        %v11791 = vrot.slane %v11468, 2
        %v11792 = vrot.slane %v11468, 3
        %v11793 = vrot.slane %v11468, 4
        %v11794 = vrot.slane %v11468, 5
        %v11795 = vrot.slane %v11468, 6
        %v11796 = vrot.slane %v11468, 7
        %v11797 = vrot.slane %v11483, 1
        %v11798 = vrot.slane %v11483, 2
        %v11799 = vrot.slane %v11483, 3
        %v11800 = vrot.slane %v11483, 4
        %v11801 = vrot.slane %v11483, 5
        %v11802 = vrot.slane %v11483, 6
        %v11803 = vrot.slane %v11483, 7
        %v11804 = vrot.slane %v11498, 1
        %v11805 = vrot.slane %v11498, 2
        %v11806 = vrot.slane %v11498, 3
        %v11807 = vrot.slane %v11498, 4
        %v11808 = vrot.slane %v11498, 5
        %v11809 = vrot.slane %v11498, 6
        %v11810 = vrot.slane %v11498, 7
        %v11811 = vrot.slane %v11513, 1
        %v11812 = vrot.slane %v11513, 2
        %v11813 = vrot.slane %v11513, 3
        %v11814 = vrot.slane %v11513, 4
        %v11815 = vrot.slane %v11513, 5
        %v11816 = vrot.slane %v11513, 6
        %v11817 = vrot.slane %v11513, 7
        %v11818 = vrot.slane %v11528, 1
        %v11819 = vrot.slane %v11528, 2
        %v11820 = vrot.slane %v11528, 3
        %v11821 = vrot.slane %v11528, 4
        %v11822 = vrot.slane %v11528, 5
        %v11823 = vrot.slane %v11528, 6
        %v11824 = vrot.slane %v11528, 7
        %v11825 = vrot.slane %v11543, 1
        %v11826 = vrot.slane %v11543, 2
        %v11827 = vrot.slane %v11543, 3
        %v11828 = vrot.slane %v11543, 4
        %v11829 = vrot.slane %v11543, 5
        %v11830 = vrot.slane %v11543, 6
        %v11831 = vrot.slane %v11543, 7
        %v11832 = vrot.slane %v11558, 1
        %v11833 = vrot.slane %v11558, 2
        %v11834 = vrot.slane %v11558, 3
        %v11835 = vrot.slane %v11558, 4
        %v11836 = vrot.slane %v11558, 5
        %v11837 = vrot.slane %v11558, 6
        %v11838 = vrot.slane %v11558, 7
        %v11839 = vrot.slane %v11573, 1
        %v11840 = vrot.slane %v11573, 2
        %v11841 = vrot.slane %v11573, 3
        %v11842 = vrot.slane %v11573, 4
        %v11843 = vrot.slane %v11573, 5
        %v11844 = vrot.slane %v11573, 6
        %v11845 = vrot.slane %v11573, 7
        %v11846 = vrot.slane %v11588, 1
        %v11847 = vrot.slane %v11588, 2
        %v11848 = vrot.slane %v11588, 3
        %v11849 = vrot.slane %v11588, 4
        %v11850 = vrot.slane %v11588, 5
        %v11851 = vrot.slane %v11588, 6
        %v11852 = vrot.slane %v11588, 7
        %v11853 = vrot.slane %v11603, 1
        %v11854 = vrot.slane %v11603, 2
        %v11855 = vrot.slane %v11603, 3
        %v11856 = vrot.slane %v11603, 4
        %v11857 = vrot.slane %v11603, 5
        %v11858 = vrot.slane %v11603, 6
        %v11859 = vrot.slane %v11603, 7
        %11860 = vst [vmem:[#allocation1] ss:$9 sm:$0xff] %v11138
        %s11861 = scalar_lea.vmem [#allocation1], 1
        %11862 = vst [vmem:[%s11861] ss:$9 sm:$0xff] %v11636
        %s11863 = scalar_lea.vmem [#allocation1], 2
        %11864 = vst [vmem:[%s11863] ss:$9 sm:$0xff] %v11637
        %s11865 = scalar_lea.vmem [#allocation1], 3
        %11866 = vst [vmem:[%s11865] ss:$9 sm:$0xff] %v11638
        %s11867 = scalar_lea.vmem [#allocation1], 4
        %11868 = vst [vmem:[%s11867] ss:$9 sm:$0xff] %v11639
        %s11869 = scalar_lea.vmem [#allocation1], 5
        %11870 = vst [vmem:[%s11869] ss:$9 sm:$0xff] %v11640
        %s11871 = scalar_lea.vmem [#allocation1], 6
        %11872 = vst [vmem:[%s11871] ss:$9 sm:$0xff] %v11641
        %s11873 = scalar_lea.vmem [#allocation1], 7
        %11874 = vst [vmem:[%s11873] ss:$9 sm:$0xff] %v11642
        %v11875 = vld [vmem:[#allocation1] sm:$0xff]
        %11876 = vst [vmem:[#allocation1] ss:$9 sm:$0xff] %v11153
        %11877 = vst [vmem:[%s11861] ss:$9 sm:$0xff] %v11643
        %11878 = vst [vmem:[%s11863] ss:$9 sm:$0xff] %v11644
        %11879 = vst [vmem:[%s11865] ss:$9 sm:$0xff] %v11645
        %11880 = vst [vmem:[%s11867] ss:$9 sm:$0xff] %v11646
        %11881 = vst [vmem:[%s11869] ss:$9 sm:$0xff] %v11647
        %11882 = vst [vmem:[%s11871] ss:$9 sm:$0xff] %v11648
        %11883 = vst [vmem:[%s11873] ss:$9 sm:$0xff] %v11649
        %v11884 = vld [vmem:[#allocation1] sm:$0xff]
        %11885 = vst [vmem:[#allocation1] ss:$9 sm:$0xff] %v11168
        %11886 = vst [vmem:[%s11861] ss:$9 sm:$0xff] %v11650
        %11887 = vst [vmem:[%s11863] ss:$9 sm:$0xff] %v11651
        %11888 = vst [vmem:[%s11865] ss:$9 sm:$0xff] %v11652
        %11889 = vst [vmem:[%s11867] ss:$9 sm:$0xff] %v11653
        %11890 = vst [vmem:[%s11869] ss:$9 sm:$0xff] %v11654
        %11891 = vst [vmem:[%s11871] ss:$9 sm:$0xff] %v11655
        %11892 = vst [vmem:[%s11873] ss:$9 sm:$0xff] %v11656
        %v11893 = vld [vmem:[#allocation1] sm:$0xff]
        %11894 = vst [vmem:[#allocation1] ss:$9 sm:$0xff] %v11183
        %11895 = vst [vmem:[%s11861] ss:$9 sm:$0xff] %v11657
        %11896 = vst [vmem:[%s11863] ss:$9 sm:$0xff] %v11658
        %11897 = vst [vmem:[%s11865] ss:$9 sm:$0xff] %v11659
        %11898 = vst [vmem:[%s11867] ss:$9 sm:$0xff] %v11660
        %11899 = vst [vmem:[%s11869] ss:$9 sm:$0xff] %v11661
        %11900 = vst [vmem:[%s11871] ss:$9 sm:$0xff] %v11662
        %11901 = vst [vmem:[%s11873] ss:$9 sm:$0xff] %v11663
        %v11902 = vld [vmem:[#allocation1] sm:$0xff]
        %11903 = vst [vmem:[#allocation1] ss:$9 sm:$0xff] %v11198
        %11904 = vst [vmem:[%s11861] ss:$9 sm:$0xff] %v11664
        %11905 = vst [vmem:[%s11863] ss:$9 sm:$0xff] %v11665
        %11906 = vst [vmem:[%s11865] ss:$9 sm:$0xff] %v11666
        %11907 = vst [vmem:[%s11867] ss:$9 sm:$0xff] %v11667
        %11908 = vst [vmem:[%s11869] ss:$9 sm:$0xff] %v11668
        %11909 = vst [vmem:[%s11871] ss:$9 sm:$0xff] %v11669
        %11910 = vst [vmem:[%s11873] ss:$9 sm:$0xff] %v11670
        %v11911 = vld [vmem:[#allocation1] sm:$0xff]
        %11912 = vst [vmem:[#allocation1] ss:$9 sm:$0xff] %v11213
        %11913 = vst [vmem:[%s11861] ss:$9 sm:$0xff] %v11671
        %11914 = vst [vmem:[%s11863] ss:$9 sm:$0xff] %v11672
        %11915 = vst [vmem:[%s11865] ss:$9 sm:$0xff] %v11673
        %11916 = vst [vmem:[%s11867] ss:$9 sm:$0xff] %v11674
        %11917 = vst [vmem:[%s11869] ss:$9 sm:$0xff] %v11675
        %11918 = vst [vmem:[%s11871] ss:$9 sm:$0xff] %v11676
        %11919 = vst [vmem:[%s11873] ss:$9 sm:$0xff] %v11677
        %v11920 = vld [vmem:[#allocation1] sm:$0xff]
        %11921 = vst [vmem:[#allocation1] ss:$9 sm:$0xff] %v11228
        %11922 = vst [vmem:[%s11861] ss:$9 sm:$0xff] %v11678
        %11923 = vst [vmem:[%s11863] ss:$9 sm:$0xff] %v11679
        %11924 = vst [vmem:[%s11865] ss:$9 sm:$0xff] %v11680
        %11925 = vst [vmem:[%s11867] ss:$9 sm:$0xff] %v11681
        %11926 = vst [vmem:[%s11869] ss:$9 sm:$0xff] %v11682
        %11927 = vst [vmem:[%s11871] ss:$9 sm:$0xff] %v11683
        %11928 = vst [vmem:[%s11873] ss:$9 sm:$0xff] %v11684
        %v11929 = vld [vmem:[#allocation1] sm:$0xff]
        %11930 = vst [vmem:[#allocation1] ss:$9 sm:$0xff] %v11243
        %11931 = vst [vmem:[%s11861] ss:$9 sm:$0xff] %v11685
        %11932 = vst [vmem:[%s11863] ss:$9 sm:$0xff] %v11686
        %11933 = vst [vmem:[%s11865] ss:$9 sm:$0xff] %v11687
        %11934 = vst [vmem:[%s11867] ss:$9 sm:$0xff] %v11688
        %11935 = vst [vmem:[%s11869] ss:$9 sm:$0xff] %v11689
        %11936 = vst [vmem:[%s11871] ss:$9 sm:$0xff] %v11690
        %11937 = vst [vmem:[%s11873] ss:$9 sm:$0xff] %v11691
        %v11938 = vld [vmem:[#allocation1] sm:$0xff]
        %11939 = vst [vmem:[#allocation1] ss:$9 sm:$0xff] %v11258
        %11940 = vst [vmem:[%s11861] ss:$9 sm:$0xff] %v11692
        %11941 = vst [vmem:[%s11863] ss:$9 sm:$0xff] %v11693
        %11942 = vst [vmem:[%s11865] ss:$9 sm:$0xff] %v11694
        %11943 = vst [vmem:[%s11867] ss:$9 sm:$0xff] %v11695
        %11944 = vst [vmem:[%s11869] ss:$9 sm:$0xff] %v11696
        %11945 = vst [vmem:[%s11871] ss:$9 sm:$0xff] %v11697
        %11946 = vst [vmem:[%s11873] ss:$9 sm:$0xff] %v11698
        %v11947 = vld [vmem:[#allocation1] sm:$0xff]
        %11948 = vst [vmem:[#allocation1] ss:$9 sm:$0xff] %v11273
        %11949 = vst [vmem:[%s11861] ss:$9 sm:$0xff] %v11699
        %11950 = vst [vmem:[%s11863] ss:$9 sm:$0xff] %v11700
        %11951 = vst [vmem:[%s11865] ss:$9 sm:$0xff] %v11701
        %11952 = vst [vmem:[%s11867] ss:$9 sm:$0xff] %v11702
        %11953 = vst [vmem:[%s11869] ss:$9 sm:$0xff] %v11703
        %11954 = vst [vmem:[%s11871] ss:$9 sm:$0xff] %v11704
        %11955 = vst [vmem:[%s11873] ss:$9 sm:$0xff] %v11705
        %v11956 = vld [vmem:[#allocation1] sm:$0xff]
        %11957 = vst [vmem:[#allocation1] ss:$9 sm:$0xff] %v11288
        %11958 = vst [vmem:[%s11861] ss:$9 sm:$0xff] %v11706
        %11959 = vst [vmem:[%s11863] ss:$9 sm:$0xff] %v11707
        %11960 = vst [vmem:[%s11865] ss:$9 sm:$0xff] %v11708
        %11961 = vst [vmem:[%s11867] ss:$9 sm:$0xff] %v11709
        %11962 = vst [vmem:[%s11869] ss:$9 sm:$0xff] %v11710
        %11963 = vst [vmem:[%s11871] ss:$9 sm:$0xff] %v11711
        %11964 = vst [vmem:[%s11873] ss:$9 sm:$0xff] %v11712
        %v11965 = vld [vmem:[#allocation1] sm:$0xff]
        %11966 = vst [vmem:[#allocation1] ss:$9 sm:$0xff] %v11303
        %11967 = vst [vmem:[%s11861] ss:$9 sm:$0xff] %v11713
        %11968 = vst [vmem:[%s11863] ss:$9 sm:$0xff] %v11714
        %11969 = vst [vmem:[%s11865] ss:$9 sm:$0xff] %v11715
        %11970 = vst [vmem:[%s11867] ss:$9 sm:$0xff] %v11716
        %11971 = vst [vmem:[%s11869] ss:$9 sm:$0xff] %v11717
        %11972 = vst [vmem:[%s11871] ss:$9 sm:$0xff] %v11718
        %11973 = vst [vmem:[%s11873] ss:$9 sm:$0xff] %v11719
        %v11974 = vld [vmem:[#allocation1] sm:$0xff]
        %11975 = vst [vmem:[#allocation1] ss:$9 sm:$0xff] %v11318
        %11976 = vst [vmem:[%s11861] ss:$9 sm:$0xff] %v11720
        %11977 = vst [vmem:[%s11863] ss:$9 sm:$0xff] %v11721
        %11978 = vst [vmem:[%s11865] ss:$9 sm:$0xff] %v11722
        %11979 = vst [vmem:[%s11867] ss:$9 sm:$0xff] %v11723
        %11980 = vst [vmem:[%s11869] ss:$9 sm:$0xff] %v11724
        %11981 = vst [vmem:[%s11871] ss:$9 sm:$0xff] %v11725
        %11982 = vst [vmem:[%s11873] ss:$9 sm:$0xff] %v11726
        %v11983 = vld [vmem:[#allocation1] sm:$0xff]
        %11984 = vst [vmem:[#allocation1] ss:$9 sm:$0xff] %v11333
        %11985 = vst [vmem:[%s11861] ss:$9 sm:$0xff] %v11727
        %11986 = vst [vmem:[%s11863] ss:$9 sm:$0xff] %v11728
        %11987 = vst [vmem:[%s11865] ss:$9 sm:$0xff] %v11729
        %11988 = vst [vmem:[%s11867] ss:$9 sm:$0xff] %v11730
        %11989 = vst [vmem:[%s11869] ss:$9 sm:$0xff] %v11731
        %11990 = vst [vmem:[%s11871] ss:$9 sm:$0xff] %v11732
        %11991 = vst [vmem:[%s11873] ss:$9 sm:$0xff] %v11733
        %v11992 = vld [vmem:[#allocation1] sm:$0xff]
        %11993 = vst [vmem:[#allocation1] ss:$9 sm:$0xff] %v11348
        %11994 = vst [vmem:[%s11861] ss:$9 sm:$0xff] %v11734
        %11995 = vst [vmem:[%s11863] ss:$9 sm:$0xff] %v11735
        %11996 = vst [vmem:[%s11865] ss:$9 sm:$0xff] %v11736
        %11997 = vst [vmem:[%s11867] ss:$9 sm:$0xff] %v11737
        %11998 = vst [vmem:[%s11869] ss:$9 sm:$0xff] %v11738
        %11999 = vst [vmem:[%s11871] ss:$9 sm:$0xff] %v11739
        %12000 = vst [vmem:[%s11873] ss:$9 sm:$0xff] %v11740
        %v12001 = vld [vmem:[#allocation1] sm:$0xff]
        %12002 = vst [vmem:[#allocation1] ss:$9 sm:$0xff] %v11363
        %12003 = vst [vmem:[%s11861] ss:$9 sm:$0xff] %v11741
        %12004 = vst [vmem:[%s11863] ss:$9 sm:$0xff] %v11742
        %12005 = vst [vmem:[%s11865] ss:$9 sm:$0xff] %v11743
        %12006 = vst [vmem:[%s11867] ss:$9 sm:$0xff] %v11744
        %12007 = vst [vmem:[%s11869] ss:$9 sm:$0xff] %v11745
        %12008 = vst [vmem:[%s11871] ss:$9 sm:$0xff] %v11746
        %12009 = vst [vmem:[%s11873] ss:$9 sm:$0xff] %v11747
        %v12010 = vld [vmem:[#allocation1] sm:$0xff]
        %12011 = vst [vmem:[#allocation1] ss:$9 sm:$0xff] %v11378
        %12012 = vst [vmem:[%s11861] ss:$9 sm:$0xff] %v11748
        %12013 = vst [vmem:[%s11863] ss:$9 sm:$0xff] %v11749
        %12014 = vst [vmem:[%s11865] ss:$9 sm:$0xff] %v11750
        %12015 = vst [vmem:[%s11867] ss:$9 sm:$0xff] %v11751
        %12016 = vst [vmem:[%s11869] ss:$9 sm:$0xff] %v11752
        %12017 = vst [vmem:[%s11871] ss:$9 sm:$0xff] %v11753
        %12018 = vst [vmem:[%s11873] ss:$9 sm:$0xff] %v11754
        %v12019 = vld [vmem:[#allocation1] sm:$0xff]
        %12020 = vst [vmem:[#allocation1] ss:$9 sm:$0xff] %v11393
        %12021 = vst [vmem:[%s11861] ss:$9 sm:$0xff] %v11755
        %12022 = vst [vmem:[%s11863] ss:$9 sm:$0xff] %v11756
        %12023 = vst [vmem:[%s11865] ss:$9 sm:$0xff] %v11757
        %12024 = vst [vmem:[%s11867] ss:$9 sm:$0xff] %v11758
        %12025 = vst [vmem:[%s11869] ss:$9 sm:$0xff] %v11759
        %12026 = vst [vmem:[%s11871] ss:$9 sm:$0xff] %v11760
        %12027 = vst [vmem:[%s11873] ss:$9 sm:$0xff] %v11761
        %v12028 = vld [vmem:[#allocation1] sm:$0xff]
        %12029 = vst [vmem:[#allocation1] ss:$9 sm:$0xff] %v11408
        %12030 = vst [vmem:[%s11861] ss:$9 sm:$0xff] %v11762
        %12031 = vst [vmem:[%s11863] ss:$9 sm:$0xff] %v11763
        %12032 = vst [vmem:[%s11865] ss:$9 sm:$0xff] %v11764
        %12033 = vst [vmem:[%s11867] ss:$9 sm:$0xff] %v11765
        %12034 = vst [vmem:[%s11869] ss:$9 sm:$0xff] %v11766
        %12035 = vst [vmem:[%s11871] ss:$9 sm:$0xff] %v11767
        %12036 = vst [vmem:[%s11873] ss:$9 sm:$0xff] %v11768
        %v12037 = vld [vmem:[#allocation1] sm:$0xff]
        %12038 = vst [vmem:[#allocation1] ss:$9 sm:$0xff] %v11423
        %12039 = vst [vmem:[%s11861] ss:$9 sm:$0xff] %v11769
        %12040 = vst [vmem:[%s11863] ss:$9 sm:$0xff] %v11770
        %12041 = vst [vmem:[%s11865] ss:$9 sm:$0xff] %v11771
        %12042 = vst [vmem:[%s11867] ss:$9 sm:$0xff] %v11772
        %12043 = vst [vmem:[%s11869] ss:$9 sm:$0xff] %v11773
        %12044 = vst [vmem:[%s11871] ss:$9 sm:$0xff] %v11774
        %12045 = vst [vmem:[%s11873] ss:$9 sm:$0xff] %v11775
        %v12046 = vld [vmem:[#allocation1] sm:$0xff]
        %12047 = vst [vmem:[#allocation1] ss:$9 sm:$0xff] %v11438
        %12048 = vst [vmem:[%s11861] ss:$9 sm:$0xff] %v11776
        %12049 = vst [vmem:[%s11863] ss:$9 sm:$0xff] %v11777
        %12050 = vst [vmem:[%s11865] ss:$9 sm:$0xff] %v11778
        %12051 = vst [vmem:[%s11867] ss:$9 sm:$0xff] %v11779
        %12052 = vst [vmem:[%s11869] ss:$9 sm:$0xff] %v11780
        %12053 = vst [vmem:[%s11871] ss:$9 sm:$0xff] %v11781
        %12054 = vst [vmem:[%s11873] ss:$9 sm:$0xff] %v11782
        %v12055 = vld [vmem:[#allocation1] sm:$0xff]
        %12056 = vst [vmem:[#allocation1] ss:$9 sm:$0xff] %v11453
        %12057 = vst [vmem:[%s11861] ss:$9 sm:$0xff] %v11783
        %12058 = vst [vmem:[%s11863] ss:$9 sm:$0xff] %v11784
        %12059 = vst [vmem:[%s11865] ss:$9 sm:$0xff] %v11785
        %12060 = vst [vmem:[%s11867] ss:$9 sm:$0xff] %v11786
        %12061 = vst [vmem:[%s11869] ss:$9 sm:$0xff] %v11787
        %12062 = vst [vmem:[%s11871] ss:$9 sm:$0xff] %v11788
        %12063 = vst [vmem:[%s11873] ss:$9 sm:$0xff] %v11789
        %v12064 = vld [vmem:[#allocation1] sm:$0xff]
        %12065 = vst [vmem:[#allocation1] ss:$9 sm:$0xff] %v11468
        %12066 = vst [vmem:[%s11861] ss:$9 sm:$0xff] %v11790
        %12067 = vst [vmem:[%s11863] ss:$9 sm:$0xff] %v11791
        %12068 = vst [vmem:[%s11865] ss:$9 sm:$0xff] %v11792
        %12069 = vst [vmem:[%s11867] ss:$9 sm:$0xff] %v11793
        %12070 = vst [vmem:[%s11869] ss:$9 sm:$0xff] %v11794
        %12071 = vst [vmem:[%s11871] ss:$9 sm:$0xff] %v11795
        %12072 = vst [vmem:[%s11873] ss:$9 sm:$0xff] %v11796
        %v12073 = vld [vmem:[#allocation1] sm:$0xff]
        %12074 = vst [vmem:[#allocation1] ss:$9 sm:$0xff] %v11483
        %12075 = vst [vmem:[%s11861] ss:$9 sm:$0xff] %v11797
        %12076 = vst [vmem:[%s11863] ss:$9 sm:$0xff] %v11798
        %12077 = vst [vmem:[%s11865] ss:$9 sm:$0xff] %v11799
        %12078 = vst [vmem:[%s11867] ss:$9 sm:$0xff] %v11800
        %12079 = vst [vmem:[%s11869] ss:$9 sm:$0xff] %v11801
        %12080 = vst [vmem:[%s11871] ss:$9 sm:$0xff] %v11802
        %12081 = vst [vmem:[%s11873] ss:$9 sm:$0xff] %v11803
        %v12082 = vld [vmem:[#allocation1] sm:$0xff]
        %12083 = vst [vmem:[#allocation1] ss:$9 sm:$0xff] %v11498
        %12084 = vst [vmem:[%s11861] ss:$9 sm:$0xff] %v11804
        %12085 = vst [vmem:[%s11863] ss:$9 sm:$0xff] %v11805
        %12086 = vst [vmem:[%s11865] ss:$9 sm:$0xff] %v11806
        %12087 = vst [vmem:[%s11867] ss:$9 sm:$0xff] %v11807
        %12088 = vst [vmem:[%s11869] ss:$9 sm:$0xff] %v11808
        %12089 = vst [vmem:[%s11871] ss:$9 sm:$0xff] %v11809
        %12090 = vst [vmem:[%s11873] ss:$9 sm:$0xff] %v11810
        %v12091 = vld [vmem:[#allocation1] sm:$0xff]
        %12092 = vst [vmem:[#allocation1] ss:$9 sm:$0xff] %v11513
        %12093 = vst [vmem:[%s11861] ss:$9 sm:$0xff] %v11811
        %12094 = vst [vmem:[%s11863] ss:$9 sm:$0xff] %v11812
        %12095 = vst [vmem:[%s11865] ss:$9 sm:$0xff] %v11813
        %12096 = vst [vmem:[%s11867] ss:$9 sm:$0xff] %v11814
        %12097 = vst [vmem:[%s11869] ss:$9 sm:$0xff] %v11815
        %12098 = vst [vmem:[%s11871] ss:$9 sm:$0xff] %v11816
        %12099 = vst [vmem:[%s11873] ss:$9 sm:$0xff] %v11817
        %v12100 = vld [vmem:[#allocation1] sm:$0xff]
        %12101 = vst [vmem:[#allocation1] ss:$9 sm:$0xff] %v11528
        %12102 = vst [vmem:[%s11861] ss:$9 sm:$0xff] %v11818
        %12103 = vst [vmem:[%s11863] ss:$9 sm:$0xff] %v11819
        %12104 = vst [vmem:[%s11865] ss:$9 sm:$0xff] %v11820
        %12105 = vst [vmem:[%s11867] ss:$9 sm:$0xff] %v11821
        %12106 = vst [vmem:[%s11869] ss:$9 sm:$0xff] %v11822
        %12107 = vst [vmem:[%s11871] ss:$9 sm:$0xff] %v11823
        %12108 = vst [vmem:[%s11873] ss:$9 sm:$0xff] %v11824
        %v12109 = vld [vmem:[#allocation1] sm:$0xff]
        %12110 = vst [vmem:[#allocation1] ss:$9 sm:$0xff] %v11543
        %12111 = vst [vmem:[%s11861] ss:$9 sm:$0xff] %v11825
        %12112 = vst [vmem:[%s11863] ss:$9 sm:$0xff] %v11826
        %12113 = vst [vmem:[%s11865] ss:$9 sm:$0xff] %v11827
        %12114 = vst [vmem:[%s11867] ss:$9 sm:$0xff] %v11828
        %12115 = vst [vmem:[%s11869] ss:$9 sm:$0xff] %v11829
        %12116 = vst [vmem:[%s11871] ss:$9 sm:$0xff] %v11830
        %12117 = vst [vmem:[%s11873] ss:$9 sm:$0xff] %v11831
        %v12118 = vld [vmem:[#allocation1] sm:$0xff]
        %12119 = vst [vmem:[#allocation1] ss:$9 sm:$0xff] %v11558
        %12120 = vst [vmem:[%s11861] ss:$9 sm:$0xff] %v11832
        %12121 = vst [vmem:[%s11863] ss:$9 sm:$0xff] %v11833
        %12122 = vst [vmem:[%s11865] ss:$9 sm:$0xff] %v11834
        %12123 = vst [vmem:[%s11867] ss:$9 sm:$0xff] %v11835
        %12124 = vst [vmem:[%s11869] ss:$9 sm:$0xff] %v11836
        %12125 = vst [vmem:[%s11871] ss:$9 sm:$0xff] %v11837
        %12126 = vst [vmem:[%s11873] ss:$9 sm:$0xff] %v11838
        %v12127 = vld [vmem:[#allocation1] sm:$0xff]
        %12128 = vst [vmem:[#allocation1] ss:$9 sm:$0xff] %v11573
        %12129 = vst [vmem:[%s11861] ss:$9 sm:$0xff] %v11839
        %12130 = vst [vmem:[%s11863] ss:$9 sm:$0xff] %v11840
        %12131 = vst [vmem:[%s11865] ss:$9 sm:$0xff] %v11841
        %12132 = vst [vmem:[%s11867] ss:$9 sm:$0xff] %v11842
        %12133 = vst [vmem:[%s11869] ss:$9 sm:$0xff] %v11843
        %12134 = vst [vmem:[%s11871] ss:$9 sm:$0xff] %v11844
        %12135 = vst [vmem:[%s11873] ss:$9 sm:$0xff] %v11845
        %v12136 = vld [vmem:[#allocation1] sm:$0xff]
        %12137 = vst [vmem:[#allocation1] ss:$9 sm:$0xff] %v11588
        %12138 = vst [vmem:[%s11861] ss:$9 sm:$0xff] %v11846
        %12139 = vst [vmem:[%s11863] ss:$9 sm:$0xff] %v11847
        %12140 = vst [vmem:[%s11865] ss:$9 sm:$0xff] %v11848
        %12141 = vst [vmem:[%s11867] ss:$9 sm:$0xff] %v11849
        %12142 = vst [vmem:[%s11869] ss:$9 sm:$0xff] %v11850
        %12143 = vst [vmem:[%s11871] ss:$9 sm:$0xff] %v11851
        %12144 = vst [vmem:[%s11873] ss:$9 sm:$0xff] %v11852
        %v12145 = vld [vmem:[#allocation1] sm:$0xff]
        %12146 = vst [vmem:[#allocation1] ss:$9 sm:$0xff] %v11603
        %12147 = vst [vmem:[%s11861] ss:$9 sm:$0xff] %v11853
        %12148 = vst [vmem:[%s11863] ss:$9 sm:$0xff] %v11854
        %12149 = vst [vmem:[%s11865] ss:$9 sm:$0xff] %v11855
        %12150 = vst [vmem:[%s11867] ss:$9 sm:$0xff] %v11856
        %12151 = vst [vmem:[%s11869] ss:$9 sm:$0xff] %v11857
        %12152 = vst [vmem:[%s11871] ss:$9 sm:$0xff] %v11858
        %12153 = vst [vmem:[%s11873] ss:$9 sm:$0xff] %v11859
        %v12154 = vld [vmem:[#allocation1] sm:$0xff]
        %12155 = vset.pattern.permute.xlu0 0
        %12156 = vperm.xlu0 %12155, %v11875
        %v12157 = vpop.permute.xlu0 %12156
        %12158 = vset.pattern.permute.xlu0 0
        %12159 = vperm.xlu0 %12158, %v11884
        %v12160 = vpop.permute.xlu0 %12159
        %12161 = vset.pattern.permute.xlu0 0
        %12162 = vperm.xlu0 %12161, %v11893
        %v12163 = vpop.permute.xlu0 %12162
        %12164 = vset.pattern.permute.xlu0 0
        %12165 = vperm.xlu0 %12164, %v11902
        %v12166 = vpop.permute.xlu0 %12165
        %12167 = vset.pattern.permute.xlu0 0
        %12168 = vperm.xlu0 %12167, %v11911
        %v12169 = vpop.permute.xlu0 %12168
        %12170 = vset.pattern.permute.xlu0 0
        %12171 = vperm.xlu0 %12170, %v11920
        %v12172 = vpop.permute.xlu0 %12171
        %12173 = vset.pattern.permute.xlu0 0
        %12174 = vperm.xlu0 %12173, %v11929
        %v12175 = vpop.permute.xlu0 %12174
        %12176 = vset.pattern.permute.xlu0 0
        %12177 = vperm.xlu0 %12176, %v11938
        %v12178 = vpop.permute.xlu0 %12177
        %12179 = vset.pattern.permute.xlu0 0
        %12180 = vperm.xlu0 %12179, %v11947
        %v12181 = vpop.permute.xlu0 %12180
        %12182 = vset.pattern.permute.xlu0 0
        %12183 = vperm.xlu0 %12182, %v11956
        %v12184 = vpop.permute.xlu0 %12183
        %12185 = vset.pattern.permute.xlu0 0
        %12186 = vperm.xlu0 %12185, %v11965
        %v12187 = vpop.permute.xlu0 %12186
        %12188 = vset.pattern.permute.xlu0 0
        %12189 = vperm.xlu0 %12188, %v11974
        %v12190 = vpop.permute.xlu0 %12189
        %12191 = vset.pattern.permute.xlu0 0
        %12192 = vperm.xlu0 %12191, %v11983
        %v12193 = vpop.permute.xlu0 %12192
        %12194 = vset.pattern.permute.xlu0 0
        %12195 = vperm.xlu0 %12194, %v11992
        %v12196 = vpop.permute.xlu0 %12195
        %12197 = vset.pattern.permute.xlu0 0
        %12198 = vperm.xlu0 %12197, %v12001
        %v12199 = vpop.permute.xlu0 %12198
        %12200 = vset.pattern.permute.xlu0 0
        %12201 = vperm.xlu0 %12200, %v12010
        %v12202 = vpop.permute.xlu0 %12201
        %12203 = vset.pattern.permute.xlu0 0
        %12204 = vperm.xlu0 %12203, %v12019
        %v12205 = vpop.permute.xlu0 %12204
        %12206 = vset.pattern.permute.xlu0 0
        %12207 = vperm.xlu0 %12206, %v12028
        %v12208 = vpop.permute.xlu0 %12207
        %12209 = vset.pattern.permute.xlu0 0
        %12210 = vperm.xlu0 %12209, %v12037
        %v12211 = vpop.permute.xlu0 %12210
        %12212 = vset.pattern.permute.xlu0 0
        %12213 = vperm.xlu0 %12212, %v12046
        %v12214 = vpop.permute.xlu0 %12213
        %12215 = vset.pattern.permute.xlu0 0
        %12216 = vperm.xlu0 %12215, %v12055
        %v12217 = vpop.permute.xlu0 %12216
        %12218 = vset.pattern.permute.xlu0 0
        %12219 = vperm.xlu0 %12218, %v12064
        %v12220 = vpop.permute.xlu0 %12219
        %12221 = vset.pattern.permute.xlu0 0
        %12222 = vperm.xlu0 %12221, %v12073
        %v12223 = vpop.permute.xlu0 %12222
        %12224 = vset.pattern.permute.xlu0 0
        %12225 = vperm.xlu0 %12224, %v12082
        %v12226 = vpop.permute.xlu0 %12225
        %12227 = vset.pattern.permute.xlu0 0
        %12228 = vperm.xlu0 %12227, %v12091
        %v12229 = vpop.permute.xlu0 %12228
        %12230 = vset.pattern.permute.xlu0 0
        %12231 = vperm.xlu0 %12230, %v12100
        %v12232 = vpop.permute.xlu0 %12231
        %12233 = vset.pattern.permute.xlu0 0
        %12234 = vperm.xlu0 %12233, %v12109
        %v12235 = vpop.permute.xlu0 %12234
        %12236 = vset.pattern.permute.xlu0 0
        %12237 = vperm.xlu0 %12236, %v12118
        %v12238 = vpop.permute.xlu0 %12237
        %12239 = vset.pattern.permute.xlu0 0
        %12240 = vperm.xlu0 %12239, %v12127
        %v12241 = vpop.permute.xlu0 %12240
        %12242 = vset.pattern.permute.xlu0 0
        %12243 = vperm.xlu0 %12242, %v12136
        %v12244 = vpop.permute.xlu0 %12243
        %12245 = vset.pattern.permute.xlu0 0
        %12246 = vperm.xlu0 %12245, %v12145
        %v12247 = vpop.permute.xlu0 %12246
        %12248 = vset.pattern.permute.xlu0 0
        %12249 = vperm.xlu0 %12248, %v12154
        %v12250 = vpop.permute.xlu0 %12249
        %v12251 = vlaneseq
        %v12252 = vand.u32 %v12251, 127
        %v12253 = vperm.slane %v12157, %v12252
        %v12254 = vadd.s32 %v12252, 4294967288
        %v12255 = vperm.slane %v12160, %v12254
        %vm12256 = vcmask 130112
        %v12257 = vsel %vm12256, %v12255, %v12253
        %v12258 = vadd.s32 %v12252, 4294967280
        %v12259 = vperm.slane %v12163, %v12258
        %vm12260 = vcmask 195712
        %v12261 = vsel %vm12260, %v12259, %v12257
        %v12262 = vadd.s32 %v12252, 4294967272
        %v12263 = vperm.slane %v12166, %v12262
        %vm12264 = vcmask 261312
        %v12265 = vsel %vm12264, %v12263, %v12261
        %v12266 = vadd.s32 %v12252, 4294967264
        %v12267 = vperm.slane %v12169, %v12266
        %vm12268 = vcmask 326912
        %v12269 = vsel %vm12268, %v12267, %v12265
        %v12270 = vadd.s32 %v12252, 4294967256
        %v12271 = vperm.slane %v12172, %v12270
        %vm12272 = vcmask 392512
        %v12273 = vsel %vm12272, %v12271, %v12269
        %v12274 = vadd.s32 %v12252, 4294967248
        %v12275 = vperm.slane %v12175, %v12274
        %vm12276 = vcmask 458112
        %v12277 = vsel %vm12276, %v12275, %v12273
        %v12278 = vadd.s32 %v12252, 4294967240
        %v12279 = vperm.slane %v12178, %v12278
        %vm12280 = vcmask 523712
        %v12281 = vsel %vm12280, %v12279, %v12277
        %v12282 = vadd.s32 %v12252, 4294967232
        %v12283 = vperm.slane %v12181, %v12282
        %vm12284 = vcmask 589312
        %v12285 = vsel %vm12284, %v12283, %v12281
        %v12286 = vadd.s32 %v12252, 4294967224
        %v12287 = vperm.slane %v12184, %v12286
        %vm12288 = vcmask 654912
        %v12289 = vsel %vm12288, %v12287, %v12285
        %v12290 = vadd.s32 %v12252, 4294967216
        %v12291 = vperm.slane %v12187, %v12290
        %vm12292 = vcmask 720512
        %v12293 = vsel %vm12292, %v12291, %v12289
        %v12294 = vadd.s32 %v12252, 4294967208
        %v12295 = vperm.slane %v12190, %v12294
        %vm12296 = vcmask 786112
        %v12297 = vsel %vm12296, %v12295, %v12293
        %v12298 = vadd.s32 %v12252, 4294967200
        %v12299 = vperm.slane %v12193, %v12298
        %vm12300 = vcmask 851712
        %v12301 = vsel %vm12300, %v12299, %v12297
        %v12302 = vadd.s32 %v12252, 4294967192
        %v12303 = vperm.slane %v12196, %v12302
        %vm12304 = vcmask 917312
        %v12305 = vsel %vm12304, %v12303, %v12301
        %v12306 = vadd.s32 %v12252, 4294967184
        %v12307 = vperm.slane %v12199, %v12306
        %vm12308 = vcmask 982912
        %v12309 = vsel %vm12308, %v12307, %v12305
        %v12310 = vadd.s32 %v12252, 4294967176
        %v12311 = vperm.slane %v12202, %v12310
        %vm12312 = vcmask 1048512
        %v12313 = vsel %vm12312, %v12311, %v12309
        %v12314 = vperm.slane %v12205, %v12252
        %v12315 = vperm.slane %v12208, %v12254
        %v12316 = vsel %vm12256, %v12315, %v12314
        %v12317 = vperm.slane %v12211, %v12258
        %v12318 = vsel %vm12260, %v12317, %v12316
        %v12319 = vperm.slane %v12214, %v12262
        %v12320 = vsel %vm12264, %v12319, %v12318
        %v12321 = vperm.slane %v12217, %v12266
        %v12322 = vsel %vm12268, %v12321, %v12320
        %v12323 = vperm.slane %v12220, %v12270
        %v12324 = vsel %vm12272, %v12323, %v12322
        %v12325 = vperm.slane %v12223, %v12274
        %v12326 = vsel %vm12276, %v12325, %v12324
        %v12327 = vperm.slane %v12226, %v12278
        %v12328 = vsel %vm12280, %v12327, %v12326
        %v12329 = vperm.slane %v12229, %v12282
        %v12330 = vsel %vm12284, %v12329, %v12328
        %v12331 = vperm.slane %v12232, %v12286
        %v12332 = vsel %vm12288, %v12331, %v12330
        %v12333 = vperm.slane %v12235, %v12290
        %v12334 = vsel %vm12292, %v12333, %v12332
        %v12335 = vperm.slane %v12238, %v12294
        %v12336 = vsel %vm12296, %v12335, %v12334
        %v12337 = vperm.slane %v12241, %v12298
        %v12338 = vsel %vm12300, %v12337, %v12336
        %v12339 = vperm.slane %v12244, %v12302
        %v12340 = vsel %vm12304, %v12339, %v12338
        %v12341 = vperm.slane %v12247, %v12306
        %v12342 = vsel %vm12308, %v12341, %v12340
        %v12343 = vperm.slane %v12250, %v12310
        %v12344 = vsel %vm12312, %v12343, %v12342
        %v12345 = vrot.slane %v12344, 7
        %v12346 = vsel %vm614, %v12313, %v12345
        %v12348 = vlaneseq
        %vm12349 = vcmp.ge.s32.totalorder %v12348, 0
        %vm12350 = vcmp.lt.s32.totalorder %v12348, 256
        %vm12351 = vmand %vm12349, %vm12350
        %12352 = vst.msk [vmem:[%s543] sm:$0x3] %vm12351, %v12346
        %s12353 = sand.u32 %s403, 1
        %s12354 = scalar_lea.sflag [#allocation4], %s12353
        %s12355 = sand.u32 %s403, 1
        %s12356 = smul.addr %s12355, 2
        %s12357 = scalar_lea.vmem [#allocation3], %s12356
        // Predicated region
        $region89: #{tpu_custom_call.1} parent=87 // pred_check
          %p12358 = pneg %p413
        $region90: #{tpu_custom_call.1} parent=87 // pred_check_branch
          %12360 = sbr.rel (%p12358) target = $region92
        $region91: #{tpu_custom_call.1} parent=87 // pred_region
          %12362 = vsyncadd %s12354, 0
          %s12363 = smul.addr %s33, 2
          %s12364 = scalar_lea.hbm %s17, %s12363
          %s12366 = sshll.u32 %s12357, 4
          %s12367 = int_to_ptr.vmem [resolvable:$true] %s12366
          %s12368 = sshll.u32 %s12364, 4
          %s12369 = int_to_ptr.hbm [resolvable:$true] %s12368
          %12371 = dma.vmem_to_hbm [thread:$0]  %s12367, 32, %s12369, %s12354
        $region92: #{tpu_custom_call.1} parent=87 // pred_fallthru
          _
      $region88: #{tpu_custom_call.1} parent=5 // pred_fallthru
        _
      %p12372 = scmp.le.s32.totalorder 2, %s28
      // Predicated region
      $region93: #{tpu_custom_call.1} parent=5 // pred_check
        %p12373 = pneg %p12372
      $region94: #{tpu_custom_call.1} parent=5 // pred_check_branch
        %12375 = sbr.rel (%p12373) target = $region96
      $region95: #{tpu_custom_call.1} parent=5 // pred_region
        %s12376 = ssub.s32 %s28, 2
        // Predicated region
        $region97: #{tpu_custom_call.1} parent=95 // pred_check
          %p12377 = pneg %p419
        $region98: #{tpu_custom_call.1} parent=95 // pred_check_branch
          %12379 = sbr.rel (%p12377) target = $region100
        $region99: #{tpu_custom_call.1} parent=95 // pred_region
          %s12380 = sand.u32 %s404, 1
          %s12381 = scalar_lea.sflag [#allocation4], %s12380
          %s12382 = sand.u32 %s404, 1
          %s12383 = smul.addr %s12382, 2
          %s12384 = scalar_lea.vmem [#allocation3], %s12383
          %12386 = dma.done %s12381, 32
        $region100: #{tpu_custom_call.1} parent=95 // pred_fallthru
          _
      $region96: #{tpu_custom_call.1} parent=5 // pred_fallthru
        _
    $region6: #{tpu_custom_call.1} parent=1 // loop_footer
      %s32 = sadd.s32 1, %s28
    $region7: #{tpu_custom_call.1} parent=1 // loop_footer_branch
      %27 = sbr.rel target = $region3
    $region8: #{tpu_custom_call.1} parent=1 // loop_exit
      _
    %12387 = vsyncpa [#allocation4], 1
    %s12388 = scalar_lea.sflag [#allocation4], 1
    %12389 = vsyncpa %s12388, 1

</llo_original>
